<compile_context>
chip_gen: v7x
topology: tpu7x:2x2x1
jax: 0.10.0
libtpu: 0.0.40
codegen_flags: <defaults>
</compile_context>

<pallas_src>
import functools
import math

import jax
import jax.numpy as jnp
from jax.experimental import pallas as pl
from jax.experimental.pallas import tpu as pltpu


# -----------------------------------------------------------------------------
# In-kernel helpers
# -----------------------------------------------------------------------------
def _layer_norm(x, gamma, beta, eps):
    mu = jnp.mean(x, axis=-1, keepdims=True)
    var = jnp.mean(jnp.square(x - mu), axis=-1, keepdims=True)
    return (x - mu) * jax.lax.rsqrt(var + eps) * gamma + beta


# -----------------------------------------------------------------------------
# Single fused kernel: L encoder layers + final LN + MLP head (per batch chunk)
# -----------------------------------------------------------------------------
def _fused_value_kernel(x_ref, m_ref,
                        wqkv_ref, bqkv_ref, wo_ref, w1_ref, b1_ref, w2_ref,
                        lnb_ref, hln_ref, hw1_ref, hb1_ref, hw2_ref, hb2_ref,
                        o_ref, *, num_layers, num_heads, eps):
    TB, S, D = x_ref.shape
    H = num_heads
    Dh = D // H
    M = TB * S

    # Fold batch into the matmul M dimension for all dense layers.
    x = x_ref[...].reshape(M, D)                                   # [M, D] f32

    # Key-padding bias, hoisted out of the layer loop: 0 for valid keys,
    # -1e30 for padded keys.  Finite value -> a fully masked row degenerates
    # to a uniform distribution instead of NaN (no sequence is all padding).
    bias = jnp.where(m_ref[...] > 0, 0.0, -1e30)                   # [TB, 1, S]
    bias = jnp.broadcast_to(bias, (TB, H, S)).reshape(TB * H, 1, S)

    def split_heads(t):   # [M, D] f32 -> [TB*H, S, Dh]
        return t.reshape(TB, S, H, Dh).transpose((0, 2, 1, 3)).reshape(
            TB * H, S, Dh)

    for l in range(num_layers):        # static unrolled; weights stay in VMEM
        ln = lnb_ref[l]                # [6, D]: ln1_g, ln1_b, ln2_g, ln2_b, bo, b2

        # Fused QKV projection (one MXU pass over x).  The 1/sqrt(Dh) softmax
        # scale is already folded into the Q columns of wqkv / bqkv.
        qkv = jnp.dot(x.astype(jnp.bfloat16), wqkv_ref[l],
                      preferred_element_type=jnp.float32) + bqkv_ref[l]

        q = split_heads(qkv[:, :D]).astype(jnp.bfloat16)           # [TB*H,S,Dh]
        k = split_heads(qkv[:, D:2 * D]).astype(jnp.bfloat16)
        v = split_heads(qkv[:, 2 * D:]).astype(jnp.bfloat16)

        # Batched masked softmax attention over (batch*head).
        s = jnp.einsum("bqd,bkd->bqk", q, k,
                       preferred_element_type=jnp.float32) + bias  # [TB*H,S,S]
        s = s - jnp.max(s, axis=-1, keepdims=True)
        p = jnp.exp(s)
        p = p * pl.reciprocal(jnp.sum(p, axis=-1, keepdims=True), approx=True)
        attn = jnp.einsum("bqk,bkd->bqd", p.astype(jnp.bfloat16), v,
                          preferred_element_type=jnp.float32)      # [TB*H,S,Dh]
        attn = attn.reshape(TB, H, S, Dh).transpose((0, 2, 1, 3)).reshape(M, D)

        attn = jnp.dot(attn.astype(jnp.bfloat16), wo_ref[l],
                       preferred_element_type=jnp.float32) + ln[4:5]

        # Residual + post-LN 1.
        x1 = _layer_norm(x + attn, ln[0:1], ln[1:2], eps)

        # Feed-forward + residual + post-LN 2.
        h = jnp.dot(x1.astype(jnp.bfloat16), w1_ref[l],
                    preferred_element_type=jnp.float32) + b1_ref[l]
        h = jnp.maximum(h, 0.0)
        y = jnp.dot(h.astype(jnp.bfloat16), w2_ref[l],
                    preferred_element_type=jnp.float32) + ln[5:6]
        x = _layer_norm(x1 + y, ln[2:3], ln[3:4], eps)

    # Head: final LayerNorm -> Linear/ReLU -> Linear/Sigmoid.
    hln = hln_ref[...]
    xh = _layer_norm(x, hln[0:1], hln[1:2], eps)
    h = jnp.dot(xh.astype(jnp.bfloat16), hw1_ref[...],
                preferred_element_type=jnp.float32) + hb1_ref[...]
    h = jnp.maximum(h, 0.0)
    y = jnp.dot(h.astype(jnp.bfloat16), hw2_ref[...],
                preferred_element_type=jnp.float32) + hb2_ref[...]  # [M, 1]

    # Single final store of predictions for this batch chunk.
    o_ref[0] = jax.nn.sigmoid(y).reshape(TB, S).astype(o_ref.dtype)


# -----------------------------------------------------------------------------
# pallas_call wrapper
# -----------------------------------------------------------------------------
def _rep_spec(shape):
    """Whole-array block, same block for every grid step (weights)."""
    n = len(shape)
    return pl.BlockSpec(shape, lambda c, _n=n: (0,) * _n)


@functools.partial(jax.jit, static_argnames=("num_heads",))
def value_module_forward(params, embeds, mask, *, num_heads):
    """embeds [B,S,D] f32, mask [B,1,S] f32 (1 = valid token) -> preds [B,S]."""
    B, S, D = embeds.shape
    num_layers = params["wqkv"].shape[0]

    # >= 2 parallel grid steps when possible so v7x uses both TensorCores;
    # the batch elements inside each chunk are folded into the matmul M dim.
    n_chunks = 2 if (B >= 2 and B % 2 == 0) else 1
    TB = B // n_chunks

    weights = (params["wqkv"], params["bqkv"], params["wo"],
               params["w1"], params["b1"], params["w2"], params["lnb"],
               params["head_ln"], params["head_w1"], params["head_b1"],
               params["head_w2"], params["head_b2"])

    out = pl.pallas_call(
        functools.partial(_fused_value_kernel, num_layers=num_layers,
                          num_heads=num_heads, eps=1e-5),
        out_shape=jax.ShapeDtypeStruct((n_chunks, TB, S), jnp.float32),
        grid=(n_chunks,),
        in_specs=[pl.BlockSpec((TB, S, D), lambda c: (c, 0, 0)),
                  pl.BlockSpec((TB, 1, S), lambda c: (c, 0, 0))]
                 + [_rep_spec(w.shape) for w in weights],
        out_specs=pl.BlockSpec((1, TB, S), lambda c: (c, 0, 0)),
        compiler_params=pltpu.CompilerParams(
            dimension_semantics=("parallel",),
            vmem_limit_bytes=32 * 1024 * 1024),
    )(embeds.astype(jnp.float32), mask.astype(jnp.float32), *weights)

    return out.reshape(B, S)


# -----------------------------------------------------------------------------
# Deterministic synthetic parameters (stacked / packed layout)
# -----------------------------------------------------------------------------
def make_params(key, d_model, num_heads, num_layers, dim_feedforward):
    D, L, F = d_model, num_layers, dim_feedforward
    scale = 1.0 / math.sqrt(D // num_heads)
    init = 0.02

    def nrm(k, shape):
        return jax.random.normal(k, shape, jnp.float32) * init

    keys = jax.random.split(key, 4 * L + 2)
    wqkv, wo, w1, w2 = [], [], [], []
    for l in range(L):
        kq, ko, k1, k2 = keys[4 * l:4 * l + 4]
        w = nrm(kq, (D, 3 * D))
        # Fold the 1/sqrt(Dh) softmax scale into the Q columns once at init
        # (bqkv Q-part would be scaled too; it is zero here).
        w = w.at[:, :D].multiply(scale)
        wqkv.append(w)
        wo.append(nrm(ko, (D, D)))
        w1.append(nrm(k1, (D, F)))
        w2.append(nrm(k2, (F, D)))

    # Packed per-layer small vectors: ln1_g, ln1_b, ln2_g, ln2_b, bo, b2.
    lnb = jnp.stack([jnp.ones((D,)), jnp.zeros((D,)),
                     jnp.ones((D,)), jnp.zeros((D,)),
                     jnp.zeros((D,)), jnp.zeros((D,))]).astype(jnp.float32)

    return {
        "wqkv": jnp.stack(wqkv).astype(jnp.bfloat16),      # [L, D, 3D]
        "bqkv": jnp.zeros((L, 1, 3 * D), jnp.float32),     # [L, 1, 3D]
        "wo":   jnp.stack(wo).astype(jnp.bfloat16),        # [L, D, D]
        "w1":   jnp.stack(w1).astype(jnp.bfloat16),        # [L, D, F]
        "b1":   jnp.zeros((L, 1, F), jnp.float32),         # [L, 1, F]
        "w2":   jnp.stack(w2).astype(jnp.bfloat16),        # [L, F, D]
        "lnb":  jnp.tile(lnb[None], (L, 1, 1)),            # [L, 6, D]
        "head_ln": jnp.stack([jnp.ones((D,), jnp.float32),
                              jnp.zeros((D,), jnp.float32)]),        # [2, D]
        "head_w1": nrm(keys[-2], (D, D // 2)).astype(jnp.bfloat16),  # [D, D/2]
        "head_b1": jnp.zeros((1, D // 2), jnp.float32),
        "head_w2": nrm(keys[-1], (D // 2, 1)).astype(jnp.bfloat16),  # [D/2, 1]
        "head_b2": jnp.zeros((1, 1), jnp.float32),
    }


# -----------------------------------------------------------------------------
if __name__ == "__main__":
    B, S = 2, 8
    D_MODEL = 32
    NUM_HEADS = 4
    NUM_LAYERS = 2
    DIM_FF = 2048   # nn.TransformerEncoderLayer default dim_feedforward

    key = jax.random.PRNGKey(0)
    k_params, k_embeds = jax.random.split(key)

    params = make_params(k_params, D_MODEL, NUM_HEADS, NUM_LAYERS, DIM_FF)
    embeds = jax.random.normal(k_embeds, (B, S, D_MODEL), jnp.float32)

    # mask [B, 1, S]: 1 = valid token, 0 = padding (last 2 tokens of batch 1).
    mask = jnp.ones((B, 1, S), jnp.float32)
    mask = mask.at[1, 0, -2:].set(0.0)

    preds = value_module_forward(params, embeds, mask, num_heads=NUM_HEADS)
    preds = jax.block_until_ready(preds)

    assert preds.shape == (B, S)
    assert bool(jnp.all(jnp.isfinite(preds)))
    assert bool(jnp.all((preds >= 0.0) & (preds <= 1.0)))
    print("KERNEL_OK")
</pallas_src>

<mosaic_0001>
module attributes {stable_mosaic.version = 11 : i64} {
  func.func @_fused_value_kernel(%arg0: i32, %arg1: memref<1x8x32xf32, #tpu.memory_space<vmem>>, %arg2: memref<1x1x8xf32, #tpu.memory_space<vmem>>, %arg3: memref<2x32x96xbf16, #tpu.memory_space<vmem>>, %arg4: memref<2x1x96xf32, #tpu.memory_space<vmem>>, %arg5: memref<2x32x32xbf16, #tpu.memory_space<vmem>>, %arg6: memref<2x32x2048xbf16, #tpu.memory_space<vmem>>, %arg7: memref<2x1x2048xf32, #tpu.memory_space<vmem>>, %arg8: memref<2x2048x32xbf16, #tpu.memory_space<vmem>>, %arg9: memref<2x6x32xf32, #tpu.memory_space<vmem>>, %arg10: memref<2x32xf32, #tpu.memory_space<vmem>>, %arg11: memref<32x16xbf16, #tpu.memory_space<vmem>>, %arg12: memref<1x16xf32, #tpu.memory_space<vmem>>, %arg13: memref<16x1xbf16, #tpu.memory_space<vmem>>, %arg14: memref<1x1xf32, #tpu.memory_space<vmem>>, %arg15: memref<1x1x8xf32, #tpu.memory_space<vmem>>) attributes {dimension_semantics = [#tpu.dimension_semantics<parallel>], iteration_bounds = array<i64: 2>, scalar_prefetch = 0 : i64, scratch_operands = 0 : i64, tpu.core_type = #tpu.core_type<tc>, window_params = [{transform_indices = @transform_0, window_bounds = array<i64: 1, 8, 32>}, {transform_indices = @transform_1, window_bounds = array<i64: 1, 1, 8>}, {pipeline_mode = #tpu.pipeline_mode<synchronous>, transform_indices = @transform_2, window_bounds = array<i64: 2, 32, 96>}, {pipeline_mode = #tpu.pipeline_mode<synchronous>, transform_indices = @transform_3, window_bounds = array<i64: 2, 1, 96>}, {pipeline_mode = #tpu.pipeline_mode<synchronous>, transform_indices = @transform_4, window_bounds = array<i64: 2, 32, 32>}, {pipeline_mode = #tpu.pipeline_mode<synchronous>, transform_indices = @transform_5, window_bounds = array<i64: 2, 32, 2048>}, {pipeline_mode = #tpu.pipeline_mode<synchronous>, transform_indices = @transform_6, window_bounds = array<i64: 2, 1, 2048>}, {pipeline_mode = #tpu.pipeline_mode<synchronous>, transform_indices = @transform_7, window_bounds = array<i64: 2, 2048, 32>}, {pipeline_mode = #tpu.pipeline_mode<synchronous>, transform_indices = @transform_8, window_bounds = array<i64: 2, 6, 32>}, {pipeline_mode = #tpu.pipeline_mode<synchronous>, transform_indices = @transform_9, window_bounds = array<i64: 2, 32>}, {pipeline_mode = #tpu.pipeline_mode<synchronous>, transform_indices = @transform_10, window_bounds = array<i64: 32, 16>}, {pipeline_mode = #tpu.pipeline_mode<synchronous>, transform_indices = @transform_11, window_bounds = array<i64: 1, 16>}, {pipeline_mode = #tpu.pipeline_mode<synchronous>, transform_indices = @transform_12, window_bounds = array<i64: 16, 1>}, {pipeline_mode = #tpu.pipeline_mode<synchronous>, transform_indices = @transform_13, window_bounds = array<i64: 1, 1>}, {transform_indices = @transform_14, window_bounds = array<i64: 1, 1, 8>}]} {
    %c0 = arith.constant 0 : index
    %c0_0 = arith.constant 0 : index
    %c0_1 = arith.constant 0 : index
    %0 = vector.load %arg1[%c0, %c0_0, %c0_1] : memref<1x8x32xf32, #tpu.memory_space<vmem>>, vector<1x8x32xf32>
    %1 = vector.shape_cast %0 : vector<1x8x32xf32> to vector<8x32xf32>
    %c0_2 = arith.constant 0 : index
    %c0_3 = arith.constant 0 : index
    %c0_4 = arith.constant 0 : index
    %2 = vector.load %arg2[%c0_2, %c0_3, %c0_4] : memref<1x1x8xf32, #tpu.memory_space<vmem>>, vector<1x1x8xf32>
    %cst = arith.constant 0.000000e+00 : f32
    %3 = vector.broadcast %cst : f32 to vector<1x1x8xf32>
    %4 = arith.cmpf ogt, %2, %3 : vector<1x1x8xf32>
    %cst_5 = arith.constant 0.000000e+00 : f32
    %cst_6 = arith.constant -1.000000e+30 : f32
    %5 = vector.broadcast %cst_5 : f32 to vector<1x1x8xf32>
    %6 = vector.broadcast %cst_6 : f32 to vector<1x1x8xf32>
    %7 = arith.select %4, %5, %6 : vector<1x1x8xi1>, vector<1x1x8xf32>
    %8 = vector.shape_cast %7 : vector<1x1x8xf32> to vector<1x1x8xf32>
    %9 = vector.broadcast %8 : vector<1x1x8xf32> to vector<1x4x8xf32>
    %10 = vector.shape_cast %9 : vector<1x4x8xf32> to vector<4x1x8xf32>
    %c0_7 = arith.constant 0 : index
    %c0_8 = arith.constant 0 : index
    %c0_9 = arith.constant 0 : index
    %11 = vector.load %arg9[%c0_7, %c0_8, %c0_9] : memref<2x6x32xf32, #tpu.memory_space<vmem>>, vector<1x6x32xf32>
    %12 = vector.shape_cast %11 : vector<1x6x32xf32> to vector<6x32xf32>
    %13 = arith.truncf %1 : vector<8x32xf32> to vector<8x32xbf16>
    %c0_10 = arith.constant 0 : index
    %c0_11 = arith.constant 0 : index
    %c0_12 = arith.constant 0 : index
    %14 = vector.load %arg3[%c0_10, %c0_11, %c0_12] : memref<2x32x96xbf16, #tpu.memory_space<vmem>>, vector<1x32x96xbf16>
    %15 = vector.shape_cast %14 : vector<1x32x96xbf16> to vector<32x96xbf16>
    %cst_13 = arith.constant dense<0.000000e+00> : vector<8x96xf32>
    %16 = tpu.matmul %13, %15, %cst_13 {dimension_numbers = #tpu.dot_dimension_numbers<[1], [0], [0], [1], [0, 0, 1, 1], [], []>} : vector<8x32xbf16>, vector<32x96xbf16>, vector<8x96xf32> -> vector<8x96xf32>
    %c0_14 = arith.constant 0 : index
    %c0_15 = arith.constant 0 : index
    %c0_16 = arith.constant 0 : index
    %17 = vector.load %arg4[%c0_14, %c0_15, %c0_16] : memref<2x1x96xf32, #tpu.memory_space<vmem>>, vector<1x1x96xf32>
    %18 = vector.shape_cast %17 : vector<1x1x96xf32> to vector<1x96xf32>
    %19 = vector.broadcast %18 : vector<1x96xf32> to vector<8x96xf32>
    %20 = arith.addf %16, %19 : vector<8x96xf32>
    %21 = vector.extract_strided_slice %20 {offsets = [0, 0], sizes = [8, 32], strides = [1, 1]} : vector<8x96xf32> to vector<8x32xf32>
    %22 = vector.shape_cast %21 : vector<8x32xf32> to vector<1x8x4x8xf32>
    %23 = tpu.transpose %22, [0, 2, 1, 3] : vector<1x8x4x8xf32> -> vector<1x4x8x8xf32>
    %24 = vector.shape_cast %23 : vector<1x4x8x8xf32> to vector<4x8x8xf32>
    %25 = arith.truncf %24 : vector<4x8x8xf32> to vector<4x8x8xbf16>
    %26 = vector.extract_strided_slice %20 {offsets = [0, 32], sizes = [8, 32], strides = [1, 1]} : vector<8x96xf32> to vector<8x32xf32>
    %27 = vector.shape_cast %26 : vector<8x32xf32> to vector<1x8x4x8xf32>
    %28 = tpu.transpose %27, [0, 2, 1, 3] : vector<1x8x4x8xf32> -> vector<1x4x8x8xf32>
    %29 = vector.shape_cast %28 : vector<1x4x8x8xf32> to vector<4x8x8xf32>
    %30 = arith.truncf %29 : vector<4x8x8xf32> to vector<4x8x8xbf16>
    %31 = vector.extract_strided_slice %20 {offsets = [0, 64], sizes = [8, 32], strides = [1, 1]} : vector<8x96xf32> to vector<8x32xf32>
    %32 = vector.shape_cast %31 : vector<8x32xf32> to vector<1x8x4x8xf32>
    %33 = tpu.transpose %32, [0, 2, 1, 3] : vector<1x8x4x8xf32> -> vector<1x4x8x8xf32>
    %34 = vector.shape_cast %33 : vector<1x4x8x8xf32> to vector<4x8x8xf32>
    %35 = arith.truncf %34 : vector<4x8x8xf32> to vector<4x8x8xbf16>
    "tpu.trace_start"() <{level = 10 : i32, message = "bqd,bkd->bqk"}> : () -> ()
    %cst_17 = arith.constant dense<0.000000e+00> : vector<4x8x8xf32>
    %36 = tpu.matmul %25, %30, %cst_17 {dimension_numbers = #tpu.dot_dimension_numbers<[2], [2], [1], [1], [0, 0, 0, 1, 1, 1], [0], [0]>} : vector<4x8x8xbf16>, vector<4x8x8xbf16>, vector<4x8x8xf32> -> vector<4x8x8xf32>
    "tpu.trace_stop"() : () -> ()
    %37 = vector.broadcast %10 : vector<4x1x8xf32> to vector<4x8x8xf32>
    %38 = arith.addf %36, %37 : vector<4x8x8xf32>
    %cst_18 = arith.constant dense<0xFF800000> : vector<4x8xf32>
    %39 = vector.multi_reduction <maximumf>, %38, %cst_18 [2] : vector<4x8x8xf32> to vector<4x8xf32>
    %40 = vector.shape_cast %39 : vector<4x8xf32> to vector<4x8x1xf32>
    %41 = vector.broadcast %40 : vector<4x8x1xf32> to vector<4x8x8xf32>
    %42 = arith.subf %38, %41 : vector<4x8x8xf32>
    %43 = math.exp %42 : vector<4x8x8xf32>
    %cst_19 = arith.constant dense<0.000000e+00> : vector<4x8xf32>
    %44 = vector.multi_reduction <add>, %43, %cst_19 [2] : vector<4x8x8xf32> to vector<4x8xf32>
    %45 = vector.shape_cast %44 : vector<4x8xf32> to vector<4x8x1xf32>
    %46 = tpu.reciprocal %45 {approx = true} : vector<4x8x1xf32> -> vector<4x8x1xf32>
    %47 = vector.broadcast %46 : vector<4x8x1xf32> to vector<4x8x8xf32>
    %48 = arith.mulf %43, %47 : vector<4x8x8xf32>
    %49 = arith.truncf %48 : vector<4x8x8xf32> to vector<4x8x8xbf16>
    "tpu.trace_start"() <{level = 10 : i32, message = "bqk,bkd->bqd"}> : () -> ()
    %cst_20 = arith.constant dense<0.000000e+00> : vector<4x8x8xf32>
    %50 = tpu.matmul %49, %35, %cst_20 {dimension_numbers = #tpu.dot_dimension_numbers<[2], [1], [1], [2], [0, 0, 0, 1, 1, 2], [0], [0]>} : vector<4x8x8xbf16>, vector<4x8x8xbf16>, vector<4x8x8xf32> -> vector<4x8x8xf32>
    "tpu.trace_stop"() : () -> ()
    %51 = vector.shape_cast %50 : vector<4x8x8xf32> to vector<1x4x8x8xf32>
    %52 = tpu.transpose %51, [0, 2, 1, 3] : vector<1x4x8x8xf32> -> vector<1x8x4x8xf32>
    %53 = vector.shape_cast %52 : vector<1x8x4x8xf32> to vector<8x32xf32>
    %54 = arith.truncf %53 : vector<8x32xf32> to vector<8x32xbf16>
    %c0_21 = arith.constant 0 : index
    %c0_22 = arith.constant 0 : index
    %c0_23 = arith.constant 0 : index
    %55 = vector.load %arg5[%c0_21, %c0_22, %c0_23] : memref<2x32x32xbf16, #tpu.memory_space<vmem>>, vector<1x32x32xbf16>
    %56 = vector.shape_cast %55 : vector<1x32x32xbf16> to vector<32x32xbf16>
    %cst_24 = arith.constant dense<0.000000e+00> : vector<8x32xf32>
    %57 = tpu.matmul %54, %56, %cst_24 {dimension_numbers = #tpu.dot_dimension_numbers<[1], [0], [0], [1], [0, 0, 1, 1], [], []>} : vector<8x32xbf16>, vector<32x32xbf16>, vector<8x32xf32> -> vector<8x32xf32>
    %58 = vector.extract_strided_slice %12 {offsets = [4, 0], sizes = [1, 32], strides = [1, 1]} : vector<6x32xf32> to vector<1x32xf32>
    %59 = vector.broadcast %58 : vector<1x32xf32> to vector<8x32xf32>
    %60 = arith.addf %57, %59 : vector<8x32xf32>
    %61 = arith.addf %1, %60 : vector<8x32xf32>
    %62 = vector.extract_strided_slice %12 {offsets = [0, 0], sizes = [1, 32], strides = [1, 1]} : vector<6x32xf32> to vector<1x32xf32>
    %63 = vector.extract_strided_slice %12 {offsets = [1, 0], sizes = [1, 32], strides = [1, 1]} : vector<6x32xf32> to vector<1x32xf32>
    %cst_25 = arith.constant dense<0.000000e+00> : vector<8xf32>
    %64 = vector.multi_reduction <add>, %61, %cst_25 [1] : vector<8x32xf32> to vector<8xf32>
    %65 = vector.shape_cast %64 : vector<8xf32> to vector<8x1xf32>
    %cst_26 = arith.constant 3.200000e+01 : f32
    %66 = vector.broadcast %cst_26 : f32 to vector<8x1xf32>
    %67 = arith.divf %65, %66 : vector<8x1xf32>
    %68 = vector.broadcast %67 : vector<8x1xf32> to vector<8x32xf32>
    %69 = arith.subf %61, %68 : vector<8x32xf32>
    %70 = arith.mulf %69, %69 : vector<8x32xf32>
    %cst_27 = arith.constant dense<0.000000e+00> : vector<8xf32>
    %71 = vector.multi_reduction <add>, %70, %cst_27 [1] : vector<8x32xf32> to vector<8xf32>
    %72 = vector.shape_cast %71 : vector<8xf32> to vector<8x1xf32>
    %cst_28 = arith.constant 3.200000e+01 : f32
    %73 = vector.broadcast %cst_28 : f32 to vector<8x1xf32>
    %74 = arith.divf %72, %73 : vector<8x1xf32>
    %75 = vector.broadcast %67 : vector<8x1xf32> to vector<8x32xf32>
    %76 = arith.subf %61, %75 : vector<8x32xf32>
    %cst_29 = arith.constant 9.99999974E-6 : f32
    %77 = vector.broadcast %cst_29 : f32 to vector<8x1xf32>
    %78 = arith.addf %74, %77 : vector<8x1xf32>
    %79 = math.rsqrt %78 : vector<8x1xf32>
    %80 = vector.broadcast %79 : vector<8x1xf32> to vector<8x32xf32>
    %81 = arith.mulf %76, %80 : vector<8x32xf32>
    %82 = vector.broadcast %62 : vector<1x32xf32> to vector<8x32xf32>
    %83 = arith.mulf %81, %82 : vector<8x32xf32>
    %84 = vector.broadcast %63 : vector<1x32xf32> to vector<8x32xf32>
    %85 = arith.addf %83, %84 : vector<8x32xf32>
    %86 = arith.truncf %85 : vector<8x32xf32> to vector<8x32xbf16>
    %c0_30 = arith.constant 0 : index
    %c0_31 = arith.constant 0 : index
    %c0_32 = arith.constant 0 : index
    %87 = vector.load %arg6[%c0_30, %c0_31, %c0_32] : memref<2x32x2048xbf16, #tpu.memory_space<vmem>>, vector<1x32x2048xbf16>
    %88 = vector.shape_cast %87 : vector<1x32x2048xbf16> to vector<32x2048xbf16>
    %cst_33 = arith.constant dense<0.000000e+00> : vector<8x2048xf32>
    %89 = tpu.matmul %86, %88, %cst_33 {dimension_numbers = #tpu.dot_dimension_numbers<[1], [0], [0], [1], [0, 0, 1, 1], [], []>} : vector<8x32xbf16>, vector<32x2048xbf16>, vector<8x2048xf32> -> vector<8x2048xf32>
    %c0_34 = arith.constant 0 : index
    %c0_35 = arith.constant 0 : index
    %c0_36 = arith.constant 0 : index
    %90 = vector.load %arg7[%c0_34, %c0_35, %c0_36] : memref<2x1x2048xf32, #tpu.memory_space<vmem>>, vector<1x1x2048xf32>
    %91 = vector.shape_cast %90 : vector<1x1x2048xf32> to vector<1x2048xf32>
    %92 = vector.broadcast %91 : vector<1x2048xf32> to vector<8x2048xf32>
    %93 = arith.addf %89, %92 : vector<8x2048xf32>
    %cst_37 = arith.constant 0.000000e+00 : f32
    %94 = vector.broadcast %cst_37 : f32 to vector<8x2048xf32>
    %95 = arith.maximumf %93, %94 : vector<8x2048xf32>
    %96 = arith.truncf %95 : vector<8x2048xf32> to vector<8x2048xbf16>
    %c0_38 = arith.constant 0 : index
    %c0_39 = arith.constant 0 : index
    %c0_40 = arith.constant 0 : index
    %97 = vector.load %arg8[%c0_38, %c0_39, %c0_40] : memref<2x2048x32xbf16, #tpu.memory_space<vmem>>, vector<1x2048x32xbf16>
    %98 = vector.shape_cast %97 : vector<1x2048x32xbf16> to vector<2048x32xbf16>
    %cst_41 = arith.constant dense<0.000000e+00> : vector<8x32xf32>
    %99 = tpu.matmul %96, %98, %cst_41 {dimension_numbers = #tpu.dot_dimension_numbers<[1], [0], [0], [1], [0, 0, 1, 1], [], []>} : vector<8x2048xbf16>, vector<2048x32xbf16>, vector<8x32xf32> -> vector<8x32xf32>
    %100 = vector.extract_strided_slice %12 {offsets = [5, 0], sizes = [1, 32], strides = [1, 1]} : vector<6x32xf32> to vector<1x32xf32>
    %101 = vector.broadcast %100 : vector<1x32xf32> to vector<8x32xf32>
    %102 = arith.addf %99, %101 : vector<8x32xf32>
    %103 = arith.addf %85, %102 : vector<8x32xf32>
    %104 = vector.extract_strided_slice %12 {offsets = [2, 0], sizes = [1, 32], strides = [1, 1]} : vector<6x32xf32> to vector<1x32xf32>
    %105 = vector.extract_strided_slice %12 {offsets = [3, 0], sizes = [1, 32], strides = [1, 1]} : vector<6x32xf32> to vector<1x32xf32>
    %cst_42 = arith.constant dense<0.000000e+00> : vector<8xf32>
    %106 = vector.multi_reduction <add>, %103, %cst_42 [1] : vector<8x32xf32> to vector<8xf32>
    %107 = vector.shape_cast %106 : vector<8xf32> to vector<8x1xf32>
    %cst_43 = arith.constant 3.200000e+01 : f32
    %108 = vector.broadcast %cst_43 : f32 to vector<8x1xf32>
    %109 = arith.divf %107, %108 : vector<8x1xf32>
    %110 = vector.broadcast %109 : vector<8x1xf32> to vector<8x32xf32>
    %111 = arith.subf %103, %110 : vector<8x32xf32>
    %112 = arith.mulf %111, %111 : vector<8x32xf32>
    %cst_44 = arith.constant dense<0.000000e+00> : vector<8xf32>
    %113 = vector.multi_reduction <add>, %112, %cst_44 [1] : vector<8x32xf32> to vector<8xf32>
    %114 = vector.shape_cast %113 : vector<8xf32> to vector<8x1xf32>
    %cst_45 = arith.constant 3.200000e+01 : f32
    %115 = vector.broadcast %cst_45 : f32 to vector<8x1xf32>
    %116 = arith.divf %114, %115 : vector<8x1xf32>
    %117 = vector.broadcast %109 : vector<8x1xf32> to vector<8x32xf32>
    %118 = arith.subf %103, %117 : vector<8x32xf32>
    %cst_46 = arith.constant 9.99999974E-6 : f32
    %119 = vector.broadcast %cst_46 : f32 to vector<8x1xf32>
    %120 = arith.addf %116, %119 : vector<8x1xf32>
    %121 = math.rsqrt %120 : vector<8x1xf32>
    %122 = vector.broadcast %121 : vector<8x1xf32> to vector<8x32xf32>
    %123 = arith.mulf %118, %122 : vector<8x32xf32>
    %124 = vector.broadcast %104 : vector<1x32xf32> to vector<8x32xf32>
    %125 = arith.mulf %123, %124 : vector<8x32xf32>
    %126 = vector.broadcast %105 : vector<1x32xf32> to vector<8x32xf32>
    %127 = arith.addf %125, %126 : vector<8x32xf32>
    %c1 = arith.constant 1 : index
    %c0_47 = arith.constant 0 : index
    %c0_48 = arith.constant 0 : index
    %128 = vector.load %arg9[%c1, %c0_47, %c0_48] : memref<2x6x32xf32, #tpu.memory_space<vmem>>, vector<1x6x32xf32>
    %129 = vector.shape_cast %128 : vector<1x6x32xf32> to vector<6x32xf32>
    %130 = arith.truncf %127 : vector<8x32xf32> to vector<8x32xbf16>
    %c1_49 = arith.constant 1 : index
    %c0_50 = arith.constant 0 : index
    %c0_51 = arith.constant 0 : index
    %131 = vector.load %arg3[%c1_49, %c0_50, %c0_51] : memref<2x32x96xbf16, #tpu.memory_space<vmem>>, vector<1x32x96xbf16>
    %132 = vector.shape_cast %131 : vector<1x32x96xbf16> to vector<32x96xbf16>
    %cst_52 = arith.constant dense<0.000000e+00> : vector<8x96xf32>
    %133 = tpu.matmul %130, %132, %cst_52 {dimension_numbers = #tpu.dot_dimension_numbers<[1], [0], [0], [1], [0, 0, 1, 1], [], []>} : vector<8x32xbf16>, vector<32x96xbf16>, vector<8x96xf32> -> vector<8x96xf32>
    %c1_53 = arith.constant 1 : index
    %c0_54 = arith.constant 0 : index
    %c0_55 = arith.constant 0 : index
    %134 = vector.load %arg4[%c1_53, %c0_54, %c0_55] : memref<2x1x96xf32, #tpu.memory_space<vmem>>, vector<1x1x96xf32>
    %135 = vector.shape_cast %134 : vector<1x1x96xf32> to vector<1x96xf32>
    %136 = vector.broadcast %135 : vector<1x96xf32> to vector<8x96xf32>
    %137 = arith.addf %133, %136 : vector<8x96xf32>
    %138 = vector.extract_strided_slice %137 {offsets = [0, 0], sizes = [8, 32], strides = [1, 1]} : vector<8x96xf32> to vector<8x32xf32>
    %139 = vector.shape_cast %138 : vector<8x32xf32> to vector<1x8x4x8xf32>
    %140 = tpu.transpose %139, [0, 2, 1, 3] : vector<1x8x4x8xf32> -> vector<1x4x8x8xf32>
    %141 = vector.shape_cast %140 : vector<1x4x8x8xf32> to vector<4x8x8xf32>
    %142 = arith.truncf %141 : vector<4x8x8xf32> to vector<4x8x8xbf16>
    %143 = vector.extract_strided_slice %137 {offsets = [0, 32], sizes = [8, 32], strides = [1, 1]} : vector<8x96xf32> to vector<8x32xf32>
    %144 = vector.shape_cast %143 : vector<8x32xf32> to vector<1x8x4x8xf32>
    %145 = tpu.transpose %144, [0, 2, 1, 3] : vector<1x8x4x8xf32> -> vector<1x4x8x8xf32>
    %146 = vector.shape_cast %145 : vector<1x4x8x8xf32> to vector<4x8x8xf32>
    %147 = arith.truncf %146 : vector<4x8x8xf32> to vector<4x8x8xbf16>
    %148 = vector.extract_strided_slice %137 {offsets = [0, 64], sizes = [8, 32], strides = [1, 1]} : vector<8x96xf32> to vector<8x32xf32>
    %149 = vector.shape_cast %148 : vector<8x32xf32> to vector<1x8x4x8xf32>
    %150 = tpu.transpose %149, [0, 2, 1, 3] : vector<1x8x4x8xf32> -> vector<1x4x8x8xf32>
    %151 = vector.shape_cast %150 : vector<1x4x8x8xf32> to vector<4x8x8xf32>
    %152 = arith.truncf %151 : vector<4x8x8xf32> to vector<4x8x8xbf16>
    "tpu.trace_start"() <{level = 10 : i32, message = "bqd,bkd->bqk"}> : () -> ()
    %cst_56 = arith.constant dense<0.000000e+00> : vector<4x8x8xf32>
    %153 = tpu.matmul %142, %147, %cst_56 {dimension_numbers = #tpu.dot_dimension_numbers<[2], [2], [1], [1], [0, 0, 0, 1, 1, 1], [0], [0]>} : vector<4x8x8xbf16>, vector<4x8x8xbf16>, vector<4x8x8xf32> -> vector<4x8x8xf32>
    "tpu.trace_stop"() : () -> ()
    %154 = vector.broadcast %10 : vector<4x1x8xf32> to vector<4x8x8xf32>
    %155 = arith.addf %153, %154 : vector<4x8x8xf32>
    %cst_57 = arith.constant dense<0xFF800000> : vector<4x8xf32>
    %156 = vector.multi_reduction <maximumf>, %155, %cst_57 [2] : vector<4x8x8xf32> to vector<4x8xf32>
    %157 = vector.shape_cast %156 : vector<4x8xf32> to vector<4x8x1xf32>
    %158 = vector.broadcast %157 : vector<4x8x1xf32> to vector<4x8x8xf32>
    %159 = arith.subf %155, %158 : vector<4x8x8xf32>
    %160 = math.exp %159 : vector<4x8x8xf32>
    %cst_58 = arith.constant dense<0.000000e+00> : vector<4x8xf32>
    %161 = vector.multi_reduction <add>, %160, %cst_58 [2] : vector<4x8x8xf32> to vector<4x8xf32>
    %162 = vector.shape_cast %161 : vector<4x8xf32> to vector<4x8x1xf32>
    %163 = tpu.reciprocal %162 {approx = true} : vector<4x8x1xf32> -> vector<4x8x1xf32>
    %164 = vector.broadcast %163 : vector<4x8x1xf32> to vector<4x8x8xf32>
    %165 = arith.mulf %160, %164 : vector<4x8x8xf32>
    %166 = arith.truncf %165 : vector<4x8x8xf32> to vector<4x8x8xbf16>
    "tpu.trace_start"() <{level = 10 : i32, message = "bqk,bkd->bqd"}> : () -> ()
    %cst_59 = arith.constant dense<0.000000e+00> : vector<4x8x8xf32>
    %167 = tpu.matmul %166, %152, %cst_59 {dimension_numbers = #tpu.dot_dimension_numbers<[2], [1], [1], [2], [0, 0, 0, 1, 1, 2], [0], [0]>} : vector<4x8x8xbf16>, vector<4x8x8xbf16>, vector<4x8x8xf32> -> vector<4x8x8xf32>
    "tpu.trace_stop"() : () -> ()
    %168 = vector.shape_cast %167 : vector<4x8x8xf32> to vector<1x4x8x8xf32>
    %169 = tpu.transpose %168, [0, 2, 1, 3] : vector<1x4x8x8xf32> -> vector<1x8x4x8xf32>
    %170 = vector.shape_cast %169 : vector<1x8x4x8xf32> to vector<8x32xf32>
    %171 = arith.truncf %170 : vector<8x32xf32> to vector<8x32xbf16>
    %c1_60 = arith.constant 1 : index
    %c0_61 = arith.constant 0 : index
    %c0_62 = arith.constant 0 : index
    %172 = vector.load %arg5[%c1_60, %c0_61, %c0_62] : memref<2x32x32xbf16, #tpu.memory_space<vmem>>, vector<1x32x32xbf16>
    %173 = vector.shape_cast %172 : vector<1x32x32xbf16> to vector<32x32xbf16>
    %cst_63 = arith.constant dense<0.000000e+00> : vector<8x32xf32>
    %174 = tpu.matmul %171, %173, %cst_63 {dimension_numbers = #tpu.dot_dimension_numbers<[1], [0], [0], [1], [0, 0, 1, 1], [], []>} : vector<8x32xbf16>, vector<32x32xbf16>, vector<8x32xf32> -> vector<8x32xf32>
    %175 = vector.extract_strided_slice %129 {offsets = [4, 0], sizes = [1, 32], strides = [1, 1]} : vector<6x32xf32> to vector<1x32xf32>
    %176 = vector.broadcast %175 : vector<1x32xf32> to vector<8x32xf32>
    %177 = arith.addf %174, %176 : vector<8x32xf32>
    %178 = arith.addf %127, %177 : vector<8x32xf32>
    %179 = vector.extract_strided_slice %129 {offsets = [0, 0], sizes = [1, 32], strides = [1, 1]} : vector<6x32xf32> to vector<1x32xf32>
    %180 = vector.extract_strided_slice %129 {offsets = [1, 0], sizes = [1, 32], strides = [1, 1]} : vector<6x32xf32> to vector<1x32xf32>
    %cst_64 = arith.constant dense<0.000000e+00> : vector<8xf32>
    %181 = vector.multi_reduction <add>, %178, %cst_64 [1] : vector<8x32xf32> to vector<8xf32>
    %182 = vector.shape_cast %181 : vector<8xf32> to vector<8x1xf32>
    %cst_65 = arith.constant 3.200000e+01 : f32
    %183 = vector.broadcast %cst_65 : f32 to vector<8x1xf32>
    %184 = arith.divf %182, %183 : vector<8x1xf32>
    %185 = vector.broadcast %184 : vector<8x1xf32> to vector<8x32xf32>
    %186 = arith.subf %178, %185 : vector<8x32xf32>
    %187 = arith.mulf %186, %186 : vector<8x32xf32>
    %cst_66 = arith.constant dense<0.000000e+00> : vector<8xf32>
    %188 = vector.multi_reduction <add>, %187, %cst_66 [1] : vector<8x32xf32> to vector<8xf32>
    %189 = vector.shape_cast %188 : vector<8xf32> to vector<8x1xf32>
    %cst_67 = arith.constant 3.200000e+01 : f32
    %190 = vector.broadcast %cst_67 : f32 to vector<8x1xf32>
    %191 = arith.divf %189, %190 : vector<8x1xf32>
    %192 = vector.broadcast %184 : vector<8x1xf32> to vector<8x32xf32>
    %193 = arith.subf %178, %192 : vector<8x32xf32>
    %cst_68 = arith.constant 9.99999974E-6 : f32
    %194 = vector.broadcast %cst_68 : f32 to vector<8x1xf32>
    %195 = arith.addf %191, %194 : vector<8x1xf32>
    %196 = math.rsqrt %195 : vector<8x1xf32>
    %197 = vector.broadcast %196 : vector<8x1xf32> to vector<8x32xf32>
    %198 = arith.mulf %193, %197 : vector<8x32xf32>
    %199 = vector.broadcast %179 : vector<1x32xf32> to vector<8x32xf32>
    %200 = arith.mulf %198, %199 : vector<8x32xf32>
    %201 = vector.broadcast %180 : vector<1x32xf32> to vector<8x32xf32>
    %202 = arith.addf %200, %201 : vector<8x32xf32>
    %203 = arith.truncf %202 : vector<8x32xf32> to vector<8x32xbf16>
    %c1_69 = arith.constant 1 : index
    %c0_70 = arith.constant 0 : index
    %c0_71 = arith.constant 0 : index
    %204 = vector.load %arg6[%c1_69, %c0_70, %c0_71] : memref<2x32x2048xbf16, #tpu.memory_space<vmem>>, vector<1x32x2048xbf16>
    %205 = vector.shape_cast %204 : vector<1x32x2048xbf16> to vector<32x2048xbf16>
    %cst_72 = arith.constant dense<0.000000e+00> : vector<8x2048xf32>
    %206 = tpu.matmul %203, %205, %cst_72 {dimension_numbers = #tpu.dot_dimension_numbers<[1], [0], [0], [1], [0, 0, 1, 1], [], []>} : vector<8x32xbf16>, vector<32x2048xbf16>, vector<8x2048xf32> -> vector<8x2048xf32>
    %c1_73 = arith.constant 1 : index
    %c0_74 = arith.constant 0 : index
    %c0_75 = arith.constant 0 : index
    %207 = vector.load %arg7[%c1_73, %c0_74, %c0_75] : memref<2x1x2048xf32, #tpu.memory_space<vmem>>, vector<1x1x2048xf32>
    %208 = vector.shape_cast %207 : vector<1x1x2048xf32> to vector<1x2048xf32>
    %209 = vector.broadcast %208 : vector<1x2048xf32> to vector<8x2048xf32>
    %210 = arith.addf %206, %209 : vector<8x2048xf32>
    %cst_76 = arith.constant 0.000000e+00 : f32
    %211 = vector.broadcast %cst_76 : f32 to vector<8x2048xf32>
    %212 = arith.maximumf %210, %211 : vector<8x2048xf32>
    %213 = arith.truncf %212 : vector<8x2048xf32> to vector<8x2048xbf16>
    %c1_77 = arith.constant 1 : index
    %c0_78 = arith.constant 0 : index
    %c0_79 = arith.constant 0 : index
    %214 = vector.load %arg8[%c1_77, %c0_78, %c0_79] : memref<2x2048x32xbf16, #tpu.memory_space<vmem>>, vector<1x2048x32xbf16>
    %215 = vector.shape_cast %214 : vector<1x2048x32xbf16> to vector<2048x32xbf16>
    %cst_80 = arith.constant dense<0.000000e+00> : vector<8x32xf32>
    %216 = tpu.matmul %213, %215, %cst_80 {dimension_numbers = #tpu.dot_dimension_numbers<[1], [0], [0], [1], [0, 0, 1, 1], [], []>} : vector<8x2048xbf16>, vector<2048x32xbf16>, vector<8x32xf32> -> vector<8x32xf32>
    %217 = vector.extract_strided_slice %129 {offsets = [5, 0], sizes = [1, 32], strides = [1, 1]} : vector<6x32xf32> to vector<1x32xf32>
    %218 = vector.broadcast %217 : vector<1x32xf32> to vector<8x32xf32>
    %219 = arith.addf %216, %218 : vector<8x32xf32>
    %220 = arith.addf %202, %219 : vector<8x32xf32>
    %221 = vector.extract_strided_slice %129 {offsets = [2, 0], sizes = [1, 32], strides = [1, 1]} : vector<6x32xf32> to vector<1x32xf32>
    %222 = vector.extract_strided_slice %129 {offsets = [3, 0], sizes = [1, 32], strides = [1, 1]} : vector<6x32xf32> to vector<1x32xf32>
    %cst_81 = arith.constant dense<0.000000e+00> : vector<8xf32>
    %223 = vector.multi_reduction <add>, %220, %cst_81 [1] : vector<8x32xf32> to vector<8xf32>
    %224 = vector.shape_cast %223 : vector<8xf32> to vector<8x1xf32>
    %cst_82 = arith.constant 3.200000e+01 : f32
    %225 = vector.broadcast %cst_82 : f32 to vector<8x1xf32>
    %226 = arith.divf %224, %225 : vector<8x1xf32>
    %227 = vector.broadcast %226 : vector<8x1xf32> to vector<8x32xf32>
    %228 = arith.subf %220, %227 : vector<8x32xf32>
    %229 = arith.mulf %228, %228 : vector<8x32xf32>
    %cst_83 = arith.constant dense<0.000000e+00> : vector<8xf32>
    %230 = vector.multi_reduction <add>, %229, %cst_83 [1] : vector<8x32xf32> to vector<8xf32>
    %231 = vector.shape_cast %230 : vector<8xf32> to vector<8x1xf32>
    %cst_84 = arith.constant 3.200000e+01 : f32
    %232 = vector.broadcast %cst_84 : f32 to vector<8x1xf32>
    %233 = arith.divf %231, %232 : vector<8x1xf32>
    %234 = vector.broadcast %226 : vector<8x1xf32> to vector<8x32xf32>
    %235 = arith.subf %220, %234 : vector<8x32xf32>
    %cst_85 = arith.constant 9.99999974E-6 : f32
    %236 = vector.broadcast %cst_85 : f32 to vector<8x1xf32>
    %237 = arith.addf %233, %236 : vector<8x1xf32>
    %238 = math.rsqrt %237 : vector<8x1xf32>
    %239 = vector.broadcast %238 : vector<8x1xf32> to vector<8x32xf32>
    %240 = arith.mulf %235, %239 : vector<8x32xf32>
    %241 = vector.broadcast %221 : vector<1x32xf32> to vector<8x32xf32>
    %242 = arith.mulf %240, %241 : vector<8x32xf32>
    %243 = vector.broadcast %222 : vector<1x32xf32> to vector<8x32xf32>
    %244 = arith.addf %242, %243 : vector<8x32xf32>
    %c0_86 = arith.constant 0 : index
    %c0_87 = arith.constant 0 : index
    %245 = vector.load %arg10[%c0_86, %c0_87] : memref<2x32xf32, #tpu.memory_space<vmem>>, vector<2x32xf32>
    %246 = vector.extract_strided_slice %245 {offsets = [0, 0], sizes = [1, 32], strides = [1, 1]} : vector<2x32xf32> to vector<1x32xf32>
    %247 = vector.extract_strided_slice %245 {offsets = [1, 0], sizes = [1, 32], strides = [1, 1]} : vector<2x32xf32> to vector<1x32xf32>
    %cst_88 = arith.constant dense<0.000000e+00> : vector<8xf32>
    %248 = vector.multi_reduction <add>, %244, %cst_88 [1] : vector<8x32xf32> to vector<8xf32>
    %249 = vector.shape_cast %248 : vector<8xf32> to vector<8x1xf32>
    %cst_89 = arith.constant 3.200000e+01 : f32
    %250 = vector.broadcast %cst_89 : f32 to vector<8x1xf32>
    %251 = arith.divf %249, %250 : vector<8x1xf32>
    %252 = vector.broadcast %251 : vector<8x1xf32> to vector<8x32xf32>
    %253 = arith.subf %244, %252 : vector<8x32xf32>
    %254 = arith.mulf %253, %253 : vector<8x32xf32>
    %cst_90 = arith.constant dense<0.000000e+00> : vector<8xf32>
    %255 = vector.multi_reduction <add>, %254, %cst_90 [1] : vector<8x32xf32> to vector<8xf32>
    %256 = vector.shape_cast %255 : vector<8xf32> to vector<8x1xf32>
    %cst_91 = arith.constant 3.200000e+01 : f32
    %257 = vector.broadcast %cst_91 : f32 to vector<8x1xf32>
    %258 = arith.divf %256, %257 : vector<8x1xf32>
    %259 = vector.broadcast %251 : vector<8x1xf32> to vector<8x32xf32>
    %260 = arith.subf %244, %259 : vector<8x32xf32>
    %cst_92 = arith.constant 9.99999974E-6 : f32
    %261 = vector.broadcast %cst_92 : f32 to vector<8x1xf32>
    %262 = arith.addf %258, %261 : vector<8x1xf32>
    %263 = math.rsqrt %262 : vector<8x1xf32>
    %264 = vector.broadcast %263 : vector<8x1xf32> to vector<8x32xf32>
    %265 = arith.mulf %260, %264 : vector<8x32xf32>
    %266 = vector.broadcast %246 : vector<1x32xf32> to vector<8x32xf32>
    %267 = arith.mulf %265, %266 : vector<8x32xf32>
    %268 = vector.broadcast %247 : vector<1x32xf32> to vector<8x32xf32>
    %269 = arith.addf %267, %268 : vector<8x32xf32>
    %270 = arith.truncf %269 : vector<8x32xf32> to vector<8x32xbf16>
    %c0_93 = arith.constant 0 : index
    %c0_94 = arith.constant 0 : index
    %271 = vector.load %arg11[%c0_93, %c0_94] : memref<32x16xbf16, #tpu.memory_space<vmem>>, vector<32x16xbf16>
    %cst_95 = arith.constant dense<0.000000e+00> : vector<8x16xf32>
    %272 = tpu.matmul %270, %271, %cst_95 {dimension_numbers = #tpu.dot_dimension_numbers<[1], [0], [0], [1], [0, 0, 1, 1], [], []>} : vector<8x32xbf16>, vector<32x16xbf16>, vector<8x16xf32> -> vector<8x16xf32>
    %c0_96 = arith.constant 0 : index
    %c0_97 = arith.constant 0 : index
    %273 = vector.load %arg12[%c0_96, %c0_97] : memref<1x16xf32, #tpu.memory_space<vmem>>, vector<1x16xf32>
    %274 = vector.broadcast %273 : vector<1x16xf32> to vector<8x16xf32>
    %275 = arith.addf %272, %274 : vector<8x16xf32>
    %cst_98 = arith.constant 0.000000e+00 : f32
    %276 = vector.broadcast %cst_98 : f32 to vector<8x16xf32>
    %277 = arith.maximumf %275, %276 : vector<8x16xf32>
    %278 = arith.truncf %277 : vector<8x16xf32> to vector<8x16xbf16>
    %c0_99 = arith.constant 0 : index
    %c0_100 = arith.constant 0 : index
    %279 = vector.load %arg13[%c0_99, %c0_100] : memref<16x1xbf16, #tpu.memory_space<vmem>>, vector<16x1xbf16>
    %cst_101 = arith.constant dense<0.000000e+00> : vector<8x1xf32>
    %280 = tpu.matmul %278, %279, %cst_101 {dimension_numbers = #tpu.dot_dimension_numbers<[1], [0], [0], [1], [0, 0, 1, 1], [], []>} : vector<8x16xbf16>, vector<16x1xbf16>, vector<8x1xf32> -> vector<8x1xf32>
    %c0_102 = arith.constant 0 : index
    %c0_103 = arith.constant 0 : index
    %281 = vector.load %arg14[%c0_102, %c0_103] : memref<1x1xf32, #tpu.memory_space<vmem>>, vector<1x1xf32>
    %282 = vector.broadcast %281 : vector<1x1xf32> to vector<8x1xf32>
    %283 = arith.addf %280, %282 : vector<8x1xf32>
    %284 = arith.negf %283 : vector<8x1xf32>
    %285 = math.exp %284 : vector<8x1xf32>
    %cst_104 = arith.constant 1.000000e+00 : f32
    %286 = vector.broadcast %cst_104 : f32 to vector<8x1xf32>
    %287 = arith.addf %286, %285 : vector<8x1xf32>
    %288 = arith.divf %286, %287 : vector<8x1xf32>
    %289 = vector.shape_cast %288 : vector<8x1xf32> to vector<1x8xf32>
    %c0_105 = arith.constant 0 : index
    %c0_106 = arith.constant 0 : index
    %c0_107 = arith.constant 0 : index
    %290 = vector.load %arg15[%c0_105, %c0_106, %c0_107] : memref<1x1x8xf32, #tpu.memory_space<vmem>>, vector<1x1x8xf32>
    %291 = vector.shape_cast %290 : vector<1x1x8xf32> to vector<1x8xf32>
    %292 = vector.shape_cast %289 : vector<1x8xf32> to vector<1x1x8xf32>
    tpu.vector_store %arg15[%c0_105, %c0_106, %c0_107], %292 {strides = array<i32>} : memref<1x1x8xf32, #tpu.memory_space<vmem>>, vector<1x1x8xf32>,
    return
  }
  func.func @transform_0(%arg0: i32) -> (i32, i32, i32) {
    %c0_i32 = arith.constant 0 : i32
    %c0_i32_0 = arith.constant 0 : i32
    %c0_i32_1 = arith.constant 0 : i32
    return %arg0, %c0_i32, %c0_i32_0 : i32, i32, i32
  }
  func.func @transform_1(%arg0: i32) -> (i32, i32, i32) {
    %c0_i32 = arith.constant 0 : i32
    %c0_i32_0 = arith.constant 0 : i32
    %c0_i32_1 = arith.constant 0 : i32
    return %arg0, %c0_i32, %c0_i32_0 : i32, i32, i32
  }
  func.func @transform_2(%arg0: i32) -> (i32, i32, i32) {
    %c0_i32 = arith.constant 0 : i32
    %c0_i32_0 = arith.constant 0 : i32
    %c0_i32_1 = arith.constant 0 : i32
    %c0_i32_2 = arith.constant 0 : i32
    return %c0_i32, %c0_i32_0, %c0_i32_1 : i32, i32, i32
  }
  func.func @transform_3(%arg0: i32) -> (i32, i32, i32) {
    %c0_i32 = arith.constant 0 : i32
    %c0_i32_0 = arith.constant 0 : i32
    %c0_i32_1 = arith.constant 0 : i32
    %c0_i32_2 = arith.constant 0 : i32
    return %c0_i32, %c0_i32_0, %c0_i32_1 : i32, i32, i32
  }
  func.func @transform_4(%arg0: i32) -> (i32, i32, i32) {
    %c0_i32 = arith.constant 0 : i32
    %c0_i32_0 = arith.constant 0 : i32
    %c0_i32_1 = arith.constant 0 : i32
    %c0_i32_2 = arith.constant 0 : i32
    return %c0_i32, %c0_i32_0, %c0_i32_1 : i32, i32, i32
  }
  func.func @transform_5(%arg0: i32) -> (i32, i32, i32) {
    %c0_i32 = arith.constant 0 : i32
    %c0_i32_0 = arith.constant 0 : i32
    %c0_i32_1 = arith.constant 0 : i32
    %c0_i32_2 = arith.constant 0 : i32
    return %c0_i32, %c0_i32_0, %c0_i32_1 : i32, i32, i32
  }
  func.func @transform_6(%arg0: i32) -> (i32, i32, i32) {
    %c0_i32 = arith.constant 0 : i32
    %c0_i32_0 = arith.constant 0 : i32
    %c0_i32_1 = arith.constant 0 : i32
    %c0_i32_2 = arith.constant 0 : i32
    return %c0_i32, %c0_i32_0, %c0_i32_1 : i32, i32, i32
  }
  func.func @transform_7(%arg0: i32) -> (i32, i32, i32) {
    %c0_i32 = arith.constant 0 : i32
    %c0_i32_0 = arith.constant 0 : i32
    %c0_i32_1 = arith.constant 0 : i32
    %c0_i32_2 = arith.constant 0 : i32
    return %c0_i32, %c0_i32_0, %c0_i32_1 : i32, i32, i32
  }
  func.func @transform_8(%arg0: i32) -> (i32, i32, i32) {
    %c0_i32 = arith.constant 0 : i32
    %c0_i32_0 = arith.constant 0 : i32
    %c0_i32_1 = arith.constant 0 : i32
    %c0_i32_2 = arith.constant 0 : i32
    return %c0_i32, %c0_i32_0, %c0_i32_1 : i32, i32, i32
  }
  func.func @transform_9(%arg0: i32) -> (i32, i32) {
    %c0_i32 = arith.constant 0 : i32
    %c0_i32_0 = arith.constant 0 : i32
    %c0_i32_1 = arith.constant 0 : i32
    return %c0_i32, %c0_i32_0 : i32, i32
  }
  func.func @transform_10(%arg0: i32) -> (i32, i32) {
    %c0_i32 = arith.constant 0 : i32
    %c0_i32_0 = arith.constant 0 : i32
    %c0_i32_1 = arith.constant 0 : i32
    return %c0_i32, %c0_i32_0 : i32, i32
  }
  func.func @transform_11(%arg0: i32) -> (i32, i32) {
    %c0_i32 = arith.constant 0 : i32
    %c0_i32_0 = arith.constant 0 : i32
    %c0_i32_1 = arith.constant 0 : i32
    return %c0_i32, %c0_i32_0 : i32, i32
  }
  func.func @transform_12(%arg0: i32) -> (i32, i32) {
    %c0_i32 = arith.constant 0 : i32
    %c0_i32_0 = arith.constant 0 : i32
    %c0_i32_1 = arith.constant 0 : i32
    return %c0_i32, %c0_i32_0 : i32, i32
  }
  func.func @transform_13(%arg0: i32) -> (i32, i32) {
    %c0_i32 = arith.constant 0 : i32
    %c0_i32_0 = arith.constant 0 : i32
    %c0_i32_1 = arith.constant 0 : i32
    return %c0_i32, %c0_i32_0 : i32, i32
  }
  func.func @transform_14(%arg0: i32) -> (i32, i32, i32) {
    %c0_i32 = arith.constant 0 : i32
    %c0_i32_0 = arith.constant 0 : i32
    %c0_i32_1 = arith.constant 0 : i32
    return %arg0, %c0_i32, %c0_i32_0 : i32, i32, i32
  }
}

</mosaic_0001>

<llo_original>
// kernel: value_module_forward.1
$region0: #{value_module_forward.1}
  #allocation0 [shape = 'u32[]', space=smem, size = 0x4, offset = 0x4, fixed_abs, tag = 'smem constant byte address 0x4 - core index']
  #allocation1 [shape = 'u32[144,128]{1,0:T(1,128)}', space=vmem, size = 0x12000, scoped, tag = 'internal scratch']
  #allocation2 [shape = 'f32[1,1]{1,0:T(1,128)S(1)}', space=vmem, size = 0x200, scoped, tag = 'scoped memory for value_module_forward.1']
  %s0 = inlined_call_operand.vmem [shape: f32[2,8,32], index: 0, kind: input, shape index: {}]
  %s1 = inlined_call_operand.vmem [shape: f32[2,1,8], index: 1, kind: input, shape index: {}]
  %s2 = inlined_call_operand.vmem [shape: bf16[2,32,96], index: 2, kind: input, shape index: {}]
  %s3 = inlined_call_operand.vmem [shape: f32[2,1,96], index: 3, kind: input, shape index: {}]
  %s4 = inlined_call_operand.vmem [shape: bf16[2,32,32], index: 4, kind: input, shape index: {}]
  %s5 = inlined_call_operand.vmem [shape: bf16[2,32,2048], index: 5, kind: input, shape index: {}]
  %s6 = inlined_call_operand.vmem [shape: f32[2,1,2048], index: 6, kind: input, shape index: {}]
  %s7 = inlined_call_operand.vmem [shape: bf16[2,2048,32], index: 7, kind: input, shape index: {}]
  %s8 = inlined_call_operand.vmem [shape: f32[2,6,32], index: 8, kind: input, shape index: {}]
  %s9 = inlined_call_operand.vmem [shape: f32[2,32], index: 9, kind: input, shape index: {}]
  %s10 = inlined_call_operand.vmem [shape: bf16[32,16], index: 10, kind: input, shape index: {}]
  %s11 = inlined_call_operand.vmem [shape: f32[1,16], index: 11, kind: input, shape index: {}]
  %s12 = inlined_call_operand.vmem [shape: bf16[16,1], index: 12, kind: input, shape index: {}]
  %s13 = inlined_call_operand.<no memory space> [shape: f32[1,1], index: 13, kind: input, shape index: {}]
  %s14 = inlined_call_operand.hbm [shape: f32[2,1,8], index: 14, kind: output, shape index: {}]
  %s15 = sld [smem:[#allocation0]]
  $region89: #{value_module_forward.1} parent=0
    _
  %s17 = ssub.s32 1, %s15
  %s18 = scalar_select 0, %s17, %s15
  %v19 = vstv %s13
  %20 = vst [vmem:[#allocation2] sm:$0x1] %v19
  $region1: #{value_module_forward.1} parent=0
    #allocation3 [shape = 'u8[1024]{0}', space=vmem, size = 0x400, scoped, tag = 'output window, operand 0']
    #allocation4 [shape = 's32[2]{0}', space=sflag, size = 0x8, scoped, tag = 'scoped memory for value_module_forward.1']
    %21 = vsyncpa [#allocation4], 0
    %s22 = scalar_lea.sflag [#allocation4], 1
    %23 = vsyncpa %s22, 0
    loop: start=0, step=1, limit=4
    $region2: #{value_module_forward.1} parent=1 // loop_pre_header
      _
    $region3: #{value_module_forward.1} parent=1 // loop_header
      %s25 = sphi 0, %s29
      %p26 = scmp.ge.s32.totalorder %s25, 4
      %s35 = sphi 0, %s37
      %s38 = sphi 0, %s35
      %s39 = sphi 0, %s38
      %s55 = sphi 0, %s39
      %s61 = sphi 0, %s63
      %s64 = sphi 0, %s61
      %s65 = sphi 0, %s64
      %s81 = sphi 0, %s65
      %s85 = sphi 0, %s85
      %s87 = sphi 0, %s85
      %s88 = sphi 0, %s87
      %s102 = sphi 0, %s88
      %s106 = sphi 0, %s106
      %s108 = sphi 0, %s106
      %s109 = sphi 0, %s108
      %s123 = sphi 0, %s109
      %s127 = sphi 0, %s127
      %s129 = sphi 0, %s127
      %s130 = sphi 0, %s129
      %s144 = sphi 0, %s130
      %s148 = sphi 0, %s148
      %s150 = sphi 0, %s148
      %s151 = sphi 0, %s150
      %s165 = sphi 0, %s151
      %s169 = sphi 0, %s169
      %s171 = sphi 0, %s169
      %s172 = sphi 0, %s171
      %s186 = sphi 0, %s172
      %s190 = sphi 0, %s190
      %s192 = sphi 0, %s190
      %s193 = sphi 0, %s192
      %s207 = sphi 0, %s193
      %s211 = sphi 0, %s211
      %s213 = sphi 0, %s211
      %s214 = sphi 0, %s213
      %s228 = sphi 0, %s214
      %s232 = sphi 0, %s232
      %s234 = sphi 0, %s232
      %s235 = sphi 0, %s234
      %s249 = sphi 0, %s235
      %s253 = sphi 0, %s253
      %s255 = sphi 0, %s253
      %s256 = sphi 0, %s255
      %s270 = sphi 0, %s256
      %s274 = sphi 0, %s274
      %s276 = sphi 0, %s274
      %s277 = sphi 0, %s276
      %s291 = sphi 0, %s277
      %s295 = sphi 0, %s295
      %s297 = sphi 0, %s295
      %s298 = sphi 0, %s297
      %s312 = sphi 0, %s298
      %s316 = sphi 0, %s316
      %s318 = sphi 0, %s316
      %s319 = sphi 0, %s318
      %s333 = sphi 0, %s319
      %s339 = sphi 0, %s341
      %s342 = sphi 0, %s339
      %s343 = sphi 0, %s342
      %s359 = sphi 0, %s343
    $region4: #{value_module_forward.1} parent=1 // loop_header_branch
      %28 = sbr.rel (%p26) target = $region8
    $region5: #{value_module_forward.1} parent=1 // loop_body
      %s30 = ssub.s32 %s25, 1
      %s31 = ssub.s32 %s25, 2
      %s32 = sadd.s32 %s25, 1
      %s33 = ssub.s32 %s25, %s32
      %p34 = scmp.eq.s32.totalorder %s33, 0
      %s36 = sadd.s32 %s35, 1
      %s37 = scalar_select %p34, %s35, %s36
      %p40 = pneg %p34
      %p41 = scmp.eq.s32.totalorder %s25, 1
      %p42 = por %p40, %p41
      %p43 = scmp.ne.s32.totalorder %s35, %s38
      %p44 = scmp.eq.s32.totalorder %s25, 0
      %p45 = por %p43, %p44
      %p46 = scmp.ne.s32.totalorder %s35, %s38
      %p47 = scmp.eq.s32.totalorder %s30, 1
      %p48 = por %p46, %p47
      %p49 = scmp.ne.s32.totalorder %s38, %s39
      %p50 = scmp.eq.s32.totalorder %s30, 0
      %p51 = por %p49, %p50
      %p52 = scmp.ne.s32.totalorder %s38, %s39
      %p53 = scmp.eq.s32.totalorder %s31, 1
      %p54 = por %p52, %p53
      %p56 = scmp.ne.s32.totalorder %s39, %s55
      %p57 = scmp.eq.s32.totalorder %s31, 0
      %p58 = por %p56, %p57
      %s59 = ssub.s32 %s25, %s32
      %p60 = scmp.eq.s32.totalorder %s59, 0
      %s62 = sadd.s32 %s61, 1
      %s63 = scalar_select %p60, %s61, %s62
      %p66 = pneg %p60
      %p67 = scmp.eq.s32.totalorder %s25, 1
      %p68 = por %p66, %p67
      %p69 = scmp.ne.s32.totalorder %s61, %s64
      %p70 = scmp.eq.s32.totalorder %s25, 0
      %p71 = por %p69, %p70
      %p72 = scmp.ne.s32.totalorder %s61, %s64
      %p73 = scmp.eq.s32.totalorder %s30, 1
      %p74 = por %p72, %p73
      %p75 = scmp.ne.s32.totalorder %s64, %s65
      %p76 = scmp.eq.s32.totalorder %s30, 0
      %p77 = por %p75, %p76
      %p78 = scmp.ne.s32.totalorder %s64, %s65
      %p79 = scmp.eq.s32.totalorder %s31, 1
      %p80 = por %p78, %p79
      %p82 = scmp.ne.s32.totalorder %s65, %s81
      %p83 = scmp.eq.s32.totalorder %s31, 0
      %p84 = por %p82, %p83
      %s86 = sadd.s32 %s85, 1
      %p89 = scmp.eq.s32.totalorder %s25, 1
      %p90 = scmp.ne.s32.totalorder %s85, %s87
      %p91 = scmp.eq.s32.totalorder %s25, 0
      %p92 = por %p90, %p91
      %p93 = scmp.ne.s32.totalorder %s85, %s87
      %p94 = scmp.eq.s32.totalorder %s30, 1
      %p95 = por %p93, %p94
      %p96 = scmp.ne.s32.totalorder %s87, %s88
      %p97 = scmp.eq.s32.totalorder %s30, 0
      %p98 = por %p96, %p97
      %p99 = scmp.ne.s32.totalorder %s87, %s88
      %p100 = scmp.eq.s32.totalorder %s31, 1
      %p101 = por %p99, %p100
      %p103 = scmp.ne.s32.totalorder %s88, %s102
      %p104 = scmp.eq.s32.totalorder %s31, 0
      %p105 = por %p103, %p104
      %s107 = sadd.s32 %s106, 1
      %p110 = scmp.eq.s32.totalorder %s25, 1
      %p111 = scmp.ne.s32.totalorder %s106, %s108
      %p112 = scmp.eq.s32.totalorder %s25, 0
      %p113 = por %p111, %p112
      %p114 = scmp.ne.s32.totalorder %s106, %s108
      %p115 = scmp.eq.s32.totalorder %s30, 1
      %p116 = por %p114, %p115
      %p117 = scmp.ne.s32.totalorder %s108, %s109
      %p118 = scmp.eq.s32.totalorder %s30, 0
      %p119 = por %p117, %p118
      %p120 = scmp.ne.s32.totalorder %s108, %s109
      %p121 = scmp.eq.s32.totalorder %s31, 1
      %p122 = por %p120, %p121
      %p124 = scmp.ne.s32.totalorder %s109, %s123
      %p125 = scmp.eq.s32.totalorder %s31, 0
      %p126 = por %p124, %p125
      %s128 = sadd.s32 %s127, 1
      %p131 = scmp.eq.s32.totalorder %s25, 1
      %p132 = scmp.ne.s32.totalorder %s127, %s129
      %p133 = scmp.eq.s32.totalorder %s25, 0
      %p134 = por %p132, %p133
      %p135 = scmp.ne.s32.totalorder %s127, %s129
      %p136 = scmp.eq.s32.totalorder %s30, 1
      %p137 = por %p135, %p136
      %p138 = scmp.ne.s32.totalorder %s129, %s130
      %p139 = scmp.eq.s32.totalorder %s30, 0
      %p140 = por %p138, %p139
      %p141 = scmp.ne.s32.totalorder %s129, %s130
      %p142 = scmp.eq.s32.totalorder %s31, 1
      %p143 = por %p141, %p142
      %p145 = scmp.ne.s32.totalorder %s130, %s144
      %p146 = scmp.eq.s32.totalorder %s31, 0
      %p147 = por %p145, %p146
      %s149 = sadd.s32 %s148, 1
      %p152 = scmp.eq.s32.totalorder %s25, 1
      %p153 = scmp.ne.s32.totalorder %s148, %s150
      %p154 = scmp.eq.s32.totalorder %s25, 0
      %p155 = por %p153, %p154
      %p156 = scmp.ne.s32.totalorder %s148, %s150
      %p157 = scmp.eq.s32.totalorder %s30, 1
      %p158 = por %p156, %p157
      %p159 = scmp.ne.s32.totalorder %s150, %s151
      %p160 = scmp.eq.s32.totalorder %s30, 0
      %p161 = por %p159, %p160
      %p162 = scmp.ne.s32.totalorder %s150, %s151
      %p163 = scmp.eq.s32.totalorder %s31, 1
      %p164 = por %p162, %p163
      %p166 = scmp.ne.s32.totalorder %s151, %s165
      %p167 = scmp.eq.s32.totalorder %s31, 0
      %p168 = por %p166, %p167
      %s170 = sadd.s32 %s169, 1
      %p173 = scmp.eq.s32.totalorder %s25, 1
      %p174 = scmp.ne.s32.totalorder %s169, %s171
      %p175 = scmp.eq.s32.totalorder %s25, 0
      %p176 = por %p174, %p175
      %p177 = scmp.ne.s32.totalorder %s169, %s171
      %p178 = scmp.eq.s32.totalorder %s30, 1
      %p179 = por %p177, %p178
      %p180 = scmp.ne.s32.totalorder %s171, %s172
      %p181 = scmp.eq.s32.totalorder %s30, 0
      %p182 = por %p180, %p181
      %p183 = scmp.ne.s32.totalorder %s171, %s172
      %p184 = scmp.eq.s32.totalorder %s31, 1
      %p185 = por %p183, %p184
      %p187 = scmp.ne.s32.totalorder %s172, %s186
      %p188 = scmp.eq.s32.totalorder %s31, 0
      %p189 = por %p187, %p188
      %s191 = sadd.s32 %s190, 1
      %p194 = scmp.eq.s32.totalorder %s25, 1
      %p195 = scmp.ne.s32.totalorder %s190, %s192
      %p196 = scmp.eq.s32.totalorder %s25, 0
      %p197 = por %p195, %p196
      %p198 = scmp.ne.s32.totalorder %s190, %s192
      %p199 = scmp.eq.s32.totalorder %s30, 1
      %p200 = por %p198, %p199
      %p201 = scmp.ne.s32.totalorder %s192, %s193
      %p202 = scmp.eq.s32.totalorder %s30, 0
      %p203 = por %p201, %p202
      %p204 = scmp.ne.s32.totalorder %s192, %s193
      %p205 = scmp.eq.s32.totalorder %s31, 1
      %p206 = por %p204, %p205
      %p208 = scmp.ne.s32.totalorder %s193, %s207
      %p209 = scmp.eq.s32.totalorder %s31, 0
      %p210 = por %p208, %p209
      %s212 = sadd.s32 %s211, 1
      %p215 = scmp.eq.s32.totalorder %s25, 1
      %p216 = scmp.ne.s32.totalorder %s211, %s213
      %p217 = scmp.eq.s32.totalorder %s25, 0
      %p218 = por %p216, %p217
      %p219 = scmp.ne.s32.totalorder %s211, %s213
      %p220 = scmp.eq.s32.totalorder %s30, 1
      %p221 = por %p219, %p220
      %p222 = scmp.ne.s32.totalorder %s213, %s214
      %p223 = scmp.eq.s32.totalorder %s30, 0
      %p224 = por %p222, %p223
      %p225 = scmp.ne.s32.totalorder %s213, %s214
      %p226 = scmp.eq.s32.totalorder %s31, 1
      %p227 = por %p225, %p226
      %p229 = scmp.ne.s32.totalorder %s214, %s228
      %p230 = scmp.eq.s32.totalorder %s31, 0
      %p231 = por %p229, %p230
      %s233 = sadd.s32 %s232, 1
      %p236 = scmp.eq.s32.totalorder %s25, 1
      %p237 = scmp.ne.s32.totalorder %s232, %s234
      %p238 = scmp.eq.s32.totalorder %s25, 0
      %p239 = por %p237, %p238
      %p240 = scmp.ne.s32.totalorder %s232, %s234
      %p241 = scmp.eq.s32.totalorder %s30, 1
      %p242 = por %p240, %p241
      %p243 = scmp.ne.s32.totalorder %s234, %s235
      %p244 = scmp.eq.s32.totalorder %s30, 0
      %p245 = por %p243, %p244
      %p246 = scmp.ne.s32.totalorder %s234, %s235
      %p247 = scmp.eq.s32.totalorder %s31, 1
      %p248 = por %p246, %p247
      %p250 = scmp.ne.s32.totalorder %s235, %s249
      %p251 = scmp.eq.s32.totalorder %s31, 0
      %p252 = por %p250, %p251
      %s254 = sadd.s32 %s253, 1
      %p257 = scmp.eq.s32.totalorder %s25, 1
      %p258 = scmp.ne.s32.totalorder %s253, %s255
      %p259 = scmp.eq.s32.totalorder %s25, 0
      %p260 = por %p258, %p259
      %p261 = scmp.ne.s32.totalorder %s253, %s255
      %p262 = scmp.eq.s32.totalorder %s30, 1
      %p263 = por %p261, %p262
      %p264 = scmp.ne.s32.totalorder %s255, %s256
      %p265 = scmp.eq.s32.totalorder %s30, 0
      %p266 = por %p264, %p265
      %p267 = scmp.ne.s32.totalorder %s255, %s256
      %p268 = scmp.eq.s32.totalorder %s31, 1
      %p269 = por %p267, %p268
      %p271 = scmp.ne.s32.totalorder %s256, %s270
      %p272 = scmp.eq.s32.totalorder %s31, 0
      %p273 = por %p271, %p272
      %s275 = sadd.s32 %s274, 1
      %p278 = scmp.eq.s32.totalorder %s25, 1
      %p279 = scmp.ne.s32.totalorder %s274, %s276
      %p280 = scmp.eq.s32.totalorder %s25, 0
      %p281 = por %p279, %p280
      %p282 = scmp.ne.s32.totalorder %s274, %s276
      %p283 = scmp.eq.s32.totalorder %s30, 1
      %p284 = por %p282, %p283
      %p285 = scmp.ne.s32.totalorder %s276, %s277
      %p286 = scmp.eq.s32.totalorder %s30, 0
      %p287 = por %p285, %p286
      %p288 = scmp.ne.s32.totalorder %s276, %s277
      %p289 = scmp.eq.s32.totalorder %s31, 1
      %p290 = por %p288, %p289
      %p292 = scmp.ne.s32.totalorder %s277, %s291
      %p293 = scmp.eq.s32.totalorder %s31, 0
      %p294 = por %p292, %p293
      %s296 = sadd.s32 %s295, 1
      %p299 = scmp.eq.s32.totalorder %s25, 1
      %p300 = scmp.ne.s32.totalorder %s295, %s297
      %p301 = scmp.eq.s32.totalorder %s25, 0
      %p302 = por %p300, %p301
      %p303 = scmp.ne.s32.totalorder %s295, %s297
      %p304 = scmp.eq.s32.totalorder %s30, 1
      %p305 = por %p303, %p304
      %p306 = scmp.ne.s32.totalorder %s297, %s298
      %p307 = scmp.eq.s32.totalorder %s30, 0
      %p308 = por %p306, %p307
      %p309 = scmp.ne.s32.totalorder %s297, %s298
      %p310 = scmp.eq.s32.totalorder %s31, 1
      %p311 = por %p309, %p310
      %p313 = scmp.ne.s32.totalorder %s298, %s312
      %p314 = scmp.eq.s32.totalorder %s31, 0
      %p315 = por %p313, %p314
      %s317 = sadd.s32 %s316, 1
      %p320 = scmp.eq.s32.totalorder %s25, 1
      %p321 = scmp.ne.s32.totalorder %s316, %s318
      %p322 = scmp.eq.s32.totalorder %s25, 0
      %p323 = por %p321, %p322
      %p324 = scmp.ne.s32.totalorder %s316, %s318
      %p325 = scmp.eq.s32.totalorder %s30, 1
      %p326 = por %p324, %p325
      %p327 = scmp.ne.s32.totalorder %s318, %s319
      %p328 = scmp.eq.s32.totalorder %s30, 0
      %p329 = por %p327, %p328
      %p330 = scmp.ne.s32.totalorder %s318, %s319
      %p331 = scmp.eq.s32.totalorder %s31, 1
      %p332 = por %p330, %p331
      %p334 = scmp.ne.s32.totalorder %s319, %s333
      %p335 = scmp.eq.s32.totalorder %s31, 0
      %p336 = por %p334, %p335
      %s337 = ssub.s32 %s25, %s32
      %p338 = scmp.eq.s32.totalorder %s337, 0
      %s340 = sadd.s32 %s339, 1
      %s341 = scalar_select %p338, %s339, %s340
      %p344 = pneg %p338
      %p345 = scmp.eq.s32.totalorder %s25, 1
      %p346 = por %p344, %p345
      %p347 = scmp.ne.s32.totalorder %s339, %s342
      %p348 = scmp.eq.s32.totalorder %s25, 0
      %p349 = por %p347, %p348
      %p350 = scmp.ne.s32.totalorder %s339, %s342
      %p351 = scmp.eq.s32.totalorder %s30, 1
      %p352 = por %p350, %p351
      %p353 = scmp.ne.s32.totalorder %s342, %s343
      %p354 = scmp.eq.s32.totalorder %s30, 0
      %p355 = por %p353, %p354
      %p356 = scmp.ne.s32.totalorder %s342, %s343
      %p357 = scmp.eq.s32.totalorder %s31, 1
      %p358 = por %p356, %p357
      %p360 = scmp.ne.s32.totalorder %s343, %s359
      %p361 = scmp.eq.s32.totalorder %s31, 0
      %p362 = por %p360, %p361
      %p363 = scmp.le.s32.totalorder 1, %s25
      %p364 = scmp.lt.s32.totalorder %s25, 3
      %p365 = pnand %p363, %p364
      %p366 = pneg %p365
      // Predicated region
      $region9: #{value_module_forward.1} parent=5 // pred_check
        _
      $region10: #{value_module_forward.1} parent=5 // pred_check_branch
        %368 = sbr.rel (%p365) target = $region12
      $region11: #{value_module_forward.1} parent=5 // pred_region
        %s369 = ssub.s32 %s25, 1
        // Predicated region
        $region13: #{value_module_forward.1} parent=11 // pred_check
          %p370 = pneg %p98
        $region14: #{value_module_forward.1} parent=11 // pred_check_branch
          %372 = sbr.rel (%p370) target = $region16
        $region15: #{value_module_forward.1} parent=11 // pred_region
          _
        $region16: #{value_module_forward.1} parent=11 // pred_fallthru
          _
        // Predicated region
        $region17: #{value_module_forward.1} parent=11 // pred_check
          %p373 = pneg %p119
        $region18: #{value_module_forward.1} parent=11 // pred_check_branch
          %375 = sbr.rel (%p373) target = $region20
        $region19: #{value_module_forward.1} parent=11 // pred_region
          _
        $region20: #{value_module_forward.1} parent=11 // pred_fallthru
          _
        // Predicated region
        $region21: #{value_module_forward.1} parent=11 // pred_check
          %p376 = pneg %p140
        $region22: #{value_module_forward.1} parent=11 // pred_check_branch
          %378 = sbr.rel (%p376) target = $region24
        $region23: #{value_module_forward.1} parent=11 // pred_region
          _
        $region24: #{value_module_forward.1} parent=11 // pred_fallthru
          _
        // Predicated region
        $region25: #{value_module_forward.1} parent=11 // pred_check
          %p379 = pneg %p161
        $region26: #{value_module_forward.1} parent=11 // pred_check_branch
          %381 = sbr.rel (%p379) target = $region28
        $region27: #{value_module_forward.1} parent=11 // pred_region
          _
        $region28: #{value_module_forward.1} parent=11 // pred_fallthru
          _
        // Predicated region
        $region29: #{value_module_forward.1} parent=11 // pred_check
          %p382 = pneg %p182
        $region30: #{value_module_forward.1} parent=11 // pred_check_branch
          %384 = sbr.rel (%p382) target = $region32
        $region31: #{value_module_forward.1} parent=11 // pred_region
          _
        $region32: #{value_module_forward.1} parent=11 // pred_fallthru
          _
        // Predicated region
        $region33: #{value_module_forward.1} parent=11 // pred_check
          %p385 = pneg %p203
        $region34: #{value_module_forward.1} parent=11 // pred_check_branch
          %387 = sbr.rel (%p385) target = $region36
        $region35: #{value_module_forward.1} parent=11 // pred_region
          _
        $region36: #{value_module_forward.1} parent=11 // pred_fallthru
          _
        // Predicated region
        $region37: #{value_module_forward.1} parent=11 // pred_check
          %p388 = pneg %p224
        $region38: #{value_module_forward.1} parent=11 // pred_check_branch
          %390 = sbr.rel (%p388) target = $region40
        $region39: #{value_module_forward.1} parent=11 // pred_region
          _
        $region40: #{value_module_forward.1} parent=11 // pred_fallthru
          _
        // Predicated region
        $region41: #{value_module_forward.1} parent=11 // pred_check
          %p391 = pneg %p245
        $region42: #{value_module_forward.1} parent=11 // pred_check_branch
          %393 = sbr.rel (%p391) target = $region44
        $region43: #{value_module_forward.1} parent=11 // pred_region
          _
        $region44: #{value_module_forward.1} parent=11 // pred_fallthru
          _
        // Predicated region
        $region45: #{value_module_forward.1} parent=11 // pred_check
          %p394 = pneg %p266
        $region46: #{value_module_forward.1} parent=11 // pred_check_branch
          %396 = sbr.rel (%p394) target = $region48
        $region47: #{value_module_forward.1} parent=11 // pred_region
          _
        $region48: #{value_module_forward.1} parent=11 // pred_fallthru
          _
        // Predicated region
        $region49: #{value_module_forward.1} parent=11 // pred_check
          %p397 = pneg %p287
        $region50: #{value_module_forward.1} parent=11 // pred_check_branch
          %399 = sbr.rel (%p397) target = $region52
        $region51: #{value_module_forward.1} parent=11 // pred_region
          _
        $region52: #{value_module_forward.1} parent=11 // pred_fallthru
          _
        // Predicated region
        $region53: #{value_module_forward.1} parent=11 // pred_check
          %p400 = pneg %p308
        $region54: #{value_module_forward.1} parent=11 // pred_check_branch
          %402 = sbr.rel (%p400) target = $region56
        $region55: #{value_module_forward.1} parent=11 // pred_region
          _
        $region56: #{value_module_forward.1} parent=11 // pred_fallthru
          _
        // Predicated region
        $region57: #{value_module_forward.1} parent=11 // pred_check
          %p403 = pneg %p329
        $region58: #{value_module_forward.1} parent=11 // pred_check_branch
          %405 = sbr.rel (%p403) target = $region60
        $region59: #{value_module_forward.1} parent=11 // pred_region
          _
        $region60: #{value_module_forward.1} parent=11 // pred_fallthru
          _
      $region12: #{value_module_forward.1} parent=5 // pred_fallthru
        _
      %p406 = scmp.lt.s32.totalorder %s25, 2
      // Predicated region
      $region61: #{value_module_forward.1} parent=5 // pred_check
        %p407 = pneg %p406
      $region62: #{value_module_forward.1} parent=5 // pred_check_branch
        %409 = sbr.rel (%p407) target = $region64
      $region63: #{value_module_forward.1} parent=5 // pred_region
        // Predicated region
        $region65: #{value_module_forward.1} parent=63 // pred_check
          %p410 = pneg %p45
        $region66: #{value_module_forward.1} parent=63 // pred_check_branch
          %412 = sbr.rel (%p410) target = $region68
        $region67: #{value_module_forward.1} parent=63 // pred_region
          %p413 = scmp.lt.s32.totalorder %s25, 1
          %s414 = scalar_select %p413, %s25, 1
          %s415 = smul.addr %s414, 8
          %s416 = scalar_lea.vmem %s0, %s415
        $region68: #{value_module_forward.1} parent=63 // pred_fallthru
          _
        // Predicated region
        $region69: #{value_module_forward.1} parent=63 // pred_check
          %p417 = pneg %p71
        $region70: #{value_module_forward.1} parent=63 // pred_check_branch
          %419 = sbr.rel (%p417) target = $region72
        $region71: #{value_module_forward.1} parent=63 // pred_region
          %p420 = scmp.lt.s32.totalorder %s25, 1
          %s421 = scalar_select %p420, %s25, 1
          %s422 = scalar_lea.vmem %s1, %s421
        $region72: #{value_module_forward.1} parent=63 // pred_fallthru
          _
      $region64: #{value_module_forward.1} parent=5 // pred_fallthru
        _
      %p423 = scmp.le.s32.totalorder 1, %s25
      %p424 = scmp.lt.s32.totalorder %s25, 3
      %p425 = pnand %p423, %p424
      %p426 = pneg %p425
      // Predicated region
      $region73: #{value_module_forward.1} parent=5 // pred_check
        _
      $region74: #{value_module_forward.1} parent=5 // pred_check_branch
        %428 = sbr.rel (%p425) target = $region76
      $region75: #{value_module_forward.1} parent=5 // pred_region
        %s429 = ssub.s32 %s25, 1
        %p430 = scmp.lt.s32.totalorder %s30, 1
        %s431 = scalar_select %p430, %s30, 1
        %s432 = smul.addr %s431, 8
        %s433 = scalar_lea.vmem %s0, %s432
        %p434 = pneg %p51
        %p435 = pneg %p48
        %p436 = scmp.lt.s32.totalorder %s30, 1
        %s437 = scalar_select %p436, %s30, 1
        %s438 = scalar_lea.vmem %s1, %s437
        %p439 = pneg %p77
        %p440 = pneg %p74
        %p441 = pneg %p98
        %p442 = pneg %p95
        %p443 = pneg %p119
        %p444 = pneg %p116
        %p445 = pneg %p140
        %p446 = pneg %p137
        %p447 = pneg %p161
        %p448 = pneg %p158
        %p449 = pneg %p182
        %p450 = pneg %p179
        %p451 = pneg %p203
        %p452 = pneg %p200
        %p453 = pneg %p224
        %p454 = pneg %p221
        %p455 = pneg %p245
        %p456 = pneg %p242
        %p457 = pneg %p266
        %p458 = pneg %p263
        %p459 = pneg %p287
        %p460 = pneg %p284
        %p461 = pneg %p308
        %p462 = pneg %p305
        %p463 = pneg %p329
        %p464 = pneg %p326
        %p465 = pneg %p355
        %p466 = pneg %p352
        %s467 = sand.u32 %s342, 1
        %s468 = scalar_lea.sflag [#allocation4], %s467
        %s469 = sand.u32 %s342, 1
        %s470 = scalar_lea.vmem [#allocation3], %s469
        %p471 = scmp.lt.s32.totalorder %s30, 1
        %s472 = scalar_select %p471, %s30, 1
        %s473 = smul.addr %s472, 8
        %s474 = scalar_lea.vmem %s0, %s473
        %p475 = scmp.lt.s32.totalorder %s30, 1
        %s476 = scalar_select %p475, %s30, 1
        %s477 = scalar_lea.vmem %s1, %s476
        %v479 = vld [vmem:[%s474] sm:$0xff]
        %v480 = vld [vmem:[%s477] sm:$0x1]
        %vm481 = vcmp.gt.f32.partialorder %v480, 0.0
        %v482 = vsel %vm481, 0.0, -1e+30
        %v483 = vld [vmem:[%s8] sm:$0x3f]
        %v484 = vpack.c.bf16 %v479, %v479
        %v485 = vld [vmem:[%s2] sm:$0xf]
        %v486 = vld [vmem:[%s2 + $0x4] sm:$0xf]
        %v487 = vld [vmem:[%s2 + $0x8] sm:$0xf]
        %v488 = vld [vmem:[%s2 + $0xc] sm:$0xf]
        %v489 = vld [vmem:[%s3] sm:$0x1]
        %v491 = vlaneseq
        %v492 = vshrl.u32 %v491, 7
        %v493 = vsub.s32 0, %v492
        %v494 = vrot.slane %v489, %v493
        %v500 = vunpack.c.l.b16 %v485
        %v501 = vunpack.c.l.b16 %v486
        %v502 = vunpack.c.l.b16 %v487
        %v503 = vunpack.c.l.b16 %v488
        %v504 = vpack.c.b16 %v501, %v500
        %v505 = vpack.c.b16 %v503, %v502
        %vm508 = vcmask 261120
        %v510 = vsel %vm508, %v484, 0
        %512 = vmatprep.subr.bf16.mxu0 0
        %513 = vmatpush1.bf16.msra.mxu0 %v504
        %514 = vmatprep.subr.bf16.mxu0 0
        %515 = vmatpush1.bf16.msra.mxu0 %v505
        %516 = vmatprep.subr.bf16.mxu0 0
        %517 = vmatpush1.bf16.msra.mxu0 0
        %518 = vmatprep.subr.bf16.mxu0 0
        %519 = vmatpush1.bf16.msra.mxu0 0
        %520 = vmatprep.subr.bf16.mxu0 0
        %521 = vmatpush1.bf16.msra.mxu0 0
        %522 = vmatprep.subr.bf16.mxu0 0
        %523 = vmatpush1.bf16.msra.mxu0 0
        %524 = vmatprep.subr.bf16.mxu0 0
        %525 = vmatpush1.bf16.msra.mxu0 0
        %526 = vmatprep.subr.bf16.mxu0 0
        %527 = vmatpush1.bf16.msra.mxu0 0
        %528 = vmatprep.subr.bf16.mxu0 0
        %529 = vmatpush1.bf16.msra.mxu0 0
        %530 = vmatprep.subr.bf16.mxu0 0
        %531 = vmatpush1.bf16.msra.mxu0 0
        %532 = vmatprep.subr.bf16.mxu0 0
        %533 = vmatpush1.bf16.msra.mxu0 0
        %534 = vmatprep.subr.bf16.mxu0 0
        %535 = vmatpush1.bf16.msra.mxu0 0
        %536 = vmatprep.subr.bf16.mxu0 0
        %537 = vmatpush1.bf16.msra.mxu0 0
        %538 = vmatprep.subr.bf16.mxu0 0
        %539 = vmatpush1.bf16.msra.mxu0 0
        %540 = vmatprep.subr.bf16.mxu0 0
        %541 = vmatpush1.bf16.msra.mxu0 0
        %542 = vmatprep.subr.bf16.mxu0 0
        %543 = vmatpush1.bf16.msra.mxu0 0
        %544 = vmatprep.mubr.bf16.mxu0 0
        %545 = vmatmul.mubr.bf16.gmra.mrb[0].mxu0 %v510
        %v546 = vpop.f32.mrb[0].mxu0
        %v547 = vadd.f32 %v494, %v546
        %v548 = vpop.f32.mrb[0].mxu0
        %v549 = vpop.f32.mrb[0].mxu0
        %v550 = vpop.f32.mrb[0].mxu0
        %551 = vdwg.mxu0
        %553 = vrot.lane.b32.xlu0 %v547, 120
        %v554 = vpop.permute.xlu0 %553
        %556 = vrot.lane.b32.xlu0 %v547, 112
        %v557 = vpop.permute.xlu0 %556
        %559 = vrot.lane.b32.xlu0 %v547, 104
        %v560 = vpop.permute.xlu0 %559
        %v562 = vcombine.low %v547, %v557
        %v563 = vcombine.high %v547, %v557
        %v565 = vunpack.c.l.s4 1983009808
        %v566 = vunpack.c.0.s8 %v565
        %v567 = vlaneseq
        %v568 = vshrl.u32 %v567, 7
        %v569 = vsub.s32 %v566, %v568
        %v570 = vrot.slane %v562, %v569
        %v572 = vunpack.c.l.s4 1983009808
        %v573 = vunpack.c.0.s8 %v572
        %v574 = vlaneseq
        %v575 = vshrl.u32 %v574, 7
        %v576 = vsub.s32 %v573, %v575
        %v577 = vrot.slane %v563, %v576
        %v578 = vcombine.low %v554, %v560
        %v579 = vcombine.high %v554, %v560
        %v581 = vunpack.c.l.s4 1983009808
        %v582 = vunpack.c.0.s8 %v581
        %v583 = vlaneseq
        %v584 = vshrl.u32 %v583, 7
        %v585 = vsub.s32 %v582, %v584
        %v586 = vrot.slane %v578, %v585
        %v588 = vunpack.c.l.s4 1983009808
        %v589 = vunpack.c.0.s8 %v588
        %v590 = vlaneseq
        %v591 = vshrl.u32 %v590, 7
        %v592 = vsub.s32 %v589, %v591
        %v593 = vrot.slane %v579, %v592
        %v594 = vcombine.low %v570, %v586
        %v595 = vcombine.high %v570, %v586
        %v597 = vunpack.c.l.s4 1934713408
        %v598 = vunpack.c.0.s8 %v597
        %v599 = vlaneseq
        %v600 = vshrl.u32 %v599, 7
        %v601 = vsub.s32 %v598, %v600
        %v602 = vrot.slane %v594, %v601
        %v604 = vunpack.c.l.s4 1934713408
        %v605 = vunpack.c.0.s8 %v604
        %v606 = vlaneseq
        %v607 = vshrl.u32 %v606, 7
        %v608 = vsub.s32 %v605, %v607
        %v609 = vrot.slane %v595, %v608
        %v610 = vcombine.low %v577, %v593
        %v611 = vcombine.high %v577, %v593
        %v613 = vunpack.c.l.s4 1934713408
        %v614 = vunpack.c.0.s8 %v613
        %v615 = vlaneseq
        %v616 = vshrl.u32 %v615, 7
        %v617 = vsub.s32 %v614, %v616
        %v618 = vrot.slane %v610, %v617
        %v620 = vunpack.c.l.s4 1934713408
        %v621 = vunpack.c.0.s8 %v620
        %v622 = vlaneseq
        %v623 = vshrl.u32 %v622, 7
        %v624 = vsub.s32 %v621, %v623
        %v625 = vrot.slane %v611, %v624
        %v626 = vcombine.high %v602, 0.0
        %v627 = vcombine.high %v609, 0.0
        %v628 = vcombine.high %v618, 0.0
        %v629 = vcombine.high %v625, 0.0
        %v630 = vcombine.low %v602, %v609
        %v632 = vunpack.c.l.s4 1983009808
        %v633 = vunpack.c.0.s8 %v632
        %v634 = vlaneseq
        %v635 = vshrl.u32 %v634, 7
        %v636 = vsub.s32 %v633, %v635
        %v637 = vrot.slane %v630, %v636
        %v638 = vcombine.low %v626, %v627
        %v640 = vunpack.c.l.s4 1983009808
        %v641 = vunpack.c.0.s8 %v640
        %v642 = vlaneseq
        %v643 = vshrl.u32 %v642, 7
        %v644 = vsub.s32 %v641, %v643
        %v645 = vrot.slane %v638, %v644
        %v646 = vcombine.low %v618, %v625
        %v648 = vunpack.c.l.s4 1983009808
        %v649 = vunpack.c.0.s8 %v648
        %v650 = vlaneseq
        %v651 = vshrl.u32 %v650, 7
        %v652 = vsub.s32 %v649, %v651
        %v653 = vrot.slane %v646, %v652
        %v654 = vcombine.low %v628, %v629
        %v656 = vunpack.c.l.s4 1983009808
        %v657 = vunpack.c.0.s8 %v656
        %v658 = vlaneseq
        %v659 = vshrl.u32 %v658, 7
        %v660 = vsub.s32 %v657, %v659
        %v661 = vrot.slane %v654, %v660
        %v662 = vcombine.low %v637, %v645
        %v663 = vcombine.high %v637, %v645
        %v665 = vunpack.c.l.s4 1934713408
        %v666 = vunpack.c.0.s8 %v665
        %v667 = vlaneseq
        %v668 = vshrl.u32 %v667, 7
        %v669 = vsub.s32 %v666, %v668
        %v670 = vrot.slane %v662, %v669
        %v672 = vunpack.c.l.s4 1934713408
        %v673 = vunpack.c.0.s8 %v672
        %v674 = vlaneseq
        %v675 = vshrl.u32 %v674, 7
        %v676 = vsub.s32 %v673, %v675
        %v677 = vrot.slane %v663, %v676
        %v678 = vcombine.low %v653, %v661
        %v679 = vcombine.high %v653, %v661
        %v681 = vunpack.c.l.s4 1934713408
        %v682 = vunpack.c.0.s8 %v681
        %v683 = vlaneseq
        %v684 = vshrl.u32 %v683, 7
        %v685 = vsub.s32 %v682, %v684
        %v686 = vrot.slane %v678, %v685
        %v688 = vunpack.c.l.s4 1934713408
        %v689 = vunpack.c.0.s8 %v688
        %v690 = vlaneseq
        %v691 = vshrl.u32 %v690, 7
        %v692 = vsub.s32 %v689, %v691
        %v693 = vrot.slane %v679, %v692
        %v694 = vcombine.low %v670, %v686
        %v695 = vcombine.high %v670, %v686
        %v696 = vcombine.low %v677, %v693
        %v697 = vcombine.high %v677, %v693
        %v698 = vpack.c.bf16 %v694, %v694
        %v699 = vpack.c.bf16 %v695, %v695
        %v700 = vpack.c.bf16 %v696, %v696
        %v701 = vpack.c.bf16 %v697, %v697
        %702 = vrot.lane.b32.xlu0 %v547, 96
        %v703 = vpop.permute.xlu0 %702
        %704 = vrot.lane.b32.xlu0 %v554, 96
        %v705 = vpop.permute.xlu0 %704
        %706 = vrot.lane.b32.xlu0 %v557, 96
        %v707 = vpop.permute.xlu0 %706
        %708 = vrot.lane.b32.xlu0 %v560, 96
        %v709 = vpop.permute.xlu0 %708
        %v714 = vcombine.low %v703, %v707
        %v715 = vcombine.high %v703, %v707
        %v717 = vunpack.c.l.s4 1983009808
        %v718 = vunpack.c.0.s8 %v717
        %v719 = vlaneseq
        %v720 = vshrl.u32 %v719, 7
        %v721 = vsub.s32 %v718, %v720
        %v722 = vrot.slane %v714, %v721
        %v724 = vunpack.c.l.s4 1983009808
        %v725 = vunpack.c.0.s8 %v724
        %v726 = vlaneseq
        %v727 = vshrl.u32 %v726, 7
        %v728 = vsub.s32 %v725, %v727
        %v729 = vrot.slane %v715, %v728
        %v730 = vcombine.low %v705, %v709
        %v731 = vcombine.high %v705, %v709
        %v733 = vunpack.c.l.s4 1983009808
        %v734 = vunpack.c.0.s8 %v733
        %v735 = vlaneseq
        %v736 = vshrl.u32 %v735, 7
        %v737 = vsub.s32 %v734, %v736
        %v738 = vrot.slane %v730, %v737
        %v740 = vunpack.c.l.s4 1983009808
        %v741 = vunpack.c.0.s8 %v740
        %v742 = vlaneseq
        %v743 = vshrl.u32 %v742, 7
        %v744 = vsub.s32 %v741, %v743
        %v745 = vrot.slane %v731, %v744
        %v746 = vcombine.low %v722, %v738
        %v747 = vcombine.high %v722, %v738
        %v749 = vunpack.c.l.s4 1934713408
        %v750 = vunpack.c.0.s8 %v749
        %v751 = vlaneseq
        %v752 = vshrl.u32 %v751, 7
        %v753 = vsub.s32 %v750, %v752
        %v754 = vrot.slane %v746, %v753
        %v756 = vunpack.c.l.s4 1934713408
        %v757 = vunpack.c.0.s8 %v756
        %v758 = vlaneseq
        %v759 = vshrl.u32 %v758, 7
        %v760 = vsub.s32 %v757, %v759
        %v761 = vrot.slane %v747, %v760
        %v762 = vcombine.low %v729, %v745
        %v763 = vcombine.high %v729, %v745
        %v765 = vunpack.c.l.s4 1934713408
        %v766 = vunpack.c.0.s8 %v765
        %v767 = vlaneseq
        %v768 = vshrl.u32 %v767, 7
        %v769 = vsub.s32 %v766, %v768
        %v770 = vrot.slane %v762, %v769
        %v772 = vunpack.c.l.s4 1934713408
        %v773 = vunpack.c.0.s8 %v772
        %v774 = vlaneseq
        %v775 = vshrl.u32 %v774, 7
        %v776 = vsub.s32 %v773, %v775
        %v777 = vrot.slane %v763, %v776
        %v778 = vcombine.high %v754, 0.0
        %v779 = vcombine.high %v761, 0.0
        %v780 = vcombine.high %v770, 0.0
        %v781 = vcombine.high %v777, 0.0
        %v782 = vcombine.low %v754, %v761
        %v784 = vunpack.c.l.s4 1983009808
        %v785 = vunpack.c.0.s8 %v784
        %v786 = vlaneseq
        %v787 = vshrl.u32 %v786, 7
        %v788 = vsub.s32 %v785, %v787
        %v789 = vrot.slane %v782, %v788
        %v790 = vcombine.low %v778, %v779
        %v792 = vunpack.c.l.s4 1983009808
        %v793 = vunpack.c.0.s8 %v792
        %v794 = vlaneseq
        %v795 = vshrl.u32 %v794, 7
        %v796 = vsub.s32 %v793, %v795
        %v797 = vrot.slane %v790, %v796
        %v798 = vcombine.low %v770, %v777
        %v800 = vunpack.c.l.s4 1983009808
        %v801 = vunpack.c.0.s8 %v800
        %v802 = vlaneseq
        %v803 = vshrl.u32 %v802, 7
        %v804 = vsub.s32 %v801, %v803
        %v805 = vrot.slane %v798, %v804
        %v806 = vcombine.low %v780, %v781
        %v808 = vunpack.c.l.s4 1983009808
        %v809 = vunpack.c.0.s8 %v808
        %v810 = vlaneseq
        %v811 = vshrl.u32 %v810, 7
        %v812 = vsub.s32 %v809, %v811
        %v813 = vrot.slane %v806, %v812
        %v814 = vcombine.low %v789, %v797
        %v815 = vcombine.high %v789, %v797
        %v817 = vunpack.c.l.s4 1934713408
        %v818 = vunpack.c.0.s8 %v817
        %v819 = vlaneseq
        %v820 = vshrl.u32 %v819, 7
        %v821 = vsub.s32 %v818, %v820
        %v822 = vrot.slane %v814, %v821
        %v824 = vunpack.c.l.s4 1934713408
        %v825 = vunpack.c.0.s8 %v824
        %v826 = vlaneseq
        %v827 = vshrl.u32 %v826, 7
        %v828 = vsub.s32 %v825, %v827
        %v829 = vrot.slane %v815, %v828
        %v830 = vcombine.low %v805, %v813
        %v831 = vcombine.high %v805, %v813
        %v833 = vunpack.c.l.s4 1934713408
        %v834 = vunpack.c.0.s8 %v833
        %v835 = vlaneseq
        %v836 = vshrl.u32 %v835, 7
        %v837 = vsub.s32 %v834, %v836
        %v838 = vrot.slane %v830, %v837
        %v840 = vunpack.c.l.s4 1934713408
        %v841 = vunpack.c.0.s8 %v840
        %v842 = vlaneseq
        %v843 = vshrl.u32 %v842, 7
        %v844 = vsub.s32 %v841, %v843
        %v845 = vrot.slane %v831, %v844
        %v846 = vcombine.low %v822, %v838
        %v847 = vcombine.high %v822, %v838
        %v848 = vcombine.low %v829, %v845
        %v849 = vcombine.high %v829, %v845
        %v850 = vpack.c.bf16 %v846, %v846
        %v851 = vpack.c.bf16 %v847, %v847
        %v852 = vpack.c.bf16 %v848, %v848
        %v853 = vpack.c.bf16 %v849, %v849
        %854 = vrot.lane.b32.xlu0 %v547, 64
        %v855 = vpop.permute.xlu0 %854
        %856 = vrot.lane.b32.xlu0 %v554, 64
        %v857 = vpop.permute.xlu0 %856
        %858 = vrot.lane.b32.xlu0 %v557, 64
        %v859 = vpop.permute.xlu0 %858
        %860 = vrot.lane.b32.xlu0 %v560, 64
        %v861 = vpop.permute.xlu0 %860
        %v866 = vcombine.low %v855, %v859
        %v867 = vcombine.high %v855, %v859
        %v869 = vunpack.c.l.s4 1983009808
        %v870 = vunpack.c.0.s8 %v869
        %v871 = vlaneseq
        %v872 = vshrl.u32 %v871, 7
        %v873 = vsub.s32 %v870, %v872
        %v874 = vrot.slane %v866, %v873
        %v876 = vunpack.c.l.s4 1983009808
        %v877 = vunpack.c.0.s8 %v876
        %v878 = vlaneseq
        %v879 = vshrl.u32 %v878, 7
        %v880 = vsub.s32 %v877, %v879
        %v881 = vrot.slane %v867, %v880
        %v882 = vcombine.low %v857, %v861
        %v883 = vcombine.high %v857, %v861
        %v885 = vunpack.c.l.s4 1983009808
        %v886 = vunpack.c.0.s8 %v885
        %v887 = vlaneseq
        %v888 = vshrl.u32 %v887, 7
        %v889 = vsub.s32 %v886, %v888
        %v890 = vrot.slane %v882, %v889
        %v892 = vunpack.c.l.s4 1983009808
        %v893 = vunpack.c.0.s8 %v892
        %v894 = vlaneseq
        %v895 = vshrl.u32 %v894, 7
        %v896 = vsub.s32 %v893, %v895
        %v897 = vrot.slane %v883, %v896
        %v898 = vcombine.low %v874, %v890
        %v899 = vcombine.high %v874, %v890
        %v901 = vunpack.c.l.s4 1934713408
        %v902 = vunpack.c.0.s8 %v901
        %v903 = vlaneseq
        %v904 = vshrl.u32 %v903, 7
        %v905 = vsub.s32 %v902, %v904
        %v906 = vrot.slane %v898, %v905
        %v908 = vunpack.c.l.s4 1934713408
        %v909 = vunpack.c.0.s8 %v908
        %v910 = vlaneseq
        %v911 = vshrl.u32 %v910, 7
        %v912 = vsub.s32 %v909, %v911
        %v913 = vrot.slane %v899, %v912
        %v914 = vcombine.low %v881, %v897
        %v915 = vcombine.high %v881, %v897
        %v917 = vunpack.c.l.s4 1934713408
        %v918 = vunpack.c.0.s8 %v917
        %v919 = vlaneseq
        %v920 = vshrl.u32 %v919, 7
        %v921 = vsub.s32 %v918, %v920
        %v922 = vrot.slane %v914, %v921
        %v924 = vunpack.c.l.s4 1934713408
        %v925 = vunpack.c.0.s8 %v924
        %v926 = vlaneseq
        %v927 = vshrl.u32 %v926, 7
        %v928 = vsub.s32 %v925, %v927
        %v929 = vrot.slane %v915, %v928
        %v930 = vcombine.high %v906, 0.0
        %v931 = vcombine.high %v913, 0.0
        %v932 = vcombine.high %v922, 0.0
        %v933 = vcombine.high %v929, 0.0
        %v934 = vcombine.low %v906, %v913
        %v936 = vunpack.c.l.s4 1983009808
        %v937 = vunpack.c.0.s8 %v936
        %v938 = vlaneseq
        %v939 = vshrl.u32 %v938, 7
        %v940 = vsub.s32 %v937, %v939
        %v941 = vrot.slane %v934, %v940
        %v942 = vcombine.low %v930, %v931
        %v944 = vunpack.c.l.s4 1983009808
        %v945 = vunpack.c.0.s8 %v944
        %v946 = vlaneseq
        %v947 = vshrl.u32 %v946, 7
        %v948 = vsub.s32 %v945, %v947
        %v949 = vrot.slane %v942, %v948
        %v950 = vcombine.low %v922, %v929
        %v952 = vunpack.c.l.s4 1983009808
        %v953 = vunpack.c.0.s8 %v952
        %v954 = vlaneseq
        %v955 = vshrl.u32 %v954, 7
        %v956 = vsub.s32 %v953, %v955
        %v957 = vrot.slane %v950, %v956
        %v958 = vcombine.low %v932, %v933
        %v960 = vunpack.c.l.s4 1983009808
        %v961 = vunpack.c.0.s8 %v960
        %v962 = vlaneseq
        %v963 = vshrl.u32 %v962, 7
        %v964 = vsub.s32 %v961, %v963
        %v965 = vrot.slane %v958, %v964
        %v966 = vcombine.low %v941, %v949
        %v967 = vcombine.high %v941, %v949
        %v969 = vunpack.c.l.s4 1934713408
        %v970 = vunpack.c.0.s8 %v969
        %v971 = vlaneseq
        %v972 = vshrl.u32 %v971, 7
        %v973 = vsub.s32 %v970, %v972
        %v974 = vrot.slane %v966, %v973
        %v976 = vunpack.c.l.s4 1934713408
        %v977 = vunpack.c.0.s8 %v976
        %v978 = vlaneseq
        %v979 = vshrl.u32 %v978, 7
        %v980 = vsub.s32 %v977, %v979
        %v981 = vrot.slane %v967, %v980
        %v982 = vcombine.low %v957, %v965
        %v983 = vcombine.high %v957, %v965
        %v985 = vunpack.c.l.s4 1934713408
        %v986 = vunpack.c.0.s8 %v985
        %v987 = vlaneseq
        %v988 = vshrl.u32 %v987, 7
        %v989 = vsub.s32 %v986, %v988
        %v990 = vrot.slane %v982, %v989
        %v992 = vunpack.c.l.s4 1934713408
        %v993 = vunpack.c.0.s8 %v992
        %v994 = vlaneseq
        %v995 = vshrl.u32 %v994, 7
        %v996 = vsub.s32 %v993, %v995
        %v997 = vrot.slane %v983, %v996
        %v998 = vcombine.low %v974, %v990
        %v999 = vcombine.high %v974, %v990
        %v1000 = vcombine.low %v981, %v997
        %v1001 = vcombine.high %v981, %v997
        %v1002 = vpack.c.bf16 %v998, %v998
        %v1003 = vpack.c.bf16 %v999, %v999
        %v1004 = vpack.c.bf16 %v1000, %v1000
        %v1005 = vpack.c.bf16 %v1001, %v1001
        %v1007 = vlaneseq
        %v1008 = vshrl.u32 %v1007, 7
        %v1009 = vsub.s32 0, %v1008
        %v1010 = vrot.slane %v482, %v1009
        %vm1012 = vcmask 64512
        %v1014 = vsel %vm1012, %v698, 0
        %v1017 = vsel %vm1012, %v850, 0
        %1019 = vmatprep.subr.bf16.mxu0 0
        %1020 = vmatpush1.bf16.xpose.msra.mxu0 %v1017
        %1021 = vmatprep.subr.bf16.mxu0 0
        %1022 = vmatpush1.bf16.xpose.msra.mxu0 0
        %1023 = vmatprep.subr.bf16.mxu0 0
        %1024 = vmatpush1.bf16.xpose.msra.mxu0 0
        %1025 = vmatprep.subr.bf16.mxu0 0
        %1026 = vmatpush1.bf16.xpose.msra.mxu0 0
        %1027 = vmatprep.subr.bf16.mxu0 0
        %1028 = vmatpush1.bf16.xpose.msra.mxu0 0
        %1029 = vmatprep.subr.bf16.mxu0 0
        %1030 = vmatpush1.bf16.xpose.msra.mxu0 0
        %1031 = vmatprep.subr.bf16.mxu0 0
        %1032 = vmatpush1.bf16.xpose.msra.mxu0 0
        %1033 = vmatprep.subr.bf16.mxu0 0
        %1034 = vmatpush1.bf16.xpose.msra.mxu0 0
        %1035 = vmatprep.subr.bf16.mxu0 0
        %1036 = vmatpush1.bf16.xpose.msra.mxu0 0
        %1037 = vmatprep.subr.bf16.mxu0 0
        %1038 = vmatpush1.bf16.xpose.msra.mxu0 0
        %1039 = vmatprep.subr.bf16.mxu0 0
        %1040 = vmatpush1.bf16.xpose.msra.mxu0 0
        %1041 = vmatprep.subr.bf16.mxu0 0
        %1042 = vmatpush1.bf16.xpose.msra.mxu0 0
        %1043 = vmatprep.subr.bf16.mxu0 0
        %1044 = vmatpush1.bf16.xpose.msra.mxu0 0
        %1045 = vmatprep.subr.bf16.mxu0 0
        %1046 = vmatpush1.bf16.xpose.msra.mxu0 0
        %1047 = vmatprep.subr.bf16.mxu0 0
        %1048 = vmatpush1.bf16.xpose.msra.mxu0 0
        %1049 = vmatprep.subr.bf16.mxu0 0
        %1050 = vmatpush1.bf16.xpose.msra.mxu0 0
        %1051 = vmatprep.mubr.bf16.mxu0 0
        %1052 = vmatmul.mubr.bf16.gmra.mrb[0].mxu0 %v1014
        %v1053 = vpop.f32.mrb[0].mxu0
        %v1054 = vadd.f32 %v1010, %v1053
        %v1055 = vpop.f32.mrb[0].mxu0
        %v1056 = vpop.f32.mrb[0].mxu0
        %v1057 = vpop.f32.mrb[0].mxu0
        %1058 = vdwg.mxu0
        %v1060 = vsel %vm1012, %v699, 0
        %v1063 = vsel %vm1012, %v851, 0
        %1065 = vmatprep.subr.bf16.mxu0 0
        %1066 = vmatpush1.bf16.xpose.msra.mxu0 %v1063
        %1067 = vmatprep.subr.bf16.mxu0 0
        %1068 = vmatpush1.bf16.xpose.msra.mxu0 0
        %1069 = vmatprep.subr.bf16.mxu0 0
        %1070 = vmatpush1.bf16.xpose.msra.mxu0 0
        %1071 = vmatprep.subr.bf16.mxu0 0
        %1072 = vmatpush1.bf16.xpose.msra.mxu0 0
        %1073 = vmatprep.subr.bf16.mxu0 0
        %1074 = vmatpush1.bf16.xpose.msra.mxu0 0
        %1075 = vmatprep.subr.bf16.mxu0 0
        %1076 = vmatpush1.bf16.xpose.msra.mxu0 0
        %1077 = vmatprep.subr.bf16.mxu0 0
        %1078 = vmatpush1.bf16.xpose.msra.mxu0 0
        %1079 = vmatprep.subr.bf16.mxu0 0
        %1080 = vmatpush1.bf16.xpose.msra.mxu0 0
        %1081 = vmatprep.subr.bf16.mxu0 0
        %1082 = vmatpush1.bf16.xpose.msra.mxu0 0
        %1083 = vmatprep.subr.bf16.mxu0 0
        %1084 = vmatpush1.bf16.xpose.msra.mxu0 0
        %1085 = vmatprep.subr.bf16.mxu0 0
        %1086 = vmatpush1.bf16.xpose.msra.mxu0 0
        %1087 = vmatprep.subr.bf16.mxu0 0
        %1088 = vmatpush1.bf16.xpose.msra.mxu0 0
        %1089 = vmatprep.subr.bf16.mxu0 0
        %1090 = vmatpush1.bf16.xpose.msra.mxu0 0
        %1091 = vmatprep.subr.bf16.mxu0 0
        %1092 = vmatpush1.bf16.xpose.msra.mxu0 0
        %1093 = vmatprep.subr.bf16.mxu0 0
        %1094 = vmatpush1.bf16.xpose.msra.mxu0 0
        %1095 = vmatprep.subr.bf16.mxu0 0
        %1096 = vmatpush1.bf16.xpose.msra.mxu0 0
        %1097 = vmatprep.mubr.bf16.mxu0 0
        %1098 = vmatmul.mubr.bf16.gmra.mrb[0].mxu0 %v1060
        %v1099 = vpop.f32.mrb[0].mxu0
        %v1100 = vadd.f32 %v1010, %v1099
        %v1101 = vpop.f32.mrb[0].mxu0
        %v1102 = vpop.f32.mrb[0].mxu0
        %v1103 = vpop.f32.mrb[0].mxu0
        %1104 = vdwg.mxu0
        %v1106 = vsel %vm1012, %v700, 0
        %v1109 = vsel %vm1012, %v852, 0
        %1111 = vmatprep.subr.bf16.mxu0 0
        %1112 = vmatpush1.bf16.xpose.msra.mxu0 %v1109
        %1113 = vmatprep.subr.bf16.mxu0 0
        %1114 = vmatpush1.bf16.xpose.msra.mxu0 0
        %1115 = vmatprep.subr.bf16.mxu0 0
        %1116 = vmatpush1.bf16.xpose.msra.mxu0 0
        %1117 = vmatprep.subr.bf16.mxu0 0
        %1118 = vmatpush1.bf16.xpose.msra.mxu0 0
        %1119 = vmatprep.subr.bf16.mxu0 0
        %1120 = vmatpush1.bf16.xpose.msra.mxu0 0
        %1121 = vmatprep.subr.bf16.mxu0 0
        %1122 = vmatpush1.bf16.xpose.msra.mxu0 0
        %1123 = vmatprep.subr.bf16.mxu0 0
        %1124 = vmatpush1.bf16.xpose.msra.mxu0 0
        %1125 = vmatprep.subr.bf16.mxu0 0
        %1126 = vmatpush1.bf16.xpose.msra.mxu0 0
        %1127 = vmatprep.subr.bf16.mxu0 0
        %1128 = vmatpush1.bf16.xpose.msra.mxu0 0
        %1129 = vmatprep.subr.bf16.mxu0 0
        %1130 = vmatpush1.bf16.xpose.msra.mxu0 0
        %1131 = vmatprep.subr.bf16.mxu0 0
        %1132 = vmatpush1.bf16.xpose.msra.mxu0 0
        %1133 = vmatprep.subr.bf16.mxu0 0
        %1134 = vmatpush1.bf16.xpose.msra.mxu0 0
        %1135 = vmatprep.subr.bf16.mxu0 0
        %1136 = vmatpush1.bf16.xpose.msra.mxu0 0
        %1137 = vmatprep.subr.bf16.mxu0 0
        %1138 = vmatpush1.bf16.xpose.msra.mxu0 0
        %1139 = vmatprep.subr.bf16.mxu0 0
        %1140 = vmatpush1.bf16.xpose.msra.mxu0 0
        %1141 = vmatprep.subr.bf16.mxu0 0
        %1142 = vmatpush1.bf16.xpose.msra.mxu0 0
        %1143 = vmatprep.mubr.bf16.mxu0 0
        %1144 = vmatmul.mubr.bf16.gmra.mrb[0].mxu0 %v1106
        %v1145 = vpop.f32.mrb[0].mxu0
        %v1146 = vadd.f32 %v1010, %v1145
        %v1147 = vpop.f32.mrb[0].mxu0
        %v1148 = vpop.f32.mrb[0].mxu0
        %v1149 = vpop.f32.mrb[0].mxu0
        %1150 = vdwg.mxu0
        %v1152 = vsel %vm1012, %v701, 0
        %v1155 = vsel %vm1012, %v853, 0
        %1157 = vmatprep.subr.bf16.mxu0 0
        %1158 = vmatpush1.bf16.xpose.msra.mxu0 %v1155
        %1159 = vmatprep.subr.bf16.mxu0 0
        %1160 = vmatpush1.bf16.xpose.msra.mxu0 0
        %1161 = vmatprep.subr.bf16.mxu0 0
        %1162 = vmatpush1.bf16.xpose.msra.mxu0 0
        %1163 = vmatprep.subr.bf16.mxu0 0
        %1164 = vmatpush1.bf16.xpose.msra.mxu0 0
        %1165 = vmatprep.subr.bf16.mxu0 0
        %1166 = vmatpush1.bf16.xpose.msra.mxu0 0
        %1167 = vmatprep.subr.bf16.mxu0 0
        %1168 = vmatpush1.bf16.xpose.msra.mxu0 0
        %1169 = vmatprep.subr.bf16.mxu0 0
        %1170 = vmatpush1.bf16.xpose.msra.mxu0 0
        %1171 = vmatprep.subr.bf16.mxu0 0
        %1172 = vmatpush1.bf16.xpose.msra.mxu0 0
        %1173 = vmatprep.subr.bf16.mxu0 0
        %1174 = vmatpush1.bf16.xpose.msra.mxu0 0
        %1175 = vmatprep.subr.bf16.mxu0 0
        %1176 = vmatpush1.bf16.xpose.msra.mxu0 0
        %1177 = vmatprep.subr.bf16.mxu0 0
        %1178 = vmatpush1.bf16.xpose.msra.mxu0 0
        %1179 = vmatprep.subr.bf16.mxu0 0
        %1180 = vmatpush1.bf16.xpose.msra.mxu0 0
        %1181 = vmatprep.subr.bf16.mxu0 0
        %1182 = vmatpush1.bf16.xpose.msra.mxu0 0
        %1183 = vmatprep.subr.bf16.mxu0 0
        %1184 = vmatpush1.bf16.xpose.msra.mxu0 0
        %1185 = vmatprep.subr.bf16.mxu0 0
        %1186 = vmatpush1.bf16.xpose.msra.mxu0 0
        %1187 = vmatprep.subr.bf16.mxu0 0
        %1188 = vmatpush1.bf16.xpose.msra.mxu0 0
        %1189 = vmatprep.mubr.bf16.mxu0 0
        %1190 = vmatmul.mubr.bf16.gmra.mrb[0].mxu0 %v1152
        %v1191 = vpop.f32.mrb[0].mxu0
        %v1192 = vadd.f32 %v1010, %v1191
        %v1193 = vpop.f32.mrb[0].mxu0
        %v1194 = vpop.f32.mrb[0].mxu0
        %v1195 = vpop.f32.mrb[0].mxu0
        %1196 = vdwg.mxu0
        %v1197 = vsel %vm1012, %v1054, -inf
        %1198 = vmax.xlane.f32.xlu0 %v1197
        %v1199 = vpop.xlane.xlu0 %1198
        %v1200 = vsel %vm1012, %v1100, -inf
        %1201 = vmax.xlane.f32.xlu0 %v1200
        %v1202 = vpop.xlane.xlu0 %1201
        %v1203 = vsel %vm1012, %v1146, -inf
        %1204 = vmax.xlane.f32.xlu0 %v1203
        %v1205 = vpop.xlane.xlu0 %1204
        %v1206 = vsel %vm1012, %v1192, -inf
        %1207 = vmax.xlane.f32.xlu0 %v1206
        %v1208 = vpop.xlane.xlu0 %1207
        %v1209 = vsub.f32 %v1054, %v1199
        %v1210 = vsub.f32 %v1100, %v1202
        %v1211 = vsub.f32 %v1146, %v1205
        %v1212 = vsub.f32 %v1192, %v1208
        %v1213 = vmul.f32 %v1209, 1.442695
        %v1214 = vpow.pop %v1213
        %v1215 = vmul.f32 %v1210, 1.442695
        %v1216 = vpow.pop %v1215
        %v1217 = vmul.f32 %v1211, 1.442695
        %v1218 = vpow.pop %v1217
        %v1219 = vmul.f32 %v1212, 1.442695
        %v1220 = vpow.pop %v1219
        %v1221 = vsel %vm1012, %v1214, 0.0
        %1222 = vadd.xlane.f32.xlu0 %v1221
        %v1223 = vpop.xlane.xlu0 %1222
        %v1224 = vsel %vm1012, %v1216, 0.0
        %1225 = vadd.xlane.f32.xlu0 %v1224
        %v1226 = vpop.xlane.xlu0 %1225
        %v1227 = vsel %vm1012, %v1218, 0.0
        %1228 = vadd.xlane.f32.xlu0 %v1227
        %v1229 = vpop.xlane.xlu0 %1228
        %v1230 = vsel %vm1012, %v1220, 0.0
        %1231 = vadd.xlane.f32.xlu0 %v1230
        %v1232 = vpop.xlane.xlu0 %1231
        %v1233 = vrcp.pop %v1223
        %v1234 = vrcp.pop %v1226
        %v1235 = vrcp.pop %v1229
        %v1236 = vrcp.pop %v1232
        %v1237 = vmul.f32 %v1214, %v1233
        %v1238 = vmul.f32 %v1216, %v1234
        %v1239 = vmul.f32 %v1218, %v1235
        %v1240 = vmul.f32 %v1220, %v1236
        %v1241 = vpack.c.bf16 %v1237, %v1237
        %v1242 = vpack.c.bf16 %v1238, %v1238
        %v1243 = vpack.c.bf16 %v1239, %v1239
        %v1244 = vpack.c.bf16 %v1240, %v1240
        %v1246 = vsel %vm1012, %v1241, 0
        %vm1248 = vcmask 1043456
        %v1250 = vsel %vm1248, %v1002, 0
        %1252 = vmatprep.subr.bf16.mxu0 0
        %1253 = vmatpush1.bf16.msra.mxu0 %v1250
        %1254 = vmatprep.subr.bf16.mxu0 0
        %1255 = vmatpush1.bf16.msra.mxu0 0
        %1256 = vmatprep.subr.bf16.mxu0 0
        %1257 = vmatpush1.bf16.msra.mxu0 0
        %1258 = vmatprep.subr.bf16.mxu0 0
        %1259 = vmatpush1.bf16.msra.mxu0 0
        %1260 = vmatprep.subr.bf16.mxu0 0
        %1261 = vmatpush1.bf16.msra.mxu0 0
        %1262 = vmatprep.subr.bf16.mxu0 0
        %1263 = vmatpush1.bf16.msra.mxu0 0
        %1264 = vmatprep.subr.bf16.mxu0 0
        %1265 = vmatpush1.bf16.msra.mxu0 0
        %1266 = vmatprep.subr.bf16.mxu0 0
        %1267 = vmatpush1.bf16.msra.mxu0 0
        %1268 = vmatprep.subr.bf16.mxu0 0
        %1269 = vmatpush1.bf16.msra.mxu0 0
        %1270 = vmatprep.subr.bf16.mxu0 0
        %1271 = vmatpush1.bf16.msra.mxu0 0
        %1272 = vmatprep.subr.bf16.mxu0 0
        %1273 = vmatpush1.bf16.msra.mxu0 0
        %1274 = vmatprep.subr.bf16.mxu0 0
        %1275 = vmatpush1.bf16.msra.mxu0 0
        %1276 = vmatprep.subr.bf16.mxu0 0
        %1277 = vmatpush1.bf16.msra.mxu0 0
        %1278 = vmatprep.subr.bf16.mxu0 0
        %1279 = vmatpush1.bf16.msra.mxu0 0
        %1280 = vmatprep.subr.bf16.mxu0 0
        %1281 = vmatpush1.bf16.msra.mxu0 0
        %1282 = vmatprep.subr.bf16.mxu0 0
        %1283 = vmatpush1.bf16.msra.mxu0 0
        %1284 = vmatprep.mubr.bf16.mxu0 0
        %1285 = vmatmul.mubr.bf16.gmra.mrb[0].mxu0 %v1246
        %v1286 = vpop.f32.mrb[0].mxu0
        %v1287 = vadd.f32 0.0, %v1286
        %v1288 = vpop.f32.mrb[0].mxu0
        %v1289 = vpop.f32.mrb[0].mxu0
        %v1290 = vpop.f32.mrb[0].mxu0
        %1291 = vdwg.mxu0
        %v1293 = vsel %vm1012, %v1242, 0
        %v1296 = vsel %vm1248, %v1003, 0
        %1298 = vmatprep.subr.bf16.mxu0 0
        %1299 = vmatpush1.bf16.msra.mxu0 %v1296
        %1300 = vmatprep.subr.bf16.mxu0 0
        %1301 = vmatpush1.bf16.msra.mxu0 0
        %1302 = vmatprep.subr.bf16.mxu0 0
        %1303 = vmatpush1.bf16.msra.mxu0 0
        %1304 = vmatprep.subr.bf16.mxu0 0
        %1305 = vmatpush1.bf16.msra.mxu0 0
        %1306 = vmatprep.subr.bf16.mxu0 0
        %1307 = vmatpush1.bf16.msra.mxu0 0
        %1308 = vmatprep.subr.bf16.mxu0 0
        %1309 = vmatpush1.bf16.msra.mxu0 0
        %1310 = vmatprep.subr.bf16.mxu0 0
        %1311 = vmatpush1.bf16.msra.mxu0 0
        %1312 = vmatprep.subr.bf16.mxu0 0
        %1313 = vmatpush1.bf16.msra.mxu0 0
        %1314 = vmatprep.subr.bf16.mxu0 0
        %1315 = vmatpush1.bf16.msra.mxu0 0
        %1316 = vmatprep.subr.bf16.mxu0 0
        %1317 = vmatpush1.bf16.msra.mxu0 0
        %1318 = vmatprep.subr.bf16.mxu0 0
        %1319 = vmatpush1.bf16.msra.mxu0 0
        %1320 = vmatprep.subr.bf16.mxu0 0
        %1321 = vmatpush1.bf16.msra.mxu0 0
        %1322 = vmatprep.subr.bf16.mxu0 0
        %1323 = vmatpush1.bf16.msra.mxu0 0
        %1324 = vmatprep.subr.bf16.mxu0 0
        %1325 = vmatpush1.bf16.msra.mxu0 0
        %1326 = vmatprep.subr.bf16.mxu0 0
        %1327 = vmatpush1.bf16.msra.mxu0 0
        %1328 = vmatprep.subr.bf16.mxu0 0
        %1329 = vmatpush1.bf16.msra.mxu0 0
        %1330 = vmatprep.mubr.bf16.mxu0 0
        %1331 = vmatmul.mubr.bf16.gmra.mrb[0].mxu0 %v1293
        %v1332 = vpop.f32.mrb[0].mxu0
        %v1333 = vadd.f32 0.0, %v1332
        %v1334 = vpop.f32.mrb[0].mxu0
        %v1335 = vpop.f32.mrb[0].mxu0
        %v1336 = vpop.f32.mrb[0].mxu0
        %1337 = vdwg.mxu0
        %v1339 = vsel %vm1012, %v1243, 0
        %v1342 = vsel %vm1248, %v1004, 0
        %1344 = vmatprep.subr.bf16.mxu0 0
        %1345 = vmatpush1.bf16.msra.mxu0 %v1342
        %1346 = vmatprep.subr.bf16.mxu0 0
        %1347 = vmatpush1.bf16.msra.mxu0 0
        %1348 = vmatprep.subr.bf16.mxu0 0
        %1349 = vmatpush1.bf16.msra.mxu0 0
        %1350 = vmatprep.subr.bf16.mxu0 0
        %1351 = vmatpush1.bf16.msra.mxu0 0
        %1352 = vmatprep.subr.bf16.mxu0 0
        %1353 = vmatpush1.bf16.msra.mxu0 0
        %1354 = vmatprep.subr.bf16.mxu0 0
        %1355 = vmatpush1.bf16.msra.mxu0 0
        %1356 = vmatprep.subr.bf16.mxu0 0
        %1357 = vmatpush1.bf16.msra.mxu0 0
        %1358 = vmatprep.subr.bf16.mxu0 0
        %1359 = vmatpush1.bf16.msra.mxu0 0
        %1360 = vmatprep.subr.bf16.mxu0 0
        %1361 = vmatpush1.bf16.msra.mxu0 0
        %1362 = vmatprep.subr.bf16.mxu0 0
        %1363 = vmatpush1.bf16.msra.mxu0 0
        %1364 = vmatprep.subr.bf16.mxu0 0
        %1365 = vmatpush1.bf16.msra.mxu0 0
        %1366 = vmatprep.subr.bf16.mxu0 0
        %1367 = vmatpush1.bf16.msra.mxu0 0
        %1368 = vmatprep.subr.bf16.mxu0 0
        %1369 = vmatpush1.bf16.msra.mxu0 0
        %1370 = vmatprep.subr.bf16.mxu0 0
        %1371 = vmatpush1.bf16.msra.mxu0 0
        %1372 = vmatprep.subr.bf16.mxu0 0
        %1373 = vmatpush1.bf16.msra.mxu0 0
        %1374 = vmatprep.subr.bf16.mxu0 0
        %1375 = vmatpush1.bf16.msra.mxu0 0
        %1376 = vmatprep.mubr.bf16.mxu0 0
        %1377 = vmatmul.mubr.bf16.gmra.mrb[0].mxu0 %v1339
        %v1378 = vpop.f32.mrb[0].mxu0
        %v1379 = vadd.f32 0.0, %v1378
        %v1380 = vpop.f32.mrb[0].mxu0
        %v1381 = vpop.f32.mrb[0].mxu0
        %v1382 = vpop.f32.mrb[0].mxu0
        %1383 = vdwg.mxu0
        %v1385 = vsel %vm1012, %v1244, 0
        %v1388 = vsel %vm1248, %v1005, 0
        %1390 = vmatprep.subr.bf16.mxu0 0
        %1391 = vmatpush1.bf16.msra.mxu0 %v1388
        %1392 = vmatprep.subr.bf16.mxu0 0
        %1393 = vmatpush1.bf16.msra.mxu0 0
        %1394 = vmatprep.subr.bf16.mxu0 0
        %1395 = vmatpush1.bf16.msra.mxu0 0
        %1396 = vmatprep.subr.bf16.mxu0 0
        %1397 = vmatpush1.bf16.msra.mxu0 0
        %1398 = vmatprep.subr.bf16.mxu0 0
        %1399 = vmatpush1.bf16.msra.mxu0 0
        %1400 = vmatprep.subr.bf16.mxu0 0
        %1401 = vmatpush1.bf16.msra.mxu0 0
        %1402 = vmatprep.subr.bf16.mxu0 0
        %1403 = vmatpush1.bf16.msra.mxu0 0
        %1404 = vmatprep.subr.bf16.mxu0 0
        %1405 = vmatpush1.bf16.msra.mxu0 0
        %1406 = vmatprep.subr.bf16.mxu0 0
        %1407 = vmatpush1.bf16.msra.mxu0 0
        %1408 = vmatprep.subr.bf16.mxu0 0
        %1409 = vmatpush1.bf16.msra.mxu0 0
        %1410 = vmatprep.subr.bf16.mxu0 0
        %1411 = vmatpush1.bf16.msra.mxu0 0
        %1412 = vmatprep.subr.bf16.mxu0 0
        %1413 = vmatpush1.bf16.msra.mxu0 0
        %1414 = vmatprep.subr.bf16.mxu0 0
        %1415 = vmatpush1.bf16.msra.mxu0 0
        %1416 = vmatprep.subr.bf16.mxu0 0
        %1417 = vmatpush1.bf16.msra.mxu0 0
        %1418 = vmatprep.subr.bf16.mxu0 0
        %1419 = vmatpush1.bf16.msra.mxu0 0
        %1420 = vmatprep.subr.bf16.mxu0 0
        %1421 = vmatpush1.bf16.msra.mxu0 0
        %1422 = vmatprep.mubr.bf16.mxu0 0
        %1423 = vmatmul.mubr.bf16.gmra.mrb[0].mxu0 %v1385
        %v1424 = vpop.f32.mrb[0].mxu0
        %v1425 = vadd.f32 0.0, %v1424
        %v1426 = vpop.f32.mrb[0].mxu0
        %v1427 = vpop.f32.mrb[0].mxu0
        %v1428 = vpop.f32.mrb[0].mxu0
        %1429 = vdwg.mxu0
        %v1430 = vcombine.low %v1287, %v1379
        %v1431 = vcombine.high %v1287, %v1379
        %v1433 = vunpack.c.l.s4 1983009808
        %v1434 = vunpack.c.0.s8 %v1433
        %v1435 = vlaneseq
        %v1436 = vshrl.u32 %v1435, 7
        %v1437 = vsub.s32 %v1434, %v1436
        %v1438 = vrot.slane %v1430, %v1437
        %v1440 = vunpack.c.l.s4 1983009808
        %v1441 = vunpack.c.0.s8 %v1440
        %v1442 = vlaneseq
        %v1443 = vshrl.u32 %v1442, 7
        %v1444 = vsub.s32 %v1441, %v1443
        %v1445 = vrot.slane %v1431, %v1444
        %v1446 = vcombine.low %v1333, %v1425
        %v1447 = vcombine.high %v1333, %v1425
        %v1449 = vunpack.c.l.s4 1983009808
        %v1450 = vunpack.c.0.s8 %v1449
        %v1451 = vlaneseq
        %v1452 = vshrl.u32 %v1451, 7
        %v1453 = vsub.s32 %v1450, %v1452
        %v1454 = vrot.slane %v1446, %v1453
        %v1456 = vunpack.c.l.s4 1983009808
        %v1457 = vunpack.c.0.s8 %v1456
        %v1458 = vlaneseq
        %v1459 = vshrl.u32 %v1458, 7
        %v1460 = vsub.s32 %v1457, %v1459
        %v1461 = vrot.slane %v1447, %v1460
        %v1462 = vcombine.low %v1438, %v1454
        %v1463 = vcombine.high %v1438, %v1454
        %v1465 = vunpack.c.l.s4 1934713408
        %v1466 = vunpack.c.0.s8 %v1465
        %v1467 = vlaneseq
        %v1468 = vshrl.u32 %v1467, 7
        %v1469 = vsub.s32 %v1466, %v1468
        %v1470 = vrot.slane %v1462, %v1469
        %v1472 = vunpack.c.l.s4 1934713408
        %v1473 = vunpack.c.0.s8 %v1472
        %v1474 = vlaneseq
        %v1475 = vshrl.u32 %v1474, 7
        %v1476 = vsub.s32 %v1473, %v1475
        %v1477 = vrot.slane %v1463, %v1476
        %v1478 = vcombine.low %v1445, %v1461
        %v1479 = vcombine.high %v1445, %v1461
        %v1481 = vunpack.c.l.s4 1934713408
        %v1482 = vunpack.c.0.s8 %v1481
        %v1483 = vlaneseq
        %v1484 = vshrl.u32 %v1483, 7
        %v1485 = vsub.s32 %v1482, %v1484
        %v1486 = vrot.slane %v1478, %v1485
        %v1488 = vunpack.c.l.s4 1934713408
        %v1489 = vunpack.c.0.s8 %v1488
        %v1490 = vlaneseq
        %v1491 = vshrl.u32 %v1490, 7
        %v1492 = vsub.s32 %v1489, %v1491
        %v1493 = vrot.slane %v1479, %v1492
        %v1494 = vcombine.high %v1470, 0.0
        %v1495 = vcombine.high %v1477, 0.0
        %v1496 = vcombine.high %v1486, 0.0
        %v1497 = vcombine.high %v1493, 0.0
        %v1498 = vcombine.low %v1470, %v1477
        %v1500 = vunpack.c.l.s4 1983009808
        %v1501 = vunpack.c.0.s8 %v1500
        %v1502 = vlaneseq
        %v1503 = vshrl.u32 %v1502, 7
        %v1504 = vsub.s32 %v1501, %v1503
        %v1505 = vrot.slane %v1498, %v1504
        %v1506 = vcombine.low %v1494, %v1495
        %v1508 = vunpack.c.l.s4 1983009808
        %v1509 = vunpack.c.0.s8 %v1508
        %v1510 = vlaneseq
        %v1511 = vshrl.u32 %v1510, 7
        %v1512 = vsub.s32 %v1509, %v1511
        %v1513 = vrot.slane %v1506, %v1512
        %v1514 = vcombine.low %v1486, %v1493
        %v1516 = vunpack.c.l.s4 1983009808
        %v1517 = vunpack.c.0.s8 %v1516
        %v1518 = vlaneseq
        %v1519 = vshrl.u32 %v1518, 7
        %v1520 = vsub.s32 %v1517, %v1519
        %v1521 = vrot.slane %v1514, %v1520
        %v1522 = vcombine.low %v1496, %v1497
        %v1524 = vunpack.c.l.s4 1983009808
        %v1525 = vunpack.c.0.s8 %v1524
        %v1526 = vlaneseq
        %v1527 = vshrl.u32 %v1526, 7
        %v1528 = vsub.s32 %v1525, %v1527
        %v1529 = vrot.slane %v1522, %v1528
        %v1530 = vcombine.low %v1505, %v1513
        %v1531 = vcombine.high %v1505, %v1513
        %v1533 = vunpack.c.l.s4 1934713408
        %v1534 = vunpack.c.0.s8 %v1533
        %v1535 = vlaneseq
        %v1536 = vshrl.u32 %v1535, 7
        %v1537 = vsub.s32 %v1534, %v1536
        %v1538 = vrot.slane %v1530, %v1537
        %v1540 = vunpack.c.l.s4 1934713408
        %v1541 = vunpack.c.0.s8 %v1540
        %v1542 = vlaneseq
        %v1543 = vshrl.u32 %v1542, 7
        %v1544 = vsub.s32 %v1541, %v1543
        %v1545 = vrot.slane %v1531, %v1544
        %v1546 = vcombine.low %v1521, %v1529
        %v1547 = vcombine.high %v1521, %v1529
        %v1549 = vunpack.c.l.s4 1934713408
        %v1550 = vunpack.c.0.s8 %v1549
        %v1551 = vlaneseq
        %v1552 = vshrl.u32 %v1551, 7
        %v1553 = vsub.s32 %v1550, %v1552
        %v1554 = vrot.slane %v1546, %v1553
        %v1556 = vunpack.c.l.s4 1934713408
        %v1557 = vunpack.c.0.s8 %v1556
        %v1558 = vlaneseq
        %v1559 = vshrl.u32 %v1558, 7
        %v1560 = vsub.s32 %v1557, %v1559
        %v1561 = vrot.slane %v1547, %v1560
        %v1562 = vcombine.low %v1538, %v1554
        %v1563 = vcombine.high %v1538, %v1554
        %v1564 = vcombine.low %v1545, %v1561
        %v1565 = vcombine.high %v1545, %v1561
        %1567 = vrot.lane.b32.xlu0 %v1563, 8
        %v1568 = vpop.permute.xlu0 %1567
        %1571 = vrot.lane.b32.xlu0 %v1564, 16
        %v1572 = vpop.permute.xlu0 %1571
        %1575 = vrot.lane.b32.xlu0 %v1565, 24
        %v1576 = vpop.permute.xlu0 %1575
        %v1578 = vsel %vm1012, %v1562, %v1568
        %vm1579 = vcmask 130048
        %v1580 = vsel %vm1579, %v1578, %v1572
        %vm1581 = vcmask 195584
        %v1582 = vsel %vm1581, %v1580, %v1576
        %v1583 = vpack.c.bf16 %v1582, %v1582
        %v1584 = vld [vmem:[%s4] sm:$0xf]
        %v1585 = vld [vmem:[%s4 + $0x4] sm:$0xf]
        %v1586 = vld [vmem:[%s4 + $0x8] sm:$0xf]
        %v1587 = vld [vmem:[%s4 + $0xc] sm:$0xf]
        %v1588 = vlaneseq
        %v1589 = vshrl.u32 %v1588, 7
        %v1590 = vsub.s32 4, %v1589
        %v1591 = vrot.slane %v483, %v1590
        %v1596 = vunpack.c.l.b16 %v1584
        %v1597 = vunpack.c.l.b16 %v1585
        %v1598 = vunpack.c.l.b16 %v1586
        %v1599 = vunpack.c.l.b16 %v1587
        %v1600 = vpack.c.b16 %v1597, %v1596
        %v1601 = vpack.c.b16 %v1599, %v1598
        %v1605 = vsel %vm508, %v1583, 0
        %1607 = vmatprep.subr.bf16.mxu0 0
        %1608 = vmatpush1.bf16.msra.mxu0 %v1600
        %1609 = vmatprep.subr.bf16.mxu0 0
        %1610 = vmatpush1.bf16.msra.mxu0 %v1601
        %1611 = vmatprep.subr.bf16.mxu0 0
        %1612 = vmatpush1.bf16.msra.mxu0 0
        %1613 = vmatprep.subr.bf16.mxu0 0
        %1614 = vmatpush1.bf16.msra.mxu0 0
        %1615 = vmatprep.subr.bf16.mxu0 0
        %1616 = vmatpush1.bf16.msra.mxu0 0
        %1617 = vmatprep.subr.bf16.mxu0 0
        %1618 = vmatpush1.bf16.msra.mxu0 0
        %1619 = vmatprep.subr.bf16.mxu0 0
        %1620 = vmatpush1.bf16.msra.mxu0 0
        %1621 = vmatprep.subr.bf16.mxu0 0
        %1622 = vmatpush1.bf16.msra.mxu0 0
        %1623 = vmatprep.subr.bf16.mxu0 0
        %1624 = vmatpush1.bf16.msra.mxu0 0
        %1625 = vmatprep.subr.bf16.mxu0 0
        %1626 = vmatpush1.bf16.msra.mxu0 0
        %1627 = vmatprep.subr.bf16.mxu0 0
        %1628 = vmatpush1.bf16.msra.mxu0 0
        %1629 = vmatprep.subr.bf16.mxu0 0
        %1630 = vmatpush1.bf16.msra.mxu0 0
        %1631 = vmatprep.subr.bf16.mxu0 0
        %1632 = vmatpush1.bf16.msra.mxu0 0
        %1633 = vmatprep.subr.bf16.mxu0 0
        %1634 = vmatpush1.bf16.msra.mxu0 0
        %1635 = vmatprep.subr.bf16.mxu0 0
        %1636 = vmatpush1.bf16.msra.mxu0 0
        %1637 = vmatprep.subr.bf16.mxu0 0
        %1638 = vmatpush1.bf16.msra.mxu0 0
        %1639 = vmatprep.mubr.bf16.mxu0 0
        %1640 = vmatmul.mubr.bf16.gmra.mrb[0].mxu0 %v1605
        %v1641 = vpop.f32.mrb[0].mxu0
        %v1642 = vadd.f32 %v1591, %v1641
        %v1643 = vpop.f32.mrb[0].mxu0
        %v1644 = vpop.f32.mrb[0].mxu0
        %v1645 = vpop.f32.mrb[0].mxu0
        %1646 = vdwg.mxu0
        %v1647 = vadd.f32 %v479, %v1642
        %v1648 = vsel %vm508, %v1647, 0.0
        %1649 = vadd.xlane.f32.xlu0 %v1648
        %v1650 = vpop.xlane.xlu0 %1649
        %v1651 = vrcp.pop 32.0
        %v1652 = vmul.f32 %v1650, %v1651
        %v1653 = vsub.f32 %v1647, %v1652
        %v1654 = vmul.f32 %v1653, %v1653
        %v1655 = vsel %vm508, %v1654, 0.0
        %1656 = vadd.xlane.f32.xlu0 %v1655
        %v1657 = vpop.xlane.xlu0 %1656
        %v1658 = vmul.f32 %v1657, %v1651
        %v1659 = vadd.f32 %v1658, 1e-05
        %v1660 = vrsqrt.pop %v1659
        %v1661 = vmul.f32 %v1653, %v1660
        %v1662 = vlaneseq
        %v1663 = vshrl.u32 %v1662, 7
        %v1664 = vsub.s32 0, %v1663
        %v1665 = vrot.slane %v483, %v1664
        %v1666 = vmul.f32 %v1661, %v1665
        %v1667 = vlaneseq
        %v1668 = vshrl.u32 %v1667, 7
        %v1669 = vsub.s32 1, %v1668
        %v1670 = vrot.slane %v483, %v1669
        %v1671 = vadd.f32 %v1666, %v1670
        %v1672 = vpack.c.bf16 %v1671, %v1671
        %v1673 = vld [vmem:[%s5] sm:$0xff]
        %v1674 = vld [vmem:[%s5 + $0x8] sm:$0xff]
        %v1675 = vld [vmem:[%s5 + $0x10] sm:$0xff]
        %v1676 = vld [vmem:[%s5 + $0x18] sm:$0xff]
        %v1677 = vld [vmem:[%s5 + $0x20] sm:$0xff]
        %v1678 = vld [vmem:[%s5 + $0x28] sm:$0xff]
        %v1679 = vld [vmem:[%s5 + $0x30] sm:$0xff]
        %v1680 = vld [vmem:[%s5 + $0x38] sm:$0xff]
        %v1681 = vld [vmem:[%s5 + $0x40] sm:$0xff]
        %v1682 = vld [vmem:[%s5 + $0x48] sm:$0xff]
        %v1683 = vld [vmem:[%s5 + $0x50] sm:$0xff]
        %v1684 = vld [vmem:[%s5 + $0x58] sm:$0xff]
        %v1685 = vld [vmem:[%s5 + $0x60] sm:$0xff]
        %v1686 = vld [vmem:[%s5 + $0x68] sm:$0xff]
        %v1687 = vld [vmem:[%s5 + $0x70] sm:$0xff]
        %v1688 = vld [vmem:[%s5 + $0x78] sm:$0xff]
        %v1689 = vld [vmem:[%s5 + $0x80] sm:$0xff]
        %v1690 = vld [vmem:[%s5 + $0x88] sm:$0xff]
        %v1691 = vld [vmem:[%s5 + $0x90] sm:$0xff]
        %v1692 = vld [vmem:[%s5 + $0x98] sm:$0xff]
        %v1693 = vld [vmem:[%s5 + $0xa0] sm:$0xff]
        %v1694 = vld [vmem:[%s5 + $0xa8] sm:$0xff]
        %v1695 = vld [vmem:[%s5 + $0xb0] sm:$0xff]
        %v1696 = vld [vmem:[%s5 + $0xb8] sm:$0xff]
        %v1697 = vld [vmem:[%s5 + $0xc0] sm:$0xff]
        %v1698 = vld [vmem:[%s5 + $0xc8] sm:$0xff]
        %v1699 = vld [vmem:[%s5 + $0xd0] sm:$0xff]
        %v1700 = vld [vmem:[%s5 + $0xd8] sm:$0xff]
        %v1701 = vld [vmem:[%s5 + $0xe0] sm:$0xff]
        %v1702 = vld [vmem:[%s5 + $0xe8] sm:$0xff]
        %v1703 = vld [vmem:[%s5 + $0xf0] sm:$0xff]
        %v1704 = vld [vmem:[%s5 + $0xf8] sm:$0xff]
        %v1705 = vld [vmem:[%s6] sm:$0xff]
        %v1706 = vld [vmem:[%s6 + $0x8] sm:$0xff]
        %v1709 = vlaneseq
        %v1710 = vshrl.u32 %v1709, 7
        %v1711 = vsub.s32 0, %v1710
        %v1712 = vrot.slane %v1705, %v1711
        %v1713 = vlaneseq
        %v1714 = vshrl.u32 %v1713, 7
        %v1715 = vsub.s32 1, %v1714
        %v1716 = vrot.slane %v1705, %v1715
        %v1717 = vlaneseq
        %v1718 = vshrl.u32 %v1717, 7
        %v1719 = vsub.s32 2, %v1718
        %v1720 = vrot.slane %v1705, %v1719
        %v1721 = vlaneseq
        %v1722 = vshrl.u32 %v1721, 7
        %v1723 = vsub.s32 3, %v1722
        %v1724 = vrot.slane %v1705, %v1723
        %v1725 = vlaneseq
        %v1726 = vshrl.u32 %v1725, 7
        %v1727 = vsub.s32 4, %v1726
        %v1728 = vrot.slane %v1705, %v1727
        %v1729 = vlaneseq
        %v1730 = vshrl.u32 %v1729, 7
        %v1731 = vsub.s32 5, %v1730
        %v1732 = vrot.slane %v1705, %v1731
        %v1733 = vlaneseq
        %v1734 = vshrl.u32 %v1733, 7
        %v1735 = vsub.s32 6, %v1734
        %v1736 = vrot.slane %v1705, %v1735
        %v1737 = vlaneseq
        %v1738 = vshrl.u32 %v1737, 7
        %v1739 = vsub.s32 7, %v1738
        %v1740 = vrot.slane %v1705, %v1739
        %v1741 = vlaneseq
        %v1742 = vshrl.u32 %v1741, 7
        %v1743 = vsub.s32 0, %v1742
        %v1744 = vrot.slane %v1706, %v1743
        %v1745 = vlaneseq
        %v1746 = vshrl.u32 %v1745, 7
        %v1747 = vsub.s32 1, %v1746
        %v1748 = vrot.slane %v1706, %v1747
        %v1749 = vlaneseq
        %v1750 = vshrl.u32 %v1749, 7
        %v1751 = vsub.s32 2, %v1750
        %v1752 = vrot.slane %v1706, %v1751
        %v1753 = vlaneseq
        %v1754 = vshrl.u32 %v1753, 7
        %v1755 = vsub.s32 3, %v1754
        %v1756 = vrot.slane %v1706, %v1755
        %v1757 = vlaneseq
        %v1758 = vshrl.u32 %v1757, 7
        %v1759 = vsub.s32 4, %v1758
        %v1760 = vrot.slane %v1706, %v1759
        %v1761 = vlaneseq
        %v1762 = vshrl.u32 %v1761, 7
        %v1763 = vsub.s32 5, %v1762
        %v1764 = vrot.slane %v1706, %v1763
        %v1765 = vlaneseq
        %v1766 = vshrl.u32 %v1765, 7
        %v1767 = vsub.s32 6, %v1766
        %v1768 = vrot.slane %v1706, %v1767
        %v1769 = vlaneseq
        %v1770 = vshrl.u32 %v1769, 7
        %v1771 = vsub.s32 7, %v1770
        %v1772 = vrot.slane %v1706, %v1771
        %v1821 = vunpack.c.l.b16 %v1673
        %v1822 = vunpack.c.h.b16 %v1673
        %v1823 = vunpack.c.l.b16 %v1674
        %v1824 = vunpack.c.h.b16 %v1674
        %v1825 = vunpack.c.l.b16 %v1675
        %v1826 = vunpack.c.h.b16 %v1675
        %v1827 = vunpack.c.l.b16 %v1676
        %v1828 = vunpack.c.h.b16 %v1676
        %v1829 = vunpack.c.l.b16 %v1677
        %v1830 = vunpack.c.h.b16 %v1677
        %v1831 = vunpack.c.l.b16 %v1678
        %v1832 = vunpack.c.h.b16 %v1678
        %v1833 = vunpack.c.l.b16 %v1679
        %v1834 = vunpack.c.h.b16 %v1679
        %v1835 = vunpack.c.l.b16 %v1680
        %v1836 = vunpack.c.h.b16 %v1680
        %v1837 = vunpack.c.l.b16 %v1681
        %v1838 = vunpack.c.h.b16 %v1681
        %v1839 = vunpack.c.l.b16 %v1682
        %v1840 = vunpack.c.h.b16 %v1682
        %v1841 = vunpack.c.l.b16 %v1683
        %v1842 = vunpack.c.h.b16 %v1683
        %v1843 = vunpack.c.l.b16 %v1684
        %v1844 = vunpack.c.h.b16 %v1684
        %v1845 = vunpack.c.l.b16 %v1685
        %v1846 = vunpack.c.h.b16 %v1685
        %v1847 = vunpack.c.l.b16 %v1686
        %v1848 = vunpack.c.h.b16 %v1686
        %v1849 = vunpack.c.l.b16 %v1687
        %v1850 = vunpack.c.h.b16 %v1687
        %v1851 = vunpack.c.l.b16 %v1688
        %v1852 = vunpack.c.h.b16 %v1688
        %v1853 = vunpack.c.l.b16 %v1689
        %v1854 = vunpack.c.h.b16 %v1689
        %v1855 = vunpack.c.l.b16 %v1690
        %v1856 = vunpack.c.h.b16 %v1690
        %v1857 = vunpack.c.l.b16 %v1691
        %v1858 = vunpack.c.h.b16 %v1691
        %v1859 = vunpack.c.l.b16 %v1692
        %v1860 = vunpack.c.h.b16 %v1692
        %v1861 = vunpack.c.l.b16 %v1693
        %v1862 = vunpack.c.h.b16 %v1693
        %v1863 = vunpack.c.l.b16 %v1694
        %v1864 = vunpack.c.h.b16 %v1694
        %v1865 = vunpack.c.l.b16 %v1695
        %v1866 = vunpack.c.h.b16 %v1695
        %v1867 = vunpack.c.l.b16 %v1696
        %v1868 = vunpack.c.h.b16 %v1696
        %v1869 = vunpack.c.l.b16 %v1697
        %v1870 = vunpack.c.h.b16 %v1697
        %v1871 = vunpack.c.l.b16 %v1698
        %v1872 = vunpack.c.h.b16 %v1698
        %v1873 = vunpack.c.l.b16 %v1699
        %v1874 = vunpack.c.h.b16 %v1699
        %v1875 = vunpack.c.l.b16 %v1700
        %v1876 = vunpack.c.h.b16 %v1700
        %v1877 = vunpack.c.l.b16 %v1701
        %v1878 = vunpack.c.h.b16 %v1701
        %v1879 = vunpack.c.l.b16 %v1702
        %v1880 = vunpack.c.h.b16 %v1702
        %v1881 = vunpack.c.l.b16 %v1703
        %v1882 = vunpack.c.h.b16 %v1703
        %v1883 = vunpack.c.l.b16 %v1704
        %v1884 = vunpack.c.h.b16 %v1704
        %v1885 = vpack.c.b16 %v1837, %v1821
        %v1886 = vpack.c.b16 %v1838, %v1822
        %v1887 = vpack.c.b16 %v1839, %v1823
        %v1888 = vpack.c.b16 %v1840, %v1824
        %v1889 = vpack.c.b16 %v1841, %v1825
        %v1890 = vpack.c.b16 %v1842, %v1826
        %v1891 = vpack.c.b16 %v1843, %v1827
        %v1892 = vpack.c.b16 %v1844, %v1828
        %v1893 = vpack.c.b16 %v1845, %v1829
        %v1894 = vpack.c.b16 %v1846, %v1830
        %v1895 = vpack.c.b16 %v1847, %v1831
        %v1896 = vpack.c.b16 %v1848, %v1832
        %v1897 = vpack.c.b16 %v1849, %v1833
        %v1898 = vpack.c.b16 %v1850, %v1834
        %v1899 = vpack.c.b16 %v1851, %v1835
        %v1900 = vpack.c.b16 %v1852, %v1836
        %v1901 = vpack.c.b16 %v1869, %v1853
        %v1902 = vpack.c.b16 %v1870, %v1854
        %v1903 = vpack.c.b16 %v1871, %v1855
        %v1904 = vpack.c.b16 %v1872, %v1856
        %v1905 = vpack.c.b16 %v1873, %v1857
        %v1906 = vpack.c.b16 %v1874, %v1858
        %v1907 = vpack.c.b16 %v1875, %v1859
        %v1908 = vpack.c.b16 %v1876, %v1860
        %v1909 = vpack.c.b16 %v1877, %v1861
        %v1910 = vpack.c.b16 %v1878, %v1862
        %v1911 = vpack.c.b16 %v1879, %v1863
        %v1912 = vpack.c.b16 %v1880, %v1864
        %v1913 = vpack.c.b16 %v1881, %v1865
        %v1914 = vpack.c.b16 %v1882, %v1866
        %v1915 = vpack.c.b16 %v1883, %v1867
        %v1916 = vpack.c.b16 %v1884, %v1868
        %v1950 = vsel %vm508, %v1672, 0
        %1952 = vmatprep.subr.bf16.mxu0 %v1886
        %1953 = vmatpush1.bf16.msra.mxu0 %v1885
        %1954 = vmatprep.subr.bf16.mxu0 %v1902
        %1955 = vmatpush1.bf16.msra.mxu0 %v1901
        %1956 = vmatprep.subr.bf16.mxu0 0
        %1957 = vmatpush1.bf16.msra.mxu0 0
        %1958 = vmatprep.subr.bf16.mxu0 0
        %1959 = vmatpush1.bf16.msra.mxu0 0
        %1960 = vmatprep.subr.bf16.mxu0 0
        %1961 = vmatpush1.bf16.msra.mxu0 0
        %1962 = vmatprep.subr.bf16.mxu0 0
        %1963 = vmatpush1.bf16.msra.mxu0 0
        %1964 = vmatprep.subr.bf16.mxu0 0
        %1965 = vmatpush1.bf16.msra.mxu0 0
        %1966 = vmatprep.subr.bf16.mxu0 0
        %1967 = vmatpush1.bf16.msra.mxu0 0
        %1968 = vmatprep.subr.bf16.mxu0 0
        %1969 = vmatpush1.bf16.msra.mxu0 0
        %1970 = vmatprep.subr.bf16.mxu0 0
        %1971 = vmatpush1.bf16.msra.mxu0 0
        %1972 = vmatprep.subr.bf16.mxu0 0
        %1973 = vmatpush1.bf16.msra.mxu0 0
        %1974 = vmatprep.subr.bf16.mxu0 0
        %1975 = vmatpush1.bf16.msra.mxu0 0
        %1976 = vmatprep.subr.bf16.mxu0 0
        %1977 = vmatpush1.bf16.msra.mxu0 0
        %1978 = vmatprep.subr.bf16.mxu0 0
        %1979 = vmatpush1.bf16.msra.mxu0 0
        %1980 = vmatprep.subr.bf16.mxu0 0
        %1981 = vmatpush1.bf16.msra.mxu0 0
        %1982 = vmatprep.subr.bf16.mxu0 0
        %1983 = vmatpush1.bf16.msra.mxu0 0
        %1984 = vmatprep.mubr.bf16.mxu0 0
        %1985 = vmatmul.mubr.bf16.gmra.mrb[0].mxu0 %v1950
        %v1986 = vpop.f32.mrb[0].mxu0
        %v1987 = vadd.f32 %v1712, %v1986
        %v1988 = vpop.f32.mrb[0].mxu0
        %v1989 = vadd.f32 %v1716, %v1988
        %v1990 = vpop.f32.mrb[0].mxu0
        %v1991 = vpop.f32.mrb[0].mxu0
        %1992 = vdwg.mxu0
        %1993 = vmatprep.subr.bf16.mxu0 %v1888
        %1994 = vmatpush1.bf16.msra.mxu0 %v1887
        %1995 = vmatprep.subr.bf16.mxu0 %v1904
        %1996 = vmatpush1.bf16.msra.mxu0 %v1903
        %1997 = vmatprep.subr.bf16.mxu0 0
        %1998 = vmatpush1.bf16.msra.mxu0 0
        %1999 = vmatprep.subr.bf16.mxu0 0
        %2000 = vmatpush1.bf16.msra.mxu0 0
        %2001 = vmatprep.subr.bf16.mxu0 0
        %2002 = vmatpush1.bf16.msra.mxu0 0
        %2003 = vmatprep.subr.bf16.mxu0 0
        %2004 = vmatpush1.bf16.msra.mxu0 0
        %2005 = vmatprep.subr.bf16.mxu0 0
        %2006 = vmatpush1.bf16.msra.mxu0 0
        %2007 = vmatprep.subr.bf16.mxu0 0
        %2008 = vmatpush1.bf16.msra.mxu0 0
        %2009 = vmatprep.subr.bf16.mxu0 0
        %2010 = vmatpush1.bf16.msra.mxu0 0
        %2011 = vmatprep.subr.bf16.mxu0 0
        %2012 = vmatpush1.bf16.msra.mxu0 0
        %2013 = vmatprep.subr.bf16.mxu0 0
        %2014 = vmatpush1.bf16.msra.mxu0 0
        %2015 = vmatprep.subr.bf16.mxu0 0
        %2016 = vmatpush1.bf16.msra.mxu0 0
        %2017 = vmatprep.subr.bf16.mxu0 0
        %2018 = vmatpush1.bf16.msra.mxu0 0
        %2019 = vmatprep.subr.bf16.mxu0 0
        %2020 = vmatpush1.bf16.msra.mxu0 0
        %2021 = vmatprep.subr.bf16.mxu0 0
        %2022 = vmatpush1.bf16.msra.mxu0 0
        %2023 = vmatprep.subr.bf16.mxu0 0
        %2024 = vmatpush1.bf16.msra.mxu0 0
        %2025 = vmatprep.mubr.bf16.mxu0 0
        %2026 = vmatmul.mubr.bf16.gmra.mrb[0].mxu0 %v1950
        %v2027 = vpop.f32.mrb[0].mxu0
        %v2028 = vadd.f32 %v1720, %v2027
        %v2029 = vpop.f32.mrb[0].mxu0
        %v2030 = vadd.f32 %v1724, %v2029
        %v2031 = vpop.f32.mrb[0].mxu0
        %v2032 = vpop.f32.mrb[0].mxu0
        %2033 = vdwg.mxu0
        %2034 = vmatprep.subr.bf16.mxu0 %v1890
        %2035 = vmatpush1.bf16.msra.mxu0 %v1889
        %2036 = vmatprep.subr.bf16.mxu0 %v1906
        %2037 = vmatpush1.bf16.msra.mxu0 %v1905
        %2038 = vmatprep.subr.bf16.mxu0 0
        %2039 = vmatpush1.bf16.msra.mxu0 0
        %2040 = vmatprep.subr.bf16.mxu0 0
        %2041 = vmatpush1.bf16.msra.mxu0 0
        %2042 = vmatprep.subr.bf16.mxu0 0
        %2043 = vmatpush1.bf16.msra.mxu0 0
        %2044 = vmatprep.subr.bf16.mxu0 0
        %2045 = vmatpush1.bf16.msra.mxu0 0
        %2046 = vmatprep.subr.bf16.mxu0 0
        %2047 = vmatpush1.bf16.msra.mxu0 0
        %2048 = vmatprep.subr.bf16.mxu0 0
        %2049 = vmatpush1.bf16.msra.mxu0 0
        %2050 = vmatprep.subr.bf16.mxu0 0
        %2051 = vmatpush1.bf16.msra.mxu0 0
        %2052 = vmatprep.subr.bf16.mxu0 0
        %2053 = vmatpush1.bf16.msra.mxu0 0
        %2054 = vmatprep.subr.bf16.mxu0 0
        %2055 = vmatpush1.bf16.msra.mxu0 0
        %2056 = vmatprep.subr.bf16.mxu0 0
        %2057 = vmatpush1.bf16.msra.mxu0 0
        %2058 = vmatprep.subr.bf16.mxu0 0
        %2059 = vmatpush1.bf16.msra.mxu0 0
        %2060 = vmatprep.subr.bf16.mxu0 0
        %2061 = vmatpush1.bf16.msra.mxu0 0
        %2062 = vmatprep.subr.bf16.mxu0 0
        %2063 = vmatpush1.bf16.msra.mxu0 0
        %2064 = vmatprep.subr.bf16.mxu0 0
        %2065 = vmatpush1.bf16.msra.mxu0 0
        %2066 = vmatprep.mubr.bf16.mxu0 0
        %2067 = vmatmul.mubr.bf16.gmra.mrb[0].mxu0 %v1950
        %v2068 = vpop.f32.mrb[0].mxu0
        %v2069 = vadd.f32 %v1728, %v2068
        %v2070 = vpop.f32.mrb[0].mxu0
        %v2071 = vadd.f32 %v1732, %v2070
        %v2072 = vpop.f32.mrb[0].mxu0
        %v2073 = vpop.f32.mrb[0].mxu0
        %2074 = vdwg.mxu0
        %2075 = vmatprep.subr.bf16.mxu0 %v1892
        %2076 = vmatpush1.bf16.msra.mxu0 %v1891
        %2077 = vmatprep.subr.bf16.mxu0 %v1908
        %2078 = vmatpush1.bf16.msra.mxu0 %v1907
        %2079 = vmatprep.subr.bf16.mxu0 0
        %2080 = vmatpush1.bf16.msra.mxu0 0
        %2081 = vmatprep.subr.bf16.mxu0 0
        %2082 = vmatpush1.bf16.msra.mxu0 0
        %2083 = vmatprep.subr.bf16.mxu0 0
        %2084 = vmatpush1.bf16.msra.mxu0 0
        %2085 = vmatprep.subr.bf16.mxu0 0
        %2086 = vmatpush1.bf16.msra.mxu0 0
        %2087 = vmatprep.subr.bf16.mxu0 0
        %2088 = vmatpush1.bf16.msra.mxu0 0
        %2089 = vmatprep.subr.bf16.mxu0 0
        %2090 = vmatpush1.bf16.msra.mxu0 0
        %2091 = vmatprep.subr.bf16.mxu0 0
        %2092 = vmatpush1.bf16.msra.mxu0 0
        %2093 = vmatprep.subr.bf16.mxu0 0
        %2094 = vmatpush1.bf16.msra.mxu0 0
        %2095 = vmatprep.subr.bf16.mxu0 0
        %2096 = vmatpush1.bf16.msra.mxu0 0
        %2097 = vmatprep.subr.bf16.mxu0 0
        %2098 = vmatpush1.bf16.msra.mxu0 0
        %2099 = vmatprep.subr.bf16.mxu0 0
        %2100 = vmatpush1.bf16.msra.mxu0 0
        %2101 = vmatprep.subr.bf16.mxu0 0
        %2102 = vmatpush1.bf16.msra.mxu0 0
        %2103 = vmatprep.subr.bf16.mxu0 0
        %2104 = vmatpush1.bf16.msra.mxu0 0
        %2105 = vmatprep.subr.bf16.mxu0 0
        %2106 = vmatpush1.bf16.msra.mxu0 0
        %2107 = vmatprep.mubr.bf16.mxu0 0
        %2108 = vmatmul.mubr.bf16.gmra.mrb[0].mxu0 %v1950
        %v2109 = vpop.f32.mrb[0].mxu0
        %v2110 = vadd.f32 %v1736, %v2109
        %v2111 = vpop.f32.mrb[0].mxu0
        %v2112 = vadd.f32 %v1740, %v2111
        %v2113 = vpop.f32.mrb[0].mxu0
        %v2114 = vpop.f32.mrb[0].mxu0
        %2115 = vdwg.mxu0
        %2116 = vmatprep.subr.bf16.mxu0 %v1894
        %2117 = vmatpush1.bf16.msra.mxu0 %v1893
        %2118 = vmatprep.subr.bf16.mxu0 %v1910
        %2119 = vmatpush1.bf16.msra.mxu0 %v1909
        %2120 = vmatprep.subr.bf16.mxu0 0
        %2121 = vmatpush1.bf16.msra.mxu0 0
        %2122 = vmatprep.subr.bf16.mxu0 0
        %2123 = vmatpush1.bf16.msra.mxu0 0
        %2124 = vmatprep.subr.bf16.mxu0 0
        %2125 = vmatpush1.bf16.msra.mxu0 0
        %2126 = vmatprep.subr.bf16.mxu0 0
        %2127 = vmatpush1.bf16.msra.mxu0 0
        %2128 = vmatprep.subr.bf16.mxu0 0
        %2129 = vmatpush1.bf16.msra.mxu0 0
        %2130 = vmatprep.subr.bf16.mxu0 0
        %2131 = vmatpush1.bf16.msra.mxu0 0
        %2132 = vmatprep.subr.bf16.mxu0 0
        %2133 = vmatpush1.bf16.msra.mxu0 0
        %2134 = vmatprep.subr.bf16.mxu0 0
        %2135 = vmatpush1.bf16.msra.mxu0 0
        %2136 = vmatprep.subr.bf16.mxu0 0
        %2137 = vmatpush1.bf16.msra.mxu0 0
        %2138 = vmatprep.subr.bf16.mxu0 0
        %2139 = vmatpush1.bf16.msra.mxu0 0
        %2140 = vmatprep.subr.bf16.mxu0 0
        %2141 = vmatpush1.bf16.msra.mxu0 0
        %2142 = vmatprep.subr.bf16.mxu0 0
        %2143 = vmatpush1.bf16.msra.mxu0 0
        %2144 = vmatprep.subr.bf16.mxu0 0
        %2145 = vmatpush1.bf16.msra.mxu0 0
        %2146 = vmatprep.subr.bf16.mxu0 0
        %2147 = vmatpush1.bf16.msra.mxu0 0
        %2148 = vmatprep.mubr.bf16.mxu0 0
        %2149 = vmatmul.mubr.bf16.gmra.mrb[0].mxu0 %v1950
        %v2150 = vpop.f32.mrb[0].mxu0
        %v2151 = vadd.f32 %v1744, %v2150
        %v2152 = vpop.f32.mrb[0].mxu0
        %v2153 = vadd.f32 %v1748, %v2152
        %v2154 = vpop.f32.mrb[0].mxu0
        %v2155 = vpop.f32.mrb[0].mxu0
        %2156 = vdwg.mxu0
        %2157 = vmatprep.subr.bf16.mxu0 %v1896
        %2158 = vmatpush1.bf16.msra.mxu0 %v1895
        %2159 = vmatprep.subr.bf16.mxu0 %v1912
        %2160 = vmatpush1.bf16.msra.mxu0 %v1911
        %2161 = vmatprep.subr.bf16.mxu0 0
        %2162 = vmatpush1.bf16.msra.mxu0 0
        %2163 = vmatprep.subr.bf16.mxu0 0
        %2164 = vmatpush1.bf16.msra.mxu0 0
        %2165 = vmatprep.subr.bf16.mxu0 0
        %2166 = vmatpush1.bf16.msra.mxu0 0
        %2167 = vmatprep.subr.bf16.mxu0 0
        %2168 = vmatpush1.bf16.msra.mxu0 0
        %2169 = vmatprep.subr.bf16.mxu0 0
        %2170 = vmatpush1.bf16.msra.mxu0 0
        %2171 = vmatprep.subr.bf16.mxu0 0
        %2172 = vmatpush1.bf16.msra.mxu0 0
        %2173 = vmatprep.subr.bf16.mxu0 0
        %2174 = vmatpush1.bf16.msra.mxu0 0
        %2175 = vmatprep.subr.bf16.mxu0 0
        %2176 = vmatpush1.bf16.msra.mxu0 0
        %2177 = vmatprep.subr.bf16.mxu0 0
        %2178 = vmatpush1.bf16.msra.mxu0 0
        %2179 = vmatprep.subr.bf16.mxu0 0
        %2180 = vmatpush1.bf16.msra.mxu0 0
        %2181 = vmatprep.subr.bf16.mxu0 0
        %2182 = vmatpush1.bf16.msra.mxu0 0
        %2183 = vmatprep.subr.bf16.mxu0 0
        %2184 = vmatpush1.bf16.msra.mxu0 0
        %2185 = vmatprep.subr.bf16.mxu0 0
        %2186 = vmatpush1.bf16.msra.mxu0 0
        %2187 = vmatprep.subr.bf16.mxu0 0
        %2188 = vmatpush1.bf16.msra.mxu0 0
        %2189 = vmatprep.mubr.bf16.mxu0 0
        %2190 = vmatmul.mubr.bf16.gmra.mrb[0].mxu0 %v1950
        %v2191 = vpop.f32.mrb[0].mxu0
        %v2192 = vadd.f32 %v1752, %v2191
        %v2193 = vpop.f32.mrb[0].mxu0
        %v2194 = vadd.f32 %v1756, %v2193
        %v2195 = vpop.f32.mrb[0].mxu0
        %v2196 = vpop.f32.mrb[0].mxu0
        %2197 = vdwg.mxu0
        %2198 = vmatprep.subr.bf16.mxu0 %v1898
        %2199 = vmatpush1.bf16.msra.mxu0 %v1897
        %2200 = vmatprep.subr.bf16.mxu0 %v1914
        %2201 = vmatpush1.bf16.msra.mxu0 %v1913
        %2202 = vmatprep.subr.bf16.mxu0 0
        %2203 = vmatpush1.bf16.msra.mxu0 0
        %2204 = vmatprep.subr.bf16.mxu0 0
        %2205 = vmatpush1.bf16.msra.mxu0 0
        %2206 = vmatprep.subr.bf16.mxu0 0
        %2207 = vmatpush1.bf16.msra.mxu0 0
        %2208 = vmatprep.subr.bf16.mxu0 0
        %2209 = vmatpush1.bf16.msra.mxu0 0
        %2210 = vmatprep.subr.bf16.mxu0 0
        %2211 = vmatpush1.bf16.msra.mxu0 0
        %2212 = vmatprep.subr.bf16.mxu0 0
        %2213 = vmatpush1.bf16.msra.mxu0 0
        %2214 = vmatprep.subr.bf16.mxu0 0
        %2215 = vmatpush1.bf16.msra.mxu0 0
        %2216 = vmatprep.subr.bf16.mxu0 0
        %2217 = vmatpush1.bf16.msra.mxu0 0
        %2218 = vmatprep.subr.bf16.mxu0 0
        %2219 = vmatpush1.bf16.msra.mxu0 0
        %2220 = vmatprep.subr.bf16.mxu0 0
        %2221 = vmatpush1.bf16.msra.mxu0 0
        %2222 = vmatprep.subr.bf16.mxu0 0
        %2223 = vmatpush1.bf16.msra.mxu0 0
        %2224 = vmatprep.subr.bf16.mxu0 0
        %2225 = vmatpush1.bf16.msra.mxu0 0
        %2226 = vmatprep.subr.bf16.mxu0 0
        %2227 = vmatpush1.bf16.msra.mxu0 0
        %2228 = vmatprep.subr.bf16.mxu0 0
        %2229 = vmatpush1.bf16.msra.mxu0 0
        %2230 = vmatprep.mubr.bf16.mxu0 0
        %2231 = vmatmul.mubr.bf16.gmra.mrb[0].mxu0 %v1950
        %v2232 = vpop.f32.mrb[0].mxu0
        %v2233 = vadd.f32 %v1760, %v2232
        %v2234 = vpop.f32.mrb[0].mxu0
        %v2235 = vadd.f32 %v1764, %v2234
        %v2236 = vpop.f32.mrb[0].mxu0
        %v2237 = vpop.f32.mrb[0].mxu0
        %2238 = vdwg.mxu0
        %2239 = vmatprep.subr.bf16.mxu0 %v1900
        %2240 = vmatpush1.bf16.msra.mxu0 %v1899
        %2241 = vmatprep.subr.bf16.mxu0 %v1916
        %2242 = vmatpush1.bf16.msra.mxu0 %v1915
        %2243 = vmatprep.subr.bf16.mxu0 0
        %2244 = vmatpush1.bf16.msra.mxu0 0
        %2245 = vmatprep.subr.bf16.mxu0 0
        %2246 = vmatpush1.bf16.msra.mxu0 0
        %2247 = vmatprep.subr.bf16.mxu0 0
        %2248 = vmatpush1.bf16.msra.mxu0 0
        %2249 = vmatprep.subr.bf16.mxu0 0
        %2250 = vmatpush1.bf16.msra.mxu0 0
        %2251 = vmatprep.subr.bf16.mxu0 0
        %2252 = vmatpush1.bf16.msra.mxu0 0
        %2253 = vmatprep.subr.bf16.mxu0 0
        %2254 = vmatpush1.bf16.msra.mxu0 0
        %2255 = vmatprep.subr.bf16.mxu0 0
        %2256 = vmatpush1.bf16.msra.mxu0 0
        %2257 = vmatprep.subr.bf16.mxu0 0
        %2258 = vmatpush1.bf16.msra.mxu0 0
        %2259 = vmatprep.subr.bf16.mxu0 0
        %2260 = vmatpush1.bf16.msra.mxu0 0
        %2261 = vmatprep.subr.bf16.mxu0 0
        %2262 = vmatpush1.bf16.msra.mxu0 0
        %2263 = vmatprep.subr.bf16.mxu0 0
        %2264 = vmatpush1.bf16.msra.mxu0 0
        %2265 = vmatprep.subr.bf16.mxu0 0
        %2266 = vmatpush1.bf16.msra.mxu0 0
        %2267 = vmatprep.subr.bf16.mxu0 0
        %2268 = vmatpush1.bf16.msra.mxu0 0
        %2269 = vmatprep.subr.bf16.mxu0 0
        %2270 = vmatpush1.bf16.msra.mxu0 0
        %2271 = vmatprep.mubr.bf16.mxu0 0
        %2272 = vmatmul.mubr.bf16.gmra.mrb[0].mxu0 %v1950
        %v2273 = vpop.f32.mrb[0].mxu0
        %v2274 = vadd.f32 %v1768, %v2273
        %v2275 = vpop.f32.mrb[0].mxu0
        %v2276 = vadd.f32 %v1772, %v2275
        %v2277 = vpop.f32.mrb[0].mxu0
        %v2278 = vpop.f32.mrb[0].mxu0
        %2279 = vdwg.mxu0
        %v2280 = vmax.f32 %v1987, 0.0
        %v2281 = vmax.f32 %v1989, 0.0
        %v2282 = vmax.f32 %v2028, 0.0
        %v2283 = vmax.f32 %v2030, 0.0
        %v2284 = vmax.f32 %v2069, 0.0
        %v2285 = vmax.f32 %v2071, 0.0
        %v2286 = vmax.f32 %v2110, 0.0
        %v2287 = vmax.f32 %v2112, 0.0
        %v2288 = vmax.f32 %v2151, 0.0
        %v2289 = vmax.f32 %v2153, 0.0
        %v2290 = vmax.f32 %v2192, 0.0
        %v2291 = vmax.f32 %v2194, 0.0
        %v2292 = vmax.f32 %v2233, 0.0
        %v2293 = vmax.f32 %v2235, 0.0
        %v2294 = vmax.f32 %v2274, 0.0
        %v2295 = vmax.f32 %v2276, 0.0
        %v2296 = vpack.c.bf16 %v2280, %v2280
        %v2297 = vpack.c.bf16 %v2281, %v2281
        %v2298 = vpack.c.bf16 %v2282, %v2282
        %v2299 = vpack.c.bf16 %v2283, %v2283
        %v2300 = vpack.c.bf16 %v2284, %v2284
        %v2301 = vpack.c.bf16 %v2285, %v2285
        %v2302 = vpack.c.bf16 %v2286, %v2286
        %v2303 = vpack.c.bf16 %v2287, %v2287
        %v2304 = vpack.c.bf16 %v2288, %v2288
        %v2305 = vpack.c.bf16 %v2289, %v2289
        %v2306 = vpack.c.bf16 %v2290, %v2290
        %v2307 = vpack.c.bf16 %v2291, %v2291
        %v2308 = vpack.c.bf16 %v2292, %v2292
        %v2309 = vpack.c.bf16 %v2293, %v2293
        %v2310 = vpack.c.bf16 %v2294, %v2294
        %v2311 = vpack.c.bf16 %v2295, %v2295
        %v2312 = vld [vmem:[%s7] sm:$0xf]
        %v2313 = vld [vmem:[%s7 + $0x4] sm:$0xf]
        %v2314 = vld [vmem:[%s7 + $0x8] sm:$0xf]
        %v2315 = vld [vmem:[%s7 + $0xc] sm:$0xf]
        %v2316 = vld [vmem:[%s7 + $0x10] sm:$0xf]
        %v2317 = vld [vmem:[%s7 + $0x14] sm:$0xf]
        %v2318 = vld [vmem:[%s7 + $0x18] sm:$0xf]
        %v2319 = vld [vmem:[%s7 + $0x1c] sm:$0xf]
        %v2320 = vld [vmem:[%s7 + $0x20] sm:$0xf]
        %v2321 = vld [vmem:[%s7 + $0x24] sm:$0xf]
        %v2322 = vld [vmem:[%s7 + $0x28] sm:$0xf]
        %v2323 = vld [vmem:[%s7 + $0x2c] sm:$0xf]
        %v2324 = vld [vmem:[%s7 + $0x30] sm:$0xf]
        %v2325 = vld [vmem:[%s7 + $0x34] sm:$0xf]
        %v2326 = vld [vmem:[%s7 + $0x38] sm:$0xf]
        %v2327 = vld [vmem:[%s7 + $0x3c] sm:$0xf]
        %v2328 = vld [vmem:[%s7 + $0x40] sm:$0xf]
        %v2329 = vld [vmem:[%s7 + $0x44] sm:$0xf]
        %v2330 = vld [vmem:[%s7 + $0x48] sm:$0xf]
        %v2331 = vld [vmem:[%s7 + $0x4c] sm:$0xf]
        %v2332 = vld [vmem:[%s7 + $0x50] sm:$0xf]
        %v2333 = vld [vmem:[%s7 + $0x54] sm:$0xf]
        %v2334 = vld [vmem:[%s7 + $0x58] sm:$0xf]
        %v2335 = vld [vmem:[%s7 + $0x5c] sm:$0xf]
        %v2336 = vld [vmem:[%s7 + $0x60] sm:$0xf]
        %v2337 = vld [vmem:[%s7 + $0x64] sm:$0xf]
        %v2338 = vld [vmem:[%s7 + $0x68] sm:$0xf]
        %v2339 = vld [vmem:[%s7 + $0x6c] sm:$0xf]
        %v2340 = vld [vmem:[%s7 + $0x70] sm:$0xf]
        %v2341 = vld [vmem:[%s7 + $0x74] sm:$0xf]
        %v2342 = vld [vmem:[%s7 + $0x78] sm:$0xf]
        %v2343 = vld [vmem:[%s7 + $0x7c] sm:$0xf]
        %v2344 = vld [vmem:[%s7 + $0x80] sm:$0xf]
        %v2345 = vld [vmem:[%s7 + $0x84] sm:$0xf]
        %v2346 = vld [vmem:[%s7 + $0x88] sm:$0xf]
        %v2347 = vld [vmem:[%s7 + $0x8c] sm:$0xf]
        %v2348 = vld [vmem:[%s7 + $0x90] sm:$0xf]
        %v2349 = vld [vmem:[%s7 + $0x94] sm:$0xf]
        %v2350 = vld [vmem:[%s7 + $0x98] sm:$0xf]
        %v2351 = vld [vmem:[%s7 + $0x9c] sm:$0xf]
        %v2352 = vld [vmem:[%s7 + $0xa0] sm:$0xf]
        %v2353 = vld [vmem:[%s7 + $0xa4] sm:$0xf]
        %v2354 = vld [vmem:[%s7 + $0xa8] sm:$0xf]
        %v2355 = vld [vmem:[%s7 + $0xac] sm:$0xf]
        %v2356 = vld [vmem:[%s7 + $0xb0] sm:$0xf]
        %v2357 = vld [vmem:[%s7 + $0xb4] sm:$0xf]
        %v2358 = vld [vmem:[%s7 + $0xb8] sm:$0xf]
        %v2359 = vld [vmem:[%s7 + $0xbc] sm:$0xf]
        %v2360 = vld [vmem:[%s7 + $0xc0] sm:$0xf]
        %v2361 = vld [vmem:[%s7 + $0xc4] sm:$0xf]
        %v2362 = vld [vmem:[%s7 + $0xc8] sm:$0xf]
        %v2363 = vld [vmem:[%s7 + $0xcc] sm:$0xf]
        %v2364 = vld [vmem:[%s7 + $0xd0] sm:$0xf]
        %v2365 = vld [vmem:[%s7 + $0xd4] sm:$0xf]
        %v2366 = vld [vmem:[%s7 + $0xd8] sm:$0xf]
        %v2367 = vld [vmem:[%s7 + $0xdc] sm:$0xf]
        %v2368 = vld [vmem:[%s7 + $0xe0] sm:$0xf]
        %v2369 = vld [vmem:[%s7 + $0xe4] sm:$0xf]
        %v2370 = vld [vmem:[%s7 + $0xe8] sm:$0xf]
        %v2371 = vld [vmem:[%s7 + $0xec] sm:$0xf]
        %v2372 = vld [vmem:[%s7 + $0xf0] sm:$0xf]
        %v2373 = vld [vmem:[%s7 + $0xf4] sm:$0xf]
        %v2374 = vld [vmem:[%s7 + $0xf8] sm:$0xf]
        %v2375 = vld [vmem:[%s7 + $0xfc] sm:$0xf]
        %v2376 = vld [vmem:[%s7 + $0x100] sm:$0xf]
        %v2377 = vld [vmem:[%s7 + $0x104] sm:$0xf]
        %v2378 = vld [vmem:[%s7 + $0x108] sm:$0xf]
        %v2379 = vld [vmem:[%s7 + $0x10c] sm:$0xf]
        %v2380 = vld [vmem:[%s7 + $0x110] sm:$0xf]
        %v2381 = vld [vmem:[%s7 + $0x114] sm:$0xf]
        %v2382 = vld [vmem:[%s7 + $0x118] sm:$0xf]
        %v2383 = vld [vmem:[%s7 + $0x11c] sm:$0xf]
        %v2384 = vld [vmem:[%s7 + $0x120] sm:$0xf]
        %v2385 = vld [vmem:[%s7 + $0x124] sm:$0xf]
        %v2386 = vld [vmem:[%s7 + $0x128] sm:$0xf]
        %v2387 = vld [vmem:[%s7 + $0x12c] sm:$0xf]
        %v2388 = vld [vmem:[%s7 + $0x130] sm:$0xf]
        %v2389 = vld [vmem:[%s7 + $0x134] sm:$0xf]
        %v2390 = vld [vmem:[%s7 + $0x138] sm:$0xf]
        %v2391 = vld [vmem:[%s7 + $0x13c] sm:$0xf]
        %v2392 = vld [vmem:[%s7 + $0x140] sm:$0xf]
        %v2393 = vld [vmem:[%s7 + $0x144] sm:$0xf]
        %v2394 = vld [vmem:[%s7 + $0x148] sm:$0xf]
        %v2395 = vld [vmem:[%s7 + $0x14c] sm:$0xf]
        %v2396 = vld [vmem:[%s7 + $0x150] sm:$0xf]
        %v2397 = vld [vmem:[%s7 + $0x154] sm:$0xf]
        %v2398 = vld [vmem:[%s7 + $0x158] sm:$0xf]
        %v2399 = vld [vmem:[%s7 + $0x15c] sm:$0xf]
        %v2400 = vld [vmem:[%s7 + $0x160] sm:$0xf]
        %v2401 = vld [vmem:[%s7 + $0x164] sm:$0xf]
        %v2402 = vld [vmem:[%s7 + $0x168] sm:$0xf]
        %v2403 = vld [vmem:[%s7 + $0x16c] sm:$0xf]
        %v2404 = vld [vmem:[%s7 + $0x170] sm:$0xf]
        %v2405 = vld [vmem:[%s7 + $0x174] sm:$0xf]
        %v2406 = vld [vmem:[%s7 + $0x178] sm:$0xf]
        %v2407 = vld [vmem:[%s7 + $0x17c] sm:$0xf]
        %v2408 = vld [vmem:[%s7 + $0x180] sm:$0xf]
        %v2409 = vld [vmem:[%s7 + $0x184] sm:$0xf]
        %v2410 = vld [vmem:[%s7 + $0x188] sm:$0xf]
        %v2411 = vld [vmem:[%s7 + $0x18c] sm:$0xf]
        %v2412 = vld [vmem:[%s7 + $0x190] sm:$0xf]
        %v2413 = vld [vmem:[%s7 + $0x194] sm:$0xf]
        %v2414 = vld [vmem:[%s7 + $0x198] sm:$0xf]
        %v2415 = vld [vmem:[%s7 + $0x19c] sm:$0xf]
        %v2416 = vld [vmem:[%s7 + $0x1a0] sm:$0xf]
        %v2417 = vld [vmem:[%s7 + $0x1a4] sm:$0xf]
        %v2418 = vld [vmem:[%s7 + $0x1a8] sm:$0xf]
        %v2419 = vld [vmem:[%s7 + $0x1ac] sm:$0xf]
        %v2420 = vld [vmem:[%s7 + $0x1b0] sm:$0xf]
        %v2421 = vld [vmem:[%s7 + $0x1b4] sm:$0xf]
        %v2422 = vld [vmem:[%s7 + $0x1b8] sm:$0xf]
        %v2423 = vld [vmem:[%s7 + $0x1bc] sm:$0xf]
        %v2424 = vld [vmem:[%s7 + $0x1c0] sm:$0xf]
        %v2425 = vld [vmem:[%s7 + $0x1c4] sm:$0xf]
        %v2426 = vld [vmem:[%s7 + $0x1c8] sm:$0xf]
        %v2427 = vld [vmem:[%s7 + $0x1cc] sm:$0xf]
        %v2428 = vld [vmem:[%s7 + $0x1d0] sm:$0xf]
        %v2429 = vld [vmem:[%s7 + $0x1d4] sm:$0xf]
        %v2430 = vld [vmem:[%s7 + $0x1d8] sm:$0xf]
        %v2431 = vld [vmem:[%s7 + $0x1dc] sm:$0xf]
        %v2432 = vld [vmem:[%s7 + $0x1e0] sm:$0xf]
        %v2433 = vld [vmem:[%s7 + $0x1e4] sm:$0xf]
        %v2434 = vld [vmem:[%s7 + $0x1e8] sm:$0xf]
        %v2435 = vld [vmem:[%s7 + $0x1ec] sm:$0xf]
        %v2436 = vld [vmem:[%s7 + $0x1f0] sm:$0xf]
        %v2437 = vld [vmem:[%s7 + $0x1f4] sm:$0xf]
        %v2438 = vld [vmem:[%s7 + $0x1f8] sm:$0xf]
        %v2439 = vld [vmem:[%s7 + $0x1fc] sm:$0xf]
        %v2440 = vld [vmem:[%s7 + $0x200] sm:$0xf]
        %v2441 = vld [vmem:[%s7 + $0x204] sm:$0xf]
        %v2442 = vld [vmem:[%s7 + $0x208] sm:$0xf]
        %v2443 = vld [vmem:[%s7 + $0x20c] sm:$0xf]
        %v2444 = vld [vmem:[%s7 + $0x210] sm:$0xf]
        %v2445 = vld [vmem:[%s7 + $0x214] sm:$0xf]
        %v2446 = vld [vmem:[%s7 + $0x218] sm:$0xf]
        %v2447 = vld [vmem:[%s7 + $0x21c] sm:$0xf]
        %v2448 = vld [vmem:[%s7 + $0x220] sm:$0xf]
        %v2449 = vld [vmem:[%s7 + $0x224] sm:$0xf]
        %v2450 = vld [vmem:[%s7 + $0x228] sm:$0xf]
        %v2451 = vld [vmem:[%s7 + $0x22c] sm:$0xf]
        %v2452 = vld [vmem:[%s7 + $0x230] sm:$0xf]
        %v2453 = vld [vmem:[%s7 + $0x234] sm:$0xf]
        %v2454 = vld [vmem:[%s7 + $0x238] sm:$0xf]
        %v2455 = vld [vmem:[%s7 + $0x23c] sm:$0xf]
        %v2456 = vld [vmem:[%s7 + $0x240] sm:$0xf]
        %v2457 = vld [vmem:[%s7 + $0x244] sm:$0xf]
        %v2458 = vld [vmem:[%s7 + $0x248] sm:$0xf]
        %v2459 = vld [vmem:[%s7 + $0x24c] sm:$0xf]
        %v2460 = vld [vmem:[%s7 + $0x250] sm:$0xf]
        %v2461 = vld [vmem:[%s7 + $0x254] sm:$0xf]
        %v2462 = vld [vmem:[%s7 + $0x258] sm:$0xf]
        %v2463 = vld [vmem:[%s7 + $0x25c] sm:$0xf]
        %v2464 = vld [vmem:[%s7 + $0x260] sm:$0xf]
        %v2465 = vld [vmem:[%s7 + $0x264] sm:$0xf]
        %v2466 = vld [vmem:[%s7 + $0x268] sm:$0xf]
        %v2467 = vld [vmem:[%s7 + $0x26c] sm:$0xf]
        %v2468 = vld [vmem:[%s7 + $0x270] sm:$0xf]
        %v2469 = vld [vmem:[%s7 + $0x274] sm:$0xf]
        %v2470 = vld [vmem:[%s7 + $0x278] sm:$0xf]
        %v2471 = vld [vmem:[%s7 + $0x27c] sm:$0xf]
        %v2472 = vld [vmem:[%s7 + $0x280] sm:$0xf]
        %v2473 = vld [vmem:[%s7 + $0x284] sm:$0xf]
        %v2474 = vld [vmem:[%s7 + $0x288] sm:$0xf]
        %v2475 = vld [vmem:[%s7 + $0x28c] sm:$0xf]
        %v2476 = vld [vmem:[%s7 + $0x290] sm:$0xf]
        %v2477 = vld [vmem:[%s7 + $0x294] sm:$0xf]
        %v2478 = vld [vmem:[%s7 + $0x298] sm:$0xf]
        %v2479 = vld [vmem:[%s7 + $0x29c] sm:$0xf]
        %v2480 = vld [vmem:[%s7 + $0x2a0] sm:$0xf]
        %v2481 = vld [vmem:[%s7 + $0x2a4] sm:$0xf]
        %v2482 = vld [vmem:[%s7 + $0x2a8] sm:$0xf]
        %v2483 = vld [vmem:[%s7 + $0x2ac] sm:$0xf]
        %v2484 = vld [vmem:[%s7 + $0x2b0] sm:$0xf]
        %v2485 = vld [vmem:[%s7 + $0x2b4] sm:$0xf]
        %v2486 = vld [vmem:[%s7 + $0x2b8] sm:$0xf]
        %v2487 = vld [vmem:[%s7 + $0x2bc] sm:$0xf]
        %v2488 = vld [vmem:[%s7 + $0x2c0] sm:$0xf]
        %v2489 = vld [vmem:[%s7 + $0x2c4] sm:$0xf]
        %v2490 = vld [vmem:[%s7 + $0x2c8] sm:$0xf]
        %v2491 = vld [vmem:[%s7 + $0x2cc] sm:$0xf]
        %v2492 = vld [vmem:[%s7 + $0x2d0] sm:$0xf]
        %v2493 = vld [vmem:[%s7 + $0x2d4] sm:$0xf]
        %v2494 = vld [vmem:[%s7 + $0x2d8] sm:$0xf]
        %v2495 = vld [vmem:[%s7 + $0x2dc] sm:$0xf]
        %v2496 = vld [vmem:[%s7 + $0x2e0] sm:$0xf]
        %v2497 = vld [vmem:[%s7 + $0x2e4] sm:$0xf]
        %v2498 = vld [vmem:[%s7 + $0x2e8] sm:$0xf]
        %v2499 = vld [vmem:[%s7 + $0x2ec] sm:$0xf]
        %v2500 = vld [vmem:[%s7 + $0x2f0] sm:$0xf]
        %v2501 = vld [vmem:[%s7 + $0x2f4] sm:$0xf]
        %v2502 = vld [vmem:[%s7 + $0x2f8] sm:$0xf]
        %v2503 = vld [vmem:[%s7 + $0x2fc] sm:$0xf]
        %v2504 = vld [vmem:[%s7 + $0x300] sm:$0xf]
        %v2505 = vld [vmem:[%s7 + $0x304] sm:$0xf]
        %v2506 = vld [vmem:[%s7 + $0x308] sm:$0xf]
        %v2507 = vld [vmem:[%s7 + $0x30c] sm:$0xf]
        %v2508 = vld [vmem:[%s7 + $0x310] sm:$0xf]
        %v2509 = vld [vmem:[%s7 + $0x314] sm:$0xf]
        %v2510 = vld [vmem:[%s7 + $0x318] sm:$0xf]
        %v2511 = vld [vmem:[%s7 + $0x31c] sm:$0xf]
        %v2512 = vld [vmem:[%s7 + $0x320] sm:$0xf]
        %v2513 = vld [vmem:[%s7 + $0x324] sm:$0xf]
        %v2514 = vld [vmem:[%s7 + $0x328] sm:$0xf]
        %v2515 = vld [vmem:[%s7 + $0x32c] sm:$0xf]
        %v2516 = vld [vmem:[%s7 + $0x330] sm:$0xf]
        %v2517 = vld [vmem:[%s7 + $0x334] sm:$0xf]
        %v2518 = vld [vmem:[%s7 + $0x338] sm:$0xf]
        %v2519 = vld [vmem:[%s7 + $0x33c] sm:$0xf]
        %v2520 = vld [vmem:[%s7 + $0x340] sm:$0xf]
        %v2521 = vld [vmem:[%s7 + $0x344] sm:$0xf]
        %v2522 = vld [vmem:[%s7 + $0x348] sm:$0xf]
        %v2523 = vld [vmem:[%s7 + $0x34c] sm:$0xf]
        %v2524 = vld [vmem:[%s7 + $0x350] sm:$0xf]
        %v2525 = vld [vmem:[%s7 + $0x354] sm:$0xf]
        %v2526 = vld [vmem:[%s7 + $0x358] sm:$0xf]
        %v2527 = vld [vmem:[%s7 + $0x35c] sm:$0xf]
        %v2528 = vld [vmem:[%s7 + $0x360] sm:$0xf]
        %v2529 = vld [vmem:[%s7 + $0x364] sm:$0xf]
        %v2530 = vld [vmem:[%s7 + $0x368] sm:$0xf]
        %v2531 = vld [vmem:[%s7 + $0x36c] sm:$0xf]
        %v2532 = vld [vmem:[%s7 + $0x370] sm:$0xf]
        %v2533 = vld [vmem:[%s7 + $0x374] sm:$0xf]
        %v2534 = vld [vmem:[%s7 + $0x378] sm:$0xf]
        %v2535 = vld [vmem:[%s7 + $0x37c] sm:$0xf]
        %v2536 = vld [vmem:[%s7 + $0x380] sm:$0xf]
        %v2537 = vld [vmem:[%s7 + $0x384] sm:$0xf]
        %v2538 = vld [vmem:[%s7 + $0x388] sm:$0xf]
        %v2539 = vld [vmem:[%s7 + $0x38c] sm:$0xf]
        %v2540 = vld [vmem:[%s7 + $0x390] sm:$0xf]
        %v2541 = vld [vmem:[%s7 + $0x394] sm:$0xf]
        %v2542 = vld [vmem:[%s7 + $0x398] sm:$0xf]
        %v2543 = vld [vmem:[%s7 + $0x39c] sm:$0xf]
        %v2544 = vld [vmem:[%s7 + $0x3a0] sm:$0xf]
        %v2545 = vld [vmem:[%s7 + $0x3a4] sm:$0xf]
        %v2546 = vld [vmem:[%s7 + $0x3a8] sm:$0xf]
        %v2547 = vld [vmem:[%s7 + $0x3ac] sm:$0xf]
        %v2548 = vld [vmem:[%s7 + $0x3b0] sm:$0xf]
        %v2549 = vld [vmem:[%s7 + $0x3b4] sm:$0xf]
        %v2550 = vld [vmem:[%s7 + $0x3b8] sm:$0xf]
        %v2551 = vld [vmem:[%s7 + $0x3bc] sm:$0xf]
        %v2552 = vld [vmem:[%s7 + $0x3c0] sm:$0xf]
        %v2553 = vld [vmem:[%s7 + $0x3c4] sm:$0xf]
        %v2554 = vld [vmem:[%s7 + $0x3c8] sm:$0xf]
        %v2555 = vld [vmem:[%s7 + $0x3cc] sm:$0xf]
        %v2556 = vld [vmem:[%s7 + $0x3d0] sm:$0xf]
        %v2557 = vld [vmem:[%s7 + $0x3d4] sm:$0xf]
        %v2558 = vld [vmem:[%s7 + $0x3d8] sm:$0xf]
        %v2559 = vld [vmem:[%s7 + $0x3dc] sm:$0xf]
        %v2560 = vld [vmem:[%s7 + $0x3e0] sm:$0xf]
        %v2561 = vld [vmem:[%s7 + $0x3e4] sm:$0xf]
        %v2562 = vld [vmem:[%s7 + $0x3e8] sm:$0xf]
        %v2563 = vld [vmem:[%s7 + $0x3ec] sm:$0xf]
        %v2564 = vld [vmem:[%s7 + $0x3f0] sm:$0xf]
        %v2565 = vld [vmem:[%s7 + $0x3f4] sm:$0xf]
        %v2566 = vld [vmem:[%s7 + $0x3f8] sm:$0xf]
        %v2567 = vld [vmem:[%s7 + $0x3fc] sm:$0xf]
        %v2568 = vlaneseq
        %v2569 = vshrl.u32 %v2568, 7
        %v2570 = vsub.s32 5, %v2569
        %v2571 = vrot.slane %v483, %v2570
        %v2828 = vunpack.c.l.b16 %v2312
        %v2829 = vunpack.c.l.b16 %v2313
        %v2830 = vunpack.c.l.b16 %v2314
        %v2831 = vunpack.c.l.b16 %v2315
        %v2832 = vunpack.c.l.b16 %v2316
        %v2833 = vunpack.c.l.b16 %v2317
        %v2834 = vunpack.c.l.b16 %v2318
        %v2835 = vunpack.c.l.b16 %v2319
        %v2836 = vunpack.c.l.b16 %v2320
        %v2837 = vunpack.c.l.b16 %v2321
        %v2838 = vunpack.c.l.b16 %v2322
        %v2839 = vunpack.c.l.b16 %v2323
        %v2840 = vunpack.c.l.b16 %v2324
        %v2841 = vunpack.c.l.b16 %v2325
        %v2842 = vunpack.c.l.b16 %v2326
        %v2843 = vunpack.c.l.b16 %v2327
        %v2844 = vunpack.c.l.b16 %v2328
        %v2845 = vunpack.c.l.b16 %v2329
        %v2846 = vunpack.c.l.b16 %v2330
        %v2847 = vunpack.c.l.b16 %v2331
        %v2848 = vunpack.c.l.b16 %v2332
        %v2849 = vunpack.c.l.b16 %v2333
        %v2850 = vunpack.c.l.b16 %v2334
        %v2851 = vunpack.c.l.b16 %v2335
        %v2852 = vunpack.c.l.b16 %v2336
        %v2853 = vunpack.c.l.b16 %v2337
        %v2854 = vunpack.c.l.b16 %v2338
        %v2855 = vunpack.c.l.b16 %v2339
        %v2856 = vunpack.c.l.b16 %v2340
        %v2857 = vunpack.c.l.b16 %v2341
        %v2858 = vunpack.c.l.b16 %v2342
        %v2859 = vunpack.c.l.b16 %v2343
        %v2860 = vunpack.c.l.b16 %v2344
        %v2861 = vunpack.c.l.b16 %v2345
        %v2862 = vunpack.c.l.b16 %v2346
        %v2863 = vunpack.c.l.b16 %v2347
        %v2864 = vunpack.c.l.b16 %v2348
        %v2865 = vunpack.c.l.b16 %v2349
        %v2866 = vunpack.c.l.b16 %v2350
        %v2867 = vunpack.c.l.b16 %v2351
        %v2868 = vunpack.c.l.b16 %v2352
        %v2869 = vunpack.c.l.b16 %v2353
        %v2870 = vunpack.c.l.b16 %v2354
        %v2871 = vunpack.c.l.b16 %v2355
        %v2872 = vunpack.c.l.b16 %v2356
        %v2873 = vunpack.c.l.b16 %v2357
        %v2874 = vunpack.c.l.b16 %v2358
        %v2875 = vunpack.c.l.b16 %v2359
        %v2876 = vunpack.c.l.b16 %v2360
        %v2877 = vunpack.c.l.b16 %v2361
        %v2878 = vunpack.c.l.b16 %v2362
        %v2879 = vunpack.c.l.b16 %v2363
        %v2880 = vunpack.c.l.b16 %v2364
        %v2881 = vunpack.c.l.b16 %v2365
        %v2882 = vunpack.c.l.b16 %v2366
        %v2883 = vunpack.c.l.b16 %v2367
        %v2884 = vunpack.c.l.b16 %v2368
        %v2885 = vunpack.c.l.b16 %v2369
        %v2886 = vunpack.c.l.b16 %v2370
        %v2887 = vunpack.c.l.b16 %v2371
        %v2888 = vunpack.c.l.b16 %v2372
        %v2889 = vunpack.c.l.b16 %v2373
        %v2890 = vunpack.c.l.b16 %v2374
        %v2891 = vunpack.c.l.b16 %v2375
        %v2892 = vunpack.c.l.b16 %v2376
        %v2893 = vunpack.c.l.b16 %v2377
        %v2894 = vunpack.c.l.b16 %v2378
        %v2895 = vunpack.c.l.b16 %v2379
        %v2896 = vunpack.c.l.b16 %v2380
        %v2897 = vunpack.c.l.b16 %v2381
        %v2898 = vunpack.c.l.b16 %v2382
        %v2899 = vunpack.c.l.b16 %v2383
        %v2900 = vunpack.c.l.b16 %v2384
        %v2901 = vunpack.c.l.b16 %v2385
        %v2902 = vunpack.c.l.b16 %v2386
        %v2903 = vunpack.c.l.b16 %v2387
        %v2904 = vunpack.c.l.b16 %v2388
        %v2905 = vunpack.c.l.b16 %v2389
        %v2906 = vunpack.c.l.b16 %v2390
        %v2907 = vunpack.c.l.b16 %v2391
        %v2908 = vunpack.c.l.b16 %v2392
        %v2909 = vunpack.c.l.b16 %v2393
        %v2910 = vunpack.c.l.b16 %v2394
        %v2911 = vunpack.c.l.b16 %v2395
        %v2912 = vunpack.c.l.b16 %v2396
        %v2913 = vunpack.c.l.b16 %v2397
        %v2914 = vunpack.c.l.b16 %v2398
        %v2915 = vunpack.c.l.b16 %v2399
        %v2916 = vunpack.c.l.b16 %v2400
        %v2917 = vunpack.c.l.b16 %v2401
        %v2918 = vunpack.c.l.b16 %v2402
        %v2919 = vunpack.c.l.b16 %v2403
        %v2920 = vunpack.c.l.b16 %v2404
        %v2921 = vunpack.c.l.b16 %v2405
        %v2922 = vunpack.c.l.b16 %v2406
        %v2923 = vunpack.c.l.b16 %v2407
        %v2924 = vunpack.c.l.b16 %v2408
        %v2925 = vunpack.c.l.b16 %v2409
        %v2926 = vunpack.c.l.b16 %v2410
        %v2927 = vunpack.c.l.b16 %v2411
        %v2928 = vunpack.c.l.b16 %v2412
        %v2929 = vunpack.c.l.b16 %v2413
        %v2930 = vunpack.c.l.b16 %v2414
        %v2931 = vunpack.c.l.b16 %v2415
        %v2932 = vunpack.c.l.b16 %v2416
        %v2933 = vunpack.c.l.b16 %v2417
        %v2934 = vunpack.c.l.b16 %v2418
        %v2935 = vunpack.c.l.b16 %v2419
        %v2936 = vunpack.c.l.b16 %v2420
        %v2937 = vunpack.c.l.b16 %v2421
        %v2938 = vunpack.c.l.b16 %v2422
        %v2939 = vunpack.c.l.b16 %v2423
        %v2940 = vunpack.c.l.b16 %v2424
        %v2941 = vunpack.c.l.b16 %v2425
        %v2942 = vunpack.c.l.b16 %v2426
        %v2943 = vunpack.c.l.b16 %v2427
        %v2944 = vunpack.c.l.b16 %v2428
        %v2945 = vunpack.c.l.b16 %v2429
        %v2946 = vunpack.c.l.b16 %v2430
        %v2947 = vunpack.c.l.b16 %v2431
        %v2948 = vunpack.c.l.b16 %v2432
        %v2949 = vunpack.c.l.b16 %v2433
        %v2950 = vunpack.c.l.b16 %v2434
        %v2951 = vunpack.c.l.b16 %v2435
        %v2952 = vunpack.c.l.b16 %v2436
        %v2953 = vunpack.c.l.b16 %v2437
        %v2954 = vunpack.c.l.b16 %v2438
        %v2955 = vunpack.c.l.b16 %v2439
        %v2956 = vunpack.c.l.b16 %v2440
        %v2957 = vunpack.c.l.b16 %v2441
        %v2958 = vunpack.c.l.b16 %v2442
        %v2959 = vunpack.c.l.b16 %v2443
        %v2960 = vunpack.c.l.b16 %v2444
        %v2961 = vunpack.c.l.b16 %v2445
        %v2962 = vunpack.c.l.b16 %v2446
        %v2963 = vunpack.c.l.b16 %v2447
        %v2964 = vunpack.c.l.b16 %v2448
        %v2965 = vunpack.c.l.b16 %v2449
        %v2966 = vunpack.c.l.b16 %v2450
        %v2967 = vunpack.c.l.b16 %v2451
        %v2968 = vunpack.c.l.b16 %v2452
        %v2969 = vunpack.c.l.b16 %v2453
        %v2970 = vunpack.c.l.b16 %v2454
        %v2971 = vunpack.c.l.b16 %v2455
        %v2972 = vunpack.c.l.b16 %v2456
        %v2973 = vunpack.c.l.b16 %v2457
        %v2974 = vunpack.c.l.b16 %v2458
        %v2975 = vunpack.c.l.b16 %v2459
        %v2976 = vunpack.c.l.b16 %v2460
        %v2977 = vunpack.c.l.b16 %v2461
        %v2978 = vunpack.c.l.b16 %v2462
        %v2979 = vunpack.c.l.b16 %v2463
        %v2980 = vunpack.c.l.b16 %v2464
        %v2981 = vunpack.c.l.b16 %v2465
        %v2982 = vunpack.c.l.b16 %v2466
        %v2983 = vunpack.c.l.b16 %v2467
        %v2984 = vunpack.c.l.b16 %v2468
        %v2985 = vunpack.c.l.b16 %v2469
        %v2986 = vunpack.c.l.b16 %v2470
        %v2987 = vunpack.c.l.b16 %v2471
        %v2988 = vunpack.c.l.b16 %v2472
        %v2989 = vunpack.c.l.b16 %v2473
        %v2990 = vunpack.c.l.b16 %v2474
        %v2991 = vunpack.c.l.b16 %v2475
        %v2992 = vunpack.c.l.b16 %v2476
        %v2993 = vunpack.c.l.b16 %v2477
        %v2994 = vunpack.c.l.b16 %v2478
        %v2995 = vunpack.c.l.b16 %v2479
        %v2996 = vunpack.c.l.b16 %v2480
        %v2997 = vunpack.c.l.b16 %v2481
        %v2998 = vunpack.c.l.b16 %v2482
        %v2999 = vunpack.c.l.b16 %v2483
        %v3000 = vunpack.c.l.b16 %v2484
        %v3001 = vunpack.c.l.b16 %v2485
        %v3002 = vunpack.c.l.b16 %v2486
        %v3003 = vunpack.c.l.b16 %v2487
        %v3004 = vunpack.c.l.b16 %v2488
        %v3005 = vunpack.c.l.b16 %v2489
        %v3006 = vunpack.c.l.b16 %v2490
        %v3007 = vunpack.c.l.b16 %v2491
        %v3008 = vunpack.c.l.b16 %v2492
        %v3009 = vunpack.c.l.b16 %v2493
        %v3010 = vunpack.c.l.b16 %v2494
        %v3011 = vunpack.c.l.b16 %v2495
        %v3012 = vunpack.c.l.b16 %v2496
        %v3013 = vunpack.c.l.b16 %v2497
        %v3014 = vunpack.c.l.b16 %v2498
        %v3015 = vunpack.c.l.b16 %v2499
        %v3016 = vunpack.c.l.b16 %v2500
        %v3017 = vunpack.c.l.b16 %v2501
        %v3018 = vunpack.c.l.b16 %v2502
        %v3019 = vunpack.c.l.b16 %v2503
        %v3020 = vunpack.c.l.b16 %v2504
        %v3021 = vunpack.c.l.b16 %v2505
        %v3022 = vunpack.c.l.b16 %v2506
        %v3023 = vunpack.c.l.b16 %v2507
        %v3024 = vunpack.c.l.b16 %v2508
        %v3025 = vunpack.c.l.b16 %v2509
        %v3026 = vunpack.c.l.b16 %v2510
        %v3027 = vunpack.c.l.b16 %v2511
        %v3028 = vunpack.c.l.b16 %v2512
        %v3029 = vunpack.c.l.b16 %v2513
        %v3030 = vunpack.c.l.b16 %v2514
        %v3031 = vunpack.c.l.b16 %v2515
        %v3032 = vunpack.c.l.b16 %v2516
        %v3033 = vunpack.c.l.b16 %v2517
        %v3034 = vunpack.c.l.b16 %v2518
        %v3035 = vunpack.c.l.b16 %v2519
        %v3036 = vunpack.c.l.b16 %v2520
        %v3037 = vunpack.c.l.b16 %v2521
        %v3038 = vunpack.c.l.b16 %v2522
        %v3039 = vunpack.c.l.b16 %v2523
        %v3040 = vunpack.c.l.b16 %v2524
        %v3041 = vunpack.c.l.b16 %v2525
        %v3042 = vunpack.c.l.b16 %v2526
        %v3043 = vunpack.c.l.b16 %v2527
        %v3044 = vunpack.c.l.b16 %v2528
        %v3045 = vunpack.c.l.b16 %v2529
        %v3046 = vunpack.c.l.b16 %v2530
        %v3047 = vunpack.c.l.b16 %v2531
        %v3048 = vunpack.c.l.b16 %v2532
        %v3049 = vunpack.c.l.b16 %v2533
        %v3050 = vunpack.c.l.b16 %v2534
        %v3051 = vunpack.c.l.b16 %v2535
        %v3052 = vunpack.c.l.b16 %v2536
        %v3053 = vunpack.c.l.b16 %v2537
        %v3054 = vunpack.c.l.b16 %v2538
        %v3055 = vunpack.c.l.b16 %v2539
        %v3056 = vunpack.c.l.b16 %v2540
        %v3057 = vunpack.c.l.b16 %v2541
        %v3058 = vunpack.c.l.b16 %v2542
        %v3059 = vunpack.c.l.b16 %v2543
        %v3060 = vunpack.c.l.b16 %v2544
        %v3061 = vunpack.c.l.b16 %v2545
        %v3062 = vunpack.c.l.b16 %v2546
        %v3063 = vunpack.c.l.b16 %v2547
        %v3064 = vunpack.c.l.b16 %v2548
        %v3065 = vunpack.c.l.b16 %v2549
        %v3066 = vunpack.c.l.b16 %v2550
        %v3067 = vunpack.c.l.b16 %v2551
        %v3068 = vunpack.c.l.b16 %v2552
        %v3069 = vunpack.c.l.b16 %v2553
        %v3070 = vunpack.c.l.b16 %v2554
        %v3071 = vunpack.c.l.b16 %v2555
        %v3072 = vunpack.c.l.b16 %v2556
        %v3073 = vunpack.c.l.b16 %v2557
        %v3074 = vunpack.c.l.b16 %v2558
        %v3075 = vunpack.c.l.b16 %v2559
        %v3076 = vunpack.c.l.b16 %v2560
        %v3077 = vunpack.c.l.b16 %v2561
        %v3078 = vunpack.c.l.b16 %v2562
        %v3079 = vunpack.c.l.b16 %v2563
        %v3080 = vunpack.c.l.b16 %v2564
        %v3081 = vunpack.c.l.b16 %v2565
        %v3082 = vunpack.c.l.b16 %v2566
        %v3083 = vunpack.c.l.b16 %v2567
        %v3084 = vpack.c.b16 %v2829, %v2828
        %v3085 = vpack.c.b16 %v2831, %v2830
        %v3086 = vpack.c.b16 %v2833, %v2832
        %v3087 = vpack.c.b16 %v2835, %v2834
        %v3088 = vpack.c.b16 %v2837, %v2836
        %v3089 = vpack.c.b16 %v2839, %v2838
        %v3090 = vpack.c.b16 %v2841, %v2840
        %v3091 = vpack.c.b16 %v2843, %v2842
        %v3092 = vpack.c.b16 %v2845, %v2844
        %v3093 = vpack.c.b16 %v2847, %v2846
        %v3094 = vpack.c.b16 %v2849, %v2848
        %v3095 = vpack.c.b16 %v2851, %v2850
        %v3096 = vpack.c.b16 %v2853, %v2852
        %v3097 = vpack.c.b16 %v2855, %v2854
        %v3098 = vpack.c.b16 %v2857, %v2856
        %v3099 = vpack.c.b16 %v2859, %v2858
        %v3100 = vpack.c.b16 %v2861, %v2860
        %v3101 = vpack.c.b16 %v2863, %v2862
        %v3102 = vpack.c.b16 %v2865, %v2864
        %v3103 = vpack.c.b16 %v2867, %v2866
        %v3104 = vpack.c.b16 %v2869, %v2868
        %v3105 = vpack.c.b16 %v2871, %v2870
        %v3106 = vpack.c.b16 %v2873, %v2872
        %v3107 = vpack.c.b16 %v2875, %v2874
        %v3108 = vpack.c.b16 %v2877, %v2876
        %v3109 = vpack.c.b16 %v2879, %v2878
        %v3110 = vpack.c.b16 %v2881, %v2880
        %v3111 = vpack.c.b16 %v2883, %v2882
        %v3112 = vpack.c.b16 %v2885, %v2884
        %v3113 = vpack.c.b16 %v2887, %v2886
        %v3114 = vpack.c.b16 %v2889, %v2888
        %v3115 = vpack.c.b16 %v2891, %v2890
        %v3116 = vpack.c.b16 %v2893, %v2892
        %v3117 = vpack.c.b16 %v2895, %v2894
        %v3118 = vpack.c.b16 %v2897, %v2896
        %v3119 = vpack.c.b16 %v2899, %v2898
        %v3120 = vpack.c.b16 %v2901, %v2900
        %v3121 = vpack.c.b16 %v2903, %v2902
        %v3122 = vpack.c.b16 %v2905, %v2904
        %v3123 = vpack.c.b16 %v2907, %v2906
        %v3124 = vpack.c.b16 %v2909, %v2908
        %v3125 = vpack.c.b16 %v2911, %v2910
        %v3126 = vpack.c.b16 %v2913, %v2912
        %v3127 = vpack.c.b16 %v2915, %v2914
        %v3128 = vpack.c.b16 %v2917, %v2916
        %v3129 = vpack.c.b16 %v2919, %v2918
        %v3130 = vpack.c.b16 %v2921, %v2920
        %v3131 = vpack.c.b16 %v2923, %v2922
        %v3132 = vpack.c.b16 %v2925, %v2924
        %v3133 = vpack.c.b16 %v2927, %v2926
        %v3134 = vpack.c.b16 %v2929, %v2928
        %v3135 = vpack.c.b16 %v2931, %v2930
        %v3136 = vpack.c.b16 %v2933, %v2932
        %v3137 = vpack.c.b16 %v2935, %v2934
        %v3138 = vpack.c.b16 %v2937, %v2936
        %v3139 = vpack.c.b16 %v2939, %v2938
        %v3140 = vpack.c.b16 %v2941, %v2940
        %v3141 = vpack.c.b16 %v2943, %v2942
        %v3142 = vpack.c.b16 %v2945, %v2944
        %v3143 = vpack.c.b16 %v2947, %v2946
        %v3144 = vpack.c.b16 %v2949, %v2948
        %v3145 = vpack.c.b16 %v2951, %v2950
        %v3146 = vpack.c.b16 %v2953, %v2952
        %v3147 = vpack.c.b16 %v2955, %v2954
        %v3148 = vpack.c.b16 %v2957, %v2956
        %v3149 = vpack.c.b16 %v2959, %v2958
        %v3150 = vpack.c.b16 %v2961, %v2960
        %v3151 = vpack.c.b16 %v2963, %v2962
        %v3152 = vpack.c.b16 %v2965, %v2964
        %v3153 = vpack.c.b16 %v2967, %v2966
        %v3154 = vpack.c.b16 %v2969, %v2968
        %v3155 = vpack.c.b16 %v2971, %v2970
        %v3156 = vpack.c.b16 %v2973, %v2972
        %v3157 = vpack.c.b16 %v2975, %v2974
        %v3158 = vpack.c.b16 %v2977, %v2976
        %v3159 = vpack.c.b16 %v2979, %v2978
        %v3160 = vpack.c.b16 %v2981, %v2980
        %v3161 = vpack.c.b16 %v2983, %v2982
        %v3162 = vpack.c.b16 %v2985, %v2984
        %v3163 = vpack.c.b16 %v2987, %v2986
        %v3164 = vpack.c.b16 %v2989, %v2988
        %v3165 = vpack.c.b16 %v2991, %v2990
        %v3166 = vpack.c.b16 %v2993, %v2992
        %v3167 = vpack.c.b16 %v2995, %v2994
        %v3168 = vpack.c.b16 %v2997, %v2996
        %v3169 = vpack.c.b16 %v2999, %v2998
        %v3170 = vpack.c.b16 %v3001, %v3000
        %v3171 = vpack.c.b16 %v3003, %v3002
        %v3172 = vpack.c.b16 %v3005, %v3004
        %v3173 = vpack.c.b16 %v3007, %v3006
        %v3174 = vpack.c.b16 %v3009, %v3008
        %v3175 = vpack.c.b16 %v3011, %v3010
        %v3176 = vpack.c.b16 %v3013, %v3012
        %v3177 = vpack.c.b16 %v3015, %v3014
        %v3178 = vpack.c.b16 %v3017, %v3016
        %v3179 = vpack.c.b16 %v3019, %v3018
        %v3180 = vpack.c.b16 %v3021, %v3020
        %v3181 = vpack.c.b16 %v3023, %v3022
        %v3182 = vpack.c.b16 %v3025, %v3024
        %v3183 = vpack.c.b16 %v3027, %v3026
        %v3184 = vpack.c.b16 %v3029, %v3028
        %v3185 = vpack.c.b16 %v3031, %v3030
        %v3186 = vpack.c.b16 %v3033, %v3032
        %v3187 = vpack.c.b16 %v3035, %v3034
        %v3188 = vpack.c.b16 %v3037, %v3036
        %v3189 = vpack.c.b16 %v3039, %v3038
        %v3190 = vpack.c.b16 %v3041, %v3040
        %v3191 = vpack.c.b16 %v3043, %v3042
        %v3192 = vpack.c.b16 %v3045, %v3044
        %v3193 = vpack.c.b16 %v3047, %v3046
        %v3194 = vpack.c.b16 %v3049, %v3048
        %v3195 = vpack.c.b16 %v3051, %v3050
        %v3196 = vpack.c.b16 %v3053, %v3052
        %v3197 = vpack.c.b16 %v3055, %v3054
        %v3198 = vpack.c.b16 %v3057, %v3056
        %v3199 = vpack.c.b16 %v3059, %v3058
        %v3200 = vpack.c.b16 %v3061, %v3060
        %v3201 = vpack.c.b16 %v3063, %v3062
        %v3202 = vpack.c.b16 %v3065, %v3064
        %v3203 = vpack.c.b16 %v3067, %v3066
        %v3204 = vpack.c.b16 %v3069, %v3068
        %v3205 = vpack.c.b16 %v3071, %v3070
        %v3206 = vpack.c.b16 %v3073, %v3072
        %v3207 = vpack.c.b16 %v3075, %v3074
        %v3208 = vpack.c.b16 %v3077, %v3076
        %v3209 = vpack.c.b16 %v3079, %v3078
        %v3210 = vpack.c.b16 %v3081, %v3080
        %v3211 = vpack.c.b16 %v3083, %v3082
        %3340 = vmatprep.subr.bf16.mxu0 0
        %3341 = vmatpush1.bf16.msra.mxu0 %v3084
        %3342 = vmatprep.subr.bf16.mxu0 0
        %3343 = vmatpush1.bf16.msra.mxu0 %v3085
        %3344 = vmatprep.subr.bf16.mxu0 0
        %3345 = vmatpush1.bf16.msra.mxu0 %v3086
        %3346 = vmatprep.subr.bf16.mxu0 0
        %3347 = vmatpush1.bf16.msra.mxu0 %v3087
        %3348 = vmatprep.subr.bf16.mxu0 0
        %3349 = vmatpush1.bf16.msra.mxu0 %v3088
        %3350 = vmatprep.subr.bf16.mxu0 0
        %3351 = vmatpush1.bf16.msra.mxu0 %v3089
        %3352 = vmatprep.subr.bf16.mxu0 0
        %3353 = vmatpush1.bf16.msra.mxu0 %v3090
        %3354 = vmatprep.subr.bf16.mxu0 0
        %3355 = vmatpush1.bf16.msra.mxu0 %v3091
        %3356 = vmatprep.subr.bf16.mxu0 0
        %3357 = vmatpush1.bf16.msra.mxu0 %v3092
        %3358 = vmatprep.subr.bf16.mxu0 0
        %3359 = vmatpush1.bf16.msra.mxu0 %v3093
        %3360 = vmatprep.subr.bf16.mxu0 0
        %3361 = vmatpush1.bf16.msra.mxu0 %v3094
        %3362 = vmatprep.subr.bf16.mxu0 0
        %3363 = vmatpush1.bf16.msra.mxu0 %v3095
        %3364 = vmatprep.subr.bf16.mxu0 0
        %3365 = vmatpush1.bf16.msra.mxu0 %v3096
        %3366 = vmatprep.subr.bf16.mxu0 0
        %3367 = vmatpush1.bf16.msra.mxu0 %v3097
        %3368 = vmatprep.subr.bf16.mxu0 0
        %3369 = vmatpush1.bf16.msra.mxu0 %v3098
        %3370 = vmatprep.subr.bf16.mxu0 0
        %3371 = vmatpush1.bf16.msra.mxu0 %v3099
        %3372 = vmatprep.mubr.bf16.mxu0 %v2297
        %3373 = vmatmul.mubr.bf16.gmra.mrb[0].mxu0 %v2296
        %v3374 = vpop.f32.mrb[0].mxu0
        %v3375 = vadd.f32 %v2571, %v3374
        %v3376 = vpop.f32.mrb[0].mxu0
        %v3377 = vpop.f32.mrb[0].mxu0
        %v3378 = vpop.f32.mrb[0].mxu0
        %3379 = vdwg.mxu0
        %3380 = vmatprep.subr.bf16.mxu0 0
        %3381 = vmatpush1.bf16.msra.mxu0 %v3100
        %3382 = vmatprep.subr.bf16.mxu0 0
        %3383 = vmatpush1.bf16.msra.mxu0 %v3101
        %3384 = vmatprep.subr.bf16.mxu0 0
        %3385 = vmatpush1.bf16.msra.mxu0 %v3102
        %3386 = vmatprep.subr.bf16.mxu0 0
        %3387 = vmatpush1.bf16.msra.mxu0 %v3103
        %3388 = vmatprep.subr.bf16.mxu0 0
        %3389 = vmatpush1.bf16.msra.mxu0 %v3104
        %3390 = vmatprep.subr.bf16.mxu0 0
        %3391 = vmatpush1.bf16.msra.mxu0 %v3105
        %3392 = vmatprep.subr.bf16.mxu0 0
        %3393 = vmatpush1.bf16.msra.mxu0 %v3106
        %3394 = vmatprep.subr.bf16.mxu0 0
        %3395 = vmatpush1.bf16.msra.mxu0 %v3107
        %3396 = vmatprep.subr.bf16.mxu0 0
        %3397 = vmatpush1.bf16.msra.mxu0 %v3108
        %3398 = vmatprep.subr.bf16.mxu0 0
        %3399 = vmatpush1.bf16.msra.mxu0 %v3109
        %3400 = vmatprep.subr.bf16.mxu0 0
        %3401 = vmatpush1.bf16.msra.mxu0 %v3110
        %3402 = vmatprep.subr.bf16.mxu0 0
        %3403 = vmatpush1.bf16.msra.mxu0 %v3111
        %3404 = vmatprep.subr.bf16.mxu0 0
        %3405 = vmatpush1.bf16.msra.mxu0 %v3112
        %3406 = vmatprep.subr.bf16.mxu0 0
        %3407 = vmatpush1.bf16.msra.mxu0 %v3113
        %3408 = vmatprep.subr.bf16.mxu0 0
        %3409 = vmatpush1.bf16.msra.mxu0 %v3114
        %3410 = vmatprep.subr.bf16.mxu0 0
        %3411 = vmatpush1.bf16.msra.mxu0 %v3115
        %3412 = vmatprep.mubr.bf16.mxu0 %v2299
        %3413 = vmatmul.mubr.bf16.gmra.mrb[0].mxu0 %v2298
        %v3414 = vpop.f32.mrb[0].mxu0
        %v3415 = vadd.f32 %v3375, %v3414
        %v3416 = vpop.f32.mrb[0].mxu0
        %v3417 = vpop.f32.mrb[0].mxu0
        %v3418 = vpop.f32.mrb[0].mxu0
        %3419 = vdwg.mxu0
        %3420 = vmatprep.subr.bf16.mxu0 0
        %3421 = vmatpush1.bf16.msra.mxu0 %v3116
        %3422 = vmatprep.subr.bf16.mxu0 0
        %3423 = vmatpush1.bf16.msra.mxu0 %v3117
        %3424 = vmatprep.subr.bf16.mxu0 0
        %3425 = vmatpush1.bf16.msra.mxu0 %v3118
        %3426 = vmatprep.subr.bf16.mxu0 0
        %3427 = vmatpush1.bf16.msra.mxu0 %v3119
        %3428 = vmatprep.subr.bf16.mxu0 0
        %3429 = vmatpush1.bf16.msra.mxu0 %v3120
        %3430 = vmatprep.subr.bf16.mxu0 0
        %3431 = vmatpush1.bf16.msra.mxu0 %v3121
        %3432 = vmatprep.subr.bf16.mxu0 0
        %3433 = vmatpush1.bf16.msra.mxu0 %v3122
        %3434 = vmatprep.subr.bf16.mxu0 0
        %3435 = vmatpush1.bf16.msra.mxu0 %v3123
        %3436 = vmatprep.subr.bf16.mxu0 0
        %3437 = vmatpush1.bf16.msra.mxu0 %v3124
        %3438 = vmatprep.subr.bf16.mxu0 0
        %3439 = vmatpush1.bf16.msra.mxu0 %v3125
        %3440 = vmatprep.subr.bf16.mxu0 0
        %3441 = vmatpush1.bf16.msra.mxu0 %v3126
        %3442 = vmatprep.subr.bf16.mxu0 0
        %3443 = vmatpush1.bf16.msra.mxu0 %v3127
        %3444 = vmatprep.subr.bf16.mxu0 0
        %3445 = vmatpush1.bf16.msra.mxu0 %v3128
        %3446 = vmatprep.subr.bf16.mxu0 0
        %3447 = vmatpush1.bf16.msra.mxu0 %v3129
        %3448 = vmatprep.subr.bf16.mxu0 0
        %3449 = vmatpush1.bf16.msra.mxu0 %v3130
        %3450 = vmatprep.subr.bf16.mxu0 0
        %3451 = vmatpush1.bf16.msra.mxu0 %v3131
        %3452 = vmatprep.mubr.bf16.mxu0 %v2301
        %3453 = vmatmul.mubr.bf16.gmra.mrb[0].mxu0 %v2300
        %v3454 = vpop.f32.mrb[0].mxu0
        %v3455 = vadd.f32 %v3415, %v3454
        %v3456 = vpop.f32.mrb[0].mxu0
        %v3457 = vpop.f32.mrb[0].mxu0
        %v3458 = vpop.f32.mrb[0].mxu0
        %3459 = vdwg.mxu0
        %3460 = vmatprep.subr.bf16.mxu0 0
        %3461 = vmatpush1.bf16.msra.mxu0 %v3132
        %3462 = vmatprep.subr.bf16.mxu0 0
        %3463 = vmatpush1.bf16.msra.mxu0 %v3133
        %3464 = vmatprep.subr.bf16.mxu0 0
        %3465 = vmatpush1.bf16.msra.mxu0 %v3134
        %3466 = vmatprep.subr.bf16.mxu0 0
        %3467 = vmatpush1.bf16.msra.mxu0 %v3135
        %3468 = vmatprep.subr.bf16.mxu0 0
        %3469 = vmatpush1.bf16.msra.mxu0 %v3136
        %3470 = vmatprep.subr.bf16.mxu0 0
        %3471 = vmatpush1.bf16.msra.mxu0 %v3137
        %3472 = vmatprep.subr.bf16.mxu0 0
        %3473 = vmatpush1.bf16.msra.mxu0 %v3138
        %3474 = vmatprep.subr.bf16.mxu0 0
        %3475 = vmatpush1.bf16.msra.mxu0 %v3139
        %3476 = vmatprep.subr.bf16.mxu0 0
        %3477 = vmatpush1.bf16.msra.mxu0 %v3140
        %3478 = vmatprep.subr.bf16.mxu0 0
        %3479 = vmatpush1.bf16.msra.mxu0 %v3141
        %3480 = vmatprep.subr.bf16.mxu0 0
        %3481 = vmatpush1.bf16.msra.mxu0 %v3142
        %3482 = vmatprep.subr.bf16.mxu0 0
        %3483 = vmatpush1.bf16.msra.mxu0 %v3143
        %3484 = vmatprep.subr.bf16.mxu0 0
        %3485 = vmatpush1.bf16.msra.mxu0 %v3144
        %3486 = vmatprep.subr.bf16.mxu0 0
        %3487 = vmatpush1.bf16.msra.mxu0 %v3145
        %3488 = vmatprep.subr.bf16.mxu0 0
        %3489 = vmatpush1.bf16.msra.mxu0 %v3146
        %3490 = vmatprep.subr.bf16.mxu0 0
        %3491 = vmatpush1.bf16.msra.mxu0 %v3147
        %3492 = vmatprep.mubr.bf16.mxu0 %v2303
        %3493 = vmatmul.mubr.bf16.gmra.mrb[0].mxu0 %v2302
        %v3494 = vpop.f32.mrb[0].mxu0
        %v3495 = vadd.f32 %v3455, %v3494
        %v3496 = vpop.f32.mrb[0].mxu0
        %v3497 = vpop.f32.mrb[0].mxu0
        %v3498 = vpop.f32.mrb[0].mxu0
        %3499 = vdwg.mxu0
        %3500 = vmatprep.subr.bf16.mxu0 0
        %3501 = vmatpush1.bf16.msra.mxu0 %v3148
        %3502 = vmatprep.subr.bf16.mxu0 0
        %3503 = vmatpush1.bf16.msra.mxu0 %v3149
        %3504 = vmatprep.subr.bf16.mxu0 0
        %3505 = vmatpush1.bf16.msra.mxu0 %v3150
        %3506 = vmatprep.subr.bf16.mxu0 0
        %3507 = vmatpush1.bf16.msra.mxu0 %v3151
        %3508 = vmatprep.subr.bf16.mxu0 0
        %3509 = vmatpush1.bf16.msra.mxu0 %v3152
        %3510 = vmatprep.subr.bf16.mxu0 0
        %3511 = vmatpush1.bf16.msra.mxu0 %v3153
        %3512 = vmatprep.subr.bf16.mxu0 0
        %3513 = vmatpush1.bf16.msra.mxu0 %v3154
        %3514 = vmatprep.subr.bf16.mxu0 0
        %3515 = vmatpush1.bf16.msra.mxu0 %v3155
        %3516 = vmatprep.subr.bf16.mxu0 0
        %3517 = vmatpush1.bf16.msra.mxu0 %v3156
        %3518 = vmatprep.subr.bf16.mxu0 0
        %3519 = vmatpush1.bf16.msra.mxu0 %v3157
        %3520 = vmatprep.subr.bf16.mxu0 0
        %3521 = vmatpush1.bf16.msra.mxu0 %v3158
        %3522 = vmatprep.subr.bf16.mxu0 0
        %3523 = vmatpush1.bf16.msra.mxu0 %v3159
        %3524 = vmatprep.subr.bf16.mxu0 0
        %3525 = vmatpush1.bf16.msra.mxu0 %v3160
        %3526 = vmatprep.subr.bf16.mxu0 0
        %3527 = vmatpush1.bf16.msra.mxu0 %v3161
        %3528 = vmatprep.subr.bf16.mxu0 0
        %3529 = vmatpush1.bf16.msra.mxu0 %v3162
        %3530 = vmatprep.subr.bf16.mxu0 0
        %3531 = vmatpush1.bf16.msra.mxu0 %v3163
        %3532 = vmatprep.mubr.bf16.mxu0 %v2305
        %3533 = vmatmul.mubr.bf16.gmra.mrb[0].mxu0 %v2304
        %v3534 = vpop.f32.mrb[0].mxu0
        %v3535 = vadd.f32 %v3495, %v3534
        %v3536 = vpop.f32.mrb[0].mxu0
        %v3537 = vpop.f32.mrb[0].mxu0
        %v3538 = vpop.f32.mrb[0].mxu0
        %3539 = vdwg.mxu0
        %3540 = vmatprep.subr.bf16.mxu0 0
        %3541 = vmatpush1.bf16.msra.mxu0 %v3164
        %3542 = vmatprep.subr.bf16.mxu0 0
        %3543 = vmatpush1.bf16.msra.mxu0 %v3165
        %3544 = vmatprep.subr.bf16.mxu0 0
        %3545 = vmatpush1.bf16.msra.mxu0 %v3166
        %3546 = vmatprep.subr.bf16.mxu0 0
        %3547 = vmatpush1.bf16.msra.mxu0 %v3167
        %3548 = vmatprep.subr.bf16.mxu0 0
        %3549 = vmatpush1.bf16.msra.mxu0 %v3168
        %3550 = vmatprep.subr.bf16.mxu0 0
        %3551 = vmatpush1.bf16.msra.mxu0 %v3169
        %3552 = vmatprep.subr.bf16.mxu0 0
        %3553 = vmatpush1.bf16.msra.mxu0 %v3170
        %3554 = vmatprep.subr.bf16.mxu0 0
        %3555 = vmatpush1.bf16.msra.mxu0 %v3171
        %3556 = vmatprep.subr.bf16.mxu0 0
        %3557 = vmatpush1.bf16.msra.mxu0 %v3172
        %3558 = vmatprep.subr.bf16.mxu0 0
        %3559 = vmatpush1.bf16.msra.mxu0 %v3173
        %3560 = vmatprep.subr.bf16.mxu0 0
        %3561 = vmatpush1.bf16.msra.mxu0 %v3174
        %3562 = vmatprep.subr.bf16.mxu0 0
        %3563 = vmatpush1.bf16.msra.mxu0 %v3175
        %3564 = vmatprep.subr.bf16.mxu0 0
        %3565 = vmatpush1.bf16.msra.mxu0 %v3176
        %3566 = vmatprep.subr.bf16.mxu0 0
        %3567 = vmatpush1.bf16.msra.mxu0 %v3177
        %3568 = vmatprep.subr.bf16.mxu0 0
        %3569 = vmatpush1.bf16.msra.mxu0 %v3178
        %3570 = vmatprep.subr.bf16.mxu0 0
        %3571 = vmatpush1.bf16.msra.mxu0 %v3179
        %3572 = vmatprep.mubr.bf16.mxu0 %v2307
        %3573 = vmatmul.mubr.bf16.gmra.mrb[0].mxu0 %v2306
        %v3574 = vpop.f32.mrb[0].mxu0
        %v3575 = vadd.f32 %v3535, %v3574
        %v3576 = vpop.f32.mrb[0].mxu0
        %v3577 = vpop.f32.mrb[0].mxu0
        %v3578 = vpop.f32.mrb[0].mxu0
        %3579 = vdwg.mxu0
        %3580 = vmatprep.subr.bf16.mxu0 0
        %3581 = vmatpush1.bf16.msra.mxu0 %v3180
        %3582 = vmatprep.subr.bf16.mxu0 0
        %3583 = vmatpush1.bf16.msra.mxu0 %v3181
        %3584 = vmatprep.subr.bf16.mxu0 0
        %3585 = vmatpush1.bf16.msra.mxu0 %v3182
        %3586 = vmatprep.subr.bf16.mxu0 0
        %3587 = vmatpush1.bf16.msra.mxu0 %v3183
        %3588 = vmatprep.subr.bf16.mxu0 0
        %3589 = vmatpush1.bf16.msra.mxu0 %v3184
        %3590 = vmatprep.subr.bf16.mxu0 0
        %3591 = vmatpush1.bf16.msra.mxu0 %v3185
        %3592 = vmatprep.subr.bf16.mxu0 0
        %3593 = vmatpush1.bf16.msra.mxu0 %v3186
        %3594 = vmatprep.subr.bf16.mxu0 0
        %3595 = vmatpush1.bf16.msra.mxu0 %v3187
        %3596 = vmatprep.subr.bf16.mxu0 0
        %3597 = vmatpush1.bf16.msra.mxu0 %v3188
        %3598 = vmatprep.subr.bf16.mxu0 0
        %3599 = vmatpush1.bf16.msra.mxu0 %v3189
        %3600 = vmatprep.subr.bf16.mxu0 0
        %3601 = vmatpush1.bf16.msra.mxu0 %v3190
        %3602 = vmatprep.subr.bf16.mxu0 0
        %3603 = vmatpush1.bf16.msra.mxu0 %v3191
        %3604 = vmatprep.subr.bf16.mxu0 0
        %3605 = vmatpush1.bf16.msra.mxu0 %v3192
        %3606 = vmatprep.subr.bf16.mxu0 0
        %3607 = vmatpush1.bf16.msra.mxu0 %v3193
        %3608 = vmatprep.subr.bf16.mxu0 0
        %3609 = vmatpush1.bf16.msra.mxu0 %v3194
        %3610 = vmatprep.subr.bf16.mxu0 0
        %3611 = vmatpush1.bf16.msra.mxu0 %v3195
        %3612 = vmatprep.mubr.bf16.mxu0 %v2309
        %3613 = vmatmul.mubr.bf16.gmra.mrb[0].mxu0 %v2308
        %v3614 = vpop.f32.mrb[0].mxu0
        %v3615 = vadd.f32 %v3575, %v3614
        %v3616 = vpop.f32.mrb[0].mxu0
        %v3617 = vpop.f32.mrb[0].mxu0
        %v3618 = vpop.f32.mrb[0].mxu0
        %3619 = vdwg.mxu0
        %3620 = vmatprep.subr.bf16.mxu0 0
        %3621 = vmatpush1.bf16.msra.mxu0 %v3196
        %3622 = vmatprep.subr.bf16.mxu0 0
        %3623 = vmatpush1.bf16.msra.mxu0 %v3197
        %3624 = vmatprep.subr.bf16.mxu0 0
        %3625 = vmatpush1.bf16.msra.mxu0 %v3198
        %3626 = vmatprep.subr.bf16.mxu0 0
        %3627 = vmatpush1.bf16.msra.mxu0 %v3199
        %3628 = vmatprep.subr.bf16.mxu0 0
        %3629 = vmatpush1.bf16.msra.mxu0 %v3200
        %3630 = vmatprep.subr.bf16.mxu0 0
        %3631 = vmatpush1.bf16.msra.mxu0 %v3201
        %3632 = vmatprep.subr.bf16.mxu0 0
        %3633 = vmatpush1.bf16.msra.mxu0 %v3202
        %3634 = vmatprep.subr.bf16.mxu0 0
        %3635 = vmatpush1.bf16.msra.mxu0 %v3203
        %3636 = vmatprep.subr.bf16.mxu0 0
        %3637 = vmatpush1.bf16.msra.mxu0 %v3204
        %3638 = vmatprep.subr.bf16.mxu0 0
        %3639 = vmatpush1.bf16.msra.mxu0 %v3205
        %3640 = vmatprep.subr.bf16.mxu0 0
        %3641 = vmatpush1.bf16.msra.mxu0 %v3206
        %3642 = vmatprep.subr.bf16.mxu0 0
        %3643 = vmatpush1.bf16.msra.mxu0 %v3207
        %3644 = vmatprep.subr.bf16.mxu0 0
        %3645 = vmatpush1.bf16.msra.mxu0 %v3208
        %3646 = vmatprep.subr.bf16.mxu0 0
        %3647 = vmatpush1.bf16.msra.mxu0 %v3209
        %3648 = vmatprep.subr.bf16.mxu0 0
        %3649 = vmatpush1.bf16.msra.mxu0 %v3210
        %3650 = vmatprep.subr.bf16.mxu0 0
        %3651 = vmatpush1.bf16.msra.mxu0 %v3211
        %3652 = vmatprep.mubr.bf16.mxu0 %v2311
        %3653 = vmatmul.mubr.bf16.gmra.mrb[0].mxu0 %v2310
        %v3654 = vpop.f32.mrb[0].mxu0
        %v3655 = vadd.f32 %v3615, %v3654
        %v3656 = vpop.f32.mrb[0].mxu0
        %v3657 = vpop.f32.mrb[0].mxu0
        %v3658 = vpop.f32.mrb[0].mxu0
        %3659 = vdwg.mxu0
        %v3660 = vadd.f32 %v1671, %v3655
        %v3661 = vsel %vm508, %v3660, 0.0
        %3662 = vadd.xlane.f32.xlu0 %v3661
        %v3663 = vpop.xlane.xlu0 %3662
        %v3664 = vmul.f32 %v3663, %v1651
        %v3665 = vsub.f32 %v3660, %v3664
        %v3666 = vmul.f32 %v3665, %v3665
        %v3667 = vsel %vm508, %v3666, 0.0
        %3668 = vadd.xlane.f32.xlu0 %v3667
        %v3669 = vpop.xlane.xlu0 %3668
        %v3670 = vmul.f32 %v3669, %v1651
        %v3671 = vadd.f32 %v3670, 1e-05
        %v3672 = vrsqrt.pop %v3671
        %v3673 = vmul.f32 %v3665, %v3672
        %v3674 = vlaneseq
        %v3675 = vshrl.u32 %v3674, 7
        %v3676 = vsub.s32 2, %v3675
        %v3677 = vrot.slane %v483, %v3676
        %v3678 = vmul.f32 %v3673, %v3677
        %v3679 = vlaneseq
        %v3680 = vshrl.u32 %v3679, 7
        %v3681 = vsub.s32 3, %v3680
        %v3682 = vrot.slane %v483, %v3681
        %v3683 = vadd.f32 %v3678, %v3682
        %s3684 = scalar_lea.vmem %s8, 8
        %v3685 = vld [vmem:[%s3684] sm:$0x3f]
        %v3686 = vpack.c.bf16 %v3683, %v3683
        %s3687 = scalar_lea.vmem %s2, 16
        %v3688 = vld [vmem:[%s3687] sm:$0xf]
        %v3689 = vld [vmem:[%s3687 + $0x4] sm:$0xf]
        %v3690 = vld [vmem:[%s3687 + $0x8] sm:$0xf]
        %v3691 = vld [vmem:[%s3687 + $0xc] sm:$0xf]
        %s3692 = scalar_lea.vmem %s3, 1
        %v3693 = vld [vmem:[%s3692] sm:$0x1]
        %v3695 = vlaneseq
        %v3696 = vshrl.u32 %v3695, 7
        %v3697 = vsub.s32 0, %v3696
        %v3698 = vrot.slane %v3693, %v3697
        %v3704 = vunpack.c.l.b16 %v3688
        %v3705 = vunpack.c.l.b16 %v3689
        %v3706 = vunpack.c.l.b16 %v3690
        %v3707 = vunpack.c.l.b16 %v3691
        %v3708 = vpack.c.b16 %v3705, %v3704
        %v3709 = vpack.c.b16 %v3707, %v3706
        %v3713 = vsel %vm508, %v3686, 0
        %3715 = vmatprep.subr.bf16.mxu0 0
        %3716 = vmatpush1.bf16.msra.mxu0 %v3708
        %3717 = vmatprep.subr.bf16.mxu0 0
        %3718 = vmatpush1.bf16.msra.mxu0 %v3709
        %3719 = vmatprep.subr.bf16.mxu0 0
        %3720 = vmatpush1.bf16.msra.mxu0 0
        %3721 = vmatprep.subr.bf16.mxu0 0
        %3722 = vmatpush1.bf16.msra.mxu0 0
        %3723 = vmatprep.subr.bf16.mxu0 0
        %3724 = vmatpush1.bf16.msra.mxu0 0
        %3725 = vmatprep.subr.bf16.mxu0 0
        %3726 = vmatpush1.bf16.msra.mxu0 0
        %3727 = vmatprep.subr.bf16.mxu0 0
        %3728 = vmatpush1.bf16.msra.mxu0 0
        %3729 = vmatprep.subr.bf16.mxu0 0
        %3730 = vmatpush1.bf16.msra.mxu0 0
        %3731 = vmatprep.subr.bf16.mxu0 0
        %3732 = vmatpush1.bf16.msra.mxu0 0
        %3733 = vmatprep.subr.bf16.mxu0 0
        %3734 = vmatpush1.bf16.msra.mxu0 0
        %3735 = vmatprep.subr.bf16.mxu0 0
        %3736 = vmatpush1.bf16.msra.mxu0 0
        %3737 = vmatprep.subr.bf16.mxu0 0
        %3738 = vmatpush1.bf16.msra.mxu0 0
        %3739 = vmatprep.subr.bf16.mxu0 0
        %3740 = vmatpush1.bf16.msra.mxu0 0
        %3741 = vmatprep.subr.bf16.mxu0 0
        %3742 = vmatpush1.bf16.msra.mxu0 0
        %3743 = vmatprep.subr.bf16.mxu0 0
        %3744 = vmatpush1.bf16.msra.mxu0 0
        %3745 = vmatprep.subr.bf16.mxu0 0
        %3746 = vmatpush1.bf16.msra.mxu0 0
        %3747 = vmatprep.mubr.bf16.mxu0 0
        %3748 = vmatmul.mubr.bf16.gmra.mrb[0].mxu0 %v3713
        %v3749 = vpop.f32.mrb[0].mxu0
        %v3750 = vadd.f32 %v3698, %v3749
        %v3751 = vpop.f32.mrb[0].mxu0
        %v3752 = vpop.f32.mrb[0].mxu0
        %v3753 = vpop.f32.mrb[0].mxu0
        %3754 = vdwg.mxu0
        %3756 = vrot.lane.b32.xlu0 %v3750, 120
        %v3757 = vpop.permute.xlu0 %3756
        %3759 = vrot.lane.b32.xlu0 %v3750, 112
        %v3760 = vpop.permute.xlu0 %3759
        %3762 = vrot.lane.b32.xlu0 %v3750, 104
        %v3763 = vpop.permute.xlu0 %3762
        %v3765 = vcombine.low %v3750, %v3760
        %v3766 = vcombine.high %v3750, %v3760
        %v3768 = vunpack.c.l.s4 1983009808
        %v3769 = vunpack.c.0.s8 %v3768
        %v3770 = vlaneseq
        %v3771 = vshrl.u32 %v3770, 7
        %v3772 = vsub.s32 %v3769, %v3771
        %v3773 = vrot.slane %v3765, %v3772
        %v3775 = vunpack.c.l.s4 1983009808
        %v3776 = vunpack.c.0.s8 %v3775
        %v3777 = vlaneseq
        %v3778 = vshrl.u32 %v3777, 7
        %v3779 = vsub.s32 %v3776, %v3778
        %v3780 = vrot.slane %v3766, %v3779
        %v3781 = vcombine.low %v3757, %v3763
        %v3782 = vcombine.high %v3757, %v3763
        %v3784 = vunpack.c.l.s4 1983009808
        %v3785 = vunpack.c.0.s8 %v3784
        %v3786 = vlaneseq
        %v3787 = vshrl.u32 %v3786, 7
        %v3788 = vsub.s32 %v3785, %v3787
        %v3789 = vrot.slane %v3781, %v3788
        %v3791 = vunpack.c.l.s4 1983009808
        %v3792 = vunpack.c.0.s8 %v3791
        %v3793 = vlaneseq
        %v3794 = vshrl.u32 %v3793, 7
        %v3795 = vsub.s32 %v3792, %v3794
        %v3796 = vrot.slane %v3782, %v3795
        %v3797 = vcombine.low %v3773, %v3789
        %v3798 = vcombine.high %v3773, %v3789
        %v3800 = vunpack.c.l.s4 1934713408
        %v3801 = vunpack.c.0.s8 %v3800
        %v3802 = vlaneseq
        %v3803 = vshrl.u32 %v3802, 7
        %v3804 = vsub.s32 %v3801, %v3803
        %v3805 = vrot.slane %v3797, %v3804
        %v3807 = vunpack.c.l.s4 1934713408
        %v3808 = vunpack.c.0.s8 %v3807
        %v3809 = vlaneseq
        %v3810 = vshrl.u32 %v3809, 7
        %v3811 = vsub.s32 %v3808, %v3810
        %v3812 = vrot.slane %v3798, %v3811
        %v3813 = vcombine.low %v3780, %v3796
        %v3814 = vcombine.high %v3780, %v3796
        %v3816 = vunpack.c.l.s4 1934713408
        %v3817 = vunpack.c.0.s8 %v3816
        %v3818 = vlaneseq
        %v3819 = vshrl.u32 %v3818, 7
        %v3820 = vsub.s32 %v3817, %v3819
        %v3821 = vrot.slane %v3813, %v3820
        %v3823 = vunpack.c.l.s4 1934713408
        %v3824 = vunpack.c.0.s8 %v3823
        %v3825 = vlaneseq
        %v3826 = vshrl.u32 %v3825, 7
        %v3827 = vsub.s32 %v3824, %v3826
        %v3828 = vrot.slane %v3814, %v3827
        %v3829 = vcombine.high %v3805, 0.0
        %v3830 = vcombine.high %v3812, 0.0
        %v3831 = vcombine.high %v3821, 0.0
        %v3832 = vcombine.high %v3828, 0.0
        %v3833 = vcombine.low %v3805, %v3812
        %v3835 = vunpack.c.l.s4 1983009808
        %v3836 = vunpack.c.0.s8 %v3835
        %v3837 = vlaneseq
        %v3838 = vshrl.u32 %v3837, 7
        %v3839 = vsub.s32 %v3836, %v3838
        %v3840 = vrot.slane %v3833, %v3839
        %v3841 = vcombine.low %v3829, %v3830
        %v3843 = vunpack.c.l.s4 1983009808
        %v3844 = vunpack.c.0.s8 %v3843
        %v3845 = vlaneseq
        %v3846 = vshrl.u32 %v3845, 7
        %v3847 = vsub.s32 %v3844, %v3846
        %v3848 = vrot.slane %v3841, %v3847
        %v3849 = vcombine.low %v3821, %v3828
        %v3851 = vunpack.c.l.s4 1983009808
        %v3852 = vunpack.c.0.s8 %v3851
        %v3853 = vlaneseq
        %v3854 = vshrl.u32 %v3853, 7
        %v3855 = vsub.s32 %v3852, %v3854
        %v3856 = vrot.slane %v3849, %v3855
        %v3857 = vcombine.low %v3831, %v3832
        %v3859 = vunpack.c.l.s4 1983009808
        %v3860 = vunpack.c.0.s8 %v3859
        %v3861 = vlaneseq
        %v3862 = vshrl.u32 %v3861, 7
        %v3863 = vsub.s32 %v3860, %v3862
        %v3864 = vrot.slane %v3857, %v3863
        %v3865 = vcombine.low %v3840, %v3848
        %v3866 = vcombine.high %v3840, %v3848
        %v3868 = vunpack.c.l.s4 1934713408
        %v3869 = vunpack.c.0.s8 %v3868
        %v3870 = vlaneseq
        %v3871 = vshrl.u32 %v3870, 7
        %v3872 = vsub.s32 %v3869, %v3871
        %v3873 = vrot.slane %v3865, %v3872
        %v3875 = vunpack.c.l.s4 1934713408
        %v3876 = vunpack.c.0.s8 %v3875
        %v3877 = vlaneseq
        %v3878 = vshrl.u32 %v3877, 7
        %v3879 = vsub.s32 %v3876, %v3878
        %v3880 = vrot.slane %v3866, %v3879
        %v3881 = vcombine.low %v3856, %v3864
        %v3882 = vcombine.high %v3856, %v3864
        %v3884 = vunpack.c.l.s4 1934713408
        %v3885 = vunpack.c.0.s8 %v3884
        %v3886 = vlaneseq
        %v3887 = vshrl.u32 %v3886, 7
        %v3888 = vsub.s32 %v3885, %v3887
        %v3889 = vrot.slane %v3881, %v3888
        %v3891 = vunpack.c.l.s4 1934713408
        %v3892 = vunpack.c.0.s8 %v3891
        %v3893 = vlaneseq
        %v3894 = vshrl.u32 %v3893, 7
        %v3895 = vsub.s32 %v3892, %v3894
        %v3896 = vrot.slane %v3882, %v3895
        %v3897 = vcombine.low %v3873, %v3889
        %v3898 = vcombine.high %v3873, %v3889
        %v3899 = vcombine.low %v3880, %v3896
        %v3900 = vcombine.high %v3880, %v3896
        %v3901 = vpack.c.bf16 %v3897, %v3897
        %v3902 = vpack.c.bf16 %v3898, %v3898
        %v3903 = vpack.c.bf16 %v3899, %v3899
        %v3904 = vpack.c.bf16 %v3900, %v3900
        %3905 = vrot.lane.b32.xlu0 %v3750, 96
        %v3906 = vpop.permute.xlu0 %3905
        %3907 = vrot.lane.b32.xlu0 %v3757, 96
        %v3908 = vpop.permute.xlu0 %3907
        %3909 = vrot.lane.b32.xlu0 %v3760, 96
        %v3910 = vpop.permute.xlu0 %3909
        %3911 = vrot.lane.b32.xlu0 %v3763, 96
        %v3912 = vpop.permute.xlu0 %3911
        %v3917 = vcombine.low %v3906, %v3910
        %v3918 = vcombine.high %v3906, %v3910
        %v3920 = vunpack.c.l.s4 1983009808
        %v3921 = vunpack.c.0.s8 %v3920
        %v3922 = vlaneseq
        %v3923 = vshrl.u32 %v3922, 7
        %v3924 = vsub.s32 %v3921, %v3923
        %v3925 = vrot.slane %v3917, %v3924
        %v3927 = vunpack.c.l.s4 1983009808
        %v3928 = vunpack.c.0.s8 %v3927
        %v3929 = vlaneseq
        %v3930 = vshrl.u32 %v3929, 7
        %v3931 = vsub.s32 %v3928, %v3930
        %v3932 = vrot.slane %v3918, %v3931
        %v3933 = vcombine.low %v3908, %v3912
        %v3934 = vcombine.high %v3908, %v3912
        %v3936 = vunpack.c.l.s4 1983009808
        %v3937 = vunpack.c.0.s8 %v3936
        %v3938 = vlaneseq
        %v3939 = vshrl.u32 %v3938, 7
        %v3940 = vsub.s32 %v3937, %v3939
        %v3941 = vrot.slane %v3933, %v3940
        %v3943 = vunpack.c.l.s4 1983009808
        %v3944 = vunpack.c.0.s8 %v3943
        %v3945 = vlaneseq
        %v3946 = vshrl.u32 %v3945, 7
        %v3947 = vsub.s32 %v3944, %v3946
        %v3948 = vrot.slane %v3934, %v3947
        %v3949 = vcombine.low %v3925, %v3941
        %v3950 = vcombine.high %v3925, %v3941
        %v3952 = vunpack.c.l.s4 1934713408
        %v3953 = vunpack.c.0.s8 %v3952
        %v3954 = vlaneseq
        %v3955 = vshrl.u32 %v3954, 7
        %v3956 = vsub.s32 %v3953, %v3955
        %v3957 = vrot.slane %v3949, %v3956
        %v3959 = vunpack.c.l.s4 1934713408
        %v3960 = vunpack.c.0.s8 %v3959
        %v3961 = vlaneseq
        %v3962 = vshrl.u32 %v3961, 7
        %v3963 = vsub.s32 %v3960, %v3962
        %v3964 = vrot.slane %v3950, %v3963
        %v3965 = vcombine.low %v3932, %v3948
        %v3966 = vcombine.high %v3932, %v3948
        %v3968 = vunpack.c.l.s4 1934713408
        %v3969 = vunpack.c.0.s8 %v3968
        %v3970 = vlaneseq
        %v3971 = vshrl.u32 %v3970, 7
        %v3972 = vsub.s32 %v3969, %v3971
        %v3973 = vrot.slane %v3965, %v3972
        %v3975 = vunpack.c.l.s4 1934713408
        %v3976 = vunpack.c.0.s8 %v3975
        %v3977 = vlaneseq
        %v3978 = vshrl.u32 %v3977, 7
        %v3979 = vsub.s32 %v3976, %v3978
        %v3980 = vrot.slane %v3966, %v3979
        %v3981 = vcombine.high %v3957, 0.0
        %v3982 = vcombine.high %v3964, 0.0
        %v3983 = vcombine.high %v3973, 0.0
        %v3984 = vcombine.high %v3980, 0.0
        %v3985 = vcombine.low %v3957, %v3964
        %v3987 = vunpack.c.l.s4 1983009808
        %v3988 = vunpack.c.0.s8 %v3987
        %v3989 = vlaneseq
        %v3990 = vshrl.u32 %v3989, 7
        %v3991 = vsub.s32 %v3988, %v3990
        %v3992 = vrot.slane %v3985, %v3991
        %v3993 = vcombine.low %v3981, %v3982
        %v3995 = vunpack.c.l.s4 1983009808
        %v3996 = vunpack.c.0.s8 %v3995
        %v3997 = vlaneseq
        %v3998 = vshrl.u32 %v3997, 7
        %v3999 = vsub.s32 %v3996, %v3998
        %v4000 = vrot.slane %v3993, %v3999
        %v4001 = vcombine.low %v3973, %v3980
        %v4003 = vunpack.c.l.s4 1983009808
        %v4004 = vunpack.c.0.s8 %v4003
        %v4005 = vlaneseq
        %v4006 = vshrl.u32 %v4005, 7
        %v4007 = vsub.s32 %v4004, %v4006
        %v4008 = vrot.slane %v4001, %v4007
        %v4009 = vcombine.low %v3983, %v3984
        %v4011 = vunpack.c.l.s4 1983009808
        %v4012 = vunpack.c.0.s8 %v4011
        %v4013 = vlaneseq
        %v4014 = vshrl.u32 %v4013, 7
        %v4015 = vsub.s32 %v4012, %v4014
        %v4016 = vrot.slane %v4009, %v4015
        %v4017 = vcombine.low %v3992, %v4000
        %v4018 = vcombine.high %v3992, %v4000
        %v4020 = vunpack.c.l.s4 1934713408
        %v4021 = vunpack.c.0.s8 %v4020
        %v4022 = vlaneseq
        %v4023 = vshrl.u32 %v4022, 7
        %v4024 = vsub.s32 %v4021, %v4023
        %v4025 = vrot.slane %v4017, %v4024
        %v4027 = vunpack.c.l.s4 1934713408
        %v4028 = vunpack.c.0.s8 %v4027
        %v4029 = vlaneseq
        %v4030 = vshrl.u32 %v4029, 7
        %v4031 = vsub.s32 %v4028, %v4030
        %v4032 = vrot.slane %v4018, %v4031
        %v4033 = vcombine.low %v4008, %v4016
        %v4034 = vcombine.high %v4008, %v4016
        %v4036 = vunpack.c.l.s4 1934713408
        %v4037 = vunpack.c.0.s8 %v4036
        %v4038 = vlaneseq
        %v4039 = vshrl.u32 %v4038, 7
        %v4040 = vsub.s32 %v4037, %v4039
        %v4041 = vrot.slane %v4033, %v4040
        %v4043 = vunpack.c.l.s4 1934713408
        %v4044 = vunpack.c.0.s8 %v4043
        %v4045 = vlaneseq
        %v4046 = vshrl.u32 %v4045, 7
        %v4047 = vsub.s32 %v4044, %v4046
        %v4048 = vrot.slane %v4034, %v4047
        %v4049 = vcombine.low %v4025, %v4041
        %v4050 = vcombine.high %v4025, %v4041
        %v4051 = vcombine.low %v4032, %v4048
        %v4052 = vcombine.high %v4032, %v4048
        %v4053 = vpack.c.bf16 %v4049, %v4049
        %v4054 = vpack.c.bf16 %v4050, %v4050
        %v4055 = vpack.c.bf16 %v4051, %v4051
        %v4056 = vpack.c.bf16 %v4052, %v4052
        %4057 = vrot.lane.b32.xlu0 %v3750, 64
        %v4058 = vpop.permute.xlu0 %4057
        %4059 = vrot.lane.b32.xlu0 %v3757, 64
        %v4060 = vpop.permute.xlu0 %4059
        %4061 = vrot.lane.b32.xlu0 %v3760, 64
        %v4062 = vpop.permute.xlu0 %4061
        %4063 = vrot.lane.b32.xlu0 %v3763, 64
        %v4064 = vpop.permute.xlu0 %4063
        %v4069 = vcombine.low %v4058, %v4062
        %v4070 = vcombine.high %v4058, %v4062
        %v4072 = vunpack.c.l.s4 1983009808
        %v4073 = vunpack.c.0.s8 %v4072
        %v4074 = vlaneseq
        %v4075 = vshrl.u32 %v4074, 7
        %v4076 = vsub.s32 %v4073, %v4075
        %v4077 = vrot.slane %v4069, %v4076
        %v4079 = vunpack.c.l.s4 1983009808
        %v4080 = vunpack.c.0.s8 %v4079
        %v4081 = vlaneseq
        %v4082 = vshrl.u32 %v4081, 7
        %v4083 = vsub.s32 %v4080, %v4082
        %v4084 = vrot.slane %v4070, %v4083
        %v4085 = vcombine.low %v4060, %v4064
        %v4086 = vcombine.high %v4060, %v4064
        %v4088 = vunpack.c.l.s4 1983009808
        %v4089 = vunpack.c.0.s8 %v4088
        %v4090 = vlaneseq
        %v4091 = vshrl.u32 %v4090, 7
        %v4092 = vsub.s32 %v4089, %v4091
        %v4093 = vrot.slane %v4085, %v4092
        %v4095 = vunpack.c.l.s4 1983009808
        %v4096 = vunpack.c.0.s8 %v4095
        %v4097 = vlaneseq
        %v4098 = vshrl.u32 %v4097, 7
        %v4099 = vsub.s32 %v4096, %v4098
        %v4100 = vrot.slane %v4086, %v4099
        %v4101 = vcombine.low %v4077, %v4093
        %v4102 = vcombine.high %v4077, %v4093
        %v4104 = vunpack.c.l.s4 1934713408
        %v4105 = vunpack.c.0.s8 %v4104
        %v4106 = vlaneseq
        %v4107 = vshrl.u32 %v4106, 7
        %v4108 = vsub.s32 %v4105, %v4107
        %v4109 = vrot.slane %v4101, %v4108
        %v4111 = vunpack.c.l.s4 1934713408
        %v4112 = vunpack.c.0.s8 %v4111
        %v4113 = vlaneseq
        %v4114 = vshrl.u32 %v4113, 7
        %v4115 = vsub.s32 %v4112, %v4114
        %v4116 = vrot.slane %v4102, %v4115
        %v4117 = vcombine.low %v4084, %v4100
        %v4118 = vcombine.high %v4084, %v4100
        %v4120 = vunpack.c.l.s4 1934713408
        %v4121 = vunpack.c.0.s8 %v4120
        %v4122 = vlaneseq
        %v4123 = vshrl.u32 %v4122, 7
        %v4124 = vsub.s32 %v4121, %v4123
        %v4125 = vrot.slane %v4117, %v4124
        %v4127 = vunpack.c.l.s4 1934713408
        %v4128 = vunpack.c.0.s8 %v4127
        %v4129 = vlaneseq
        %v4130 = vshrl.u32 %v4129, 7
        %v4131 = vsub.s32 %v4128, %v4130
        %v4132 = vrot.slane %v4118, %v4131
        %v4133 = vcombine.high %v4109, 0.0
        %v4134 = vcombine.high %v4116, 0.0
        %v4135 = vcombine.high %v4125, 0.0
        %v4136 = vcombine.high %v4132, 0.0
        %v4137 = vcombine.low %v4109, %v4116
        %v4139 = vunpack.c.l.s4 1983009808
        %v4140 = vunpack.c.0.s8 %v4139
        %v4141 = vlaneseq
        %v4142 = vshrl.u32 %v4141, 7
        %v4143 = vsub.s32 %v4140, %v4142
        %v4144 = vrot.slane %v4137, %v4143
        %v4145 = vcombine.low %v4133, %v4134
        %v4147 = vunpack.c.l.s4 1983009808
        %v4148 = vunpack.c.0.s8 %v4147
        %v4149 = vlaneseq
        %v4150 = vshrl.u32 %v4149, 7
        %v4151 = vsub.s32 %v4148, %v4150
        %v4152 = vrot.slane %v4145, %v4151
        %v4153 = vcombine.low %v4125, %v4132
        %v4155 = vunpack.c.l.s4 1983009808
        %v4156 = vunpack.c.0.s8 %v4155
        %v4157 = vlaneseq
        %v4158 = vshrl.u32 %v4157, 7
        %v4159 = vsub.s32 %v4156, %v4158
        %v4160 = vrot.slane %v4153, %v4159
        %v4161 = vcombine.low %v4135, %v4136
        %v4163 = vunpack.c.l.s4 1983009808
        %v4164 = vunpack.c.0.s8 %v4163
        %v4165 = vlaneseq
        %v4166 = vshrl.u32 %v4165, 7
        %v4167 = vsub.s32 %v4164, %v4166
        %v4168 = vrot.slane %v4161, %v4167
        %v4169 = vcombine.low %v4144, %v4152
        %v4170 = vcombine.high %v4144, %v4152
        %v4172 = vunpack.c.l.s4 1934713408
        %v4173 = vunpack.c.0.s8 %v4172
        %v4174 = vlaneseq
        %v4175 = vshrl.u32 %v4174, 7
        %v4176 = vsub.s32 %v4173, %v4175
        %v4177 = vrot.slane %v4169, %v4176
        %v4179 = vunpack.c.l.s4 1934713408
        %v4180 = vunpack.c.0.s8 %v4179
        %v4181 = vlaneseq
        %v4182 = vshrl.u32 %v4181, 7
        %v4183 = vsub.s32 %v4180, %v4182
        %v4184 = vrot.slane %v4170, %v4183
        %v4185 = vcombine.low %v4160, %v4168
        %v4186 = vcombine.high %v4160, %v4168
        %v4188 = vunpack.c.l.s4 1934713408
        %v4189 = vunpack.c.0.s8 %v4188
        %v4190 = vlaneseq
        %v4191 = vshrl.u32 %v4190, 7
        %v4192 = vsub.s32 %v4189, %v4191
        %v4193 = vrot.slane %v4185, %v4192
        %v4195 = vunpack.c.l.s4 1934713408
        %v4196 = vunpack.c.0.s8 %v4195
        %v4197 = vlaneseq
        %v4198 = vshrl.u32 %v4197, 7
        %v4199 = vsub.s32 %v4196, %v4198
        %v4200 = vrot.slane %v4186, %v4199
        %v4201 = vcombine.low %v4177, %v4193
        %v4202 = vcombine.high %v4177, %v4193
        %v4203 = vcombine.low %v4184, %v4200
        %v4204 = vcombine.high %v4184, %v4200
        %v4205 = vpack.c.bf16 %v4201, %v4201
        %v4206 = vpack.c.bf16 %v4202, %v4202
        %v4207 = vpack.c.bf16 %v4203, %v4203
        %v4208 = vpack.c.bf16 %v4204, %v4204
        %v4210 = vsel %vm1012, %v3901, 0
        %v4213 = vsel %vm1012, %v4053, 0
        %4215 = vmatprep.subr.bf16.mxu0 0
        %4216 = vmatpush1.bf16.xpose.msra.mxu0 %v4213
        %4217 = vmatprep.subr.bf16.mxu0 0
        %4218 = vmatpush1.bf16.xpose.msra.mxu0 0
        %4219 = vmatprep.subr.bf16.mxu0 0
        %4220 = vmatpush1.bf16.xpose.msra.mxu0 0
        %4221 = vmatprep.subr.bf16.mxu0 0
        %4222 = vmatpush1.bf16.xpose.msra.mxu0 0
        %4223 = vmatprep.subr.bf16.mxu0 0
        %4224 = vmatpush1.bf16.xpose.msra.mxu0 0
        %4225 = vmatprep.subr.bf16.mxu0 0
        %4226 = vmatpush1.bf16.xpose.msra.mxu0 0
        %4227 = vmatprep.subr.bf16.mxu0 0
        %4228 = vmatpush1.bf16.xpose.msra.mxu0 0
        %4229 = vmatprep.subr.bf16.mxu0 0
        %4230 = vmatpush1.bf16.xpose.msra.mxu0 0
        %4231 = vmatprep.subr.bf16.mxu0 0
        %4232 = vmatpush1.bf16.xpose.msra.mxu0 0
        %4233 = vmatprep.subr.bf16.mxu0 0
        %4234 = vmatpush1.bf16.xpose.msra.mxu0 0
        %4235 = vmatprep.subr.bf16.mxu0 0
        %4236 = vmatpush1.bf16.xpose.msra.mxu0 0
        %4237 = vmatprep.subr.bf16.mxu0 0
        %4238 = vmatpush1.bf16.xpose.msra.mxu0 0
        %4239 = vmatprep.subr.bf16.mxu0 0
        %4240 = vmatpush1.bf16.xpose.msra.mxu0 0
        %4241 = vmatprep.subr.bf16.mxu0 0
        %4242 = vmatpush1.bf16.xpose.msra.mxu0 0
        %4243 = vmatprep.subr.bf16.mxu0 0
        %4244 = vmatpush1.bf16.xpose.msra.mxu0 0
        %4245 = vmatprep.subr.bf16.mxu0 0
        %4246 = vmatpush1.bf16.xpose.msra.mxu0 0
        %4247 = vmatprep.mubr.bf16.mxu0 0
        %4248 = vmatmul.mubr.bf16.gmra.mrb[0].mxu0 %v4210
        %v4249 = vpop.f32.mrb[0].mxu0
        %v4250 = vadd.f32 %v1010, %v4249
        %v4251 = vpop.f32.mrb[0].mxu0
        %v4252 = vpop.f32.mrb[0].mxu0
        %v4253 = vpop.f32.mrb[0].mxu0
        %4254 = vdwg.mxu0
        %v4256 = vsel %vm1012, %v3902, 0
        %v4259 = vsel %vm1012, %v4054, 0
        %4261 = vmatprep.subr.bf16.mxu0 0
        %4262 = vmatpush1.bf16.xpose.msra.mxu0 %v4259
        %4263 = vmatprep.subr.bf16.mxu0 0
        %4264 = vmatpush1.bf16.xpose.msra.mxu0 0
        %4265 = vmatprep.subr.bf16.mxu0 0
        %4266 = vmatpush1.bf16.xpose.msra.mxu0 0
        %4267 = vmatprep.subr.bf16.mxu0 0
        %4268 = vmatpush1.bf16.xpose.msra.mxu0 0
        %4269 = vmatprep.subr.bf16.mxu0 0
        %4270 = vmatpush1.bf16.xpose.msra.mxu0 0
        %4271 = vmatprep.subr.bf16.mxu0 0
        %4272 = vmatpush1.bf16.xpose.msra.mxu0 0
        %4273 = vmatprep.subr.bf16.mxu0 0
        %4274 = vmatpush1.bf16.xpose.msra.mxu0 0
        %4275 = vmatprep.subr.bf16.mxu0 0
        %4276 = vmatpush1.bf16.xpose.msra.mxu0 0
        %4277 = vmatprep.subr.bf16.mxu0 0
        %4278 = vmatpush1.bf16.xpose.msra.mxu0 0
        %4279 = vmatprep.subr.bf16.mxu0 0
        %4280 = vmatpush1.bf16.xpose.msra.mxu0 0
        %4281 = vmatprep.subr.bf16.mxu0 0
        %4282 = vmatpush1.bf16.xpose.msra.mxu0 0
        %4283 = vmatprep.subr.bf16.mxu0 0
        %4284 = vmatpush1.bf16.xpose.msra.mxu0 0
        %4285 = vmatprep.subr.bf16.mxu0 0
        %4286 = vmatpush1.bf16.xpose.msra.mxu0 0
        %4287 = vmatprep.subr.bf16.mxu0 0
        %4288 = vmatpush1.bf16.xpose.msra.mxu0 0
        %4289 = vmatprep.subr.bf16.mxu0 0
        %4290 = vmatpush1.bf16.xpose.msra.mxu0 0
        %4291 = vmatprep.subr.bf16.mxu0 0
        %4292 = vmatpush1.bf16.xpose.msra.mxu0 0
        %4293 = vmatprep.mubr.bf16.mxu0 0
        %4294 = vmatmul.mubr.bf16.gmra.mrb[0].mxu0 %v4256
        %v4295 = vpop.f32.mrb[0].mxu0
        %v4296 = vadd.f32 %v1010, %v4295
        %v4297 = vpop.f32.mrb[0].mxu0
        %v4298 = vpop.f32.mrb[0].mxu0
        %v4299 = vpop.f32.mrb[0].mxu0
        %4300 = vdwg.mxu0
        %v4302 = vsel %vm1012, %v3903, 0
        %v4305 = vsel %vm1012, %v4055, 0
        %4307 = vmatprep.subr.bf16.mxu0 0
        %4308 = vmatpush1.bf16.xpose.msra.mxu0 %v4305
        %4309 = vmatprep.subr.bf16.mxu0 0
        %4310 = vmatpush1.bf16.xpose.msra.mxu0 0
        %4311 = vmatprep.subr.bf16.mxu0 0
        %4312 = vmatpush1.bf16.xpose.msra.mxu0 0
        %4313 = vmatprep.subr.bf16.mxu0 0
        %4314 = vmatpush1.bf16.xpose.msra.mxu0 0
        %4315 = vmatprep.subr.bf16.mxu0 0
        %4316 = vmatpush1.bf16.xpose.msra.mxu0 0
        %4317 = vmatprep.subr.bf16.mxu0 0
        %4318 = vmatpush1.bf16.xpose.msra.mxu0 0
        %4319 = vmatprep.subr.bf16.mxu0 0
        %4320 = vmatpush1.bf16.xpose.msra.mxu0 0
        %4321 = vmatprep.subr.bf16.mxu0 0
        %4322 = vmatpush1.bf16.xpose.msra.mxu0 0
        %4323 = vmatprep.subr.bf16.mxu0 0
        %4324 = vmatpush1.bf16.xpose.msra.mxu0 0
        %4325 = vmatprep.subr.bf16.mxu0 0
        %4326 = vmatpush1.bf16.xpose.msra.mxu0 0
        %4327 = vmatprep.subr.bf16.mxu0 0
        %4328 = vmatpush1.bf16.xpose.msra.mxu0 0
        %4329 = vmatprep.subr.bf16.mxu0 0
        %4330 = vmatpush1.bf16.xpose.msra.mxu0 0
        %4331 = vmatprep.subr.bf16.mxu0 0
        %4332 = vmatpush1.bf16.xpose.msra.mxu0 0
        %4333 = vmatprep.subr.bf16.mxu0 0
        %4334 = vmatpush1.bf16.xpose.msra.mxu0 0
        %4335 = vmatprep.subr.bf16.mxu0 0
        %4336 = vmatpush1.bf16.xpose.msra.mxu0 0
        %4337 = vmatprep.subr.bf16.mxu0 0
        %4338 = vmatpush1.bf16.xpose.msra.mxu0 0
        %4339 = vmatprep.mubr.bf16.mxu0 0
        %4340 = vmatmul.mubr.bf16.gmra.mrb[0].mxu0 %v4302
        %v4341 = vpop.f32.mrb[0].mxu0
        %v4342 = vadd.f32 %v1010, %v4341
        %v4343 = vpop.f32.mrb[0].mxu0
        %v4344 = vpop.f32.mrb[0].mxu0
        %v4345 = vpop.f32.mrb[0].mxu0
        %4346 = vdwg.mxu0
        %v4348 = vsel %vm1012, %v3904, 0
        %v4351 = vsel %vm1012, %v4056, 0
        %4353 = vmatprep.subr.bf16.mxu0 0
        %4354 = vmatpush1.bf16.xpose.msra.mxu0 %v4351
        %4355 = vmatprep.subr.bf16.mxu0 0
        %4356 = vmatpush1.bf16.xpose.msra.mxu0 0
        %4357 = vmatprep.subr.bf16.mxu0 0
        %4358 = vmatpush1.bf16.xpose.msra.mxu0 0
        %4359 = vmatprep.subr.bf16.mxu0 0
        %4360 = vmatpush1.bf16.xpose.msra.mxu0 0
        %4361 = vmatprep.subr.bf16.mxu0 0
        %4362 = vmatpush1.bf16.xpose.msra.mxu0 0
        %4363 = vmatprep.subr.bf16.mxu0 0
        %4364 = vmatpush1.bf16.xpose.msra.mxu0 0
        %4365 = vmatprep.subr.bf16.mxu0 0
        %4366 = vmatpush1.bf16.xpose.msra.mxu0 0
        %4367 = vmatprep.subr.bf16.mxu0 0
        %4368 = vmatpush1.bf16.xpose.msra.mxu0 0
        %4369 = vmatprep.subr.bf16.mxu0 0
        %4370 = vmatpush1.bf16.xpose.msra.mxu0 0
        %4371 = vmatprep.subr.bf16.mxu0 0
        %4372 = vmatpush1.bf16.xpose.msra.mxu0 0
        %4373 = vmatprep.subr.bf16.mxu0 0
        %4374 = vmatpush1.bf16.xpose.msra.mxu0 0
        %4375 = vmatprep.subr.bf16.mxu0 0
        %4376 = vmatpush1.bf16.xpose.msra.mxu0 0
        %4377 = vmatprep.subr.bf16.mxu0 0
        %4378 = vmatpush1.bf16.xpose.msra.mxu0 0
        %4379 = vmatprep.subr.bf16.mxu0 0
        %4380 = vmatpush1.bf16.xpose.msra.mxu0 0
        %4381 = vmatprep.subr.bf16.mxu0 0
        %4382 = vmatpush1.bf16.xpose.msra.mxu0 0
        %4383 = vmatprep.subr.bf16.mxu0 0
        %4384 = vmatpush1.bf16.xpose.msra.mxu0 0
        %4385 = vmatprep.mubr.bf16.mxu0 0
        %4386 = vmatmul.mubr.bf16.gmra.mrb[0].mxu0 %v4348
        %v4387 = vpop.f32.mrb[0].mxu0
        %v4388 = vadd.f32 %v1010, %v4387
        %v4389 = vpop.f32.mrb[0].mxu0
        %v4390 = vpop.f32.mrb[0].mxu0
        %v4391 = vpop.f32.mrb[0].mxu0
        %4392 = vdwg.mxu0
        %v4393 = vsel %vm1012, %v4250, -inf
        %4394 = vmax.xlane.f32.xlu0 %v4393
        %v4395 = vpop.xlane.xlu0 %4394
        %v4396 = vsel %vm1012, %v4296, -inf
        %4397 = vmax.xlane.f32.xlu0 %v4396
        %v4398 = vpop.xlane.xlu0 %4397
        %v4399 = vsel %vm1012, %v4342, -inf
        %4400 = vmax.xlane.f32.xlu0 %v4399
        %v4401 = vpop.xlane.xlu0 %4400
        %v4402 = vsel %vm1012, %v4388, -inf
        %4403 = vmax.xlane.f32.xlu0 %v4402
        %v4404 = vpop.xlane.xlu0 %4403
        %v4405 = vsub.f32 %v4250, %v4395
        %v4406 = vsub.f32 %v4296, %v4398
        %v4407 = vsub.f32 %v4342, %v4401
        %v4408 = vsub.f32 %v4388, %v4404
        %v4409 = vmul.f32 %v4405, 1.442695
        %v4410 = vpow.pop %v4409
        %v4411 = vmul.f32 %v4406, 1.442695
        %v4412 = vpow.pop %v4411
        %v4413 = vmul.f32 %v4407, 1.442695
        %v4414 = vpow.pop %v4413
        %v4415 = vmul.f32 %v4408, 1.442695
        %v4416 = vpow.pop %v4415
        %v4417 = vsel %vm1012, %v4410, 0.0
        %4418 = vadd.xlane.f32.xlu0 %v4417
        %v4419 = vpop.xlane.xlu0 %4418
        %v4420 = vsel %vm1012, %v4412, 0.0
        %4421 = vadd.xlane.f32.xlu0 %v4420
        %v4422 = vpop.xlane.xlu0 %4421
        %v4423 = vsel %vm1012, %v4414, 0.0
        %4424 = vadd.xlane.f32.xlu0 %v4423
        %v4425 = vpop.xlane.xlu0 %4424
        %v4426 = vsel %vm1012, %v4416, 0.0
        %4427 = vadd.xlane.f32.xlu0 %v4426
        %v4428 = vpop.xlane.xlu0 %4427
        %v4429 = vrcp.pop %v4419
        %v4430 = vrcp.pop %v4422
        %v4431 = vrcp.pop %v4425
        %v4432 = vrcp.pop %v4428
        %v4433 = vmul.f32 %v4410, %v4429
        %v4434 = vmul.f32 %v4412, %v4430
        %v4435 = vmul.f32 %v4414, %v4431
        %v4436 = vmul.f32 %v4416, %v4432
        %v4437 = vpack.c.bf16 %v4433, %v4433
        %v4438 = vpack.c.bf16 %v4434, %v4434
        %v4439 = vpack.c.bf16 %v4435, %v4435
        %v4440 = vpack.c.bf16 %v4436, %v4436
        %v4442 = vsel %vm1012, %v4437, 0
        %v4445 = vsel %vm1248, %v4205, 0
        %4447 = vmatprep.subr.bf16.mxu0 0
        %4448 = vmatpush1.bf16.msra.mxu0 %v4445
        %4449 = vmatprep.subr.bf16.mxu0 0
        %4450 = vmatpush1.bf16.msra.mxu0 0
        %4451 = vmatprep.subr.bf16.mxu0 0
        %4452 = vmatpush1.bf16.msra.mxu0 0
        %4453 = vmatprep.subr.bf16.mxu0 0
        %4454 = vmatpush1.bf16.msra.mxu0 0
        %4455 = vmatprep.subr.bf16.mxu0 0
        %4456 = vmatpush1.bf16.msra.mxu0 0
        %4457 = vmatprep.subr.bf16.mxu0 0
        %4458 = vmatpush1.bf16.msra.mxu0 0
        %4459 = vmatprep.subr.bf16.mxu0 0
        %4460 = vmatpush1.bf16.msra.mxu0 0
        %4461 = vmatprep.subr.bf16.mxu0 0
        %4462 = vmatpush1.bf16.msra.mxu0 0
        %4463 = vmatprep.subr.bf16.mxu0 0
        %4464 = vmatpush1.bf16.msra.mxu0 0
        %4465 = vmatprep.subr.bf16.mxu0 0
        %4466 = vmatpush1.bf16.msra.mxu0 0
        %4467 = vmatprep.subr.bf16.mxu0 0
        %4468 = vmatpush1.bf16.msra.mxu0 0
        %4469 = vmatprep.subr.bf16.mxu0 0
        %4470 = vmatpush1.bf16.msra.mxu0 0
        %4471 = vmatprep.subr.bf16.mxu0 0
        %4472 = vmatpush1.bf16.msra.mxu0 0
        %4473 = vmatprep.subr.bf16.mxu0 0
        %4474 = vmatpush1.bf16.msra.mxu0 0
        %4475 = vmatprep.subr.bf16.mxu0 0
        %4476 = vmatpush1.bf16.msra.mxu0 0
        %4477 = vmatprep.subr.bf16.mxu0 0
        %4478 = vmatpush1.bf16.msra.mxu0 0
        %4479 = vmatprep.mubr.bf16.mxu0 0
        %4480 = vmatmul.mubr.bf16.gmra.mrb[0].mxu0 %v4442
        %v4481 = vpop.f32.mrb[0].mxu0
        %v4482 = vadd.f32 0.0, %v4481
        %v4483 = vpop.f32.mrb[0].mxu0
        %v4484 = vpop.f32.mrb[0].mxu0
        %v4485 = vpop.f32.mrb[0].mxu0
        %4486 = vdwg.mxu0
        %v4488 = vsel %vm1012, %v4438, 0
        %v4491 = vsel %vm1248, %v4206, 0
        %4493 = vmatprep.subr.bf16.mxu0 0
        %4494 = vmatpush1.bf16.msra.mxu0 %v4491
        %4495 = vmatprep.subr.bf16.mxu0 0
        %4496 = vmatpush1.bf16.msra.mxu0 0
        %4497 = vmatprep.subr.bf16.mxu0 0
        %4498 = vmatpush1.bf16.msra.mxu0 0
        %4499 = vmatprep.subr.bf16.mxu0 0
        %4500 = vmatpush1.bf16.msra.mxu0 0
        %4501 = vmatprep.subr.bf16.mxu0 0
        %4502 = vmatpush1.bf16.msra.mxu0 0
        %4503 = vmatprep.subr.bf16.mxu0 0
        %4504 = vmatpush1.bf16.msra.mxu0 0
        %4505 = vmatprep.subr.bf16.mxu0 0
        %4506 = vmatpush1.bf16.msra.mxu0 0
        %4507 = vmatprep.subr.bf16.mxu0 0
        %4508 = vmatpush1.bf16.msra.mxu0 0
        %4509 = vmatprep.subr.bf16.mxu0 0
        %4510 = vmatpush1.bf16.msra.mxu0 0
        %4511 = vmatprep.subr.bf16.mxu0 0
        %4512 = vmatpush1.bf16.msra.mxu0 0
        %4513 = vmatprep.subr.bf16.mxu0 0
        %4514 = vmatpush1.bf16.msra.mxu0 0
        %4515 = vmatprep.subr.bf16.mxu0 0
        %4516 = vmatpush1.bf16.msra.mxu0 0
        %4517 = vmatprep.subr.bf16.mxu0 0
        %4518 = vmatpush1.bf16.msra.mxu0 0
        %4519 = vmatprep.subr.bf16.mxu0 0
        %4520 = vmatpush1.bf16.msra.mxu0 0
        %4521 = vmatprep.subr.bf16.mxu0 0
        %4522 = vmatpush1.bf16.msra.mxu0 0
        %4523 = vmatprep.subr.bf16.mxu0 0
        %4524 = vmatpush1.bf16.msra.mxu0 0
        %4525 = vmatprep.mubr.bf16.mxu0 0
        %4526 = vmatmul.mubr.bf16.gmra.mrb[0].mxu0 %v4488
        %v4527 = vpop.f32.mrb[0].mxu0
        %v4528 = vadd.f32 0.0, %v4527
        %v4529 = vpop.f32.mrb[0].mxu0
        %v4530 = vpop.f32.mrb[0].mxu0
        %v4531 = vpop.f32.mrb[0].mxu0
        %4532 = vdwg.mxu0
        %v4534 = vsel %vm1012, %v4439, 0
        %v4537 = vsel %vm1248, %v4207, 0
        %4539 = vmatprep.subr.bf16.mxu0 0
        %4540 = vmatpush1.bf16.msra.mxu0 %v4537
        %4541 = vmatprep.subr.bf16.mxu0 0
        %4542 = vmatpush1.bf16.msra.mxu0 0
        %4543 = vmatprep.subr.bf16.mxu0 0
        %4544 = vmatpush1.bf16.msra.mxu0 0
        %4545 = vmatprep.subr.bf16.mxu0 0
        %4546 = vmatpush1.bf16.msra.mxu0 0
        %4547 = vmatprep.subr.bf16.mxu0 0
        %4548 = vmatpush1.bf16.msra.mxu0 0
        %4549 = vmatprep.subr.bf16.mxu0 0
        %4550 = vmatpush1.bf16.msra.mxu0 0
        %4551 = vmatprep.subr.bf16.mxu0 0
        %4552 = vmatpush1.bf16.msra.mxu0 0
        %4553 = vmatprep.subr.bf16.mxu0 0
        %4554 = vmatpush1.bf16.msra.mxu0 0
        %4555 = vmatprep.subr.bf16.mxu0 0
        %4556 = vmatpush1.bf16.msra.mxu0 0
        %4557 = vmatprep.subr.bf16.mxu0 0
        %4558 = vmatpush1.bf16.msra.mxu0 0
        %4559 = vmatprep.subr.bf16.mxu0 0
        %4560 = vmatpush1.bf16.msra.mxu0 0
        %4561 = vmatprep.subr.bf16.mxu0 0
        %4562 = vmatpush1.bf16.msra.mxu0 0
        %4563 = vmatprep.subr.bf16.mxu0 0
        %4564 = vmatpush1.bf16.msra.mxu0 0
        %4565 = vmatprep.subr.bf16.mxu0 0
        %4566 = vmatpush1.bf16.msra.mxu0 0
        %4567 = vmatprep.subr.bf16.mxu0 0
        %4568 = vmatpush1.bf16.msra.mxu0 0
        %4569 = vmatprep.subr.bf16.mxu0 0
        %4570 = vmatpush1.bf16.msra.mxu0 0
        %4571 = vmatprep.mubr.bf16.mxu0 0
        %4572 = vmatmul.mubr.bf16.gmra.mrb[0].mxu0 %v4534
        %v4573 = vpop.f32.mrb[0].mxu0
        %v4574 = vadd.f32 0.0, %v4573
        %v4575 = vpop.f32.mrb[0].mxu0
        %v4576 = vpop.f32.mrb[0].mxu0
        %v4577 = vpop.f32.mrb[0].mxu0
        %4578 = vdwg.mxu0
        %v4580 = vsel %vm1012, %v4440, 0
        %v4583 = vsel %vm1248, %v4208, 0
        %4585 = vmatprep.subr.bf16.mxu0 0
        %4586 = vmatpush1.bf16.msra.mxu0 %v4583
        %4587 = vmatprep.subr.bf16.mxu0 0
        %4588 = vmatpush1.bf16.msra.mxu0 0
        %4589 = vmatprep.subr.bf16.mxu0 0
        %4590 = vmatpush1.bf16.msra.mxu0 0
        %4591 = vmatprep.subr.bf16.mxu0 0
        %4592 = vmatpush1.bf16.msra.mxu0 0
        %4593 = vmatprep.subr.bf16.mxu0 0
        %4594 = vmatpush1.bf16.msra.mxu0 0
        %4595 = vmatprep.subr.bf16.mxu0 0
        %4596 = vmatpush1.bf16.msra.mxu0 0
        %4597 = vmatprep.subr.bf16.mxu0 0
        %4598 = vmatpush1.bf16.msra.mxu0 0
        %4599 = vmatprep.subr.bf16.mxu0 0
        %4600 = vmatpush1.bf16.msra.mxu0 0
        %4601 = vmatprep.subr.bf16.mxu0 0
        %4602 = vmatpush1.bf16.msra.mxu0 0
        %4603 = vmatprep.subr.bf16.mxu0 0
        %4604 = vmatpush1.bf16.msra.mxu0 0
        %4605 = vmatprep.subr.bf16.mxu0 0
        %4606 = vmatpush1.bf16.msra.mxu0 0
        %4607 = vmatprep.subr.bf16.mxu0 0
        %4608 = vmatpush1.bf16.msra.mxu0 0
        %4609 = vmatprep.subr.bf16.mxu0 0
        %4610 = vmatpush1.bf16.msra.mxu0 0
        %4611 = vmatprep.subr.bf16.mxu0 0
        %4612 = vmatpush1.bf16.msra.mxu0 0
        %4613 = vmatprep.subr.bf16.mxu0 0
        %4614 = vmatpush1.bf16.msra.mxu0 0
        %4615 = vmatprep.subr.bf16.mxu0 0
        %4616 = vmatpush1.bf16.msra.mxu0 0
        %4617 = vmatprep.mubr.bf16.mxu0 0
        %4618 = vmatmul.mubr.bf16.gmra.mrb[0].mxu0 %v4580
        %v4619 = vpop.f32.mrb[0].mxu0
        %v4620 = vadd.f32 0.0, %v4619
        %v4621 = vpop.f32.mrb[0].mxu0
        %v4622 = vpop.f32.mrb[0].mxu0
        %v4623 = vpop.f32.mrb[0].mxu0
        %4624 = vdwg.mxu0
        %v4625 = vcombine.low %v4482, %v4574
        %v4626 = vcombine.high %v4482, %v4574
        %v4628 = vunpack.c.l.s4 1983009808
        %v4629 = vunpack.c.0.s8 %v4628
        %v4630 = vlaneseq
        %v4631 = vshrl.u32 %v4630, 7
        %v4632 = vsub.s32 %v4629, %v4631
        %v4633 = vrot.slane %v4625, %v4632
        %v4635 = vunpack.c.l.s4 1983009808
        %v4636 = vunpack.c.0.s8 %v4635
        %v4637 = vlaneseq
        %v4638 = vshrl.u32 %v4637, 7
        %v4639 = vsub.s32 %v4636, %v4638
        %v4640 = vrot.slane %v4626, %v4639
        %v4641 = vcombine.low %v4528, %v4620
        %v4642 = vcombine.high %v4528, %v4620
        %v4644 = vunpack.c.l.s4 1983009808
        %v4645 = vunpack.c.0.s8 %v4644
        %v4646 = vlaneseq
        %v4647 = vshrl.u32 %v4646, 7
        %v4648 = vsub.s32 %v4645, %v4647
        %v4649 = vrot.slane %v4641, %v4648
        %v4651 = vunpack.c.l.s4 1983009808
        %v4652 = vunpack.c.0.s8 %v4651
        %v4653 = vlaneseq
        %v4654 = vshrl.u32 %v4653, 7
        %v4655 = vsub.s32 %v4652, %v4654
        %v4656 = vrot.slane %v4642, %v4655
        %v4657 = vcombine.low %v4633, %v4649
        %v4658 = vcombine.high %v4633, %v4649
        %v4660 = vunpack.c.l.s4 1934713408
        %v4661 = vunpack.c.0.s8 %v4660
        %v4662 = vlaneseq
        %v4663 = vshrl.u32 %v4662, 7
        %v4664 = vsub.s32 %v4661, %v4663
        %v4665 = vrot.slane %v4657, %v4664
        %v4667 = vunpack.c.l.s4 1934713408
        %v4668 = vunpack.c.0.s8 %v4667
        %v4669 = vlaneseq
        %v4670 = vshrl.u32 %v4669, 7
        %v4671 = vsub.s32 %v4668, %v4670
        %v4672 = vrot.slane %v4658, %v4671
        %v4673 = vcombine.low %v4640, %v4656
        %v4674 = vcombine.high %v4640, %v4656
        %v4676 = vunpack.c.l.s4 1934713408
        %v4677 = vunpack.c.0.s8 %v4676
        %v4678 = vlaneseq
        %v4679 = vshrl.u32 %v4678, 7
        %v4680 = vsub.s32 %v4677, %v4679
        %v4681 = vrot.slane %v4673, %v4680
        %v4683 = vunpack.c.l.s4 1934713408
        %v4684 = vunpack.c.0.s8 %v4683
        %v4685 = vlaneseq
        %v4686 = vshrl.u32 %v4685, 7
        %v4687 = vsub.s32 %v4684, %v4686
        %v4688 = vrot.slane %v4674, %v4687
        %v4689 = vcombine.high %v4665, 0.0
        %v4690 = vcombine.high %v4672, 0.0
        %v4691 = vcombine.high %v4681, 0.0
        %v4692 = vcombine.high %v4688, 0.0
        %v4693 = vcombine.low %v4665, %v4672
        %v4695 = vunpack.c.l.s4 1983009808
        %v4696 = vunpack.c.0.s8 %v4695
        %v4697 = vlaneseq
        %v4698 = vshrl.u32 %v4697, 7
        %v4699 = vsub.s32 %v4696, %v4698
        %v4700 = vrot.slane %v4693, %v4699
        %v4701 = vcombine.low %v4689, %v4690
        %v4703 = vunpack.c.l.s4 1983009808
        %v4704 = vunpack.c.0.s8 %v4703
        %v4705 = vlaneseq
        %v4706 = vshrl.u32 %v4705, 7
        %v4707 = vsub.s32 %v4704, %v4706
        %v4708 = vrot.slane %v4701, %v4707
        %v4709 = vcombine.low %v4681, %v4688
        %v4711 = vunpack.c.l.s4 1983009808
        %v4712 = vunpack.c.0.s8 %v4711
        %v4713 = vlaneseq
        %v4714 = vshrl.u32 %v4713, 7
        %v4715 = vsub.s32 %v4712, %v4714
        %v4716 = vrot.slane %v4709, %v4715
        %v4717 = vcombine.low %v4691, %v4692
        %v4719 = vunpack.c.l.s4 1983009808
        %v4720 = vunpack.c.0.s8 %v4719
        %v4721 = vlaneseq
        %v4722 = vshrl.u32 %v4721, 7
        %v4723 = vsub.s32 %v4720, %v4722
        %v4724 = vrot.slane %v4717, %v4723
        %v4725 = vcombine.low %v4700, %v4708
        %v4726 = vcombine.high %v4700, %v4708
        %v4728 = vunpack.c.l.s4 1934713408
        %v4729 = vunpack.c.0.s8 %v4728
        %v4730 = vlaneseq
        %v4731 = vshrl.u32 %v4730, 7
        %v4732 = vsub.s32 %v4729, %v4731
        %v4733 = vrot.slane %v4725, %v4732
        %v4735 = vunpack.c.l.s4 1934713408
        %v4736 = vunpack.c.0.s8 %v4735
        %v4737 = vlaneseq
        %v4738 = vshrl.u32 %v4737, 7
        %v4739 = vsub.s32 %v4736, %v4738
        %v4740 = vrot.slane %v4726, %v4739
        %v4741 = vcombine.low %v4716, %v4724
        %v4742 = vcombine.high %v4716, %v4724
        %v4744 = vunpack.c.l.s4 1934713408
        %v4745 = vunpack.c.0.s8 %v4744
        %v4746 = vlaneseq
        %v4747 = vshrl.u32 %v4746, 7
        %v4748 = vsub.s32 %v4745, %v4747
        %v4749 = vrot.slane %v4741, %v4748
        %v4751 = vunpack.c.l.s4 1934713408
        %v4752 = vunpack.c.0.s8 %v4751
        %v4753 = vlaneseq
        %v4754 = vshrl.u32 %v4753, 7
        %v4755 = vsub.s32 %v4752, %v4754
        %v4756 = vrot.slane %v4742, %v4755
        %v4757 = vcombine.low %v4733, %v4749
        %v4758 = vcombine.high %v4733, %v4749
        %v4759 = vcombine.low %v4740, %v4756
        %v4760 = vcombine.high %v4740, %v4756
        %4762 = vrot.lane.b32.xlu0 %v4758, 8
        %v4763 = vpop.permute.xlu0 %4762
        %4766 = vrot.lane.b32.xlu0 %v4759, 16
        %v4767 = vpop.permute.xlu0 %4766
        %4770 = vrot.lane.b32.xlu0 %v4760, 24
        %v4771 = vpop.permute.xlu0 %4770
        %v4773 = vsel %vm1012, %v4757, %v4763
        %v4774 = vsel %vm1579, %v4773, %v4767
        %v4775 = vsel %vm1581, %v4774, %v4771
        %v4776 = vpack.c.bf16 %v4775, %v4775
        %s4777 = scalar_lea.vmem %s4, 16
        %v4778 = vld [vmem:[%s4777] sm:$0xf]
        %v4779 = vld [vmem:[%s4777 + $0x4] sm:$0xf]
        %v4780 = vld [vmem:[%s4777 + $0x8] sm:$0xf]
        %v4781 = vld [vmem:[%s4777 + $0xc] sm:$0xf]
        %v4782 = vlaneseq
        %v4783 = vshrl.u32 %v4782, 7
        %v4784 = vsub.s32 4, %v4783
        %v4785 = vrot.slane %v3685, %v4784
        %v4790 = vunpack.c.l.b16 %v4778
        %v4791 = vunpack.c.l.b16 %v4779
        %v4792 = vunpack.c.l.b16 %v4780
        %v4793 = vunpack.c.l.b16 %v4781
        %v4794 = vpack.c.b16 %v4791, %v4790
        %v4795 = vpack.c.b16 %v4793, %v4792
        %v4799 = vsel %vm508, %v4776, 0
        %4801 = vmatprep.subr.bf16.mxu0 0
        %4802 = vmatpush1.bf16.msra.mxu0 %v4794
        %4803 = vmatprep.subr.bf16.mxu0 0
        %4804 = vmatpush1.bf16.msra.mxu0 %v4795
        %4805 = vmatprep.subr.bf16.mxu0 0
        %4806 = vmatpush1.bf16.msra.mxu0 0
        %4807 = vmatprep.subr.bf16.mxu0 0
        %4808 = vmatpush1.bf16.msra.mxu0 0
        %4809 = vmatprep.subr.bf16.mxu0 0
        %4810 = vmatpush1.bf16.msra.mxu0 0
        %4811 = vmatprep.subr.bf16.mxu0 0
        %4812 = vmatpush1.bf16.msra.mxu0 0
        %4813 = vmatprep.subr.bf16.mxu0 0
        %4814 = vmatpush1.bf16.msra.mxu0 0
        %4815 = vmatprep.subr.bf16.mxu0 0
        %4816 = vmatpush1.bf16.msra.mxu0 0
        %4817 = vmatprep.subr.bf16.mxu0 0
        %4818 = vmatpush1.bf16.msra.mxu0 0
        %4819 = vmatprep.subr.bf16.mxu0 0
        %4820 = vmatpush1.bf16.msra.mxu0 0
        %4821 = vmatprep.subr.bf16.mxu0 0
        %4822 = vmatpush1.bf16.msra.mxu0 0
        %4823 = vmatprep.subr.bf16.mxu0 0
        %4824 = vmatpush1.bf16.msra.mxu0 0
        %4825 = vmatprep.subr.bf16.mxu0 0
        %4826 = vmatpush1.bf16.msra.mxu0 0
        %4827 = vmatprep.subr.bf16.mxu0 0
        %4828 = vmatpush1.bf16.msra.mxu0 0
        %4829 = vmatprep.subr.bf16.mxu0 0
        %4830 = vmatpush1.bf16.msra.mxu0 0
        %4831 = vmatprep.subr.bf16.mxu0 0
        %4832 = vmatpush1.bf16.msra.mxu0 0
        %4833 = vmatprep.mubr.bf16.mxu0 0
        %4834 = vmatmul.mubr.bf16.gmra.mrb[0].mxu0 %v4799
        %v4835 = vpop.f32.mrb[0].mxu0
        %v4836 = vadd.f32 %v4785, %v4835
        %v4837 = vpop.f32.mrb[0].mxu0
        %v4838 = vpop.f32.mrb[0].mxu0
        %v4839 = vpop.f32.mrb[0].mxu0
        %4840 = vdwg.mxu0
        %v4841 = vadd.f32 %v3683, %v4836
        %v4842 = vsel %vm508, %v4841, 0.0
        %4843 = vadd.xlane.f32.xlu0 %v4842
        %v4844 = vpop.xlane.xlu0 %4843
        %v4845 = vmul.f32 %v4844, %v1651
        %v4846 = vsub.f32 %v4841, %v4845
        %v4847 = vmul.f32 %v4846, %v4846
        %v4848 = vsel %vm508, %v4847, 0.0
        %4849 = vadd.xlane.f32.xlu0 %v4848
        %v4850 = vpop.xlane.xlu0 %4849
        %v4851 = vmul.f32 %v4850, %v1651
        %v4852 = vadd.f32 %v4851, 1e-05
        %v4853 = vrsqrt.pop %v4852
        %v4854 = vmul.f32 %v4846, %v4853
        %v4855 = vlaneseq
        %v4856 = vshrl.u32 %v4855, 7
        %v4857 = vsub.s32 0, %v4856
        %v4858 = vrot.slane %v3685, %v4857
        %v4859 = vmul.f32 %v4854, %v4858
        %v4860 = vlaneseq
        %v4861 = vshrl.u32 %v4860, 7
        %v4862 = vsub.s32 1, %v4861
        %v4863 = vrot.slane %v3685, %v4862
        %v4864 = vadd.f32 %v4859, %v4863
        %v4865 = vpack.c.bf16 %v4864, %v4864
        %s4866 = scalar_lea.vmem %s5, 256
        %v4867 = vld [vmem:[%s4866] sm:$0xff]
        %v4868 = vld [vmem:[%s4866 + $0x8] sm:$0xff]
        %v4869 = vld [vmem:[%s4866 + $0x10] sm:$0xff]
        %v4870 = vld [vmem:[%s4866 + $0x18] sm:$0xff]
        %v4871 = vld [vmem:[%s4866 + $0x20] sm:$0xff]
        %v4872 = vld [vmem:[%s4866 + $0x28] sm:$0xff]
        %v4873 = vld [vmem:[%s4866 + $0x30] sm:$0xff]
        %v4874 = vld [vmem:[%s4866 + $0x38] sm:$0xff]
        %v4875 = vld [vmem:[%s4866 + $0x40] sm:$0xff]
        %v4876 = vld [vmem:[%s4866 + $0x48] sm:$0xff]
        %v4877 = vld [vmem:[%s4866 + $0x50] sm:$0xff]
        %v4878 = vld [vmem:[%s4866 + $0x58] sm:$0xff]
        %v4879 = vld [vmem:[%s4866 + $0x60] sm:$0xff]
        %v4880 = vld [vmem:[%s4866 + $0x68] sm:$0xff]
        %v4881 = vld [vmem:[%s4866 + $0x70] sm:$0xff]
        %v4882 = vld [vmem:[%s4866 + $0x78] sm:$0xff]
        %v4883 = vld [vmem:[%s4866 + $0x80] sm:$0xff]
        %v4884 = vld [vmem:[%s4866 + $0x88] sm:$0xff]
        %v4885 = vld [vmem:[%s4866 + $0x90] sm:$0xff]
        %v4886 = vld [vmem:[%s4866 + $0x98] sm:$0xff]
        %v4887 = vld [vmem:[%s4866 + $0xa0] sm:$0xff]
        %v4888 = vld [vmem:[%s4866 + $0xa8] sm:$0xff]
        %v4889 = vld [vmem:[%s4866 + $0xb0] sm:$0xff]
        %v4890 = vld [vmem:[%s4866 + $0xb8] sm:$0xff]
        %v4891 = vld [vmem:[%s4866 + $0xc0] sm:$0xff]
        %v4892 = vld [vmem:[%s4866 + $0xc8] sm:$0xff]
        %v4893 = vld [vmem:[%s4866 + $0xd0] sm:$0xff]
        %v4894 = vld [vmem:[%s4866 + $0xd8] sm:$0xff]
        %v4895 = vld [vmem:[%s4866 + $0xe0] sm:$0xff]
        %v4896 = vld [vmem:[%s4866 + $0xe8] sm:$0xff]
        %v4897 = vld [vmem:[%s4866 + $0xf0] sm:$0xff]
        %v4898 = vld [vmem:[%s4866 + $0xf8] sm:$0xff]
        %s4899 = scalar_lea.vmem %s6, 16
        %v4900 = vld [vmem:[%s4899] sm:$0xff]
        %v4901 = vld [vmem:[%s4899 + $0x8] sm:$0xff]
        %v4904 = vlaneseq
        %v4905 = vshrl.u32 %v4904, 7
        %v4906 = vsub.s32 0, %v4905
        %v4907 = vrot.slane %v4900, %v4906
        %v4908 = vlaneseq
        %v4909 = vshrl.u32 %v4908, 7
        %v4910 = vsub.s32 1, %v4909
        %v4911 = vrot.slane %v4900, %v4910
        %v4912 = vlaneseq
        %v4913 = vshrl.u32 %v4912, 7
        %v4914 = vsub.s32 2, %v4913
        %v4915 = vrot.slane %v4900, %v4914
        %v4916 = vlaneseq
        %v4917 = vshrl.u32 %v4916, 7
        %v4918 = vsub.s32 3, %v4917
        %v4919 = vrot.slane %v4900, %v4918
        %v4920 = vlaneseq
        %v4921 = vshrl.u32 %v4920, 7
        %v4922 = vsub.s32 4, %v4921
        %v4923 = vrot.slane %v4900, %v4922
        %v4924 = vlaneseq
        %v4925 = vshrl.u32 %v4924, 7
        %v4926 = vsub.s32 5, %v4925
        %v4927 = vrot.slane %v4900, %v4926
        %v4928 = vlaneseq
        %v4929 = vshrl.u32 %v4928, 7
        %v4930 = vsub.s32 6, %v4929
        %v4931 = vrot.slane %v4900, %v4930
        %v4932 = vlaneseq
        %v4933 = vshrl.u32 %v4932, 7
        %v4934 = vsub.s32 7, %v4933
        %v4935 = vrot.slane %v4900, %v4934
        %v4936 = vlaneseq
        %v4937 = vshrl.u32 %v4936, 7
        %v4938 = vsub.s32 0, %v4937
        %v4939 = vrot.slane %v4901, %v4938
        %v4940 = vlaneseq
        %v4941 = vshrl.u32 %v4940, 7
        %v4942 = vsub.s32 1, %v4941
        %v4943 = vrot.slane %v4901, %v4942
        %v4944 = vlaneseq
        %v4945 = vshrl.u32 %v4944, 7
        %v4946 = vsub.s32 2, %v4945
        %v4947 = vrot.slane %v4901, %v4946
        %v4948 = vlaneseq
        %v4949 = vshrl.u32 %v4948, 7
        %v4950 = vsub.s32 3, %v4949
        %v4951 = vrot.slane %v4901, %v4950
        %v4952 = vlaneseq
        %v4953 = vshrl.u32 %v4952, 7
        %v4954 = vsub.s32 4, %v4953
        %v4955 = vrot.slane %v4901, %v4954
        %v4956 = vlaneseq
        %v4957 = vshrl.u32 %v4956, 7
        %v4958 = vsub.s32 5, %v4957
        %v4959 = vrot.slane %v4901, %v4958
        %v4960 = vlaneseq
        %v4961 = vshrl.u32 %v4960, 7
        %v4962 = vsub.s32 6, %v4961
        %v4963 = vrot.slane %v4901, %v4962
        %v4964 = vlaneseq
        %v4965 = vshrl.u32 %v4964, 7
        %v4966 = vsub.s32 7, %v4965
        %v4967 = vrot.slane %v4901, %v4966
        %v5016 = vunpack.c.l.b16 %v4867
        %v5017 = vunpack.c.h.b16 %v4867
        %v5018 = vunpack.c.l.b16 %v4868
        %v5019 = vunpack.c.h.b16 %v4868
        %v5020 = vunpack.c.l.b16 %v4869
        %v5021 = vunpack.c.h.b16 %v4869
        %v5022 = vunpack.c.l.b16 %v4870
        %v5023 = vunpack.c.h.b16 %v4870
        %v5024 = vunpack.c.l.b16 %v4871
        %v5025 = vunpack.c.h.b16 %v4871
        %v5026 = vunpack.c.l.b16 %v4872
        %v5027 = vunpack.c.h.b16 %v4872
        %v5028 = vunpack.c.l.b16 %v4873
        %v5029 = vunpack.c.h.b16 %v4873
        %v5030 = vunpack.c.l.b16 %v4874
        %v5031 = vunpack.c.h.b16 %v4874
        %v5032 = vunpack.c.l.b16 %v4875
        %v5033 = vunpack.c.h.b16 %v4875
        %v5034 = vunpack.c.l.b16 %v4876
        %v5035 = vunpack.c.h.b16 %v4876
        %v5036 = vunpack.c.l.b16 %v4877
        %v5037 = vunpack.c.h.b16 %v4877
        %v5038 = vunpack.c.l.b16 %v4878
        %v5039 = vunpack.c.h.b16 %v4878
        %v5040 = vunpack.c.l.b16 %v4879
        %v5041 = vunpack.c.h.b16 %v4879
        %v5042 = vunpack.c.l.b16 %v4880
        %v5043 = vunpack.c.h.b16 %v4880
        %v5044 = vunpack.c.l.b16 %v4881
        %v5045 = vunpack.c.h.b16 %v4881
        %v5046 = vunpack.c.l.b16 %v4882
        %v5047 = vunpack.c.h.b16 %v4882
        %v5048 = vunpack.c.l.b16 %v4883
        %v5049 = vunpack.c.h.b16 %v4883
        %v5050 = vunpack.c.l.b16 %v4884
        %v5051 = vunpack.c.h.b16 %v4884
        %v5052 = vunpack.c.l.b16 %v4885
        %v5053 = vunpack.c.h.b16 %v4885
        %v5054 = vunpack.c.l.b16 %v4886
        %v5055 = vunpack.c.h.b16 %v4886
        %v5056 = vunpack.c.l.b16 %v4887
        %v5057 = vunpack.c.h.b16 %v4887
        %v5058 = vunpack.c.l.b16 %v4888
        %v5059 = vunpack.c.h.b16 %v4888
        %v5060 = vunpack.c.l.b16 %v4889
        %v5061 = vunpack.c.h.b16 %v4889
        %v5062 = vunpack.c.l.b16 %v4890
        %v5063 = vunpack.c.h.b16 %v4890
        %v5064 = vunpack.c.l.b16 %v4891
        %v5065 = vunpack.c.h.b16 %v4891
        %v5066 = vunpack.c.l.b16 %v4892
        %v5067 = vunpack.c.h.b16 %v4892
        %v5068 = vunpack.c.l.b16 %v4893
        %v5069 = vunpack.c.h.b16 %v4893
        %v5070 = vunpack.c.l.b16 %v4894
        %v5071 = vunpack.c.h.b16 %v4894
        %v5072 = vunpack.c.l.b16 %v4895
        %v5073 = vunpack.c.h.b16 %v4895
        %v5074 = vunpack.c.l.b16 %v4896
        %v5075 = vunpack.c.h.b16 %v4896
        %v5076 = vunpack.c.l.b16 %v4897
        %v5077 = vunpack.c.h.b16 %v4897
        %v5078 = vunpack.c.l.b16 %v4898
        %v5079 = vunpack.c.h.b16 %v4898
        %v5080 = vpack.c.b16 %v5032, %v5016
        %v5081 = vpack.c.b16 %v5033, %v5017
        %v5082 = vpack.c.b16 %v5034, %v5018
        %v5083 = vpack.c.b16 %v5035, %v5019
        %v5084 = vpack.c.b16 %v5036, %v5020
        %v5085 = vpack.c.b16 %v5037, %v5021
        %v5086 = vpack.c.b16 %v5038, %v5022
        %v5087 = vpack.c.b16 %v5039, %v5023
        %v5088 = vpack.c.b16 %v5040, %v5024
        %v5089 = vpack.c.b16 %v5041, %v5025
        %v5090 = vpack.c.b16 %v5042, %v5026
        %v5091 = vpack.c.b16 %v5043, %v5027
        %v5092 = vpack.c.b16 %v5044, %v5028
        %v5093 = vpack.c.b16 %v5045, %v5029
        %v5094 = vpack.c.b16 %v5046, %v5030
        %v5095 = vpack.c.b16 %v5047, %v5031
        %v5096 = vpack.c.b16 %v5064, %v5048
        %v5097 = vpack.c.b16 %v5065, %v5049
        %v5098 = vpack.c.b16 %v5066, %v5050
        %v5099 = vpack.c.b16 %v5067, %v5051
        %v5100 = vpack.c.b16 %v5068, %v5052
        %v5101 = vpack.c.b16 %v5069, %v5053
        %v5102 = vpack.c.b16 %v5070, %v5054
        %v5103 = vpack.c.b16 %v5071, %v5055
        %v5104 = vpack.c.b16 %v5072, %v5056
        %v5105 = vpack.c.b16 %v5073, %v5057
        %v5106 = vpack.c.b16 %v5074, %v5058
        %v5107 = vpack.c.b16 %v5075, %v5059
        %v5108 = vpack.c.b16 %v5076, %v5060
        %v5109 = vpack.c.b16 %v5077, %v5061
        %v5110 = vpack.c.b16 %v5078, %v5062
        %v5111 = vpack.c.b16 %v5079, %v5063
        %v5145 = vsel %vm508, %v4865, 0
        %5147 = vmatprep.subr.bf16.mxu0 %v5081
        %5148 = vmatpush1.bf16.msra.mxu0 %v5080
        %5149 = vmatprep.subr.bf16.mxu0 %v5097
        %5150 = vmatpush1.bf16.msra.mxu0 %v5096
        %5151 = vmatprep.subr.bf16.mxu0 0
        %5152 = vmatpush1.bf16.msra.mxu0 0
        %5153 = vmatprep.subr.bf16.mxu0 0
        %5154 = vmatpush1.bf16.msra.mxu0 0
        %5155 = vmatprep.subr.bf16.mxu0 0
        %5156 = vmatpush1.bf16.msra.mxu0 0
        %5157 = vmatprep.subr.bf16.mxu0 0
        %5158 = vmatpush1.bf16.msra.mxu0 0
        %5159 = vmatprep.subr.bf16.mxu0 0
        %5160 = vmatpush1.bf16.msra.mxu0 0
        %5161 = vmatprep.subr.bf16.mxu0 0
        %5162 = vmatpush1.bf16.msra.mxu0 0
        %5163 = vmatprep.subr.bf16.mxu0 0
        %5164 = vmatpush1.bf16.msra.mxu0 0
        %5165 = vmatprep.subr.bf16.mxu0 0
        %5166 = vmatpush1.bf16.msra.mxu0 0
        %5167 = vmatprep.subr.bf16.mxu0 0
        %5168 = vmatpush1.bf16.msra.mxu0 0
        %5169 = vmatprep.subr.bf16.mxu0 0
        %5170 = vmatpush1.bf16.msra.mxu0 0
        %5171 = vmatprep.subr.bf16.mxu0 0
        %5172 = vmatpush1.bf16.msra.mxu0 0
        %5173 = vmatprep.subr.bf16.mxu0 0
        %5174 = vmatpush1.bf16.msra.mxu0 0
        %5175 = vmatprep.subr.bf16.mxu0 0
        %5176 = vmatpush1.bf16.msra.mxu0 0
        %5177 = vmatprep.subr.bf16.mxu0 0
        %5178 = vmatpush1.bf16.msra.mxu0 0
        %5179 = vmatprep.mubr.bf16.mxu0 0
        %5180 = vmatmul.mubr.bf16.gmra.mrb[0].mxu0 %v5145
        %v5181 = vpop.f32.mrb[0].mxu0
        %v5182 = vadd.f32 %v4907, %v5181
        %v5183 = vpop.f32.mrb[0].mxu0
        %v5184 = vadd.f32 %v4911, %v5183
        %v5185 = vpop.f32.mrb[0].mxu0
        %v5186 = vpop.f32.mrb[0].mxu0
        %5187 = vdwg.mxu0
        %5188 = vmatprep.subr.bf16.mxu0 %v5083
        %5189 = vmatpush1.bf16.msra.mxu0 %v5082
        %5190 = vmatprep.subr.bf16.mxu0 %v5099
        %5191 = vmatpush1.bf16.msra.mxu0 %v5098
        %5192 = vmatprep.subr.bf16.mxu0 0
        %5193 = vmatpush1.bf16.msra.mxu0 0
        %5194 = vmatprep.subr.bf16.mxu0 0
        %5195 = vmatpush1.bf16.msra.mxu0 0
        %5196 = vmatprep.subr.bf16.mxu0 0
        %5197 = vmatpush1.bf16.msra.mxu0 0
        %5198 = vmatprep.subr.bf16.mxu0 0
        %5199 = vmatpush1.bf16.msra.mxu0 0
        %5200 = vmatprep.subr.bf16.mxu0 0
        %5201 = vmatpush1.bf16.msra.mxu0 0
        %5202 = vmatprep.subr.bf16.mxu0 0
        %5203 = vmatpush1.bf16.msra.mxu0 0
        %5204 = vmatprep.subr.bf16.mxu0 0
        %5205 = vmatpush1.bf16.msra.mxu0 0
        %5206 = vmatprep.subr.bf16.mxu0 0
        %5207 = vmatpush1.bf16.msra.mxu0 0
        %5208 = vmatprep.subr.bf16.mxu0 0
        %5209 = vmatpush1.bf16.msra.mxu0 0
        %5210 = vmatprep.subr.bf16.mxu0 0
        %5211 = vmatpush1.bf16.msra.mxu0 0
        %5212 = vmatprep.subr.bf16.mxu0 0
        %5213 = vmatpush1.bf16.msra.mxu0 0
        %5214 = vmatprep.subr.bf16.mxu0 0
        %5215 = vmatpush1.bf16.msra.mxu0 0
        %5216 = vmatprep.subr.bf16.mxu0 0
        %5217 = vmatpush1.bf16.msra.mxu0 0
        %5218 = vmatprep.subr.bf16.mxu0 0
        %5219 = vmatpush1.bf16.msra.mxu0 0
        %5220 = vmatprep.mubr.bf16.mxu0 0
        %5221 = vmatmul.mubr.bf16.gmra.mrb[0].mxu0 %v5145
        %v5222 = vpop.f32.mrb[0].mxu0
        %v5223 = vadd.f32 %v4915, %v5222
        %v5224 = vpop.f32.mrb[0].mxu0
        %v5225 = vadd.f32 %v4919, %v5224
        %v5226 = vpop.f32.mrb[0].mxu0
        %v5227 = vpop.f32.mrb[0].mxu0
        %5228 = vdwg.mxu0
        %5229 = vmatprep.subr.bf16.mxu0 %v5085
        %5230 = vmatpush1.bf16.msra.mxu0 %v5084
        %5231 = vmatprep.subr.bf16.mxu0 %v5101
        %5232 = vmatpush1.bf16.msra.mxu0 %v5100
        %5233 = vmatprep.subr.bf16.mxu0 0
        %5234 = vmatpush1.bf16.msra.mxu0 0
        %5235 = vmatprep.subr.bf16.mxu0 0
        %5236 = vmatpush1.bf16.msra.mxu0 0
        %5237 = vmatprep.subr.bf16.mxu0 0
        %5238 = vmatpush1.bf16.msra.mxu0 0
        %5239 = vmatprep.subr.bf16.mxu0 0
        %5240 = vmatpush1.bf16.msra.mxu0 0
        %5241 = vmatprep.subr.bf16.mxu0 0
        %5242 = vmatpush1.bf16.msra.mxu0 0
        %5243 = vmatprep.subr.bf16.mxu0 0
        %5244 = vmatpush1.bf16.msra.mxu0 0
        %5245 = vmatprep.subr.bf16.mxu0 0
        %5246 = vmatpush1.bf16.msra.mxu0 0
        %5247 = vmatprep.subr.bf16.mxu0 0
        %5248 = vmatpush1.bf16.msra.mxu0 0
        %5249 = vmatprep.subr.bf16.mxu0 0
        %5250 = vmatpush1.bf16.msra.mxu0 0
        %5251 = vmatprep.subr.bf16.mxu0 0
        %5252 = vmatpush1.bf16.msra.mxu0 0
        %5253 = vmatprep.subr.bf16.mxu0 0
        %5254 = vmatpush1.bf16.msra.mxu0 0
        %5255 = vmatprep.subr.bf16.mxu0 0
        %5256 = vmatpush1.bf16.msra.mxu0 0
        %5257 = vmatprep.subr.bf16.mxu0 0
        %5258 = vmatpush1.bf16.msra.mxu0 0
        %5259 = vmatprep.subr.bf16.mxu0 0
        %5260 = vmatpush1.bf16.msra.mxu0 0
        %5261 = vmatprep.mubr.bf16.mxu0 0
        %5262 = vmatmul.mubr.bf16.gmra.mrb[0].mxu0 %v5145
        %v5263 = vpop.f32.mrb[0].mxu0
        %v5264 = vadd.f32 %v4923, %v5263
        %v5265 = vpop.f32.mrb[0].mxu0
        %v5266 = vadd.f32 %v4927, %v5265
        %v5267 = vpop.f32.mrb[0].mxu0
        %v5268 = vpop.f32.mrb[0].mxu0
        %5269 = vdwg.mxu0
        %5270 = vmatprep.subr.bf16.mxu0 %v5087
        %5271 = vmatpush1.bf16.msra.mxu0 %v5086
        %5272 = vmatprep.subr.bf16.mxu0 %v5103
        %5273 = vmatpush1.bf16.msra.mxu0 %v5102
        %5274 = vmatprep.subr.bf16.mxu0 0
        %5275 = vmatpush1.bf16.msra.mxu0 0
        %5276 = vmatprep.subr.bf16.mxu0 0
        %5277 = vmatpush1.bf16.msra.mxu0 0
        %5278 = vmatprep.subr.bf16.mxu0 0
        %5279 = vmatpush1.bf16.msra.mxu0 0
        %5280 = vmatprep.subr.bf16.mxu0 0
        %5281 = vmatpush1.bf16.msra.mxu0 0
        %5282 = vmatprep.subr.bf16.mxu0 0
        %5283 = vmatpush1.bf16.msra.mxu0 0
        %5284 = vmatprep.subr.bf16.mxu0 0
        %5285 = vmatpush1.bf16.msra.mxu0 0
        %5286 = vmatprep.subr.bf16.mxu0 0
        %5287 = vmatpush1.bf16.msra.mxu0 0
        %5288 = vmatprep.subr.bf16.mxu0 0
        %5289 = vmatpush1.bf16.msra.mxu0 0
        %5290 = vmatprep.subr.bf16.mxu0 0
        %5291 = vmatpush1.bf16.msra.mxu0 0
        %5292 = vmatprep.subr.bf16.mxu0 0
        %5293 = vmatpush1.bf16.msra.mxu0 0
        %5294 = vmatprep.subr.bf16.mxu0 0
        %5295 = vmatpush1.bf16.msra.mxu0 0
        %5296 = vmatprep.subr.bf16.mxu0 0
        %5297 = vmatpush1.bf16.msra.mxu0 0
        %5298 = vmatprep.subr.bf16.mxu0 0
        %5299 = vmatpush1.bf16.msra.mxu0 0
        %5300 = vmatprep.subr.bf16.mxu0 0
        %5301 = vmatpush1.bf16.msra.mxu0 0
        %5302 = vmatprep.mubr.bf16.mxu0 0
        %5303 = vmatmul.mubr.bf16.gmra.mrb[0].mxu0 %v5145
        %v5304 = vpop.f32.mrb[0].mxu0
        %v5305 = vadd.f32 %v4931, %v5304
        %v5306 = vpop.f32.mrb[0].mxu0
        %v5307 = vadd.f32 %v4935, %v5306
        %v5308 = vpop.f32.mrb[0].mxu0
        %v5309 = vpop.f32.mrb[0].mxu0
        %5310 = vdwg.mxu0
        %5311 = vmatprep.subr.bf16.mxu0 %v5089
        %5312 = vmatpush1.bf16.msra.mxu0 %v5088
        %5313 = vmatprep.subr.bf16.mxu0 %v5105
        %5314 = vmatpush1.bf16.msra.mxu0 %v5104
        %5315 = vmatprep.subr.bf16.mxu0 0
        %5316 = vmatpush1.bf16.msra.mxu0 0
        %5317 = vmatprep.subr.bf16.mxu0 0
        %5318 = vmatpush1.bf16.msra.mxu0 0
        %5319 = vmatprep.subr.bf16.mxu0 0
        %5320 = vmatpush1.bf16.msra.mxu0 0
        %5321 = vmatprep.subr.bf16.mxu0 0
        %5322 = vmatpush1.bf16.msra.mxu0 0
        %5323 = vmatprep.subr.bf16.mxu0 0
        %5324 = vmatpush1.bf16.msra.mxu0 0
        %5325 = vmatprep.subr.bf16.mxu0 0
        %5326 = vmatpush1.bf16.msra.mxu0 0
        %5327 = vmatprep.subr.bf16.mxu0 0
        %5328 = vmatpush1.bf16.msra.mxu0 0
        %5329 = vmatprep.subr.bf16.mxu0 0
        %5330 = vmatpush1.bf16.msra.mxu0 0
        %5331 = vmatprep.subr.bf16.mxu0 0
        %5332 = vmatpush1.bf16.msra.mxu0 0
        %5333 = vmatprep.subr.bf16.mxu0 0
        %5334 = vmatpush1.bf16.msra.mxu0 0
        %5335 = vmatprep.subr.bf16.mxu0 0
        %5336 = vmatpush1.bf16.msra.mxu0 0
        %5337 = vmatprep.subr.bf16.mxu0 0
        %5338 = vmatpush1.bf16.msra.mxu0 0
        %5339 = vmatprep.subr.bf16.mxu0 0
        %5340 = vmatpush1.bf16.msra.mxu0 0
        %5341 = vmatprep.subr.bf16.mxu0 0
        %5342 = vmatpush1.bf16.msra.mxu0 0
        %5343 = vmatprep.mubr.bf16.mxu0 0
        %5344 = vmatmul.mubr.bf16.gmra.mrb[0].mxu0 %v5145
        %v5345 = vpop.f32.mrb[0].mxu0
        %v5346 = vadd.f32 %v4939, %v5345
        %v5347 = vpop.f32.mrb[0].mxu0
        %v5348 = vadd.f32 %v4943, %v5347
        %v5349 = vpop.f32.mrb[0].mxu0
        %v5350 = vpop.f32.mrb[0].mxu0
        %5351 = vdwg.mxu0
        %5352 = vmatprep.subr.bf16.mxu0 %v5091
        %5353 = vmatpush1.bf16.msra.mxu0 %v5090
        %5354 = vmatprep.subr.bf16.mxu0 %v5107
        %5355 = vmatpush1.bf16.msra.mxu0 %v5106
        %5356 = vmatprep.subr.bf16.mxu0 0
        %5357 = vmatpush1.bf16.msra.mxu0 0
        %5358 = vmatprep.subr.bf16.mxu0 0
        %5359 = vmatpush1.bf16.msra.mxu0 0
        %5360 = vmatprep.subr.bf16.mxu0 0
        %5361 = vmatpush1.bf16.msra.mxu0 0
        %5362 = vmatprep.subr.bf16.mxu0 0
        %5363 = vmatpush1.bf16.msra.mxu0 0
        %5364 = vmatprep.subr.bf16.mxu0 0
        %5365 = vmatpush1.bf16.msra.mxu0 0
        %5366 = vmatprep.subr.bf16.mxu0 0
        %5367 = vmatpush1.bf16.msra.mxu0 0
        %5368 = vmatprep.subr.bf16.mxu0 0
        %5369 = vmatpush1.bf16.msra.mxu0 0
        %5370 = vmatprep.subr.bf16.mxu0 0
        %5371 = vmatpush1.bf16.msra.mxu0 0
        %5372 = vmatprep.subr.bf16.mxu0 0
        %5373 = vmatpush1.bf16.msra.mxu0 0
        %5374 = vmatprep.subr.bf16.mxu0 0
        %5375 = vmatpush1.bf16.msra.mxu0 0
        %5376 = vmatprep.subr.bf16.mxu0 0
        %5377 = vmatpush1.bf16.msra.mxu0 0
        %5378 = vmatprep.subr.bf16.mxu0 0
        %5379 = vmatpush1.bf16.msra.mxu0 0
        %5380 = vmatprep.subr.bf16.mxu0 0
        %5381 = vmatpush1.bf16.msra.mxu0 0
        %5382 = vmatprep.subr.bf16.mxu0 0
        %5383 = vmatpush1.bf16.msra.mxu0 0
        %5384 = vmatprep.mubr.bf16.mxu0 0
        %5385 = vmatmul.mubr.bf16.gmra.mrb[0].mxu0 %v5145
        %v5386 = vpop.f32.mrb[0].mxu0
        %v5387 = vadd.f32 %v4947, %v5386
        %v5388 = vpop.f32.mrb[0].mxu0
        %v5389 = vadd.f32 %v4951, %v5388
        %v5390 = vpop.f32.mrb[0].mxu0
        %v5391 = vpop.f32.mrb[0].mxu0
        %5392 = vdwg.mxu0
        %5393 = vmatprep.subr.bf16.mxu0 %v5093
        %5394 = vmatpush1.bf16.msra.mxu0 %v5092
        %5395 = vmatprep.subr.bf16.mxu0 %v5109
        %5396 = vmatpush1.bf16.msra.mxu0 %v5108
        %5397 = vmatprep.subr.bf16.mxu0 0
        %5398 = vmatpush1.bf16.msra.mxu0 0
        %5399 = vmatprep.subr.bf16.mxu0 0
        %5400 = vmatpush1.bf16.msra.mxu0 0
        %5401 = vmatprep.subr.bf16.mxu0 0
        %5402 = vmatpush1.bf16.msra.mxu0 0
        %5403 = vmatprep.subr.bf16.mxu0 0
        %5404 = vmatpush1.bf16.msra.mxu0 0
        %5405 = vmatprep.subr.bf16.mxu0 0
        %5406 = vmatpush1.bf16.msra.mxu0 0
        %5407 = vmatprep.subr.bf16.mxu0 0
        %5408 = vmatpush1.bf16.msra.mxu0 0
        %5409 = vmatprep.subr.bf16.mxu0 0
        %5410 = vmatpush1.bf16.msra.mxu0 0
        %5411 = vmatprep.subr.bf16.mxu0 0
        %5412 = vmatpush1.bf16.msra.mxu0 0
        %5413 = vmatprep.subr.bf16.mxu0 0
        %5414 = vmatpush1.bf16.msra.mxu0 0
        %5415 = vmatprep.subr.bf16.mxu0 0
        %5416 = vmatpush1.bf16.msra.mxu0 0
        %5417 = vmatprep.subr.bf16.mxu0 0
        %5418 = vmatpush1.bf16.msra.mxu0 0
        %5419 = vmatprep.subr.bf16.mxu0 0
        %5420 = vmatpush1.bf16.msra.mxu0 0
        %5421 = vmatprep.subr.bf16.mxu0 0
        %5422 = vmatpush1.bf16.msra.mxu0 0
        %5423 = vmatprep.subr.bf16.mxu0 0
        %5424 = vmatpush1.bf16.msra.mxu0 0
        %5425 = vmatprep.mubr.bf16.mxu0 0
        %5426 = vmatmul.mubr.bf16.gmra.mrb[0].mxu0 %v5145
        %v5427 = vpop.f32.mrb[0].mxu0
        %v5428 = vadd.f32 %v4955, %v5427
        %v5429 = vpop.f32.mrb[0].mxu0
        %v5430 = vadd.f32 %v4959, %v5429
        %v5431 = vpop.f32.mrb[0].mxu0
        %v5432 = vpop.f32.mrb[0].mxu0
        %5433 = vdwg.mxu0
        %5434 = vmatprep.subr.bf16.mxu0 %v5095
        %5435 = vmatpush1.bf16.msra.mxu0 %v5094
        %5436 = vmatprep.subr.bf16.mxu0 %v5111
        %5437 = vmatpush1.bf16.msra.mxu0 %v5110
        %5438 = vmatprep.subr.bf16.mxu0 0
        %5439 = vmatpush1.bf16.msra.mxu0 0
        %5440 = vmatprep.subr.bf16.mxu0 0
        %5441 = vmatpush1.bf16.msra.mxu0 0
        %5442 = vmatprep.subr.bf16.mxu0 0
        %5443 = vmatpush1.bf16.msra.mxu0 0
        %5444 = vmatprep.subr.bf16.mxu0 0
        %5445 = vmatpush1.bf16.msra.mxu0 0
        %5446 = vmatprep.subr.bf16.mxu0 0
        %5447 = vmatpush1.bf16.msra.mxu0 0
        %5448 = vmatprep.subr.bf16.mxu0 0
        %5449 = vmatpush1.bf16.msra.mxu0 0
        %5450 = vmatprep.subr.bf16.mxu0 0
        %5451 = vmatpush1.bf16.msra.mxu0 0
        %5452 = vmatprep.subr.bf16.mxu0 0
        %5453 = vmatpush1.bf16.msra.mxu0 0
        %5454 = vmatprep.subr.bf16.mxu0 0
        %5455 = vmatpush1.bf16.msra.mxu0 0
        %5456 = vmatprep.subr.bf16.mxu0 0
        %5457 = vmatpush1.bf16.msra.mxu0 0
        %5458 = vmatprep.subr.bf16.mxu0 0
        %5459 = vmatpush1.bf16.msra.mxu0 0
        %5460 = vmatprep.subr.bf16.mxu0 0
        %5461 = vmatpush1.bf16.msra.mxu0 0
        %5462 = vmatprep.subr.bf16.mxu0 0
        %5463 = vmatpush1.bf16.msra.mxu0 0
        %5464 = vmatprep.subr.bf16.mxu0 0
        %5465 = vmatpush1.bf16.msra.mxu0 0
        %5466 = vmatprep.mubr.bf16.mxu0 0
        %5467 = vmatmul.mubr.bf16.gmra.mrb[0].mxu0 %v5145
        %v5468 = vpop.f32.mrb[0].mxu0
        %v5469 = vadd.f32 %v4963, %v5468
        %v5470 = vpop.f32.mrb[0].mxu0
        %v5471 = vadd.f32 %v4967, %v5470
        %v5472 = vpop.f32.mrb[0].mxu0
        %v5473 = vpop.f32.mrb[0].mxu0
        %5474 = vdwg.mxu0
        %v5475 = vmax.f32 %v5182, 0.0
        %v5476 = vmax.f32 %v5184, 0.0
        %v5477 = vmax.f32 %v5223, 0.0
        %v5478 = vmax.f32 %v5225, 0.0
        %v5479 = vmax.f32 %v5264, 0.0
        %v5480 = vmax.f32 %v5266, 0.0
        %v5481 = vmax.f32 %v5305, 0.0
        %v5482 = vmax.f32 %v5307, 0.0
        %v5483 = vmax.f32 %v5346, 0.0
        %v5484 = vmax.f32 %v5348, 0.0
        %v5485 = vmax.f32 %v5387, 0.0
        %v5486 = vmax.f32 %v5389, 0.0
        %v5487 = vmax.f32 %v5428, 0.0
        %v5488 = vmax.f32 %v5430, 0.0
        %v5489 = vmax.f32 %v5469, 0.0
        %v5490 = vmax.f32 %v5471, 0.0
        %v5491 = vpack.c.bf16 %v5475, %v5475
        %v5492 = vpack.c.bf16 %v5476, %v5476
        %v5493 = vpack.c.bf16 %v5477, %v5477
        %v5494 = vpack.c.bf16 %v5478, %v5478
        %v5495 = vpack.c.bf16 %v5479, %v5479
        %v5496 = vpack.c.bf16 %v5480, %v5480
        %v5497 = vpack.c.bf16 %v5481, %v5481
        %v5498 = vpack.c.bf16 %v5482, %v5482
        %v5499 = vpack.c.bf16 %v5483, %v5483
        %v5500 = vpack.c.bf16 %v5484, %v5484
        %v5501 = vpack.c.bf16 %v5485, %v5485
        %v5502 = vpack.c.bf16 %v5486, %v5486
        %v5503 = vpack.c.bf16 %v5487, %v5487
        %v5504 = vpack.c.bf16 %v5488, %v5488
        %v5505 = vpack.c.bf16 %v5489, %v5489
        %v5506 = vpack.c.bf16 %v5490, %v5490
        %s5507 = scalar_lea.vmem %s7, 1024
        %v5508 = vld [vmem:[%s5507] sm:$0xf]
        %v5509 = vld [vmem:[%s5507 + $0x4] sm:$0xf]
        %v5510 = vld [vmem:[%s5507 + $0x8] sm:$0xf]
        %v5511 = vld [vmem:[%s5507 + $0xc] sm:$0xf]
        %v5512 = vld [vmem:[%s5507 + $0x10] sm:$0xf]
        %v5513 = vld [vmem:[%s5507 + $0x14] sm:$0xf]
        %v5514 = vld [vmem:[%s5507 + $0x18] sm:$0xf]
        %v5515 = vld [vmem:[%s5507 + $0x1c] sm:$0xf]
        %v5516 = vld [vmem:[%s5507 + $0x20] sm:$0xf]
        %v5517 = vld [vmem:[%s5507 + $0x24] sm:$0xf]
        %v5518 = vld [vmem:[%s5507 + $0x28] sm:$0xf]
        %v5519 = vld [vmem:[%s5507 + $0x2c] sm:$0xf]
        %v5520 = vld [vmem:[%s5507 + $0x30] sm:$0xf]
        %v5521 = vld [vmem:[%s5507 + $0x34] sm:$0xf]
        %v5522 = vld [vmem:[%s5507 + $0x38] sm:$0xf]
        %v5523 = vld [vmem:[%s5507 + $0x3c] sm:$0xf]
        %v5524 = vld [vmem:[%s5507 + $0x40] sm:$0xf]
        %v5525 = vld [vmem:[%s5507 + $0x44] sm:$0xf]
        %v5526 = vld [vmem:[%s5507 + $0x48] sm:$0xf]
        %v5527 = vld [vmem:[%s5507 + $0x4c] sm:$0xf]
        %v5528 = vld [vmem:[%s5507 + $0x50] sm:$0xf]
        %v5529 = vld [vmem:[%s5507 + $0x54] sm:$0xf]
        %v5530 = vld [vmem:[%s5507 + $0x58] sm:$0xf]
        %v5531 = vld [vmem:[%s5507 + $0x5c] sm:$0xf]
        %v5532 = vld [vmem:[%s5507 + $0x60] sm:$0xf]
        %v5533 = vld [vmem:[%s5507 + $0x64] sm:$0xf]
        %v5534 = vld [vmem:[%s5507 + $0x68] sm:$0xf]
        %v5535 = vld [vmem:[%s5507 + $0x6c] sm:$0xf]
        %v5536 = vld [vmem:[%s5507 + $0x70] sm:$0xf]
        %v5537 = vld [vmem:[%s5507 + $0x74] sm:$0xf]
        %v5538 = vld [vmem:[%s5507 + $0x78] sm:$0xf]
        %v5539 = vld [vmem:[%s5507 + $0x7c] sm:$0xf]
        %v5540 = vld [vmem:[%s5507 + $0x80] sm:$0xf]
        %v5541 = vld [vmem:[%s5507 + $0x84] sm:$0xf]
        %v5542 = vld [vmem:[%s5507 + $0x88] sm:$0xf]
        %v5543 = vld [vmem:[%s5507 + $0x8c] sm:$0xf]
        %v5544 = vld [vmem:[%s5507 + $0x90] sm:$0xf]
        %v5545 = vld [vmem:[%s5507 + $0x94] sm:$0xf]
        %v5546 = vld [vmem:[%s5507 + $0x98] sm:$0xf]
        %v5547 = vld [vmem:[%s5507 + $0x9c] sm:$0xf]
        %v5548 = vld [vmem:[%s5507 + $0xa0] sm:$0xf]
        %v5549 = vld [vmem:[%s5507 + $0xa4] sm:$0xf]
        %v5550 = vld [vmem:[%s5507 + $0xa8] sm:$0xf]
        %v5551 = vld [vmem:[%s5507 + $0xac] sm:$0xf]
        %v5552 = vld [vmem:[%s5507 + $0xb0] sm:$0xf]
        %v5553 = vld [vmem:[%s5507 + $0xb4] sm:$0xf]
        %v5554 = vld [vmem:[%s5507 + $0xb8] sm:$0xf]
        %v5555 = vld [vmem:[%s5507 + $0xbc] sm:$0xf]
        %v5556 = vld [vmem:[%s5507 + $0xc0] sm:$0xf]
        %v5557 = vld [vmem:[%s5507 + $0xc4] sm:$0xf]
        %v5558 = vld [vmem:[%s5507 + $0xc8] sm:$0xf]
        %v5559 = vld [vmem:[%s5507 + $0xcc] sm:$0xf]
        %v5560 = vld [vmem:[%s5507 + $0xd0] sm:$0xf]
        %v5561 = vld [vmem:[%s5507 + $0xd4] sm:$0xf]
        %v5562 = vld [vmem:[%s5507 + $0xd8] sm:$0xf]
        %v5563 = vld [vmem:[%s5507 + $0xdc] sm:$0xf]
        %v5564 = vld [vmem:[%s5507 + $0xe0] sm:$0xf]
        %v5565 = vld [vmem:[%s5507 + $0xe4] sm:$0xf]
        %v5566 = vld [vmem:[%s5507 + $0xe8] sm:$0xf]
        %v5567 = vld [vmem:[%s5507 + $0xec] sm:$0xf]
        %v5568 = vld [vmem:[%s5507 + $0xf0] sm:$0xf]
        %v5569 = vld [vmem:[%s5507 + $0xf4] sm:$0xf]
        %v5570 = vld [vmem:[%s5507 + $0xf8] sm:$0xf]
        %v5571 = vld [vmem:[%s5507 + $0xfc] sm:$0xf]
        %v5572 = vld [vmem:[%s5507 + $0x100] sm:$0xf]
        %v5573 = vld [vmem:[%s5507 + $0x104] sm:$0xf]
        %v5574 = vld [vmem:[%s5507 + $0x108] sm:$0xf]
        %v5575 = vld [vmem:[%s5507 + $0x10c] sm:$0xf]
        %v5576 = vld [vmem:[%s5507 + $0x110] sm:$0xf]
        %v5577 = vld [vmem:[%s5507 + $0x114] sm:$0xf]
        %v5578 = vld [vmem:[%s5507 + $0x118] sm:$0xf]
        %v5579 = vld [vmem:[%s5507 + $0x11c] sm:$0xf]
        %v5580 = vld [vmem:[%s5507 + $0x120] sm:$0xf]
        %v5581 = vld [vmem:[%s5507 + $0x124] sm:$0xf]
        %v5582 = vld [vmem:[%s5507 + $0x128] sm:$0xf]
        %v5583 = vld [vmem:[%s5507 + $0x12c] sm:$0xf]
        %v5584 = vld [vmem:[%s5507 + $0x130] sm:$0xf]
        %v5585 = vld [vmem:[%s5507 + $0x134] sm:$0xf]
        %v5586 = vld [vmem:[%s5507 + $0x138] sm:$0xf]
        %v5587 = vld [vmem:[%s5507 + $0x13c] sm:$0xf]
        %v5588 = vld [vmem:[%s5507 + $0x140] sm:$0xf]
        %v5589 = vld [vmem:[%s5507 + $0x144] sm:$0xf]
        %v5590 = vld [vmem:[%s5507 + $0x148] sm:$0xf]
        %v5591 = vld [vmem:[%s5507 + $0x14c] sm:$0xf]
        %v5592 = vld [vmem:[%s5507 + $0x150] sm:$0xf]
        %v5593 = vld [vmem:[%s5507 + $0x154] sm:$0xf]
        %v5594 = vld [vmem:[%s5507 + $0x158] sm:$0xf]
        %v5595 = vld [vmem:[%s5507 + $0x15c] sm:$0xf]
        %v5596 = vld [vmem:[%s5507 + $0x160] sm:$0xf]
        %v5597 = vld [vmem:[%s5507 + $0x164] sm:$0xf]
        %v5598 = vld [vmem:[%s5507 + $0x168] sm:$0xf]
        %v5599 = vld [vmem:[%s5507 + $0x16c] sm:$0xf]
        %v5600 = vld [vmem:[%s5507 + $0x170] sm:$0xf]
        %v5601 = vld [vmem:[%s5507 + $0x174] sm:$0xf]
        %v5602 = vld [vmem:[%s5507 + $0x178] sm:$0xf]
        %v5603 = vld [vmem:[%s5507 + $0x17c] sm:$0xf]
        %v5604 = vld [vmem:[%s5507 + $0x180] sm:$0xf]
        %v5605 = vld [vmem:[%s5507 + $0x184] sm:$0xf]
        %v5606 = vld [vmem:[%s5507 + $0x188] sm:$0xf]
        %v5607 = vld [vmem:[%s5507 + $0x18c] sm:$0xf]
        %v5608 = vld [vmem:[%s5507 + $0x190] sm:$0xf]
        %v5609 = vld [vmem:[%s5507 + $0x194] sm:$0xf]
        %v5610 = vld [vmem:[%s5507 + $0x198] sm:$0xf]
        %v5611 = vld [vmem:[%s5507 + $0x19c] sm:$0xf]
        %v5612 = vld [vmem:[%s5507 + $0x1a0] sm:$0xf]
        %v5613 = vld [vmem:[%s5507 + $0x1a4] sm:$0xf]
        %v5614 = vld [vmem:[%s5507 + $0x1a8] sm:$0xf]
        %v5615 = vld [vmem:[%s5507 + $0x1ac] sm:$0xf]
        %v5616 = vld [vmem:[%s5507 + $0x1b0] sm:$0xf]
        %v5617 = vld [vmem:[%s5507 + $0x1b4] sm:$0xf]
        %v5618 = vld [vmem:[%s5507 + $0x1b8] sm:$0xf]
        %v5619 = vld [vmem:[%s5507 + $0x1bc] sm:$0xf]
        %v5620 = vld [vmem:[%s5507 + $0x1c0] sm:$0xf]
        %v5621 = vld [vmem:[%s5507 + $0x1c4] sm:$0xf]
        %v5622 = vld [vmem:[%s5507 + $0x1c8] sm:$0xf]
        %v5623 = vld [vmem:[%s5507 + $0x1cc] sm:$0xf]
        %v5624 = vld [vmem:[%s5507 + $0x1d0] sm:$0xf]
        %v5625 = vld [vmem:[%s5507 + $0x1d4] sm:$0xf]
        %v5626 = vld [vmem:[%s5507 + $0x1d8] sm:$0xf]
        %v5627 = vld [vmem:[%s5507 + $0x1dc] sm:$0xf]
        %v5628 = vld [vmem:[%s5507 + $0x1e0] sm:$0xf]
        %v5629 = vld [vmem:[%s5507 + $0x1e4] sm:$0xf]
        %v5630 = vld [vmem:[%s5507 + $0x1e8] sm:$0xf]
        %v5631 = vld [vmem:[%s5507 + $0x1ec] sm:$0xf]
        %v5632 = vld [vmem:[%s5507 + $0x1f0] sm:$0xf]
        %v5633 = vld [vmem:[%s5507 + $0x1f4] sm:$0xf]
        %v5634 = vld [vmem:[%s5507 + $0x1f8] sm:$0xf]
        %v5635 = vld [vmem:[%s5507 + $0x1fc] sm:$0xf]
        %v5636 = vld [vmem:[%s5507 + $0x200] sm:$0xf]
        %v5637 = vld [vmem:[%s5507 + $0x204] sm:$0xf]
        %v5638 = vld [vmem:[%s5507 + $0x208] sm:$0xf]
        %v5639 = vld [vmem:[%s5507 + $0x20c] sm:$0xf]
        %v5640 = vld [vmem:[%s5507 + $0x210] sm:$0xf]
        %v5641 = vld [vmem:[%s5507 + $0x214] sm:$0xf]
        %v5642 = vld [vmem:[%s5507 + $0x218] sm:$0xf]
        %v5643 = vld [vmem:[%s5507 + $0x21c] sm:$0xf]
        %v5644 = vld [vmem:[%s5507 + $0x220] sm:$0xf]
        %v5645 = vld [vmem:[%s5507 + $0x224] sm:$0xf]
        %v5646 = vld [vmem:[%s5507 + $0x228] sm:$0xf]
        %v5647 = vld [vmem:[%s5507 + $0x22c] sm:$0xf]
        %v5648 = vld [vmem:[%s5507 + $0x230] sm:$0xf]
        %v5649 = vld [vmem:[%s5507 + $0x234] sm:$0xf]
        %v5650 = vld [vmem:[%s5507 + $0x238] sm:$0xf]
        %v5651 = vld [vmem:[%s5507 + $0x23c] sm:$0xf]
        %v5652 = vld [vmem:[%s5507 + $0x240] sm:$0xf]
        %v5653 = vld [vmem:[%s5507 + $0x244] sm:$0xf]
        %v5654 = vld [vmem:[%s5507 + $0x248] sm:$0xf]
        %v5655 = vld [vmem:[%s5507 + $0x24c] sm:$0xf]
        %v5656 = vld [vmem:[%s5507 + $0x250] sm:$0xf]
        %v5657 = vld [vmem:[%s5507 + $0x254] sm:$0xf]
        %v5658 = vld [vmem:[%s5507 + $0x258] sm:$0xf]
        %v5659 = vld [vmem:[%s5507 + $0x25c] sm:$0xf]
        %v5660 = vld [vmem:[%s5507 + $0x260] sm:$0xf]
        %v5661 = vld [vmem:[%s5507 + $0x264] sm:$0xf]
        %v5662 = vld [vmem:[%s5507 + $0x268] sm:$0xf]
        %v5663 = vld [vmem:[%s5507 + $0x26c] sm:$0xf]
        %v5664 = vld [vmem:[%s5507 + $0x270] sm:$0xf]
        %v5665 = vld [vmem:[%s5507 + $0x274] sm:$0xf]
        %v5666 = vld [vmem:[%s5507 + $0x278] sm:$0xf]
        %v5667 = vld [vmem:[%s5507 + $0x27c] sm:$0xf]
        %v5668 = vld [vmem:[%s5507 + $0x280] sm:$0xf]
        %v5669 = vld [vmem:[%s5507 + $0x284] sm:$0xf]
        %v5670 = vld [vmem:[%s5507 + $0x288] sm:$0xf]
        %v5671 = vld [vmem:[%s5507 + $0x28c] sm:$0xf]
        %v5672 = vld [vmem:[%s5507 + $0x290] sm:$0xf]
        %v5673 = vld [vmem:[%s5507 + $0x294] sm:$0xf]
        %v5674 = vld [vmem:[%s5507 + $0x298] sm:$0xf]
        %v5675 = vld [vmem:[%s5507 + $0x29c] sm:$0xf]
        %v5676 = vld [vmem:[%s5507 + $0x2a0] sm:$0xf]
        %v5677 = vld [vmem:[%s5507 + $0x2a4] sm:$0xf]
        %v5678 = vld [vmem:[%s5507 + $0x2a8] sm:$0xf]
        %v5679 = vld [vmem:[%s5507 + $0x2ac] sm:$0xf]
        %v5680 = vld [vmem:[%s5507 + $0x2b0] sm:$0xf]
        %v5681 = vld [vmem:[%s5507 + $0x2b4] sm:$0xf]
        %v5682 = vld [vmem:[%s5507 + $0x2b8] sm:$0xf]
        %v5683 = vld [vmem:[%s5507 + $0x2bc] sm:$0xf]
        %v5684 = vld [vmem:[%s5507 + $0x2c0] sm:$0xf]
        %v5685 = vld [vmem:[%s5507 + $0x2c4] sm:$0xf]
        %v5686 = vld [vmem:[%s5507 + $0x2c8] sm:$0xf]
        %v5687 = vld [vmem:[%s5507 + $0x2cc] sm:$0xf]
        %v5688 = vld [vmem:[%s5507 + $0x2d0] sm:$0xf]
        %v5689 = vld [vmem:[%s5507 + $0x2d4] sm:$0xf]
        %v5690 = vld [vmem:[%s5507 + $0x2d8] sm:$0xf]
        %v5691 = vld [vmem:[%s5507 + $0x2dc] sm:$0xf]
        %v5692 = vld [vmem:[%s5507 + $0x2e0] sm:$0xf]
        %v5693 = vld [vmem:[%s5507 + $0x2e4] sm:$0xf]
        %v5694 = vld [vmem:[%s5507 + $0x2e8] sm:$0xf]
        %v5695 = vld [vmem:[%s5507 + $0x2ec] sm:$0xf]
        %v5696 = vld [vmem:[%s5507 + $0x2f0] sm:$0xf]
        %v5697 = vld [vmem:[%s5507 + $0x2f4] sm:$0xf]
        %v5698 = vld [vmem:[%s5507 + $0x2f8] sm:$0xf]
        %v5699 = vld [vmem:[%s5507 + $0x2fc] sm:$0xf]
        %v5700 = vld [vmem:[%s5507 + $0x300] sm:$0xf]
        %v5701 = vld [vmem:[%s5507 + $0x304] sm:$0xf]
        %v5702 = vld [vmem:[%s5507 + $0x308] sm:$0xf]
        %v5703 = vld [vmem:[%s5507 + $0x30c] sm:$0xf]
        %v5704 = vld [vmem:[%s5507 + $0x310] sm:$0xf]
        %v5705 = vld [vmem:[%s5507 + $0x314] sm:$0xf]
        %v5706 = vld [vmem:[%s5507 + $0x318] sm:$0xf]
        %v5707 = vld [vmem:[%s5507 + $0x31c] sm:$0xf]
        %v5708 = vld [vmem:[%s5507 + $0x320] sm:$0xf]
        %v5709 = vld [vmem:[%s5507 + $0x324] sm:$0xf]
        %v5710 = vld [vmem:[%s5507 + $0x328] sm:$0xf]
        %v5711 = vld [vmem:[%s5507 + $0x32c] sm:$0xf]
        %v5712 = vld [vmem:[%s5507 + $0x330] sm:$0xf]
        %v5713 = vld [vmem:[%s5507 + $0x334] sm:$0xf]
        %v5714 = vld [vmem:[%s5507 + $0x338] sm:$0xf]
        %v5715 = vld [vmem:[%s5507 + $0x33c] sm:$0xf]
        %v5716 = vld [vmem:[%s5507 + $0x340] sm:$0xf]
        %v5717 = vld [vmem:[%s5507 + $0x344] sm:$0xf]
        %v5718 = vld [vmem:[%s5507 + $0x348] sm:$0xf]
        %v5719 = vld [vmem:[%s5507 + $0x34c] sm:$0xf]
        %v5720 = vld [vmem:[%s5507 + $0x350] sm:$0xf]
        %v5721 = vld [vmem:[%s5507 + $0x354] sm:$0xf]
        %v5722 = vld [vmem:[%s5507 + $0x358] sm:$0xf]
        %v5723 = vld [vmem:[%s5507 + $0x35c] sm:$0xf]
        %v5724 = vld [vmem:[%s5507 + $0x360] sm:$0xf]
        %v5725 = vld [vmem:[%s5507 + $0x364] sm:$0xf]
        %v5726 = vld [vmem:[%s5507 + $0x368] sm:$0xf]
        %v5727 = vld [vmem:[%s5507 + $0x36c] sm:$0xf]
        %v5728 = vld [vmem:[%s5507 + $0x370] sm:$0xf]
        %v5729 = vld [vmem:[%s5507 + $0x374] sm:$0xf]
        %v5730 = vld [vmem:[%s5507 + $0x378] sm:$0xf]
        %v5731 = vld [vmem:[%s5507 + $0x37c] sm:$0xf]
        %v5732 = vld [vmem:[%s5507 + $0x380] sm:$0xf]
        %v5733 = vld [vmem:[%s5507 + $0x384] sm:$0xf]
        %v5734 = vld [vmem:[%s5507 + $0x388] sm:$0xf]
        %v5735 = vld [vmem:[%s5507 + $0x38c] sm:$0xf]
        %v5736 = vld [vmem:[%s5507 + $0x390] sm:$0xf]
        %v5737 = vld [vmem:[%s5507 + $0x394] sm:$0xf]
        %v5738 = vld [vmem:[%s5507 + $0x398] sm:$0xf]
        %v5739 = vld [vmem:[%s5507 + $0x39c] sm:$0xf]
        %v5740 = vld [vmem:[%s5507 + $0x3a0] sm:$0xf]
        %v5741 = vld [vmem:[%s5507 + $0x3a4] sm:$0xf]
        %v5742 = vld [vmem:[%s5507 + $0x3a8] sm:$0xf]
        %v5743 = vld [vmem:[%s5507 + $0x3ac] sm:$0xf]
        %v5744 = vld [vmem:[%s5507 + $0x3b0] sm:$0xf]
        %v5745 = vld [vmem:[%s5507 + $0x3b4] sm:$0xf]
        %v5746 = vld [vmem:[%s5507 + $0x3b8] sm:$0xf]
        %v5747 = vld [vmem:[%s5507 + $0x3bc] sm:$0xf]
        %v5748 = vld [vmem:[%s5507 + $0x3c0] sm:$0xf]
        %v5749 = vld [vmem:[%s5507 + $0x3c4] sm:$0xf]
        %v5750 = vld [vmem:[%s5507 + $0x3c8] sm:$0xf]
        %v5751 = vld [vmem:[%s5507 + $0x3cc] sm:$0xf]
        %v5752 = vld [vmem:[%s5507 + $0x3d0] sm:$0xf]
        %v5753 = vld [vmem:[%s5507 + $0x3d4] sm:$0xf]
        %v5754 = vld [vmem:[%s5507 + $0x3d8] sm:$0xf]
        %v5755 = vld [vmem:[%s5507 + $0x3dc] sm:$0xf]
        %v5756 = vld [vmem:[%s5507 + $0x3e0] sm:$0xf]
        %v5757 = vld [vmem:[%s5507 + $0x3e4] sm:$0xf]
        %v5758 = vld [vmem:[%s5507 + $0x3e8] sm:$0xf]
        %v5759 = vld [vmem:[%s5507 + $0x3ec] sm:$0xf]
        %v5760 = vld [vmem:[%s5507 + $0x3f0] sm:$0xf]
        %v5761 = vld [vmem:[%s5507 + $0x3f4] sm:$0xf]
        %v5762 = vld [vmem:[%s5507 + $0x3f8] sm:$0xf]
        %v5763 = vld [vmem:[%s5507 + $0x3fc] sm:$0xf]
        %v5764 = vlaneseq
        %v5765 = vshrl.u32 %v5764, 7
        %v5766 = vsub.s32 5, %v5765
        %v5767 = vrot.slane %v3685, %v5766
        %v6024 = vunpack.c.l.b16 %v5508
        %v6025 = vunpack.c.l.b16 %v5509
        %v6026 = vunpack.c.l.b16 %v5510
        %v6027 = vunpack.c.l.b16 %v5511
        %v6028 = vunpack.c.l.b16 %v5512
        %v6029 = vunpack.c.l.b16 %v5513
        %v6030 = vunpack.c.l.b16 %v5514
        %v6031 = vunpack.c.l.b16 %v5515
        %v6032 = vunpack.c.l.b16 %v5516
        %v6033 = vunpack.c.l.b16 %v5517
        %v6034 = vunpack.c.l.b16 %v5518
        %v6035 = vunpack.c.l.b16 %v5519
        %v6036 = vunpack.c.l.b16 %v5520
        %v6037 = vunpack.c.l.b16 %v5521
        %v6038 = vunpack.c.l.b16 %v5522
        %v6039 = vunpack.c.l.b16 %v5523
        %v6040 = vunpack.c.l.b16 %v5524
        %v6041 = vunpack.c.l.b16 %v5525
        %v6042 = vunpack.c.l.b16 %v5526
        %v6043 = vunpack.c.l.b16 %v5527
        %v6044 = vunpack.c.l.b16 %v5528
        %v6045 = vunpack.c.l.b16 %v5529
        %v6046 = vunpack.c.l.b16 %v5530
        %v6047 = vunpack.c.l.b16 %v5531
        %v6048 = vunpack.c.l.b16 %v5532
        %v6049 = vunpack.c.l.b16 %v5533
        %v6050 = vunpack.c.l.b16 %v5534
        %v6051 = vunpack.c.l.b16 %v5535
        %v6052 = vunpack.c.l.b16 %v5536
        %v6053 = vunpack.c.l.b16 %v5537
        %v6054 = vunpack.c.l.b16 %v5538
        %v6055 = vunpack.c.l.b16 %v5539
        %v6056 = vunpack.c.l.b16 %v5540
        %v6057 = vunpack.c.l.b16 %v5541
        %v6058 = vunpack.c.l.b16 %v5542
        %v6059 = vunpack.c.l.b16 %v5543
        %v6060 = vunpack.c.l.b16 %v5544
        %v6061 = vunpack.c.l.b16 %v5545
        %v6062 = vunpack.c.l.b16 %v5546
        %v6063 = vunpack.c.l.b16 %v5547
        %v6064 = vunpack.c.l.b16 %v5548
        %v6065 = vunpack.c.l.b16 %v5549
        %v6066 = vunpack.c.l.b16 %v5550
        %v6067 = vunpack.c.l.b16 %v5551
        %v6068 = vunpack.c.l.b16 %v5552
        %v6069 = vunpack.c.l.b16 %v5553
        %v6070 = vunpack.c.l.b16 %v5554
        %v6071 = vunpack.c.l.b16 %v5555
        %v6072 = vunpack.c.l.b16 %v5556
        %v6073 = vunpack.c.l.b16 %v5557
        %v6074 = vunpack.c.l.b16 %v5558
        %v6075 = vunpack.c.l.b16 %v5559
        %v6076 = vunpack.c.l.b16 %v5560
        %v6077 = vunpack.c.l.b16 %v5561
        %v6078 = vunpack.c.l.b16 %v5562
        %v6079 = vunpack.c.l.b16 %v5563
        %v6080 = vunpack.c.l.b16 %v5564
        %v6081 = vunpack.c.l.b16 %v5565
        %v6082 = vunpack.c.l.b16 %v5566
        %v6083 = vunpack.c.l.b16 %v5567
        %v6084 = vunpack.c.l.b16 %v5568
        %v6085 = vunpack.c.l.b16 %v5569
        %v6086 = vunpack.c.l.b16 %v5570
        %v6087 = vunpack.c.l.b16 %v5571
        %v6088 = vunpack.c.l.b16 %v5572
        %v6089 = vunpack.c.l.b16 %v5573
        %v6090 = vunpack.c.l.b16 %v5574
        %v6091 = vunpack.c.l.b16 %v5575
        %v6092 = vunpack.c.l.b16 %v5576
        %v6093 = vunpack.c.l.b16 %v5577
        %v6094 = vunpack.c.l.b16 %v5578
        %v6095 = vunpack.c.l.b16 %v5579
        %v6096 = vunpack.c.l.b16 %v5580
        %v6097 = vunpack.c.l.b16 %v5581
        %v6098 = vunpack.c.l.b16 %v5582
        %v6099 = vunpack.c.l.b16 %v5583
        %v6100 = vunpack.c.l.b16 %v5584
        %v6101 = vunpack.c.l.b16 %v5585
        %v6102 = vunpack.c.l.b16 %v5586
        %v6103 = vunpack.c.l.b16 %v5587
        %v6104 = vunpack.c.l.b16 %v5588
        %v6105 = vunpack.c.l.b16 %v5589
        %v6106 = vunpack.c.l.b16 %v5590
        %v6107 = vunpack.c.l.b16 %v5591
        %v6108 = vunpack.c.l.b16 %v5592
        %v6109 = vunpack.c.l.b16 %v5593
        %v6110 = vunpack.c.l.b16 %v5594
        %v6111 = vunpack.c.l.b16 %v5595
        %v6112 = vunpack.c.l.b16 %v5596
        %v6113 = vunpack.c.l.b16 %v5597
        %v6114 = vunpack.c.l.b16 %v5598
        %v6115 = vunpack.c.l.b16 %v5599
        %v6116 = vunpack.c.l.b16 %v5600
        %v6117 = vunpack.c.l.b16 %v5601
        %v6118 = vunpack.c.l.b16 %v5602
        %v6119 = vunpack.c.l.b16 %v5603
        %v6120 = vunpack.c.l.b16 %v5604
        %v6121 = vunpack.c.l.b16 %v5605
        %v6122 = vunpack.c.l.b16 %v5606
        %v6123 = vunpack.c.l.b16 %v5607
        %v6124 = vunpack.c.l.b16 %v5608
        %v6125 = vunpack.c.l.b16 %v5609
        %v6126 = vunpack.c.l.b16 %v5610
        %v6127 = vunpack.c.l.b16 %v5611
        %v6128 = vunpack.c.l.b16 %v5612
        %v6129 = vunpack.c.l.b16 %v5613
        %v6130 = vunpack.c.l.b16 %v5614
        %v6131 = vunpack.c.l.b16 %v5615
        %v6132 = vunpack.c.l.b16 %v5616
        %v6133 = vunpack.c.l.b16 %v5617
        %v6134 = vunpack.c.l.b16 %v5618
        %v6135 = vunpack.c.l.b16 %v5619
        %v6136 = vunpack.c.l.b16 %v5620
        %v6137 = vunpack.c.l.b16 %v5621
        %v6138 = vunpack.c.l.b16 %v5622
        %v6139 = vunpack.c.l.b16 %v5623
        %v6140 = vunpack.c.l.b16 %v5624
        %v6141 = vunpack.c.l.b16 %v5625
        %v6142 = vunpack.c.l.b16 %v5626
        %v6143 = vunpack.c.l.b16 %v5627
        %v6144 = vunpack.c.l.b16 %v5628
        %v6145 = vunpack.c.l.b16 %v5629
        %v6146 = vunpack.c.l.b16 %v5630
        %v6147 = vunpack.c.l.b16 %v5631
        %v6148 = vunpack.c.l.b16 %v5632
        %v6149 = vunpack.c.l.b16 %v5633
        %v6150 = vunpack.c.l.b16 %v5634
        %v6151 = vunpack.c.l.b16 %v5635
        %v6152 = vunpack.c.l.b16 %v5636
        %v6153 = vunpack.c.l.b16 %v5637
        %v6154 = vunpack.c.l.b16 %v5638
        %v6155 = vunpack.c.l.b16 %v5639
        %v6156 = vunpack.c.l.b16 %v5640
        %v6157 = vunpack.c.l.b16 %v5641
        %v6158 = vunpack.c.l.b16 %v5642
        %v6159 = vunpack.c.l.b16 %v5643
        %v6160 = vunpack.c.l.b16 %v5644
        %v6161 = vunpack.c.l.b16 %v5645
        %v6162 = vunpack.c.l.b16 %v5646
        %v6163 = vunpack.c.l.b16 %v5647
        %v6164 = vunpack.c.l.b16 %v5648
        %v6165 = vunpack.c.l.b16 %v5649
        %v6166 = vunpack.c.l.b16 %v5650
        %v6167 = vunpack.c.l.b16 %v5651
        %v6168 = vunpack.c.l.b16 %v5652
        %v6169 = vunpack.c.l.b16 %v5653
        %v6170 = vunpack.c.l.b16 %v5654
        %v6171 = vunpack.c.l.b16 %v5655
        %v6172 = vunpack.c.l.b16 %v5656
        %v6173 = vunpack.c.l.b16 %v5657
        %v6174 = vunpack.c.l.b16 %v5658
        %v6175 = vunpack.c.l.b16 %v5659
        %v6176 = vunpack.c.l.b16 %v5660
        %v6177 = vunpack.c.l.b16 %v5661
        %v6178 = vunpack.c.l.b16 %v5662
        %v6179 = vunpack.c.l.b16 %v5663
        %v6180 = vunpack.c.l.b16 %v5664
        %v6181 = vunpack.c.l.b16 %v5665
        %v6182 = vunpack.c.l.b16 %v5666
        %v6183 = vunpack.c.l.b16 %v5667
        %v6184 = vunpack.c.l.b16 %v5668
        %v6185 = vunpack.c.l.b16 %v5669
        %v6186 = vunpack.c.l.b16 %v5670
        %v6187 = vunpack.c.l.b16 %v5671
        %v6188 = vunpack.c.l.b16 %v5672
        %v6189 = vunpack.c.l.b16 %v5673
        %v6190 = vunpack.c.l.b16 %v5674
        %v6191 = vunpack.c.l.b16 %v5675
        %v6192 = vunpack.c.l.b16 %v5676
        %v6193 = vunpack.c.l.b16 %v5677
        %v6194 = vunpack.c.l.b16 %v5678
        %v6195 = vunpack.c.l.b16 %v5679
        %v6196 = vunpack.c.l.b16 %v5680
        %v6197 = vunpack.c.l.b16 %v5681
        %v6198 = vunpack.c.l.b16 %v5682
        %v6199 = vunpack.c.l.b16 %v5683
        %v6200 = vunpack.c.l.b16 %v5684
        %v6201 = vunpack.c.l.b16 %v5685
        %v6202 = vunpack.c.l.b16 %v5686
        %v6203 = vunpack.c.l.b16 %v5687
        %v6204 = vunpack.c.l.b16 %v5688
        %v6205 = vunpack.c.l.b16 %v5689
        %v6206 = vunpack.c.l.b16 %v5690
        %v6207 = vunpack.c.l.b16 %v5691
        %v6208 = vunpack.c.l.b16 %v5692
        %v6209 = vunpack.c.l.b16 %v5693
        %v6210 = vunpack.c.l.b16 %v5694
        %v6211 = vunpack.c.l.b16 %v5695
        %v6212 = vunpack.c.l.b16 %v5696
        %v6213 = vunpack.c.l.b16 %v5697
        %v6214 = vunpack.c.l.b16 %v5698
        %v6215 = vunpack.c.l.b16 %v5699
        %v6216 = vunpack.c.l.b16 %v5700
        %v6217 = vunpack.c.l.b16 %v5701
        %v6218 = vunpack.c.l.b16 %v5702
        %v6219 = vunpack.c.l.b16 %v5703
        %v6220 = vunpack.c.l.b16 %v5704
        %v6221 = vunpack.c.l.b16 %v5705
        %v6222 = vunpack.c.l.b16 %v5706
        %v6223 = vunpack.c.l.b16 %v5707
        %v6224 = vunpack.c.l.b16 %v5708
        %v6225 = vunpack.c.l.b16 %v5709
        %v6226 = vunpack.c.l.b16 %v5710
        %v6227 = vunpack.c.l.b16 %v5711
        %v6228 = vunpack.c.l.b16 %v5712
        %v6229 = vunpack.c.l.b16 %v5713
        %v6230 = vunpack.c.l.b16 %v5714
        %v6231 = vunpack.c.l.b16 %v5715
        %v6232 = vunpack.c.l.b16 %v5716
        %v6233 = vunpack.c.l.b16 %v5717
        %v6234 = vunpack.c.l.b16 %v5718
        %v6235 = vunpack.c.l.b16 %v5719
        %v6236 = vunpack.c.l.b16 %v5720
        %v6237 = vunpack.c.l.b16 %v5721
        %v6238 = vunpack.c.l.b16 %v5722
        %v6239 = vunpack.c.l.b16 %v5723
        %v6240 = vunpack.c.l.b16 %v5724
        %v6241 = vunpack.c.l.b16 %v5725
        %v6242 = vunpack.c.l.b16 %v5726
        %v6243 = vunpack.c.l.b16 %v5727
        %v6244 = vunpack.c.l.b16 %v5728
        %v6245 = vunpack.c.l.b16 %v5729
        %v6246 = vunpack.c.l.b16 %v5730
        %v6247 = vunpack.c.l.b16 %v5731
        %v6248 = vunpack.c.l.b16 %v5732
        %v6249 = vunpack.c.l.b16 %v5733
        %v6250 = vunpack.c.l.b16 %v5734
        %v6251 = vunpack.c.l.b16 %v5735
        %v6252 = vunpack.c.l.b16 %v5736
        %v6253 = vunpack.c.l.b16 %v5737
        %v6254 = vunpack.c.l.b16 %v5738
        %v6255 = vunpack.c.l.b16 %v5739
        %v6256 = vunpack.c.l.b16 %v5740
        %v6257 = vunpack.c.l.b16 %v5741
        %v6258 = vunpack.c.l.b16 %v5742
        %v6259 = vunpack.c.l.b16 %v5743
        %v6260 = vunpack.c.l.b16 %v5744
        %v6261 = vunpack.c.l.b16 %v5745
        %v6262 = vunpack.c.l.b16 %v5746
        %v6263 = vunpack.c.l.b16 %v5747
        %v6264 = vunpack.c.l.b16 %v5748
        %v6265 = vunpack.c.l.b16 %v5749
        %v6266 = vunpack.c.l.b16 %v5750
        %v6267 = vunpack.c.l.b16 %v5751
        %v6268 = vunpack.c.l.b16 %v5752
        %v6269 = vunpack.c.l.b16 %v5753
        %v6270 = vunpack.c.l.b16 %v5754
        %v6271 = vunpack.c.l.b16 %v5755
        %v6272 = vunpack.c.l.b16 %v5756
        %v6273 = vunpack.c.l.b16 %v5757
        %v6274 = vunpack.c.l.b16 %v5758
        %v6275 = vunpack.c.l.b16 %v5759
        %v6276 = vunpack.c.l.b16 %v5760
        %v6277 = vunpack.c.l.b16 %v5761
        %v6278 = vunpack.c.l.b16 %v5762
        %v6279 = vunpack.c.l.b16 %v5763
        %v6280 = vpack.c.b16 %v6025, %v6024
        %v6281 = vpack.c.b16 %v6027, %v6026
        %v6282 = vpack.c.b16 %v6029, %v6028
        %v6283 = vpack.c.b16 %v6031, %v6030
        %v6284 = vpack.c.b16 %v6033, %v6032
        %v6285 = vpack.c.b16 %v6035, %v6034
        %v6286 = vpack.c.b16 %v6037, %v6036
        %v6287 = vpack.c.b16 %v6039, %v6038
        %v6288 = vpack.c.b16 %v6041, %v6040
        %v6289 = vpack.c.b16 %v6043, %v6042
        %v6290 = vpack.c.b16 %v6045, %v6044
        %v6291 = vpack.c.b16 %v6047, %v6046
        %v6292 = vpack.c.b16 %v6049, %v6048
        %v6293 = vpack.c.b16 %v6051, %v6050
        %v6294 = vpack.c.b16 %v6053, %v6052
        %v6295 = vpack.c.b16 %v6055, %v6054
        %v6296 = vpack.c.b16 %v6057, %v6056
        %v6297 = vpack.c.b16 %v6059, %v6058
        %v6298 = vpack.c.b16 %v6061, %v6060
        %v6299 = vpack.c.b16 %v6063, %v6062
        %v6300 = vpack.c.b16 %v6065, %v6064
        %v6301 = vpack.c.b16 %v6067, %v6066
        %v6302 = vpack.c.b16 %v6069, %v6068
        %v6303 = vpack.c.b16 %v6071, %v6070
        %v6304 = vpack.c.b16 %v6073, %v6072
        %v6305 = vpack.c.b16 %v6075, %v6074
        %v6306 = vpack.c.b16 %v6077, %v6076
        %v6307 = vpack.c.b16 %v6079, %v6078
        %v6308 = vpack.c.b16 %v6081, %v6080
        %v6309 = vpack.c.b16 %v6083, %v6082
        %v6310 = vpack.c.b16 %v6085, %v6084
        %v6311 = vpack.c.b16 %v6087, %v6086
        %v6312 = vpack.c.b16 %v6089, %v6088
        %v6313 = vpack.c.b16 %v6091, %v6090
        %v6314 = vpack.c.b16 %v6093, %v6092
        %v6315 = vpack.c.b16 %v6095, %v6094
        %v6316 = vpack.c.b16 %v6097, %v6096
        %v6317 = vpack.c.b16 %v6099, %v6098
        %v6318 = vpack.c.b16 %v6101, %v6100
        %v6319 = vpack.c.b16 %v6103, %v6102
        %v6320 = vpack.c.b16 %v6105, %v6104
        %v6321 = vpack.c.b16 %v6107, %v6106
        %v6322 = vpack.c.b16 %v6109, %v6108
        %v6323 = vpack.c.b16 %v6111, %v6110
        %v6324 = vpack.c.b16 %v6113, %v6112
        %v6325 = vpack.c.b16 %v6115, %v6114
        %v6326 = vpack.c.b16 %v6117, %v6116
        %v6327 = vpack.c.b16 %v6119, %v6118
        %v6328 = vpack.c.b16 %v6121, %v6120
        %v6329 = vpack.c.b16 %v6123, %v6122
        %v6330 = vpack.c.b16 %v6125, %v6124
        %v6331 = vpack.c.b16 %v6127, %v6126
        %v6332 = vpack.c.b16 %v6129, %v6128
        %v6333 = vpack.c.b16 %v6131, %v6130
        %v6334 = vpack.c.b16 %v6133, %v6132
        %v6335 = vpack.c.b16 %v6135, %v6134
        %v6336 = vpack.c.b16 %v6137, %v6136
        %v6337 = vpack.c.b16 %v6139, %v6138
        %v6338 = vpack.c.b16 %v6141, %v6140
        %v6339 = vpack.c.b16 %v6143, %v6142
        %v6340 = vpack.c.b16 %v6145, %v6144
        %v6341 = vpack.c.b16 %v6147, %v6146
        %v6342 = vpack.c.b16 %v6149, %v6148
        %v6343 = vpack.c.b16 %v6151, %v6150
        %v6344 = vpack.c.b16 %v6153, %v6152
        %v6345 = vpack.c.b16 %v6155, %v6154
        %v6346 = vpack.c.b16 %v6157, %v6156
        %v6347 = vpack.c.b16 %v6159, %v6158
        %v6348 = vpack.c.b16 %v6161, %v6160
        %v6349 = vpack.c.b16 %v6163, %v6162
        %v6350 = vpack.c.b16 %v6165, %v6164
        %v6351 = vpack.c.b16 %v6167, %v6166
        %v6352 = vpack.c.b16 %v6169, %v6168
        %v6353 = vpack.c.b16 %v6171, %v6170
        %v6354 = vpack.c.b16 %v6173, %v6172
        %v6355 = vpack.c.b16 %v6175, %v6174
        %v6356 = vpack.c.b16 %v6177, %v6176
        %v6357 = vpack.c.b16 %v6179, %v6178
        %v6358 = vpack.c.b16 %v6181, %v6180
        %v6359 = vpack.c.b16 %v6183, %v6182
        %v6360 = vpack.c.b16 %v6185, %v6184
        %v6361 = vpack.c.b16 %v6187, %v6186
        %v6362 = vpack.c.b16 %v6189, %v6188
        %v6363 = vpack.c.b16 %v6191, %v6190
        %v6364 = vpack.c.b16 %v6193, %v6192
        %v6365 = vpack.c.b16 %v6195, %v6194
        %v6366 = vpack.c.b16 %v6197, %v6196
        %v6367 = vpack.c.b16 %v6199, %v6198
        %v6368 = vpack.c.b16 %v6201, %v6200
        %v6369 = vpack.c.b16 %v6203, %v6202
        %v6370 = vpack.c.b16 %v6205, %v6204
        %v6371 = vpack.c.b16 %v6207, %v6206
        %v6372 = vpack.c.b16 %v6209, %v6208
        %v6373 = vpack.c.b16 %v6211, %v6210
        %v6374 = vpack.c.b16 %v6213, %v6212
        %v6375 = vpack.c.b16 %v6215, %v6214
        %v6376 = vpack.c.b16 %v6217, %v6216
        %v6377 = vpack.c.b16 %v6219, %v6218
        %v6378 = vpack.c.b16 %v6221, %v6220
        %v6379 = vpack.c.b16 %v6223, %v6222
        %v6380 = vpack.c.b16 %v6225, %v6224
        %v6381 = vpack.c.b16 %v6227, %v6226
        %v6382 = vpack.c.b16 %v6229, %v6228
        %v6383 = vpack.c.b16 %v6231, %v6230
        %v6384 = vpack.c.b16 %v6233, %v6232
        %v6385 = vpack.c.b16 %v6235, %v6234
        %v6386 = vpack.c.b16 %v6237, %v6236
        %v6387 = vpack.c.b16 %v6239, %v6238
        %v6388 = vpack.c.b16 %v6241, %v6240
        %v6389 = vpack.c.b16 %v6243, %v6242
        %v6390 = vpack.c.b16 %v6245, %v6244
        %v6391 = vpack.c.b16 %v6247, %v6246
        %v6392 = vpack.c.b16 %v6249, %v6248
        %v6393 = vpack.c.b16 %v6251, %v6250
        %v6394 = vpack.c.b16 %v6253, %v6252
        %v6395 = vpack.c.b16 %v6255, %v6254
        %v6396 = vpack.c.b16 %v6257, %v6256
        %v6397 = vpack.c.b16 %v6259, %v6258
        %v6398 = vpack.c.b16 %v6261, %v6260
        %v6399 = vpack.c.b16 %v6263, %v6262
        %v6400 = vpack.c.b16 %v6265, %v6264
        %v6401 = vpack.c.b16 %v6267, %v6266
        %v6402 = vpack.c.b16 %v6269, %v6268
        %v6403 = vpack.c.b16 %v6271, %v6270
        %v6404 = vpack.c.b16 %v6273, %v6272
        %v6405 = vpack.c.b16 %v6275, %v6274
        %v6406 = vpack.c.b16 %v6277, %v6276
        %v6407 = vpack.c.b16 %v6279, %v6278
        %6536 = vmatprep.subr.bf16.mxu0 0
        %6537 = vmatpush1.bf16.msra.mxu0 %v6280
        %6538 = vmatprep.subr.bf16.mxu0 0
        %6539 = vmatpush1.bf16.msra.mxu0 %v6281
        %6540 = vmatprep.subr.bf16.mxu0 0
        %6541 = vmatpush1.bf16.msra.mxu0 %v6282
        %6542 = vmatprep.subr.bf16.mxu0 0
        %6543 = vmatpush1.bf16.msra.mxu0 %v6283
        %6544 = vmatprep.subr.bf16.mxu0 0
        %6545 = vmatpush1.bf16.msra.mxu0 %v6284
        %6546 = vmatprep.subr.bf16.mxu0 0
        %6547 = vmatpush1.bf16.msra.mxu0 %v6285
        %6548 = vmatprep.subr.bf16.mxu0 0
        %6549 = vmatpush1.bf16.msra.mxu0 %v6286
        %6550 = vmatprep.subr.bf16.mxu0 0
        %6551 = vmatpush1.bf16.msra.mxu0 %v6287
        %6552 = vmatprep.subr.bf16.mxu0 0
        %6553 = vmatpush1.bf16.msra.mxu0 %v6288
        %6554 = vmatprep.subr.bf16.mxu0 0
        %6555 = vmatpush1.bf16.msra.mxu0 %v6289
        %6556 = vmatprep.subr.bf16.mxu0 0
        %6557 = vmatpush1.bf16.msra.mxu0 %v6290
        %6558 = vmatprep.subr.bf16.mxu0 0
        %6559 = vmatpush1.bf16.msra.mxu0 %v6291
        %6560 = vmatprep.subr.bf16.mxu0 0
        %6561 = vmatpush1.bf16.msra.mxu0 %v6292
        %6562 = vmatprep.subr.bf16.mxu0 0
        %6563 = vmatpush1.bf16.msra.mxu0 %v6293
        %6564 = vmatprep.subr.bf16.mxu0 0
        %6565 = vmatpush1.bf16.msra.mxu0 %v6294
        %6566 = vmatprep.subr.bf16.mxu0 0
        %6567 = vmatpush1.bf16.msra.mxu0 %v6295
        %6568 = vmatprep.mubr.bf16.mxu0 %v5492
        %6569 = vmatmul.mubr.bf16.gmra.mrb[0].mxu0 %v5491
        %v6570 = vpop.f32.mrb[0].mxu0
        %v6571 = vadd.f32 %v5767, %v6570
        %v6572 = vpop.f32.mrb[0].mxu0
        %v6573 = vpop.f32.mrb[0].mxu0
        %v6574 = vpop.f32.mrb[0].mxu0
        %6575 = vdwg.mxu0
        %6576 = vmatprep.subr.bf16.mxu0 0
        %6577 = vmatpush1.bf16.msra.mxu0 %v6296
        %6578 = vmatprep.subr.bf16.mxu0 0
        %6579 = vmatpush1.bf16.msra.mxu0 %v6297
        %6580 = vmatprep.subr.bf16.mxu0 0
        %6581 = vmatpush1.bf16.msra.mxu0 %v6298
        %6582 = vmatprep.subr.bf16.mxu0 0
        %6583 = vmatpush1.bf16.msra.mxu0 %v6299
        %6584 = vmatprep.subr.bf16.mxu0 0
        %6585 = vmatpush1.bf16.msra.mxu0 %v6300
        %6586 = vmatprep.subr.bf16.mxu0 0
        %6587 = vmatpush1.bf16.msra.mxu0 %v6301
        %6588 = vmatprep.subr.bf16.mxu0 0
        %6589 = vmatpush1.bf16.msra.mxu0 %v6302
        %6590 = vmatprep.subr.bf16.mxu0 0
        %6591 = vmatpush1.bf16.msra.mxu0 %v6303
        %6592 = vmatprep.subr.bf16.mxu0 0
        %6593 = vmatpush1.bf16.msra.mxu0 %v6304
        %6594 = vmatprep.subr.bf16.mxu0 0
        %6595 = vmatpush1.bf16.msra.mxu0 %v6305
        %6596 = vmatprep.subr.bf16.mxu0 0
        %6597 = vmatpush1.bf16.msra.mxu0 %v6306
        %6598 = vmatprep.subr.bf16.mxu0 0
        %6599 = vmatpush1.bf16.msra.mxu0 %v6307
        %6600 = vmatprep.subr.bf16.mxu0 0
        %6601 = vmatpush1.bf16.msra.mxu0 %v6308
        %6602 = vmatprep.subr.bf16.mxu0 0
        %6603 = vmatpush1.bf16.msra.mxu0 %v6309
        %6604 = vmatprep.subr.bf16.mxu0 0
        %6605 = vmatpush1.bf16.msra.mxu0 %v6310
        %6606 = vmatprep.subr.bf16.mxu0 0
        %6607 = vmatpush1.bf16.msra.mxu0 %v6311
        %6608 = vmatprep.mubr.bf16.mxu0 %v5494
        %6609 = vmatmul.mubr.bf16.gmra.mrb[0].mxu0 %v5493
        %v6610 = vpop.f32.mrb[0].mxu0
        %v6611 = vadd.f32 %v6571, %v6610
        %v6612 = vpop.f32.mrb[0].mxu0
        %v6613 = vpop.f32.mrb[0].mxu0
        %v6614 = vpop.f32.mrb[0].mxu0
        %6615 = vdwg.mxu0
        %6616 = vmatprep.subr.bf16.mxu0 0
        %6617 = vmatpush1.bf16.msra.mxu0 %v6312
        %6618 = vmatprep.subr.bf16.mxu0 0
        %6619 = vmatpush1.bf16.msra.mxu0 %v6313
        %6620 = vmatprep.subr.bf16.mxu0 0
        %6621 = vmatpush1.bf16.msra.mxu0 %v6314
        %6622 = vmatprep.subr.bf16.mxu0 0
        %6623 = vmatpush1.bf16.msra.mxu0 %v6315
        %6624 = vmatprep.subr.bf16.mxu0 0
        %6625 = vmatpush1.bf16.msra.mxu0 %v6316
        %6626 = vmatprep.subr.bf16.mxu0 0
        %6627 = vmatpush1.bf16.msra.mxu0 %v6317
        %6628 = vmatprep.subr.bf16.mxu0 0
        %6629 = vmatpush1.bf16.msra.mxu0 %v6318
        %6630 = vmatprep.subr.bf16.mxu0 0
        %6631 = vmatpush1.bf16.msra.mxu0 %v6319
        %6632 = vmatprep.subr.bf16.mxu0 0
        %6633 = vmatpush1.bf16.msra.mxu0 %v6320
        %6634 = vmatprep.subr.bf16.mxu0 0
        %6635 = vmatpush1.bf16.msra.mxu0 %v6321
        %6636 = vmatprep.subr.bf16.mxu0 0
        %6637 = vmatpush1.bf16.msra.mxu0 %v6322
        %6638 = vmatprep.subr.bf16.mxu0 0
        %6639 = vmatpush1.bf16.msra.mxu0 %v6323
        %6640 = vmatprep.subr.bf16.mxu0 0
        %6641 = vmatpush1.bf16.msra.mxu0 %v6324
        %6642 = vmatprep.subr.bf16.mxu0 0
        %6643 = vmatpush1.bf16.msra.mxu0 %v6325
        %6644 = vmatprep.subr.bf16.mxu0 0
        %6645 = vmatpush1.bf16.msra.mxu0 %v6326
        %6646 = vmatprep.subr.bf16.mxu0 0
        %6647 = vmatpush1.bf16.msra.mxu0 %v6327
        %6648 = vmatprep.mubr.bf16.mxu0 %v5496
        %6649 = vmatmul.mubr.bf16.gmra.mrb[0].mxu0 %v5495
        %v6650 = vpop.f32.mrb[0].mxu0
        %v6651 = vadd.f32 %v6611, %v6650
        %v6652 = vpop.f32.mrb[0].mxu0
        %v6653 = vpop.f32.mrb[0].mxu0
        %v6654 = vpop.f32.mrb[0].mxu0
        %6655 = vdwg.mxu0
        %6656 = vmatprep.subr.bf16.mxu0 0
        %6657 = vmatpush1.bf16.msra.mxu0 %v6328
        %6658 = vmatprep.subr.bf16.mxu0 0
        %6659 = vmatpush1.bf16.msra.mxu0 %v6329
        %6660 = vmatprep.subr.bf16.mxu0 0
        %6661 = vmatpush1.bf16.msra.mxu0 %v6330
        %6662 = vmatprep.subr.bf16.mxu0 0
        %6663 = vmatpush1.bf16.msra.mxu0 %v6331
        %6664 = vmatprep.subr.bf16.mxu0 0
        %6665 = vmatpush1.bf16.msra.mxu0 %v6332
        %6666 = vmatprep.subr.bf16.mxu0 0
        %6667 = vmatpush1.bf16.msra.mxu0 %v6333
        %6668 = vmatprep.subr.bf16.mxu0 0
        %6669 = vmatpush1.bf16.msra.mxu0 %v6334
        %6670 = vmatprep.subr.bf16.mxu0 0
        %6671 = vmatpush1.bf16.msra.mxu0 %v6335
        %6672 = vmatprep.subr.bf16.mxu0 0
        %6673 = vmatpush1.bf16.msra.mxu0 %v6336
        %6674 = vmatprep.subr.bf16.mxu0 0
        %6675 = vmatpush1.bf16.msra.mxu0 %v6337
        %6676 = vmatprep.subr.bf16.mxu0 0
        %6677 = vmatpush1.bf16.msra.mxu0 %v6338
        %6678 = vmatprep.subr.bf16.mxu0 0
        %6679 = vmatpush1.bf16.msra.mxu0 %v6339
        %6680 = vmatprep.subr.bf16.mxu0 0
        %6681 = vmatpush1.bf16.msra.mxu0 %v6340
        %6682 = vmatprep.subr.bf16.mxu0 0
        %6683 = vmatpush1.bf16.msra.mxu0 %v6341
        %6684 = vmatprep.subr.bf16.mxu0 0
        %6685 = vmatpush1.bf16.msra.mxu0 %v6342
        %6686 = vmatprep.subr.bf16.mxu0 0
        %6687 = vmatpush1.bf16.msra.mxu0 %v6343
        %6688 = vmatprep.mubr.bf16.mxu0 %v5498
        %6689 = vmatmul.mubr.bf16.gmra.mrb[0].mxu0 %v5497
        %v6690 = vpop.f32.mrb[0].mxu0
        %v6691 = vadd.f32 %v6651, %v6690
        %v6692 = vpop.f32.mrb[0].mxu0
        %v6693 = vpop.f32.mrb[0].mxu0
        %v6694 = vpop.f32.mrb[0].mxu0
        %6695 = vdwg.mxu0
        %6696 = vmatprep.subr.bf16.mxu0 0
        %6697 = vmatpush1.bf16.msra.mxu0 %v6344
        %6698 = vmatprep.subr.bf16.mxu0 0
        %6699 = vmatpush1.bf16.msra.mxu0 %v6345
        %6700 = vmatprep.subr.bf16.mxu0 0
        %6701 = vmatpush1.bf16.msra.mxu0 %v6346
        %6702 = vmatprep.subr.bf16.mxu0 0
        %6703 = vmatpush1.bf16.msra.mxu0 %v6347
        %6704 = vmatprep.subr.bf16.mxu0 0
        %6705 = vmatpush1.bf16.msra.mxu0 %v6348
        %6706 = vmatprep.subr.bf16.mxu0 0
        %6707 = vmatpush1.bf16.msra.mxu0 %v6349
        %6708 = vmatprep.subr.bf16.mxu0 0
        %6709 = vmatpush1.bf16.msra.mxu0 %v6350
        %6710 = vmatprep.subr.bf16.mxu0 0
        %6711 = vmatpush1.bf16.msra.mxu0 %v6351
        %6712 = vmatprep.subr.bf16.mxu0 0
        %6713 = vmatpush1.bf16.msra.mxu0 %v6352
        %6714 = vmatprep.subr.bf16.mxu0 0
        %6715 = vmatpush1.bf16.msra.mxu0 %v6353
        %6716 = vmatprep.subr.bf16.mxu0 0
        %6717 = vmatpush1.bf16.msra.mxu0 %v6354
        %6718 = vmatprep.subr.bf16.mxu0 0
        %6719 = vmatpush1.bf16.msra.mxu0 %v6355
        %6720 = vmatprep.subr.bf16.mxu0 0
        %6721 = vmatpush1.bf16.msra.mxu0 %v6356
        %6722 = vmatprep.subr.bf16.mxu0 0
        %6723 = vmatpush1.bf16.msra.mxu0 %v6357
        %6724 = vmatprep.subr.bf16.mxu0 0
        %6725 = vmatpush1.bf16.msra.mxu0 %v6358
        %6726 = vmatprep.subr.bf16.mxu0 0
        %6727 = vmatpush1.bf16.msra.mxu0 %v6359
        %6728 = vmatprep.mubr.bf16.mxu0 %v5500
        %6729 = vmatmul.mubr.bf16.gmra.mrb[0].mxu0 %v5499
        %v6730 = vpop.f32.mrb[0].mxu0
        %v6731 = vadd.f32 %v6691, %v6730
        %v6732 = vpop.f32.mrb[0].mxu0
        %v6733 = vpop.f32.mrb[0].mxu0
        %v6734 = vpop.f32.mrb[0].mxu0
        %6735 = vdwg.mxu0
        %6736 = vmatprep.subr.bf16.mxu0 0
        %6737 = vmatpush1.bf16.msra.mxu0 %v6360
        %6738 = vmatprep.subr.bf16.mxu0 0
        %6739 = vmatpush1.bf16.msra.mxu0 %v6361
        %6740 = vmatprep.subr.bf16.mxu0 0
        %6741 = vmatpush1.bf16.msra.mxu0 %v6362
        %6742 = vmatprep.subr.bf16.mxu0 0
        %6743 = vmatpush1.bf16.msra.mxu0 %v6363
        %6744 = vmatprep.subr.bf16.mxu0 0
        %6745 = vmatpush1.bf16.msra.mxu0 %v6364
        %6746 = vmatprep.subr.bf16.mxu0 0
        %6747 = vmatpush1.bf16.msra.mxu0 %v6365
        %6748 = vmatprep.subr.bf16.mxu0 0
        %6749 = vmatpush1.bf16.msra.mxu0 %v6366
        %6750 = vmatprep.subr.bf16.mxu0 0
        %6751 = vmatpush1.bf16.msra.mxu0 %v6367
        %6752 = vmatprep.subr.bf16.mxu0 0
        %6753 = vmatpush1.bf16.msra.mxu0 %v6368
        %6754 = vmatprep.subr.bf16.mxu0 0
        %6755 = vmatpush1.bf16.msra.mxu0 %v6369
        %6756 = vmatprep.subr.bf16.mxu0 0
        %6757 = vmatpush1.bf16.msra.mxu0 %v6370
        %6758 = vmatprep.subr.bf16.mxu0 0
        %6759 = vmatpush1.bf16.msra.mxu0 %v6371
        %6760 = vmatprep.subr.bf16.mxu0 0
        %6761 = vmatpush1.bf16.msra.mxu0 %v6372
        %6762 = vmatprep.subr.bf16.mxu0 0
        %6763 = vmatpush1.bf16.msra.mxu0 %v6373
        %6764 = vmatprep.subr.bf16.mxu0 0
        %6765 = vmatpush1.bf16.msra.mxu0 %v6374
        %6766 = vmatprep.subr.bf16.mxu0 0
        %6767 = vmatpush1.bf16.msra.mxu0 %v6375
        %6768 = vmatprep.mubr.bf16.mxu0 %v5502
        %6769 = vmatmul.mubr.bf16.gmra.mrb[0].mxu0 %v5501
        %v6770 = vpop.f32.mrb[0].mxu0
        %v6771 = vadd.f32 %v6731, %v6770
        %v6772 = vpop.f32.mrb[0].mxu0
        %v6773 = vpop.f32.mrb[0].mxu0
        %v6774 = vpop.f32.mrb[0].mxu0
        %6775 = vdwg.mxu0
        %6776 = vmatprep.subr.bf16.mxu0 0
        %6777 = vmatpush1.bf16.msra.mxu0 %v6376
        %6778 = vmatprep.subr.bf16.mxu0 0
        %6779 = vmatpush1.bf16.msra.mxu0 %v6377
        %6780 = vmatprep.subr.bf16.mxu0 0
        %6781 = vmatpush1.bf16.msra.mxu0 %v6378
        %6782 = vmatprep.subr.bf16.mxu0 0
        %6783 = vmatpush1.bf16.msra.mxu0 %v6379
        %6784 = vmatprep.subr.bf16.mxu0 0
        %6785 = vmatpush1.bf16.msra.mxu0 %v6380
        %6786 = vmatprep.subr.bf16.mxu0 0
        %6787 = vmatpush1.bf16.msra.mxu0 %v6381
        %6788 = vmatprep.subr.bf16.mxu0 0
        %6789 = vmatpush1.bf16.msra.mxu0 %v6382
        %6790 = vmatprep.subr.bf16.mxu0 0
        %6791 = vmatpush1.bf16.msra.mxu0 %v6383
        %6792 = vmatprep.subr.bf16.mxu0 0
        %6793 = vmatpush1.bf16.msra.mxu0 %v6384
        %6794 = vmatprep.subr.bf16.mxu0 0
        %6795 = vmatpush1.bf16.msra.mxu0 %v6385
        %6796 = vmatprep.subr.bf16.mxu0 0
        %6797 = vmatpush1.bf16.msra.mxu0 %v6386
        %6798 = vmatprep.subr.bf16.mxu0 0
        %6799 = vmatpush1.bf16.msra.mxu0 %v6387
        %6800 = vmatprep.subr.bf16.mxu0 0
        %6801 = vmatpush1.bf16.msra.mxu0 %v6388
        %6802 = vmatprep.subr.bf16.mxu0 0
        %6803 = vmatpush1.bf16.msra.mxu0 %v6389
        %6804 = vmatprep.subr.bf16.mxu0 0
        %6805 = vmatpush1.bf16.msra.mxu0 %v6390
        %6806 = vmatprep.subr.bf16.mxu0 0
        %6807 = vmatpush1.bf16.msra.mxu0 %v6391
        %6808 = vmatprep.mubr.bf16.mxu0 %v5504
        %6809 = vmatmul.mubr.bf16.gmra.mrb[0].mxu0 %v5503
        %v6810 = vpop.f32.mrb[0].mxu0
        %v6811 = vadd.f32 %v6771, %v6810
        %v6812 = vpop.f32.mrb[0].mxu0
        %v6813 = vpop.f32.mrb[0].mxu0
        %v6814 = vpop.f32.mrb[0].mxu0
        %6815 = vdwg.mxu0
        %6816 = vmatprep.subr.bf16.mxu0 0
        %6817 = vmatpush1.bf16.msra.mxu0 %v6392
        %6818 = vmatprep.subr.bf16.mxu0 0
        %6819 = vmatpush1.bf16.msra.mxu0 %v6393
        %6820 = vmatprep.subr.bf16.mxu0 0
        %6821 = vmatpush1.bf16.msra.mxu0 %v6394
        %6822 = vmatprep.subr.bf16.mxu0 0
        %6823 = vmatpush1.bf16.msra.mxu0 %v6395
        %6824 = vmatprep.subr.bf16.mxu0 0
        %6825 = vmatpush1.bf16.msra.mxu0 %v6396
        %6826 = vmatprep.subr.bf16.mxu0 0
        %6827 = vmatpush1.bf16.msra.mxu0 %v6397
        %6828 = vmatprep.subr.bf16.mxu0 0
        %6829 = vmatpush1.bf16.msra.mxu0 %v6398
        %6830 = vmatprep.subr.bf16.mxu0 0
        %6831 = vmatpush1.bf16.msra.mxu0 %v6399
        %6832 = vmatprep.subr.bf16.mxu0 0
        %6833 = vmatpush1.bf16.msra.mxu0 %v6400
        %6834 = vmatprep.subr.bf16.mxu0 0
        %6835 = vmatpush1.bf16.msra.mxu0 %v6401
        %6836 = vmatprep.subr.bf16.mxu0 0
        %6837 = vmatpush1.bf16.msra.mxu0 %v6402
        %6838 = vmatprep.subr.bf16.mxu0 0
        %6839 = vmatpush1.bf16.msra.mxu0 %v6403
        %6840 = vmatprep.subr.bf16.mxu0 0
        %6841 = vmatpush1.bf16.msra.mxu0 %v6404
        %6842 = vmatprep.subr.bf16.mxu0 0
        %6843 = vmatpush1.bf16.msra.mxu0 %v6405
        %6844 = vmatprep.subr.bf16.mxu0 0
        %6845 = vmatpush1.bf16.msra.mxu0 %v6406
        %6846 = vmatprep.subr.bf16.mxu0 0
        %6847 = vmatpush1.bf16.msra.mxu0 %v6407
        %6848 = vmatprep.mubr.bf16.mxu0 %v5506
        %6849 = vmatmul.mubr.bf16.gmra.mrb[0].mxu0 %v5505
        %v6850 = vpop.f32.mrb[0].mxu0
        %v6851 = vadd.f32 %v6811, %v6850
        %v6852 = vpop.f32.mrb[0].mxu0
        %v6853 = vpop.f32.mrb[0].mxu0
        %v6854 = vpop.f32.mrb[0].mxu0
        %6855 = vdwg.mxu0
        %v6856 = vadd.f32 %v4864, %v6851
        %v6857 = vsel %vm508, %v6856, 0.0
        %6858 = vadd.xlane.f32.xlu0 %v6857
        %v6859 = vpop.xlane.xlu0 %6858
        %v6860 = vmul.f32 %v6859, %v1651
        %v6861 = vsub.f32 %v6856, %v6860
        %v6862 = vmul.f32 %v6861, %v6861
        %v6863 = vsel %vm508, %v6862, 0.0
        %6864 = vadd.xlane.f32.xlu0 %v6863
        %v6865 = vpop.xlane.xlu0 %6864
        %v6866 = vmul.f32 %v6865, %v1651
        %v6867 = vadd.f32 %v6866, 1e-05
        %v6868 = vrsqrt.pop %v6867
        %v6869 = vmul.f32 %v6861, %v6868
        %v6870 = vlaneseq
        %v6871 = vshrl.u32 %v6870, 7
        %v6872 = vsub.s32 2, %v6871
        %v6873 = vrot.slane %v3685, %v6872
        %v6874 = vmul.f32 %v6869, %v6873
        %v6875 = vlaneseq
        %v6876 = vshrl.u32 %v6875, 7
        %v6877 = vsub.s32 3, %v6876
        %v6878 = vrot.slane %v3685, %v6877
        %v6879 = vadd.f32 %v6874, %v6878
        %v6880 = vld [vmem:[%s9] sm:$0x3]
        %v6881 = vsel %vm508, %v6879, 0.0
        %6882 = vadd.xlane.f32.xlu0 %v6881
        %v6883 = vpop.xlane.xlu0 %6882
        %v6884 = vmul.f32 %v6883, %v1651
        %v6885 = vsub.f32 %v6879, %v6884
        %v6886 = vmul.f32 %v6885, %v6885
        %v6887 = vsel %vm508, %v6886, 0.0
        %6888 = vadd.xlane.f32.xlu0 %v6887
        %v6889 = vpop.xlane.xlu0 %6888
        %v6890 = vmul.f32 %v6889, %v1651
        %v6891 = vadd.f32 %v6890, 1e-05
        %v6892 = vrsqrt.pop %v6891
        %v6893 = vmul.f32 %v6885, %v6892
        %v6894 = vlaneseq
        %v6895 = vshrl.u32 %v6894, 7
        %v6896 = vsub.s32 0, %v6895
        %v6897 = vrot.slane %v6880, %v6896
        %v6898 = vmul.f32 %v6893, %v6897
        %v6899 = vlaneseq
        %v6900 = vshrl.u32 %v6899, 7
        %v6901 = vsub.s32 1, %v6900
        %v6902 = vrot.slane %v6880, %v6901
        %v6903 = vadd.f32 %v6898, %v6902
        %v6904 = vpack.c.bf16 %v6903, %v6903
        %v6905 = vld [vmem:[%s10] sm:$0xf]
        %v6906 = vld [vmem:[%s10 + $0x4] sm:$0xf]
        %v6907 = vld [vmem:[%s10 + $0x8] sm:$0xf]
        %v6908 = vld [vmem:[%s10 + $0xc] sm:$0xf]
        %v6909 = vld [vmem:[%s11] sm:$0x1]
        %v6911 = vlaneseq
        %v6912 = vshrl.u32 %v6911, 7
        %v6913 = vsub.s32 0, %v6912
        %v6914 = vrot.slane %v6909, %v6913
        %v6920 = vunpack.c.l.b16 %v6905
        %v6921 = vunpack.c.l.b16 %v6906
        %v6922 = vunpack.c.l.b16 %v6907
        %v6923 = vunpack.c.l.b16 %v6908
        %v6924 = vpack.c.b16 %v6921, %v6920
        %v6925 = vpack.c.b16 %v6923, %v6922
        %v6929 = vsel %vm508, %v6904, 0
        %6931 = vmatprep.subr.bf16.mxu0 0
        %6932 = vmatpush1.bf16.msra.mxu0 %v6924
        %6933 = vmatprep.subr.bf16.mxu0 0
        %6934 = vmatpush1.bf16.msra.mxu0 %v6925
        %6935 = vmatprep.subr.bf16.mxu0 0
        %6936 = vmatpush1.bf16.msra.mxu0 0
        %6937 = vmatprep.subr.bf16.mxu0 0
        %6938 = vmatpush1.bf16.msra.mxu0 0
        %6939 = vmatprep.subr.bf16.mxu0 0
        %6940 = vmatpush1.bf16.msra.mxu0 0
        %6941 = vmatprep.subr.bf16.mxu0 0
        %6942 = vmatpush1.bf16.msra.mxu0 0
        %6943 = vmatprep.subr.bf16.mxu0 0
        %6944 = vmatpush1.bf16.msra.mxu0 0
        %6945 = vmatprep.subr.bf16.mxu0 0
        %6946 = vmatpush1.bf16.msra.mxu0 0
        %6947 = vmatprep.subr.bf16.mxu0 0
        %6948 = vmatpush1.bf16.msra.mxu0 0
        %6949 = vmatprep.subr.bf16.mxu0 0
        %6950 = vmatpush1.bf16.msra.mxu0 0
        %6951 = vmatprep.subr.bf16.mxu0 0
        %6952 = vmatpush1.bf16.msra.mxu0 0
        %6953 = vmatprep.subr.bf16.mxu0 0
        %6954 = vmatpush1.bf16.msra.mxu0 0
        %6955 = vmatprep.subr.bf16.mxu0 0
        %6956 = vmatpush1.bf16.msra.mxu0 0
        %6957 = vmatprep.subr.bf16.mxu0 0
        %6958 = vmatpush1.bf16.msra.mxu0 0
        %6959 = vmatprep.subr.bf16.mxu0 0
        %6960 = vmatpush1.bf16.msra.mxu0 0
        %6961 = vmatprep.subr.bf16.mxu0 0
        %6962 = vmatpush1.bf16.msra.mxu0 0
        %6963 = vmatprep.mubr.bf16.mxu0 0
        %6964 = vmatmul.mubr.bf16.gmra.mrb[0].mxu0 %v6929
        %v6965 = vpop.f32.mrb[0].mxu0
        %v6966 = vadd.f32 %v6914, %v6965
        %v6967 = vpop.f32.mrb[0].mxu0
        %v6968 = vpop.f32.mrb[0].mxu0
        %v6969 = vpop.f32.mrb[0].mxu0
        %6970 = vdwg.mxu0
        %v6971 = vmax.f32 %v6966, 0.0
        %v6972 = vpack.c.bf16 %v6971, %v6971
        %v6973 = vld [vmem:[%s12] sm:$0xf]
        %v6974 = vld [vmem:[%s12 + $0x4] sm:$0xf]
        %v6975 = vld [vmem:[#allocation2] sm:$0x1]
        %v6977 = vlaneseq
        %v6978 = vshrl.u32 %v6977, 7
        %v6979 = vsub.s32 0, %v6978
        %v6980 = vrot.slane %v6975, %v6979
        %v6984 = vunpack.c.l.b16 %v6973
        %v6985 = vunpack.c.l.b16 %v6974
        %v6986 = vpack.c.b16 %v6985, %v6984
        %v6989 = vsel %vm1579, %v6972, 0
        %6991 = vmatprep.subr.bf16.mxu0 0
        %6992 = vmatpush1.bf16.msra.mxu0 %v6986
        %6993 = vmatprep.subr.bf16.mxu0 0
        %6994 = vmatpush1.bf16.msra.mxu0 0
        %6995 = vmatprep.subr.bf16.mxu0 0
        %6996 = vmatpush1.bf16.msra.mxu0 0
        %6997 = vmatprep.subr.bf16.mxu0 0
        %6998 = vmatpush1.bf16.msra.mxu0 0
        %6999 = vmatprep.subr.bf16.mxu0 0
        %7000 = vmatpush1.bf16.msra.mxu0 0
        %7001 = vmatprep.subr.bf16.mxu0 0
        %7002 = vmatpush1.bf16.msra.mxu0 0
        %7003 = vmatprep.subr.bf16.mxu0 0
        %7004 = vmatpush1.bf16.msra.mxu0 0
        %7005 = vmatprep.subr.bf16.mxu0 0
        %7006 = vmatpush1.bf16.msra.mxu0 0
        %7007 = vmatprep.subr.bf16.mxu0 0
        %7008 = vmatpush1.bf16.msra.mxu0 0
        %7009 = vmatprep.subr.bf16.mxu0 0
        %7010 = vmatpush1.bf16.msra.mxu0 0
        %7011 = vmatprep.subr.bf16.mxu0 0
        %7012 = vmatpush1.bf16.msra.mxu0 0
        %7013 = vmatprep.subr.bf16.mxu0 0
        %7014 = vmatpush1.bf16.msra.mxu0 0
        %7015 = vmatprep.subr.bf16.mxu0 0
        %7016 = vmatpush1.bf16.msra.mxu0 0
        %7017 = vmatprep.subr.bf16.mxu0 0
        %7018 = vmatpush1.bf16.msra.mxu0 0
        %7019 = vmatprep.subr.bf16.mxu0 0
        %7020 = vmatpush1.bf16.msra.mxu0 0
        %7021 = vmatprep.subr.bf16.mxu0 0
        %7022 = vmatpush1.bf16.msra.mxu0 0
        %7023 = vmatprep.mubr.bf16.mxu0 0
        %7024 = vmatmul.mubr.bf16.gmra.mrb[0].mxu0 %v6989
        %v7025 = vpop.f32.mrb[0].mxu0
        %v7026 = vadd.f32 %v6980, %v7025
        %v7027 = vpop.f32.mrb[0].mxu0
        %v7028 = vpop.f32.mrb[0].mxu0
        %v7029 = vpop.f32.mrb[0].mxu0
        %7030 = vdwg.mxu0
        %v7031 = vxor.u32 %v7026, 2147483648
        %v7032 = vmul.f32 %v7031, 1.442695
        %v7033 = vpow.pop %v7032
        %v7034 = vadd.f32 %v7033, 1.0
        %v7035 = vrcp.pop %v7034
        %v7036 = vmul.f32 1.0, %v7035
        %7038 = vset.pattern.permute.xlu0 0
        %7039 = vperm.xlu0 %7038, %v7036
        %v7040 = vpop.permute.xlu0 %7039
        %v7041 = vlaneseq
        %v7042 = vand.u32 %v7041, 127
        %v7043 = vlaneseq
        %v7044 = vshrl.u32 %v7043, 7
        %v7045 = vsub.s32 %v7042, %v7044
        %v7046 = vrot.slane %v7040, %v7045
        %vm7048 = vcmask 57344
        %7049 = vst.msk [vmem:[%s470] sm:$0x1] %vm7048, %v7046
        %s7050 = sand.u32 %s342, 1
        %s7051 = scalar_lea.sflag [#allocation4], %s7050
        %s7052 = sand.u32 %s342, 1
        %s7053 = scalar_lea.vmem [#allocation3], %s7052
        // Predicated region
        $region77: #{value_module_forward.1} parent=75 // pred_check
          %p7054 = pneg %p352
        $region78: #{value_module_forward.1} parent=75 // pred_check_branch
          %7056 = sbr.rel (%p7054) target = $region80
        $region79: #{value_module_forward.1} parent=75 // pred_region
          %s7058 = ssub.s32 16, 16
          %7059 = vsyncadd %s7051, %s7058
          %s7060 = smul.addr %s30, 16
          %s7061 = scalar_lea.hbm %s14, %s7060
          %s7063 = sshll.u32 %s7053, 4
          %s7064 = int_to_ptr.vmem [resolvable:$true] %s7063
          %7066 = dma.vmem_to_hbm [thread:$0]  %s7064, 16, %s7061, %s7051
        $region80: #{value_module_forward.1} parent=75 // pred_fallthru
          _
      $region76: #{value_module_forward.1} parent=5 // pred_fallthru
        _
      %p7067 = scmp.le.s32.totalorder 2, %s25
      // Predicated region
      $region81: #{value_module_forward.1} parent=5 // pred_check
        %p7068 = pneg %p7067
      $region82: #{value_module_forward.1} parent=5 // pred_check_branch
        %7070 = sbr.rel (%p7068) target = $region84
      $region83: #{value_module_forward.1} parent=5 // pred_region
        %s7071 = ssub.s32 %s25, 2
        // Predicated region
        $region85: #{value_module_forward.1} parent=83 // pred_check
          %p7072 = pneg %p358
        $region86: #{value_module_forward.1} parent=83 // pred_check_branch
          %7074 = sbr.rel (%p7072) target = $region88
        $region87: #{value_module_forward.1} parent=83 // pred_region
          %s7075 = sand.u32 %s343, 1
          %s7076 = scalar_lea.sflag [#allocation4], %s7075
          %s7077 = sand.u32 %s343, 1
          %s7078 = scalar_lea.vmem [#allocation3], %s7077
          %7079 = dma.done %s7076, 16
        $region88: #{value_module_forward.1} parent=83 // pred_fallthru
          _
      $region84: #{value_module_forward.1} parent=5 // pred_fallthru
        _
    $region6: #{value_module_forward.1} parent=1 // loop_footer
      %s29 = sadd.s32 1, %s25
    $region7: #{value_module_forward.1} parent=1 // loop_footer_branch
      %24 = sbr.rel target = $region3
    $region8: #{value_module_forward.1} parent=1 // loop_exit
      _
    %7080 = vsyncpa [#allocation4], 1
    %s7081 = scalar_lea.sflag [#allocation4], 1
    %7082 = vsyncpa %s7081, 1

</llo_original>
